<compile_context>
chip_gen: v7x
topology: tpu7x:2x2x1
jax: 0.10.0
libtpu: 0.0.40
codegen_flags: <defaults>
</compile_context>

<pallas_src>
import jax
import jax.numpy as jnp
from jax.experimental import pallas as pl
from jax.experimental.pallas import tpu as pltpu

NOISE_DIM = 10
N_CHANNEL = 1
HIDDEN_DIM = 64
BN_EPS = 1e-5
LANE = 128


def _cdiv(a, b):
    return -(-a // b)


def _round_up(x, m):
    return _cdiv(x, m) * m


_PARALLEL_1D = pltpu.CompilerParams(dimension_semantics=("parallel",))


# ---------------------------------------------------------------------------
# Tiling helpers
# ---------------------------------------------------------------------------
def _auto_tile_max(in_cols, out_cols, budget_bytes=4 << 20):
    # Keep the double-buffered per-stream VMEM footprint modest so the default
    # scoped VMEM (16 MiB v5e, 32 MiB v6e/v7x, 64 MiB physical v7x) always fits.
    row_bytes = 2 * (in_cols + out_cols)  # bf16 input row + bf16 output row
    t = budget_bytes // max(row_bytes, 1)
    return int(min(1024, max(8, (t // 8) * 8)))


def _choose_tiling(rows, tile_max):
    # Balanced row tiles (multiple of 8); force >=2 tiles when rows allow it so
    # the "parallel" axis can be split across both v7x TensorCores.
    rows8 = _round_up(max(rows, 1), 8)
    n_tiles = max(_cdiv(rows8, tile_max), 2 if rows8 >= 16 else 1)
    tile = _round_up(_cdiv(rows8, n_tiles), 8)
    n_tiles = _cdiv(rows8, tile)
    return tile, n_tiles, n_tiles * tile


# ---------------------------------------------------------------------------
# Pallas kernels
# ---------------------------------------------------------------------------
def _matmul_stats_kernel(x_ref, w_ref, y_ref, sum_ref, sumsq_ref):
    # bf16 (tile, K) @ bf16 (K, C) with f32 accumulation on the MXU.  BN stats
    # come from the f32 accumulator; the activation is stored as bf16.
    acc = jnp.dot(x_ref[...], w_ref[...], preferred_element_type=jnp.float32)
    y_ref[...] = acc.astype(y_ref.dtype)
    sum_ref[...] = jnp.sum(acc, axis=0)[None, None, :]
    sumsq_ref[...] = jnp.sum(acc * acc, axis=0)[None, None, :]


def _affine_relu_kernel(y_ref, scale_ref, shift_ref, o_ref):
    # BatchNorm as precomputed per-channel scale/shift + ReLU.
    # Compute in f32 (v5e has no bf16 VPU math), store bf16.
    o = y_ref[...].astype(jnp.float32) * scale_ref[...] + shift_ref[...]
    o_ref[...] = jnp.maximum(o, 0.0).astype(o_ref.dtype)


def _matmul_bias_tanh_kernel(x_ref, w_ref, b_ref, o_ref):
    acc = jnp.dot(x_ref[...], w_ref[...], preferred_element_type=jnp.float32)
    o_ref[...] = jnp.tanh(acc + b_ref[...]).astype(o_ref.dtype)


# ---------------------------------------------------------------------------
# Tiled pallas_call wrappers
# ---------------------------------------------------------------------------
def _tiled_matmul_stats(x_bf16, w_bf16):
    """Returns (y[rows, C] bf16, col_sum[C] f32, col_sumsq[C] f32)."""
    rows, K = x_bf16.shape
    C = w_bf16.shape[1]
    tile, n_tiles, rows_p = _choose_tiling(rows, _auto_tile_max(K, C))
    if rows_p != rows:
        # Zero padding rows contribute 0 to sum/sumsq (no bias in this kernel).
        x_bf16 = jnp.pad(x_bf16, ((0, rows_p - rows), (0, 0)))
    cost = pl.CostEstimate(
        flops=2 * rows_p * K * C,
        transcendentals=0,
        bytes_accessed=rows_p * K * 2 + n_tiles * K * C * 2
        + rows_p * C * 2 + 2 * n_tiles * C * 4,
    )
    y, psum, psumsq = pl.pallas_call(
        _matmul_stats_kernel,
        grid=(n_tiles,),
        in_specs=[
            pl.BlockSpec((tile, K), lambda i: (i, 0)),
            pl.BlockSpec((K, C), lambda i: (0, 0)),
        ],
        out_specs=[
            pl.BlockSpec((tile, C), lambda i: (i, 0)),
            pl.BlockSpec((1, 1, C), lambda i: (i, 0, 0)),
            pl.BlockSpec((1, 1, C), lambda i: (i, 0, 0)),
        ],
        out_shape=[
            jax.ShapeDtypeStruct((rows_p, C), jnp.bfloat16),
            jax.ShapeDtypeStruct((n_tiles, 1, C), jnp.float32),
            jax.ShapeDtypeStruct((n_tiles, 1, C), jnp.float32),
        ],
        compiler_params=_PARALLEL_1D,
        cost_estimate=cost,
    )(x_bf16, w_bf16)
    return y[:rows], jnp.sum(psum, axis=(0, 1)), jnp.sum(psumsq, axis=(0, 1))


def _tiled_affine_relu(y_bf16, scale, shift):
    """Tiled (y * scale + shift) -> ReLU; bf16 in, f32 math, bf16 out."""
    rows, C = y_bf16.shape
    tile, n_tiles, rows_p = _choose_tiling(rows, _auto_tile_max(C, C))
    if rows_p != rows:
        y_bf16 = jnp.pad(y_bf16, ((0, rows_p - rows), (0, 0)))
    cost = pl.CostEstimate(
        flops=2 * rows_p * C,
        transcendentals=0,
        bytes_accessed=rows_p * C * 4 + 2 * n_tiles * C * 4,
    )
    out = pl.pallas_call(
        _affine_relu_kernel,
        grid=(n_tiles,),
        in_specs=[
            pl.BlockSpec((tile, C), lambda i: (i, 0)),
            pl.BlockSpec((1, C), lambda i: (0, 0)),
            pl.BlockSpec((1, C), lambda i: (0, 0)),
        ],
        out_specs=pl.BlockSpec((tile, C), lambda i: (i, 0)),
        out_shape=jax.ShapeDtypeStruct((rows_p, C), jnp.bfloat16),
        compiler_params=_PARALLEL_1D,
        cost_estimate=cost,
    )(y_bf16, scale, shift)
    return out[:rows]


def _tiled_matmul_bias_tanh(x_bf16, w_bf16, bias_f32):
    rows, K = x_bf16.shape
    C = w_bf16.shape[1]
    tile, n_tiles, rows_p = _choose_tiling(rows, _auto_tile_max(K, C))
    if rows_p != rows:
        x_bf16 = jnp.pad(x_bf16, ((0, rows_p - rows), (0, 0)))
    cost = pl.CostEstimate(
        flops=2 * rows_p * K * C,
        transcendentals=rows_p * C,
        bytes_accessed=rows_p * K * 2 + n_tiles * K * C * 2 + rows_p * C * 2,
    )
    y = pl.pallas_call(
        _matmul_bias_tanh_kernel,
        grid=(n_tiles,),
        in_specs=[
            pl.BlockSpec((tile, K), lambda i: (i, 0)),
            pl.BlockSpec((K, C), lambda i: (0, 0)),
            pl.BlockSpec((1, C), lambda i: (0, 0)),
        ],
        out_specs=pl.BlockSpec((tile, C), lambda i: (i, 0)),
        out_shape=jax.ShapeDtypeStruct((rows_p, C), jnp.bfloat16),
        compiler_params=_PARALLEL_1D,
        cost_estimate=cost,
    )(x_bf16, w_bf16, bias_f32)
    return y[:rows]


# ---------------------------------------------------------------------------
# Plain-JAX glue: stride-phase ConvTranspose decomposition, BN stat finalize
# ---------------------------------------------------------------------------
def _bn_scale_shift(col_sum, col_sumsq, count):
    # TODO(synk): E[x^2]-E[x]^2 in f32 can lose precision if activation means
    # grow large vs. std; a shifted / Welford reduction would be safer at scale.
    mean = col_sum / count
    var = jnp.maximum(col_sumsq / count - mean * mean, 0.0)  # biased batch var
    rstd = jax.lax.rsqrt(var + BN_EPS)
    return rstd[None, :], (-mean * rstd)[None, :]            # scale, shift: (1, C)


def _phase_im2col(x_nhwc, kh, kw):
    """im2col for one stride-phase: 'full'-padded stride-1 windows of size (kh, kw)."""
    N, H, W, Cin = x_nhwc.shape
    qh, qw = H - 1 + kh, W - 1 + kw
    xp = jnp.pad(x_nhwc, ((0, 0), (kh - 1, kh - 1), (kw - 1, kw - 1), (0, 0)))
    cols = [xp[:, a:a + qh, b:b + qw, :] for a in range(kh) for b in range(kw)]
    x_col = jnp.concatenate(cols, axis=-1).reshape(N * qh * qw, kh * kw * Cin)
    return x_col, (N, qh, qw)


def _phase_weight(w_pt, rh, rw, s):
    """Flipped sub-kernel for stride-phase (rh, rw) of a PyTorch ConvTranspose2d
    weight (Cin, Cout, kH, kW), flattened to (Kh*Kw*Cin, Cout) matching _phase_im2col."""
    w_sub = w_pt[:, :, rh::s, rw::s][:, :, ::-1, ::-1]        # (Cin, Cout, Kh, Kw)
    kh, kw = w_sub.shape[2], w_sub.shape[3]
    cin, cout = w_sub.shape[0], w_sub.shape[1]
    return jnp.transpose(w_sub, (2, 3, 0, 1)).reshape(kh * kw * cin, cout)


def _project_bn_relu_layer(noise_bf16, w_pt):
    """Layer 1: 1x1-spatial ConvTranspose2d == direct matmul (no structural zeros)."""
    B, nd = noise_bf16.shape
    cout, k = w_pt.shape[1], w_pt.shape[2]
    # output[b, kh, kw, c] = sum_cin noise[b, cin] * w[cin, c, kh, kw]
    w_flat = jnp.transpose(w_pt, (0, 2, 3, 1)).reshape(nd, k * k * cout).astype(jnp.bfloat16)
    y, csum, csumsq = _tiled_matmul_stats(noise_bf16, w_flat)       # (B, k*k*cout) bf16
    csum_c = jnp.sum(csum.reshape(k * k, cout), axis=0)             # BN stats per channel
    csumsq_c = jnp.sum(csumsq.reshape(k * k, cout), axis=0)
    scale, shift = _bn_scale_shift(csum_c, csumsq_c, B * k * k)
    out = _tiled_affine_relu(y.reshape(B * k * k, cout), scale, shift)
    return out.reshape(B, k, k, cout)                               # (B, 3, 3, 256) bf16


def _convt_bn_relu_layer(x_nhwc, w_pt, *, k, s):
    """ConvTranspose2d (+BN +ReLU), stride-phase decomposed (no dilation zeros).
    Conv bias omitted: exactly cancelled by the BatchNorm mean subtraction."""
    N, H, W, cin = x_nhwc.shape
    cout = w_pt.shape[1]
    Hout, Wout = (H - 1) * s + k, (W - 1) * s + k
    c_pad = _round_up(cout, LANE)                 # lane-dense stores (Cout=64 -> 128)
    csum = jnp.zeros((c_pad,), jnp.float32)
    csumsq = jnp.zeros((c_pad,), jnp.float32)
    phase_y = []
    for rh in range(s):
        for rw in range(s):
            kh, kw = _cdiv(k - rh, s), _cdiv(k - rw, s)
            x_col, (n, qh, qw) = _phase_im2col(x_nhwc, kh, kw)
            w_flat = _phase_weight(w_pt, rh, rw, s)
            if c_pad != cout:
                w_flat = jnp.pad(w_flat, ((0, 0), (0, c_pad - cout)))
            y, ps, pss = _tiled_matmul_stats(x_col, w_flat.astype(jnp.bfloat16))
            csum = csum + ps
            csumsq = csumsq + pss
            phase_y.append((rh, rw, y, (n, qh, qw)))
    # BN stats over the full N*Hout*Wout output; zero-padded channels stay
    # exactly zero through the affine (rstd=1/sqrt(eps) is harmless).
    scale, shift = _bn_scale_shift(csum, csumsq, N * Hout * Wout)
    out = jnp.zeros((N, Hout, Wout, cout), jnp.bfloat16)
    for rh, rw, y, (n, qh, qw) in phase_y:
        o = _tiled_affine_relu(y, scale, shift)[:, :cout]
        out = out.at[:, rh::s, rw::s, :].set(o.reshape(n, qh, qw, cout))
    return out


def _convt_tanh_layer(x_nhwc, w_pt, b, *, k, s):
    """Final ConvTranspose2d + bias + Tanh, stride-phase decomposed.
    Cout padded to 128 lanes; output stored bf16, real channel upcast in XLA."""
    N, H, W, cin = x_nhwc.shape
    cout = w_pt.shape[1]
    Hout, Wout = (H - 1) * s + k, (W - 1) * s + k
    c_pad = _round_up(cout, LANE)
    b_pad = jnp.zeros((1, c_pad), jnp.float32).at[0, :cout].set(b)
    out = jnp.zeros((N, Hout, Wout, cout), jnp.float32)
    for rh in range(s):
        for rw in range(s):
            kh, kw = _cdiv(k - rh, s), _cdiv(k - rw, s)
            x_col, (n, qh, qw) = _phase_im2col(x_nhwc, kh, kw)
            w_flat = _phase_weight(w_pt, rh, rw, s)                  # f32 (kh*kw*cin, cout)
            w_pad = jnp.zeros((kh * kw * cin, c_pad), jnp.float32).at[:, :cout].set(w_flat)
            y = _tiled_matmul_bias_tanh(x_col, w_pad.astype(jnp.bfloat16), b_pad)
            o = y[:, :cout].astype(jnp.float32).reshape(n, qh, qw, cout)
            out = out.at[:, rh::s, rw::s, :].set(o)
    return out


# ---------------------------------------------------------------------------
# Generator: parameters + forward
# ---------------------------------------------------------------------------
def _layer_cfgs(noise_dim=NOISE_DIM, n_channel=N_CHANNEL, hidden_dim=HIDDEN_DIM):
    # (Cin, Cout, kernel_size, stride, has_bn)
    return [
        (noise_dim, hidden_dim * 4, 3, 2, True),
        (hidden_dim * 4, hidden_dim * 2, 4, 1, True),
        (hidden_dim * 2, hidden_dim, 3, 2, True),
        (hidden_dim, n_channel, 4, 2, False),
    ]


def init_params(key):
    params = []
    for cin, cout, k, s, bn in _layer_cfgs():
        key, kw_, kb_ = jax.random.split(key, 3)
        w = 0.05 * jax.random.normal(kw_, (cin, cout, k, k), jnp.float32)
        b = 0.05 * jax.random.normal(kb_, (cout,), jnp.float32)
        # BN-layer biases are kept for structural fidelity but are cancelled
        # exactly by the BatchNorm mean subtraction.
        params.append((w, b))
    return params


def generator_forward(noise, params):
    # noise: (B, noise_dim); the (B, noise_dim, 1, 1) unsqueeze collapses to a
    # direct matmul in layer 1 (1x1 spatial input).
    (w1, _b1), (w2, _b2), (w3, _b3), (w4, b4) = params
    x = _project_bn_relu_layer(noise.astype(jnp.bfloat16), w1)   # (B, 3, 3, 256)
    x = _convt_bn_relu_layer(x, w2, k=4, s=1)                    # (B, 6, 6, 128)
    x = _convt_bn_relu_layer(x, w3, k=3, s=2)                    # (B, 13, 13, 64)
    x = _convt_tanh_layer(x, w4, b4, k=4, s=2)                   # (B, 28, 28, 1) f32
    return jnp.transpose(x, (0, 3, 1, 2))                        # NCHW (B, 1, 28, 28)


if __name__ == "__main__":
    key = jax.random.PRNGKey(0)
    k_noise, k_params = jax.random.split(key)
    noise = jax.random.normal(k_noise, (2, NOISE_DIM), jnp.float32)
    params = init_params(k_params)

    fwd = jax.jit(lambda n: generator_forward(n, params))
    out = jax.block_until_ready(fwd(noise))

    assert out.shape == (2, N_CHANNEL, 28, 28), out.shape
    assert out.dtype == jnp.float32
    assert bool(jnp.all(jnp.isfinite(out)))
    assert bool(jnp.all(jnp.abs(out) <= 1.0 + 1e-6))  # Tanh range
    print("KERNEL_OK")
</pallas_src>

<mosaic_0001>
module attributes {stable_mosaic.version = 11 : i64} {
  func.func @_matmul_stats_kernel(%arg0: i32, %arg1: memref<8x10xbf16, #tpu.memory_space<vmem>>, %arg2: memref<10x2304xbf16, #tpu.memory_space<vmem>>, %arg3: memref<8x2304xbf16, #tpu.memory_space<vmem>>, %arg4: memref<1x1x2304xf32, #tpu.memory_space<vmem>>, %arg5: memref<1x1x2304xf32, #tpu.memory_space<vmem>>) attributes {dimension_semantics = [#tpu.dimension_semantics<parallel>], iteration_bounds = array<i64: 1>, scalar_prefetch = 0 : i64, scratch_operands = 0 : i64, tpu.core_type = #tpu.core_type<tc>, window_params = [{transform_indices = @transform_0, window_bounds = array<i64: 8, 10>}, {pipeline_mode = #tpu.pipeline_mode<synchronous>, transform_indices = @transform_1, window_bounds = array<i64: 10, 2304>}, {transform_indices = @transform_2, window_bounds = array<i64: 8, 2304>}, {transform_indices = @transform_3, window_bounds = array<i64: 1, 1, 2304>}, {transform_indices = @transform_4, window_bounds = array<i64: 1, 1, 2304>}]} {
    %c0 = arith.constant 0 : index
    %c0_0 = arith.constant 0 : index
    %0 = vector.load %arg1[%c0, %c0_0] : memref<8x10xbf16, #tpu.memory_space<vmem>>, vector<8x10xbf16>
    %c0_1 = arith.constant 0 : index
    %c0_2 = arith.constant 0 : index
    %1 = vector.load %arg2[%c0_1, %c0_2] : memref<10x2304xbf16, #tpu.memory_space<vmem>>, vector<10x2304xbf16>
    %cst = arith.constant dense<0.000000e+00> : vector<8x2304xf32>
    %2 = tpu.matmul %0, %1, %cst {dimension_numbers = #tpu.dot_dimension_numbers<[1], [0], [0], [1], [0, 0, 1, 1], [], []>} : vector<8x10xbf16>, vector<10x2304xbf16>, vector<8x2304xf32> -> vector<8x2304xf32>
    %3 = arith.truncf %2 : vector<8x2304xf32> to vector<8x2304xbf16>
    %c0_3 = arith.constant 0 : index
    %c0_4 = arith.constant 0 : index
    %4 = vector.load %arg3[%c0_3, %c0_4] : memref<8x2304xbf16, #tpu.memory_space<vmem>>, vector<8x2304xbf16>
    tpu.vector_store %arg3[%c0_3, %c0_4], %3 {strides = array<i32>} : memref<8x2304xbf16, #tpu.memory_space<vmem>>, vector<8x2304xbf16>,
    %cst_5 = arith.constant dense<0.000000e+00> : vector<2304xf32>
    %5 = vector.multi_reduction <add>, %2, %cst_5 [0] : vector<8x2304xf32> to vector<2304xf32>
    %6 = vector.shape_cast %5 : vector<2304xf32> to vector<1x1x2304xf32>
    %c0_6 = arith.constant 0 : index
    %c0_7 = arith.constant 0 : index
    %c0_8 = arith.constant 0 : index
    %7 = vector.load %arg4[%c0_6, %c0_7, %c0_8] : memref<1x1x2304xf32, #tpu.memory_space<vmem>>, vector<1x1x2304xf32>
    tpu.vector_store %arg4[%c0_6, %c0_7, %c0_8], %6 {strides = array<i32>} : memref<1x1x2304xf32, #tpu.memory_space<vmem>>, vector<1x1x2304xf32>,
    %8 = arith.mulf %2, %2 : vector<8x2304xf32>
    %cst_9 = arith.constant dense<0.000000e+00> : vector<2304xf32>
    %9 = vector.multi_reduction <add>, %8, %cst_9 [0] : vector<8x2304xf32> to vector<2304xf32>
    %10 = vector.shape_cast %9 : vector<2304xf32> to vector<1x1x2304xf32>
    %c0_10 = arith.constant 0 : index
    %c0_11 = arith.constant 0 : index
    %c0_12 = arith.constant 0 : index
    %11 = vector.load %arg5[%c0_10, %c0_11, %c0_12] : memref<1x1x2304xf32, #tpu.memory_space<vmem>>, vector<1x1x2304xf32>
    tpu.vector_store %arg5[%c0_10, %c0_11, %c0_12], %10 {strides = array<i32>} : memref<1x1x2304xf32, #tpu.memory_space<vmem>>, vector<1x1x2304xf32>,
    return
  }
  func.func @transform_0(%arg0: i32) -> (i32, i32) {
    %c0_i32 = arith.constant 0 : i32
    %c0_i32_0 = arith.constant 0 : i32
    return %arg0, %c0_i32 : i32, i32
  }
  func.func @transform_1(%arg0: i32) -> (i32, i32) {
    %c0_i32 = arith.constant 0 : i32
    %c0_i32_0 = arith.constant 0 : i32
    %c0_i32_1 = arith.constant 0 : i32
    return %c0_i32, %c0_i32_0 : i32, i32
  }
  func.func @transform_2(%arg0: i32) -> (i32, i32) {
    %c0_i32 = arith.constant 0 : i32
    %c0_i32_0 = arith.constant 0 : i32
    return %arg0, %c0_i32 : i32, i32
  }
  func.func @transform_3(%arg0: i32) -> (i32, i32, i32) {
    %c0_i32 = arith.constant 0 : i32
    %c0_i32_0 = arith.constant 0 : i32
    %c0_i32_1 = arith.constant 0 : i32
    return %arg0, %c0_i32, %c0_i32_0 : i32, i32, i32
  }
  func.func @transform_4(%arg0: i32) -> (i32, i32, i32) {
    %c0_i32 = arith.constant 0 : i32
    %c0_i32_0 = arith.constant 0 : i32
    %c0_i32_1 = arith.constant 0 : i32
    return %arg0, %c0_i32, %c0_i32_0 : i32, i32, i32
  }
}

module attributes {stable_mosaic.version = 11 : i64} {
  func.func @_affine_relu_kernel(%arg0: i32, %arg1: memref<16x256xbf16, #tpu.memory_space<vmem>>, %arg2: memref<1x256xf32, #tpu.memory_space<vmem>>, %arg3: memref<1x256xf32, #tpu.memory_space<vmem>>, %arg4: memref<16x256xbf16, #tpu.memory_space<vmem>>) attributes {dimension_semantics = [#tpu.dimension_semantics<parallel>], iteration_bounds = array<i64: 2>, scalar_prefetch = 0 : i64, scratch_operands = 0 : i64, tpu.core_type = #tpu.core_type<tc>, window_params = [{transform_indices = @transform_0, window_bounds = array<i64: 16, 256>}, {pipeline_mode = #tpu.pipeline_mode<synchronous>, transform_indices = @transform_1, window_bounds = array<i64: 1, 256>}, {pipeline_mode = #tpu.pipeline_mode<synchronous>, transform_indices = @transform_2, window_bounds = array<i64: 1, 256>}, {transform_indices = @transform_3, window_bounds = array<i64: 16, 256>}]} {
    %c0 = arith.constant 0 : index
    %c0_0 = arith.constant 0 : index
    %0 = vector.load %arg1[%c0, %c0_0] : memref<16x256xbf16, #tpu.memory_space<vmem>>, vector<16x256xbf16>
    %1 = arith.extf %0 : vector<16x256xbf16> to vector<16x256xf32>
    %c0_1 = arith.constant 0 : index
    %c0_2 = arith.constant 0 : index
    %2 = vector.load %arg2[%c0_1, %c0_2] : memref<1x256xf32, #tpu.memory_space<vmem>>, vector<1x256xf32>
    %3 = vector.broadcast %2 : vector<1x256xf32> to vector<16x256xf32>
    %4 = arith.mulf %1, %3 : vector<16x256xf32>
    %c0_3 = arith.constant 0 : index
    %c0_4 = arith.constant 0 : index
    %5 = vector.load %arg3[%c0_3, %c0_4] : memref<1x256xf32, #tpu.memory_space<vmem>>, vector<1x256xf32>
    %6 = vector.broadcast %5 : vector<1x256xf32> to vector<16x256xf32>
    %7 = arith.addf %4, %6 : vector<16x256xf32>
    %cst = arith.constant 0.000000e+00 : f32
    %8 = vector.broadcast %cst : f32 to vector<16x256xf32>
    %9 = arith.maximumf %7, %8 : vector<16x256xf32>
    %10 = arith.truncf %9 : vector<16x256xf32> to vector<16x256xbf16>
    %c0_5 = arith.constant 0 : index
    %c0_6 = arith.constant 0 : index
    %11 = vector.load %arg4[%c0_5, %c0_6] : memref<16x256xbf16, #tpu.memory_space<vmem>>, vector<16x256xbf16>
    tpu.vector_store %arg4[%c0_5, %c0_6], %10 {strides = array<i32>} : memref<16x256xbf16, #tpu.memory_space<vmem>>, vector<16x256xbf16>,
    return
  }
  func.func @transform_0(%arg0: i32) -> (i32, i32) {
    %c0_i32 = arith.constant 0 : i32
    %c0_i32_0 = arith.constant 0 : i32
    return %arg0, %c0_i32 : i32, i32
  }
  func.func @transform_1(%arg0: i32) -> (i32, i32) {
    %c0_i32 = arith.constant 0 : i32
    %c0_i32_0 = arith.constant 0 : i32
    %c0_i32_1 = arith.constant 0 : i32
    return %c0_i32, %c0_i32_0 : i32, i32
  }
  func.func @transform_2(%arg0: i32) -> (i32, i32) {
    %c0_i32 = arith.constant 0 : i32
    %c0_i32_0 = arith.constant 0 : i32
    %c0_i32_1 = arith.constant 0 : i32
    return %c0_i32, %c0_i32_0 : i32, i32
  }
  func.func @transform_3(%arg0: i32) -> (i32, i32) {
    %c0_i32 = arith.constant 0 : i32
    %c0_i32_0 = arith.constant 0 : i32
    return %arg0, %c0_i32 : i32, i32
  }
}

module attributes {stable_mosaic.version = 11 : i64} {
  func.func @_matmul_stats_kernel(%arg0: i32, %arg1: memref<40x4096xbf16, #tpu.memory_space<vmem>>, %arg2: memref<4096x128xbf16, #tpu.memory_space<vmem>>, %arg3: memref<40x128xbf16, #tpu.memory_space<vmem>>, %arg4: memref<1x1x128xf32, #tpu.memory_space<vmem>>, %arg5: memref<1x1x128xf32, #tpu.memory_space<vmem>>) attributes {dimension_semantics = [#tpu.dimension_semantics<parallel>], iteration_bounds = array<i64: 2>, scalar_prefetch = 0 : i64, scratch_operands = 0 : i64, tpu.core_type = #tpu.core_type<tc>, window_params = [{transform_indices = @transform_0, window_bounds = array<i64: 40, 4096>}, {pipeline_mode = #tpu.pipeline_mode<synchronous>, transform_indices = @transform_1, window_bounds = array<i64: 4096, 128>}, {transform_indices = @transform_2, window_bounds = array<i64: 40, 128>}, {transform_indices = @transform_3, window_bounds = array<i64: 1, 1, 128>}, {transform_indices = @transform_4, window_bounds = array<i64: 1, 1, 128>}]} {
    %c0 = arith.constant 0 : index
    %c0_0 = arith.constant 0 : index
    %0 = vector.load %arg1[%c0, %c0_0] : memref<40x4096xbf16, #tpu.memory_space<vmem>>, vector<40x4096xbf16>
    %c0_1 = arith.constant 0 : index
    %c0_2 = arith.constant 0 : index
    %1 = vector.load %arg2[%c0_1, %c0_2] : memref<4096x128xbf16, #tpu.memory_space<vmem>>, vector<4096x128xbf16>
    %cst = arith.constant dense<0.000000e+00> : vector<40x128xf32>
    %2 = tpu.matmul %0, %1, %cst {dimension_numbers = #tpu.dot_dimension_numbers<[1], [0], [0], [1], [0, 0, 1, 1], [], []>} : vector<40x4096xbf16>, vector<4096x128xbf16>, vector<40x128xf32> -> vector<40x128xf32>
    %3 = arith.truncf %2 : vector<40x128xf32> to vector<40x128xbf16>
    %c0_3 = arith.constant 0 : index
    %c0_4 = arith.constant 0 : index
    %4 = vector.load %arg3[%c0_3, %c0_4] : memref<40x128xbf16, #tpu.memory_space<vmem>>, vector<40x128xbf16>
    tpu.vector_store %arg3[%c0_3, %c0_4], %3 {strides = array<i32>} : memref<40x128xbf16, #tpu.memory_space<vmem>>, vector<40x128xbf16>,
    %cst_5 = arith.constant dense<0.000000e+00> : vector<128xf32>
    %5 = vector.multi_reduction <add>, %2, %cst_5 [0] : vector<40x128xf32> to vector<128xf32>
    %6 = vector.shape_cast %5 : vector<128xf32> to vector<1x1x128xf32>
    %c0_6 = arith.constant 0 : index
    %c0_7 = arith.constant 0 : index
    %c0_8 = arith.constant 0 : index
    %7 = vector.load %arg4[%c0_6, %c0_7, %c0_8] : memref<1x1x128xf32, #tpu.memory_space<vmem>>, vector<1x1x128xf32>
    tpu.vector_store %arg4[%c0_6, %c0_7, %c0_8], %6 {strides = array<i32>} : memref<1x1x128xf32, #tpu.memory_space<vmem>>, vector<1x1x128xf32>,
    %8 = arith.mulf %2, %2 : vector<40x128xf32>
    %cst_9 = arith.constant dense<0.000000e+00> : vector<128xf32>
    %9 = vector.multi_reduction <add>, %8, %cst_9 [0] : vector<40x128xf32> to vector<128xf32>
    %10 = vector.shape_cast %9 : vector<128xf32> to vector<1x1x128xf32>
    %c0_10 = arith.constant 0 : index
    %c0_11 = arith.constant 0 : index
    %c0_12 = arith.constant 0 : index
    %11 = vector.load %arg5[%c0_10, %c0_11, %c0_12] : memref<1x1x128xf32, #tpu.memory_space<vmem>>, vector<1x1x128xf32>
    tpu.vector_store %arg5[%c0_10, %c0_11, %c0_12], %10 {strides = array<i32>} : memref<1x1x128xf32, #tpu.memory_space<vmem>>, vector<1x1x128xf32>,
    return
  }
  func.func @transform_0(%arg0: i32) -> (i32, i32) {
    %c0_i32 = arith.constant 0 : i32
    %c0_i32_0 = arith.constant 0 : i32
    return %arg0, %c0_i32 : i32, i32
  }
  func.func @transform_1(%arg0: i32) -> (i32, i32) {
    %c0_i32 = arith.constant 0 : i32
    %c0_i32_0 = arith.constant 0 : i32
    %c0_i32_1 = arith.constant 0 : i32
    return %c0_i32, %c0_i32_0 : i32, i32
  }
  func.func @transform_2(%arg0: i32) -> (i32, i32) {
    %c0_i32 = arith.constant 0 : i32
    %c0_i32_0 = arith.constant 0 : i32
    return %arg0, %c0_i32 : i32, i32
  }
  func.func @transform_3(%arg0: i32) -> (i32, i32, i32) {
    %c0_i32 = arith.constant 0 : i32
    %c0_i32_0 = arith.constant 0 : i32
    %c0_i32_1 = arith.constant 0 : i32
    return %arg0, %c0_i32, %c0_i32_0 : i32, i32, i32
  }
  func.func @transform_4(%arg0: i32) -> (i32, i32, i32) {
    %c0_i32 = arith.constant 0 : i32
    %c0_i32_0 = arith.constant 0 : i32
    %c0_i32_1 = arith.constant 0 : i32
    return %arg0, %c0_i32, %c0_i32_0 : i32, i32, i32
  }
}

module attributes {stable_mosaic.version = 11 : i64} {
  func.func @_affine_relu_kernel(%arg0: i32, %arg1: memref<40x128xbf16, #tpu.memory_space<vmem>>, %arg2: memref<1x128xf32, #tpu.memory_space<vmem>>, %arg3: memref<1x128xf32, #tpu.memory_space<vmem>>, %arg4: memref<40x128xbf16, #tpu.memory_space<vmem>>) attributes {dimension_semantics = [#tpu.dimension_semantics<parallel>], iteration_bounds = array<i64: 2>, scalar_prefetch = 0 : i64, scratch_operands = 0 : i64, tpu.core_type = #tpu.core_type<tc>, window_params = [{transform_indices = @transform_0, window_bounds = array<i64: 40, 128>}, {pipeline_mode = #tpu.pipeline_mode<synchronous>, transform_indices = @transform_1, window_bounds = array<i64: 1, 128>}, {pipeline_mode = #tpu.pipeline_mode<synchronous>, transform_indices = @transform_2, window_bounds = array<i64: 1, 128>}, {transform_indices = @transform_3, window_bounds = array<i64: 40, 128>}]} {
    %c0 = arith.constant 0 : index
    %c0_0 = arith.constant 0 : index
    %0 = vector.load %arg1[%c0, %c0_0] : memref<40x128xbf16, #tpu.memory_space<vmem>>, vector<40x128xbf16>
    %1 = arith.extf %0 : vector<40x128xbf16> to vector<40x128xf32>
    %c0_1 = arith.constant 0 : index
    %c0_2 = arith.constant 0 : index
    %2 = vector.load %arg2[%c0_1, %c0_2] : memref<1x128xf32, #tpu.memory_space<vmem>>, vector<1x128xf32>
    %3 = vector.broadcast %2 : vector<1x128xf32> to vector<40x128xf32>
    %4 = arith.mulf %1, %3 : vector<40x128xf32>
    %c0_3 = arith.constant 0 : index
    %c0_4 = arith.constant 0 : index
    %5 = vector.load %arg3[%c0_3, %c0_4] : memref<1x128xf32, #tpu.memory_space<vmem>>, vector<1x128xf32>
    %6 = vector.broadcast %5 : vector<1x128xf32> to vector<40x128xf32>
    %7 = arith.addf %4, %6 : vector<40x128xf32>
    %cst = arith.constant 0.000000e+00 : f32
    %8 = vector.broadcast %cst : f32 to vector<40x128xf32>
    %9 = arith.maximumf %7, %8 : vector<40x128xf32>
    %10 = arith.truncf %9 : vector<40x128xf32> to vector<40x128xbf16>
    %c0_5 = arith.constant 0 : index
    %c0_6 = arith.constant 0 : index
    %11 = vector.load %arg4[%c0_5, %c0_6] : memref<40x128xbf16, #tpu.memory_space<vmem>>, vector<40x128xbf16>
    tpu.vector_store %arg4[%c0_5, %c0_6], %10 {strides = array<i32>} : memref<40x128xbf16, #tpu.memory_space<vmem>>, vector<40x128xbf16>,
    return
  }
  func.func @transform_0(%arg0: i32) -> (i32, i32) {
    %c0_i32 = arith.constant 0 : i32
    %c0_i32_0 = arith.constant 0 : i32
    return %arg0, %c0_i32 : i32, i32
  }
  func.func @transform_1(%arg0: i32) -> (i32, i32) {
    %c0_i32 = arith.constant 0 : i32
    %c0_i32_0 = arith.constant 0 : i32
    %c0_i32_1 = arith.constant 0 : i32
    return %c0_i32, %c0_i32_0 : i32, i32
  }
  func.func @transform_2(%arg0: i32) -> (i32, i32) {
    %c0_i32 = arith.constant 0 : i32
    %c0_i32_0 = arith.constant 0 : i32
    %c0_i32_1 = arith.constant 0 : i32
    return %c0_i32, %c0_i32_0 : i32, i32
  }
  func.func @transform_3(%arg0: i32) -> (i32, i32) {
    %c0_i32 = arith.constant 0 : i32
    %c0_i32_0 = arith.constant 0 : i32
    return %arg0, %c0_i32 : i32, i32
  }
}

module attributes {stable_mosaic.version = 11 : i64} {
  func.func @_matmul_stats_kernel(%arg0: i32, %arg1: memref<48x256xbf16, #tpu.memory_space<vmem>>, %arg2: memref<256x128xbf16, #tpu.memory_space<vmem>>, %arg3: memref<48x128xbf16, #tpu.memory_space<vmem>>, %arg4: memref<1x1x128xf32, #tpu.memory_space<vmem>>, %arg5: memref<1x1x128xf32, #tpu.memory_space<vmem>>) attributes {dimension_semantics = [#tpu.dimension_semantics<parallel>], iteration_bounds = array<i64: 2>, scalar_prefetch = 0 : i64, scratch_operands = 0 : i64, tpu.core_type = #tpu.core_type<tc>, window_params = [{transform_indices = @transform_0, window_bounds = array<i64: 48, 256>}, {pipeline_mode = #tpu.pipeline_mode<synchronous>, transform_indices = @transform_1, window_bounds = array<i64: 256, 128>}, {transform_indices = @transform_2, window_bounds = array<i64: 48, 128>}, {transform_indices = @transform_3, window_bounds = array<i64: 1, 1, 128>}, {transform_indices = @transform_4, window_bounds = array<i64: 1, 1, 128>}]} {
    %c0 = arith.constant 0 : index
    %c0_0 = arith.constant 0 : index
    %0 = vector.load %arg1[%c0, %c0_0] : memref<48x256xbf16, #tpu.memory_space<vmem>>, vector<48x256xbf16>
    %c0_1 = arith.constant 0 : index
    %c0_2 = arith.constant 0 : index
    %1 = vector.load %arg2[%c0_1, %c0_2] : memref<256x128xbf16, #tpu.memory_space<vmem>>, vector<256x128xbf16>
    %cst = arith.constant dense<0.000000e+00> : vector<48x128xf32>
    %2 = tpu.matmul %0, %1, %cst {dimension_numbers = #tpu.dot_dimension_numbers<[1], [0], [0], [1], [0, 0, 1, 1], [], []>} : vector<48x256xbf16>, vector<256x128xbf16>, vector<48x128xf32> -> vector<48x128xf32>
    %3 = arith.truncf %2 : vector<48x128xf32> to vector<48x128xbf16>
    %c0_3 = arith.constant 0 : index
    %c0_4 = arith.constant 0 : index
    %4 = vector.load %arg3[%c0_3, %c0_4] : memref<48x128xbf16, #tpu.memory_space<vmem>>, vector<48x128xbf16>
    tpu.vector_store %arg3[%c0_3, %c0_4], %3 {strides = array<i32>} : memref<48x128xbf16, #tpu.memory_space<vmem>>, vector<48x128xbf16>,
    %cst_5 = arith.constant dense<0.000000e+00> : vector<128xf32>
    %5 = vector.multi_reduction <add>, %2, %cst_5 [0] : vector<48x128xf32> to vector<128xf32>
    %6 = vector.shape_cast %5 : vector<128xf32> to vector<1x1x128xf32>
    %c0_6 = arith.constant 0 : index
    %c0_7 = arith.constant 0 : index
    %c0_8 = arith.constant 0 : index
    %7 = vector.load %arg4[%c0_6, %c0_7, %c0_8] : memref<1x1x128xf32, #tpu.memory_space<vmem>>, vector<1x1x128xf32>
    tpu.vector_store %arg4[%c0_6, %c0_7, %c0_8], %6 {strides = array<i32>} : memref<1x1x128xf32, #tpu.memory_space<vmem>>, vector<1x1x128xf32>,
    %8 = arith.mulf %2, %2 : vector<48x128xf32>
    %cst_9 = arith.constant dense<0.000000e+00> : vector<128xf32>
    %9 = vector.multi_reduction <add>, %8, %cst_9 [0] : vector<48x128xf32> to vector<128xf32>
    %10 = vector.shape_cast %9 : vector<128xf32> to vector<1x1x128xf32>
    %c0_10 = arith.constant 0 : index
    %c0_11 = arith.constant 0 : index
    %c0_12 = arith.constant 0 : index
    %11 = vector.load %arg5[%c0_10, %c0_11, %c0_12] : memref<1x1x128xf32, #tpu.memory_space<vmem>>, vector<1x1x128xf32>
    tpu.vector_store %arg5[%c0_10, %c0_11, %c0_12], %10 {strides = array<i32>} : memref<1x1x128xf32, #tpu.memory_space<vmem>>, vector<1x1x128xf32>,
    return
  }
  func.func @transform_0(%arg0: i32) -> (i32, i32) {
    %c0_i32 = arith.constant 0 : i32
    %c0_i32_0 = arith.constant 0 : i32
    return %arg0, %c0_i32 : i32, i32
  }
  func.func @transform_1(%arg0: i32) -> (i32, i32) {
    %c0_i32 = arith.constant 0 : i32
    %c0_i32_0 = arith.constant 0 : i32
    %c0_i32_1 = arith.constant 0 : i32
    return %c0_i32, %c0_i32_0 : i32, i32
  }
  func.func @transform_2(%arg0: i32) -> (i32, i32) {
    %c0_i32 = arith.constant 0 : i32
    %c0_i32_0 = arith.constant 0 : i32
    return %arg0, %c0_i32 : i32, i32
  }
  func.func @transform_3(%arg0: i32) -> (i32, i32, i32) {
    %c0_i32 = arith.constant 0 : i32
    %c0_i32_0 = arith.constant 0 : i32
    %c0_i32_1 = arith.constant 0 : i32
    return %arg0, %c0_i32, %c0_i32_0 : i32, i32, i32
  }
  func.func @transform_4(%arg0: i32) -> (i32, i32, i32) {
    %c0_i32 = arith.constant 0 : i32
    %c0_i32_0 = arith.constant 0 : i32
    %c0_i32_1 = arith.constant 0 : i32
    return %arg0, %c0_i32, %c0_i32_0 : i32, i32, i32
  }
}

module attributes {stable_mosaic.version = 11 : i64} {
  func.func @_matmul_stats_kernel(%arg0: i32, %arg1: memref<56x512xbf16, #tpu.memory_space<vmem>>, %arg2: memref<512x128xbf16, #tpu.memory_space<vmem>>, %arg3: memref<56x128xbf16, #tpu.memory_space<vmem>>, %arg4: memref<1x1x128xf32, #tpu.memory_space<vmem>>, %arg5: memref<1x1x128xf32, #tpu.memory_space<vmem>>) attributes {dimension_semantics = [#tpu.dimension_semantics<parallel>], iteration_bounds = array<i64: 2>, scalar_prefetch = 0 : i64, scratch_operands = 0 : i64, tpu.core_type = #tpu.core_type<tc>, window_params = [{transform_indices = @transform_0, window_bounds = array<i64: 56, 512>}, {pipeline_mode = #tpu.pipeline_mode<synchronous>, transform_indices = @transform_1, window_bounds = array<i64: 512, 128>}, {transform_indices = @transform_2, window_bounds = array<i64: 56, 128>}, {transform_indices = @transform_3, window_bounds = array<i64: 1, 1, 128>}, {transform_indices = @transform_4, window_bounds = array<i64: 1, 1, 128>}]} {
    %c0 = arith.constant 0 : index
    %c0_0 = arith.constant 0 : index
    %0 = vector.load %arg1[%c0, %c0_0] : memref<56x512xbf16, #tpu.memory_space<vmem>>, vector<56x512xbf16>
    %c0_1 = arith.constant 0 : index
    %c0_2 = arith.constant 0 : index
    %1 = vector.load %arg2[%c0_1, %c0_2] : memref<512x128xbf16, #tpu.memory_space<vmem>>, vector<512x128xbf16>
    %cst = arith.constant dense<0.000000e+00> : vector<56x128xf32>
    %2 = tpu.matmul %0, %1, %cst {dimension_numbers = #tpu.dot_dimension_numbers<[1], [0], [0], [1], [0, 0, 1, 1], [], []>} : vector<56x512xbf16>, vector<512x128xbf16>, vector<56x128xf32> -> vector<56x128xf32>
    %3 = arith.truncf %2 : vector<56x128xf32> to vector<56x128xbf16>
    %c0_3 = arith.constant 0 : index
    %c0_4 = arith.constant 0 : index
    %4 = vector.load %arg3[%c0_3, %c0_4] : memref<56x128xbf16, #tpu.memory_space<vmem>>, vector<56x128xbf16>
    tpu.vector_store %arg3[%c0_3, %c0_4], %3 {strides = array<i32>} : memref<56x128xbf16, #tpu.memory_space<vmem>>, vector<56x128xbf16>,
    %cst_5 = arith.constant dense<0.000000e+00> : vector<128xf32>
    %5 = vector.multi_reduction <add>, %2, %cst_5 [0] : vector<56x128xf32> to vector<128xf32>
    %6 = vector.shape_cast %5 : vector<128xf32> to vector<1x1x128xf32>
    %c0_6 = arith.constant 0 : index
    %c0_7 = arith.constant 0 : index
    %c0_8 = arith.constant 0 : index
    %7 = vector.load %arg4[%c0_6, %c0_7, %c0_8] : memref<1x1x128xf32, #tpu.memory_space<vmem>>, vector<1x1x128xf32>
    tpu.vector_store %arg4[%c0_6, %c0_7, %c0_8], %6 {strides = array<i32>} : memref<1x1x128xf32, #tpu.memory_space<vmem>>, vector<1x1x128xf32>,
    %8 = arith.mulf %2, %2 : vector<56x128xf32>
    %cst_9 = arith.constant dense<0.000000e+00> : vector<128xf32>
    %9 = vector.multi_reduction <add>, %8, %cst_9 [0] : vector<56x128xf32> to vector<128xf32>
    %10 = vector.shape_cast %9 : vector<128xf32> to vector<1x1x128xf32>
    %c0_10 = arith.constant 0 : index
    %c0_11 = arith.constant 0 : index
    %c0_12 = arith.constant 0 : index
    %11 = vector.load %arg5[%c0_10, %c0_11, %c0_12] : memref<1x1x128xf32, #tpu.memory_space<vmem>>, vector<1x1x128xf32>
    tpu.vector_store %arg5[%c0_10, %c0_11, %c0_12], %10 {strides = array<i32>} : memref<1x1x128xf32, #tpu.memory_space<vmem>>, vector<1x1x128xf32>,
    return
  }
  func.func @transform_0(%arg0: i32) -> (i32, i32) {
    %c0_i32 = arith.constant 0 : i32
    %c0_i32_0 = arith.constant 0 : i32
    return %arg0, %c0_i32 : i32, i32
  }
  func.func @transform_1(%arg0: i32) -> (i32, i32) {
    %c0_i32 = arith.constant 0 : i32
    %c0_i32_0 = arith.constant 0 : i32
    %c0_i32_1 = arith.constant 0 : i32
    return %c0_i32, %c0_i32_0 : i32, i32
  }
  func.func @transform_2(%arg0: i32) -> (i32, i32) {
    %c0_i32 = arith.constant 0 : i32
    %c0_i32_0 = arith.constant 0 : i32
    return %arg0, %c0_i32 : i32, i32
  }
  func.func @transform_3(%arg0: i32) -> (i32, i32, i32) {
    %c0_i32 = arith.constant 0 : i32
    %c0_i32_0 = arith.constant 0 : i32
    %c0_i32_1 = arith.constant 0 : i32
    return %arg0, %c0_i32, %c0_i32_0 : i32, i32, i32
  }
  func.func @transform_4(%arg0: i32) -> (i32, i32, i32) {
    %c0_i32 = arith.constant 0 : i32
    %c0_i32_0 = arith.constant 0 : i32
    %c0_i32_1 = arith.constant 0 : i32
    return %arg0, %c0_i32, %c0_i32_0 : i32, i32, i32
  }
}

module attributes {stable_mosaic.version = 11 : i64} {
  func.func @_matmul_stats_kernel(%arg0: i32, %arg1: memref<40x128xbf16, #tpu.memory_space<vmem>>, %arg2: memref<128x128xbf16, #tpu.memory_space<vmem>>, %arg3: memref<40x128xbf16, #tpu.memory_space<vmem>>, %arg4: memref<1x1x128xf32, #tpu.memory_space<vmem>>, %arg5: memref<1x1x128xf32, #tpu.memory_space<vmem>>) attributes {dimension_semantics = [#tpu.dimension_semantics<parallel>], iteration_bounds = array<i64: 2>, scalar_prefetch = 0 : i64, scratch_operands = 0 : i64, tpu.core_type = #tpu.core_type<tc>, window_params = [{transform_indices = @transform_0, window_bounds = array<i64: 40, 128>}, {pipeline_mode = #tpu.pipeline_mode<synchronous>, transform_indices = @transform_1, window_bounds = array<i64: 128, 128>}, {transform_indices = @transform_2, window_bounds = array<i64: 40, 128>}, {transform_indices = @transform_3, window_bounds = array<i64: 1, 1, 128>}, {transform_indices = @transform_4, window_bounds = array<i64: 1, 1, 128>}]} {
    %c0 = arith.constant 0 : index
    %c0_0 = arith.constant 0 : index
    %0 = vector.load %arg1[%c0, %c0_0] : memref<40x128xbf16, #tpu.memory_space<vmem>>, vector<40x128xbf16>
    %c0_1 = arith.constant 0 : index
    %c0_2 = arith.constant 0 : index
    %1 = vector.load %arg2[%c0_1, %c0_2] : memref<128x128xbf16, #tpu.memory_space<vmem>>, vector<128x128xbf16>
    %cst = arith.constant dense<0.000000e+00> : vector<40x128xf32>
    %2 = tpu.matmul %0, %1, %cst {dimension_numbers = #tpu.dot_dimension_numbers<[1], [0], [0], [1], [0, 0, 1, 1], [], []>} : vector<40x128xbf16>, vector<128x128xbf16>, vector<40x128xf32> -> vector<40x128xf32>
    %3 = arith.truncf %2 : vector<40x128xf32> to vector<40x128xbf16>
    %c0_3 = arith.constant 0 : index
    %c0_4 = arith.constant 0 : index
    %4 = vector.load %arg3[%c0_3, %c0_4] : memref<40x128xbf16, #tpu.memory_space<vmem>>, vector<40x128xbf16>
    tpu.vector_store %arg3[%c0_3, %c0_4], %3 {strides = array<i32>} : memref<40x128xbf16, #tpu.memory_space<vmem>>, vector<40x128xbf16>,
    %cst_5 = arith.constant dense<0.000000e+00> : vector<128xf32>
    %5 = vector.multi_reduction <add>, %2, %cst_5 [0] : vector<40x128xf32> to vector<128xf32>
    %6 = vector.shape_cast %5 : vector<128xf32> to vector<1x1x128xf32>
    %c0_6 = arith.constant 0 : index
    %c0_7 = arith.constant 0 : index
    %c0_8 = arith.constant 0 : index
    %7 = vector.load %arg4[%c0_6, %c0_7, %c0_8] : memref<1x1x128xf32, #tpu.memory_space<vmem>>, vector<1x1x128xf32>
    tpu.vector_store %arg4[%c0_6, %c0_7, %c0_8], %6 {strides = array<i32>} : memref<1x1x128xf32, #tpu.memory_space<vmem>>, vector<1x1x128xf32>,
    %8 = arith.mulf %2, %2 : vector<40x128xf32>
    %cst_9 = arith.constant dense<0.000000e+00> : vector<128xf32>
    %9 = vector.multi_reduction <add>, %8, %cst_9 [0] : vector<40x128xf32> to vector<128xf32>
    %10 = vector.shape_cast %9 : vector<128xf32> to vector<1x1x128xf32>
    %c0_10 = arith.constant 0 : index
    %c0_11 = arith.constant 0 : index
    %c0_12 = arith.constant 0 : index
    %11 = vector.load %arg5[%c0_10, %c0_11, %c0_12] : memref<1x1x128xf32, #tpu.memory_space<vmem>>, vector<1x1x128xf32>
    tpu.vector_store %arg5[%c0_10, %c0_11, %c0_12], %10 {strides = array<i32>} : memref<1x1x128xf32, #tpu.memory_space<vmem>>, vector<1x1x128xf32>,
    return
  }
  func.func @transform_0(%arg0: i32) -> (i32, i32) {
    %c0_i32 = arith.constant 0 : i32
    %c0_i32_0 = arith.constant 0 : i32
    return %arg0, %c0_i32 : i32, i32
  }
  func.func @transform_1(%arg0: i32) -> (i32, i32) {
    %c0_i32 = arith.constant 0 : i32
    %c0_i32_0 = arith.constant 0 : i32
    %c0_i32_1 = arith.constant 0 : i32
    return %c0_i32, %c0_i32_0 : i32, i32
  }
  func.func @transform_2(%arg0: i32) -> (i32, i32) {
    %c0_i32 = arith.constant 0 : i32
    %c0_i32_0 = arith.constant 0 : i32
    return %arg0, %c0_i32 : i32, i32
  }
  func.func @transform_3(%arg0: i32) -> (i32, i32, i32) {
    %c0_i32 = arith.constant 0 : i32
    %c0_i32_0 = arith.constant 0 : i32
    %c0_i32_1 = arith.constant 0 : i32
    return %arg0, %c0_i32, %c0_i32_0 : i32, i32, i32
  }
  func.func @transform_4(%arg0: i32) -> (i32, i32, i32) {
    %c0_i32 = arith.constant 0 : i32
    %c0_i32_0 = arith.constant 0 : i32
    %c0_i32_1 = arith.constant 0 : i32
    return %arg0, %c0_i32, %c0_i32_0 : i32, i32, i32
  }
}

module attributes {stable_mosaic.version = 11 : i64} {
  func.func @_affine_relu_kernel(%arg0: i32, %arg1: memref<48x128xbf16, #tpu.memory_space<vmem>>, %arg2: memref<1x128xf32, #tpu.memory_space<vmem>>, %arg3: memref<1x128xf32, #tpu.memory_space<vmem>>, %arg4: memref<48x128xbf16, #tpu.memory_space<vmem>>) attributes {dimension_semantics = [#tpu.dimension_semantics<parallel>], iteration_bounds = array<i64: 2>, scalar_prefetch = 0 : i64, scratch_operands = 0 : i64, tpu.core_type = #tpu.core_type<tc>, window_params = [{transform_indices = @transform_0, window_bounds = array<i64: 48, 128>}, {pipeline_mode = #tpu.pipeline_mode<synchronous>, transform_indices = @transform_1, window_bounds = array<i64: 1, 128>}, {pipeline_mode = #tpu.pipeline_mode<synchronous>, transform_indices = @transform_2, window_bounds = array<i64: 1, 128>}, {transform_indices = @transform_3, window_bounds = array<i64: 48, 128>}]} {
    %c0 = arith.constant 0 : index
    %c0_0 = arith.constant 0 : index
    %0 = vector.load %arg1[%c0, %c0_0] : memref<48x128xbf16, #tpu.memory_space<vmem>>, vector<48x128xbf16>
    %1 = arith.extf %0 : vector<48x128xbf16> to vector<48x128xf32>
    %c0_1 = arith.constant 0 : index
    %c0_2 = arith.constant 0 : index
    %2 = vector.load %arg2[%c0_1, %c0_2] : memref<1x128xf32, #tpu.memory_space<vmem>>, vector<1x128xf32>
    %3 = vector.broadcast %2 : vector<1x128xf32> to vector<48x128xf32>
    %4 = arith.mulf %1, %3 : vector<48x128xf32>
    %c0_3 = arith.constant 0 : index
    %c0_4 = arith.constant 0 : index
    %5 = vector.load %arg3[%c0_3, %c0_4] : memref<1x128xf32, #tpu.memory_space<vmem>>, vector<1x128xf32>
    %6 = vector.broadcast %5 : vector<1x128xf32> to vector<48x128xf32>
    %7 = arith.addf %4, %6 : vector<48x128xf32>
    %cst = arith.constant 0.000000e+00 : f32
    %8 = vector.broadcast %cst : f32 to vector<48x128xf32>
    %9 = arith.maximumf %7, %8 : vector<48x128xf32>
    %10 = arith.truncf %9 : vector<48x128xf32> to vector<48x128xbf16>
    %c0_5 = arith.constant 0 : index
    %c0_6 = arith.constant 0 : index
    %11 = vector.load %arg4[%c0_5, %c0_6] : memref<48x128xbf16, #tpu.memory_space<vmem>>, vector<48x128xbf16>
    tpu.vector_store %arg4[%c0_5, %c0_6], %10 {strides = array<i32>} : memref<48x128xbf16, #tpu.memory_space<vmem>>, vector<48x128xbf16>,
    return
  }
  func.func @transform_0(%arg0: i32) -> (i32, i32) {
    %c0_i32 = arith.constant 0 : i32
    %c0_i32_0 = arith.constant 0 : i32
    return %arg0, %c0_i32 : i32, i32
  }
  func.func @transform_1(%arg0: i32) -> (i32, i32) {
    %c0_i32 = arith.constant 0 : i32
    %c0_i32_0 = arith.constant 0 : i32
    %c0_i32_1 = arith.constant 0 : i32
    return %c0_i32, %c0_i32_0 : i32, i32
  }
  func.func @transform_2(%arg0: i32) -> (i32, i32) {
    %c0_i32 = arith.constant 0 : i32
    %c0_i32_0 = arith.constant 0 : i32
    %c0_i32_1 = arith.constant 0 : i32
    return %c0_i32, %c0_i32_0 : i32, i32
  }
  func.func @transform_3(%arg0: i32) -> (i32, i32) {
    %c0_i32 = arith.constant 0 : i32
    %c0_i32_0 = arith.constant 0 : i32
    return %arg0, %c0_i32 : i32, i32
  }
}

module attributes {stable_mosaic.version = 11 : i64} {
  func.func @_affine_relu_kernel(%arg0: i32, %arg1: memref<56x128xbf16, #tpu.memory_space<vmem>>, %arg2: memref<1x128xf32, #tpu.memory_space<vmem>>, %arg3: memref<1x128xf32, #tpu.memory_space<vmem>>, %arg4: memref<56x128xbf16, #tpu.memory_space<vmem>>) attributes {dimension_semantics = [#tpu.dimension_semantics<parallel>], iteration_bounds = array<i64: 2>, scalar_prefetch = 0 : i64, scratch_operands = 0 : i64, tpu.core_type = #tpu.core_type<tc>, window_params = [{transform_indices = @transform_0, window_bounds = array<i64: 56, 128>}, {pipeline_mode = #tpu.pipeline_mode<synchronous>, transform_indices = @transform_1, window_bounds = array<i64: 1, 128>}, {pipeline_mode = #tpu.pipeline_mode<synchronous>, transform_indices = @transform_2, window_bounds = array<i64: 1, 128>}, {transform_indices = @transform_3, window_bounds = array<i64: 56, 128>}]} {
    %c0 = arith.constant 0 : index
    %c0_0 = arith.constant 0 : index
    %0 = vector.load %arg1[%c0, %c0_0] : memref<56x128xbf16, #tpu.memory_space<vmem>>, vector<56x128xbf16>
    %1 = arith.extf %0 : vector<56x128xbf16> to vector<56x128xf32>
    %c0_1 = arith.constant 0 : index
    %c0_2 = arith.constant 0 : index
    %2 = vector.load %arg2[%c0_1, %c0_2] : memref<1x128xf32, #tpu.memory_space<vmem>>, vector<1x128xf32>
    %3 = vector.broadcast %2 : vector<1x128xf32> to vector<56x128xf32>
    %4 = arith.mulf %1, %3 : vector<56x128xf32>
    %c0_3 = arith.constant 0 : index
    %c0_4 = arith.constant 0 : index
    %5 = vector.load %arg3[%c0_3, %c0_4] : memref<1x128xf32, #tpu.memory_space<vmem>>, vector<1x128xf32>
    %6 = vector.broadcast %5 : vector<1x128xf32> to vector<56x128xf32>
    %7 = arith.addf %4, %6 : vector<56x128xf32>
    %cst = arith.constant 0.000000e+00 : f32
    %8 = vector.broadcast %cst : f32 to vector<56x128xf32>
    %9 = arith.maximumf %7, %8 : vector<56x128xf32>
    %10 = arith.truncf %9 : vector<56x128xf32> to vector<56x128xbf16>
    %c0_5 = arith.constant 0 : index
    %c0_6 = arith.constant 0 : index
    %11 = vector.load %arg4[%c0_5, %c0_6] : memref<56x128xbf16, #tpu.memory_space<vmem>>, vector<56x128xbf16>
    tpu.vector_store %arg4[%c0_5, %c0_6], %10 {strides = array<i32>} : memref<56x128xbf16, #tpu.memory_space<vmem>>, vector<56x128xbf16>,
    return
  }
  func.func @transform_0(%arg0: i32) -> (i32, i32) {
    %c0_i32 = arith.constant 0 : i32
    %c0_i32_0 = arith.constant 0 : i32
    return %arg0, %c0_i32 : i32, i32
  }
  func.func @transform_1(%arg0: i32) -> (i32, i32) {
    %c0_i32 = arith.constant 0 : i32
    %c0_i32_0 = arith.constant 0 : i32
    %c0_i32_1 = arith.constant 0 : i32
    return %c0_i32, %c0_i32_0 : i32, i32
  }
  func.func @transform_2(%arg0: i32) -> (i32, i32) {
    %c0_i32 = arith.constant 0 : i32
    %c0_i32_0 = arith.constant 0 : i32
    %c0_i32_1 = arith.constant 0 : i32
    return %c0_i32, %c0_i32_0 : i32, i32
  }
  func.func @transform_3(%arg0: i32) -> (i32, i32) {
    %c0_i32 = arith.constant 0 : i32
    %c0_i32_0 = arith.constant 0 : i32
    return %arg0, %c0_i32 : i32, i32
  }
}

module attributes {stable_mosaic.version = 11 : i64} {
  func.func @_matmul_bias_tanh_kernel(%arg0: i32, %arg1: memref<200x256xbf16, #tpu.memory_space<vmem>>, %arg2: memref<256x128xbf16, #tpu.memory_space<vmem>>, %arg3: memref<1x128xf32, #tpu.memory_space<vmem>>, %arg4: memref<200x128xbf16, #tpu.memory_space<vmem>>) attributes {dimension_semantics = [#tpu.dimension_semantics<parallel>], iteration_bounds = array<i64: 2>, scalar_prefetch = 0 : i64, scratch_operands = 0 : i64, tpu.core_type = #tpu.core_type<tc>, window_params = [{transform_indices = @transform_0, window_bounds = array<i64: 200, 256>}, {pipeline_mode = #tpu.pipeline_mode<synchronous>, transform_indices = @transform_1, window_bounds = array<i64: 256, 128>}, {pipeline_mode = #tpu.pipeline_mode<synchronous>, transform_indices = @transform_2, window_bounds = array<i64: 1, 128>}, {transform_indices = @transform_3, window_bounds = array<i64: 200, 128>}]} {
    %c0 = arith.constant 0 : index
    %c0_0 = arith.constant 0 : index
    %0 = vector.load %arg1[%c0, %c0_0] : memref<200x256xbf16, #tpu.memory_space<vmem>>, vector<200x256xbf16>
    %c0_1 = arith.constant 0 : index
    %c0_2 = arith.constant 0 : index
    %1 = vector.load %arg2[%c0_1, %c0_2] : memref<256x128xbf16, #tpu.memory_space<vmem>>, vector<256x128xbf16>
    %cst = arith.constant dense<0.000000e+00> : vector<200x128xf32>
    %2 = tpu.matmul %0, %1, %cst {dimension_numbers = #tpu.dot_dimension_numbers<[1], [0], [0], [1], [0, 0, 1, 1], [], []>} : vector<200x256xbf16>, vector<256x128xbf16>, vector<200x128xf32> -> vector<200x128xf32>
    %c0_3 = arith.constant 0 : index
    %c0_4 = arith.constant 0 : index
    %3 = vector.load %arg3[%c0_3, %c0_4] : memref<1x128xf32, #tpu.memory_space<vmem>>, vector<1x128xf32>
    %4 = vector.broadcast %3 : vector<1x128xf32> to vector<200x128xf32>
    %5 = arith.addf %2, %4 : vector<200x128xf32>
    %6 = math.tanh %5 : vector<200x128xf32>
    %7 = arith.truncf %6 : vector<200x128xf32> to vector<200x128xbf16>
    %c0_5 = arith.constant 0 : index
    %c0_6 = arith.constant 0 : index
    %8 = vector.load %arg4[%c0_5, %c0_6] : memref<200x128xbf16, #tpu.memory_space<vmem>>, vector<200x128xbf16>
    tpu.vector_store %arg4[%c0_5, %c0_6], %7 {strides = array<i32>} : memref<200x128xbf16, #tpu.memory_space<vmem>>, vector<200x128xbf16>,
    return
  }
  func.func @transform_0(%arg0: i32) -> (i32, i32) {
    %c0_i32 = arith.constant 0 : i32
    %c0_i32_0 = arith.constant 0 : i32
    return %arg0, %c0_i32 : i32, i32
  }
  func.func @transform_1(%arg0: i32) -> (i32, i32) {
    %c0_i32 = arith.constant 0 : i32
    %c0_i32_0 = arith.constant 0 : i32
    %c0_i32_1 = arith.constant 0 : i32
    return %c0_i32, %c0_i32_0 : i32, i32
  }
  func.func @transform_2(%arg0: i32) -> (i32, i32) {
    %c0_i32 = arith.constant 0 : i32
    %c0_i32_0 = arith.constant 0 : i32
    %c0_i32_1 = arith.constant 0 : i32
    return %c0_i32, %c0_i32_0 : i32, i32
  }
  func.func @transform_3(%arg0: i32) -> (i32, i32) {
    %c0_i32 = arith.constant 0 : i32
    %c0_i32_0 = arith.constant 0 : i32
    return %arg0, %c0_i32 : i32, i32
  }
}

</mosaic_0001>

<llo_original>
// kernel: mul.69
$region0: #{mul.69}
  #allocation0 [shape = 's32[1]{0}', space=sflag, size = 0x4, scoped, tag = 'scoped memory for mul.69']
  %s0 = inlined_call_operand.vmem [shape: f32[1,256], index: 0, kind: input, shape index: {}]
  %s1 = inlined_call_operand.vmem [shape: f32[1,256], index: 1, kind: input, shape index: {}]
  %s2 = inlined_call_operand.vmem [shape: f32[1,256], index: 2, kind: output, shape index: {}]
  %v3 = vld [vmem:[%s0] sm:$0x1]
  %v4 = vld [vmem:[%s1] sm:$0x1]
  %5 = xla_tuple %v3, %v4
  %6 = xla_tuple %5
  %v7 = vmul.f32 %v3, %v4
  %8 = xla_tuple %v7
  %9 = vst [vmem:[%s2] sm:$0x1] %v7
  %s10 = scalar_lea.vmem %s0, 1
  %v11 = vld [vmem:[%s10] sm:$0x1]
  %s12 = scalar_lea.vmem %s1, 1
  %v13 = vld [vmem:[%s12] sm:$0x1]
  %14 = xla_tuple %v11, %v13
  %15 = xla_tuple %14
  %v16 = vmul.f32 %v11, %v13
  %17 = xla_tuple %v16
  %s18 = scalar_lea.vmem %s2, 1
  %19 = vst [vmem:[%s18] sm:$0x1] %v16

// kernel: _lambda_.17
$region0: #{_lambda_.17}
  #allocation0 [shape = 'u32[]', space=smem, size = 0x4, offset = 0x4, fixed_abs, tag = 'smem constant byte address 0x4 - core index']
  #allocation1 [shape = 'u32[144,128]{1,0:T(1,128)}', space=vmem, size = 0x12000, scoped, tag = 'internal scratch']
  %s0 = inlined_call_operand.vmem [shape: bf16[32,256], index: 0, kind: input, shape index: {}]
  %s1 = inlined_call_operand.vmem [shape: f32[1,256], index: 1, kind: input, shape index: {}]
  %s2 = inlined_call_operand.vmem [shape: f32[1,256], index: 2, kind: input, shape index: {}]
  %s3 = inlined_call_operand.vmem [shape: bf16[32,256], index: 3, kind: output, shape index: {}]
  %s4 = sld [smem:[#allocation0]]
  $region45: #{_lambda_.17} parent=0
    _
  %s6 = ssub.s32 1, %s4
  %s7 = scalar_select 0, %s6, %s4
  loop: start=0, step=1, limit=4
  $region2: #{_lambda_.17} parent=0 // loop_pre_header
    _
  $region3: #{_lambda_.17} parent=0 // loop_header
    %s9 = sphi 0, %s13
    %p10 = scmp.ge.s32.totalorder %s9, 4
    %s19 = sphi 0, %s21
    %s22 = sphi 0, %s19
    %s23 = sphi 0, %s22
    %s39 = sphi 0, %s23
    %s43 = sphi 0, %s43
    %s45 = sphi 0, %s43
    %s46 = sphi 0, %s45
    %s60 = sphi 0, %s46
    %s64 = sphi 0, %s64
    %s66 = sphi 0, %s64
    %s67 = sphi 0, %s66
    %s81 = sphi 0, %s67
    %s87 = sphi 0, %s89
    %s90 = sphi 0, %s87
    %s91 = sphi 0, %s90
    %s107 = sphi 0, %s91
  $region4: #{_lambda_.17} parent=0 // loop_header_branch
    %12 = sbr.rel (%p10) target = $region8
  $region5: #{_lambda_.17} parent=0 // loop_body
    %s14 = ssub.s32 %s9, 1
    %s15 = ssub.s32 %s9, 2
    %s16 = sadd.s32 %s9, 1
    %s17 = ssub.s32 %s9, %s16
    %p18 = scmp.eq.s32.totalorder %s17, 0
    %s20 = sadd.s32 %s19, 1
    %s21 = scalar_select %p18, %s19, %s20
    %p24 = pneg %p18
    %p25 = scmp.eq.s32.totalorder %s9, 1
    %p26 = por %p24, %p25
    %p27 = scmp.ne.s32.totalorder %s19, %s22
    %p28 = scmp.eq.s32.totalorder %s9, 0
    %p29 = por %p27, %p28
    %p30 = scmp.ne.s32.totalorder %s19, %s22
    %p31 = scmp.eq.s32.totalorder %s14, 1
    %p32 = por %p30, %p31
    %p33 = scmp.ne.s32.totalorder %s22, %s23
    %p34 = scmp.eq.s32.totalorder %s14, 0
    %p35 = por %p33, %p34
    %p36 = scmp.ne.s32.totalorder %s22, %s23
    %p37 = scmp.eq.s32.totalorder %s15, 1
    %p38 = por %p36, %p37
    %p40 = scmp.ne.s32.totalorder %s23, %s39
    %p41 = scmp.eq.s32.totalorder %s15, 0
    %p42 = por %p40, %p41
    %s44 = sadd.s32 %s43, 1
    %p47 = scmp.eq.s32.totalorder %s9, 1
    %p48 = scmp.ne.s32.totalorder %s43, %s45
    %p49 = scmp.eq.s32.totalorder %s9, 0
    %p50 = por %p48, %p49
    %p51 = scmp.ne.s32.totalorder %s43, %s45
    %p52 = scmp.eq.s32.totalorder %s14, 1
    %p53 = por %p51, %p52
    %p54 = scmp.ne.s32.totalorder %s45, %s46
    %p55 = scmp.eq.s32.totalorder %s14, 0
    %p56 = por %p54, %p55
    %p57 = scmp.ne.s32.totalorder %s45, %s46
    %p58 = scmp.eq.s32.totalorder %s15, 1
    %p59 = por %p57, %p58
    %p61 = scmp.ne.s32.totalorder %s46, %s60
    %p62 = scmp.eq.s32.totalorder %s15, 0
    %p63 = por %p61, %p62
    %s65 = sadd.s32 %s64, 1
    %p68 = scmp.eq.s32.totalorder %s9, 1
    %p69 = scmp.ne.s32.totalorder %s64, %s66
    %p70 = scmp.eq.s32.totalorder %s9, 0
    %p71 = por %p69, %p70
    %p72 = scmp.ne.s32.totalorder %s64, %s66
    %p73 = scmp.eq.s32.totalorder %s14, 1
    %p74 = por %p72, %p73
    %p75 = scmp.ne.s32.totalorder %s66, %s67
    %p76 = scmp.eq.s32.totalorder %s14, 0
    %p77 = por %p75, %p76
    %p78 = scmp.ne.s32.totalorder %s66, %s67
    %p79 = scmp.eq.s32.totalorder %s15, 1
    %p80 = por %p78, %p79
    %p82 = scmp.ne.s32.totalorder %s67, %s81
    %p83 = scmp.eq.s32.totalorder %s15, 0
    %p84 = por %p82, %p83
    %s85 = ssub.s32 %s9, %s16
    %p86 = scmp.eq.s32.totalorder %s85, 0
    %s88 = sadd.s32 %s87, 1
    %s89 = scalar_select %p86, %s87, %s88
    %p92 = pneg %p86
    %p93 = scmp.eq.s32.totalorder %s9, 1
    %p94 = por %p92, %p93
    %p95 = scmp.ne.s32.totalorder %s87, %s90
    %p96 = scmp.eq.s32.totalorder %s9, 0
    %p97 = por %p95, %p96
    %p98 = scmp.ne.s32.totalorder %s87, %s90
    %p99 = scmp.eq.s32.totalorder %s14, 1
    %p100 = por %p98, %p99
    %p101 = scmp.ne.s32.totalorder %s90, %s91
    %p102 = scmp.eq.s32.totalorder %s14, 0
    %p103 = por %p101, %p102
    %p104 = scmp.ne.s32.totalorder %s90, %s91
    %p105 = scmp.eq.s32.totalorder %s15, 1
    %p106 = por %p104, %p105
    %p108 = scmp.ne.s32.totalorder %s91, %s107
    %p109 = scmp.eq.s32.totalorder %s15, 0
    %p110 = por %p108, %p109
    %p111 = scmp.le.s32.totalorder 1, %s9
    %p112 = scmp.lt.s32.totalorder %s9, 3
    %p113 = pnand %p111, %p112
    %p114 = pneg %p113
    // Predicated region
    $region9: #{_lambda_.17} parent=5 // pred_check
      _
    $region10: #{_lambda_.17} parent=5 // pred_check_branch
      %116 = sbr.rel (%p113) target = $region12
    $region11: #{_lambda_.17} parent=5 // pred_region
      %s117 = ssub.s32 %s9, 1
      // Predicated region
      $region13: #{_lambda_.17} parent=11 // pred_check
        %p118 = pneg %p56
      $region14: #{_lambda_.17} parent=11 // pred_check_branch
        %120 = sbr.rel (%p118) target = $region16
      $region15: #{_lambda_.17} parent=11 // pred_region
        _
      $region16: #{_lambda_.17} parent=11 // pred_fallthru
        _
      // Predicated region
      $region17: #{_lambda_.17} parent=11 // pred_check
        %p121 = pneg %p77
      $region18: #{_lambda_.17} parent=11 // pred_check_branch
        %123 = sbr.rel (%p121) target = $region20
      $region19: #{_lambda_.17} parent=11 // pred_region
        _
      $region20: #{_lambda_.17} parent=11 // pred_fallthru
        _
    $region12: #{_lambda_.17} parent=5 // pred_fallthru
      _
    %p124 = scmp.lt.s32.totalorder %s9, 2
    // Predicated region
    $region21: #{_lambda_.17} parent=5 // pred_check
      %p125 = pneg %p124
    $region22: #{_lambda_.17} parent=5 // pred_check_branch
      %127 = sbr.rel (%p125) target = $region24
    $region23: #{_lambda_.17} parent=5 // pred_region
      // Predicated region
      $region25: #{_lambda_.17} parent=23 // pred_check
        %p128 = pneg %p29
      $region26: #{_lambda_.17} parent=23 // pred_check_branch
        %130 = sbr.rel (%p128) target = $region28
      $region27: #{_lambda_.17} parent=23 // pred_region
        %s131 = smul.u32 2, %s9
        %p132 = scmp.lt.s32.totalorder %s131, 3
        %s133 = scalar_select %p132, %s131, 3
        %s134 = smul.addr %s133, 2
        %s135 = smul.addr %s134, 4
        %s136 = scalar_lea.vmem %s0, %s135
        %s137 = smul.u32 2, %s9
      $region28: #{_lambda_.17} parent=23 // pred_fallthru
        _
    $region24: #{_lambda_.17} parent=5 // pred_fallthru
      _
    %p138 = scmp.le.s32.totalorder 1, %s9
    %p139 = scmp.lt.s32.totalorder %s9, 3
    %p140 = pnand %p138, %p139
    %p141 = pneg %p140
    // Predicated region
    $region29: #{_lambda_.17} parent=5 // pred_check
      _
    $region30: #{_lambda_.17} parent=5 // pred_check_branch
      %143 = sbr.rel (%p140) target = $region32
    $region31: #{_lambda_.17} parent=5 // pred_region
      %s144 = ssub.s32 %s9, 1
      %s145 = smul.u32 2, %s14
      %p146 = scmp.lt.s32.totalorder %s145, 3
      %s147 = scalar_select %p146, %s145, 3
      %s148 = smul.addr %s147, 2
      %s149 = smul.addr %s148, 4
      %s150 = scalar_lea.vmem %s0, %s149
      %p151 = pneg %p35
      %p152 = pneg %p32
      %p153 = pneg %p56
      %p154 = pneg %p53
      %p155 = pneg %p77
      %p156 = pneg %p74
      %p157 = pneg %p103
      %p158 = pneg %p100
      %s159 = smul.u32 2, %s14
      %p160 = scmp.lt.s32.totalorder %s159, 3
      %s161 = scalar_select %p160, %s159, 3
      %s162 = smul.addr %s161, 2
      %s163 = smul.addr %s162, 4
      %s164 = scalar_lea.vmem %s3, %s163
      %s165 = smul.u32 2, %s14
      %p166 = scmp.lt.s32.totalorder %s165, 3
      %s167 = scalar_select %p166, %s165, 3
      %s168 = smul.addr %s167, 2
      %s169 = smul.addr %s168, 4
      %s170 = scalar_lea.vmem %s0, %s169
      %s171 = smul.u32 2, %s14
      %s172 = smul.u32 2, %s14
      %p173 = scmp.lt.s32.totalorder %s172, 3
      %s174 = scalar_select %p173, %s172, 3
      %s175 = smul.addr %s174, 2
      %s176 = smul.addr %s175, 4
      %s177 = scalar_lea.vmem %s3, %s176
      %s178 = smul.u32 2, %s14
      %v179 = vld [vmem:[%s170] sm:$0xff]
      %v180 = vld [vmem:[%s170 + $0x8] sm:$0xff]
      %v181 = vunpack.c.l.bf16 %v179
      %v182 = vunpack.c.h.bf16 %v179
      %v183 = vunpack.c.l.bf16 %v180
      %v184 = vunpack.c.h.bf16 %v180
      %v185 = vld [vmem:[%s1] sm:$0x3]
      %v187 = vlaneseq
      %v188 = vshrl.u32 %v187, 7
      %v189 = vsub.s32 0, %v188
      %v190 = vrot.slane %v185, %v189
      %v191 = vlaneseq
      %v192 = vshrl.u32 %v191, 7
      %v193 = vsub.s32 1, %v192
      %v194 = vrot.slane %v185, %v193
      %v197 = vmul.f32 %v181, %v190
      %v198 = vmul.f32 %v182, %v194
      %v199 = vmul.f32 %v183, %v190
      %v200 = vmul.f32 %v184, %v194
      %v201 = vld [vmem:[%s2] sm:$0x3]
      %v203 = vlaneseq
      %v204 = vshrl.u32 %v203, 7
      %v205 = vsub.s32 0, %v204
      %v206 = vrot.slane %v201, %v205
      %v207 = vlaneseq
      %v208 = vshrl.u32 %v207, 7
      %v209 = vsub.s32 1, %v208
      %v210 = vrot.slane %v201, %v209
      %v213 = vadd.f32 %v197, %v206
      %v214 = vadd.f32 %v198, %v210
      %v215 = vadd.f32 %v199, %v206
      %v216 = vadd.f32 %v200, %v210
      %v217 = vmax.f32 %v213, 0.0
      %v218 = vmax.f32 %v214, 0.0
      %v219 = vmax.f32 %v215, 0.0
      %v220 = vmax.f32 %v216, 0.0
      %v221 = vpack.c.bf16 %v219, %v217
      %v222 = vpack.c.bf16 %v220, %v218
      %v225 = vunpack.c.l.b16 %v221
      %v226 = vunpack.c.l.b16 %v222
      %v227 = vunpack.c.h.b16 %v221
      %v228 = vunpack.c.h.b16 %v222
      %v229 = vpack.c.b16 %v226, %v225
      %v230 = vpack.c.b16 %v228, %v227
      %233 = vst [vmem:[%s177] sm:$0xff] %v229
      %234 = vst [vmem:[%s177 + $0x8] sm:$0xff] %v230
      %s235 = smul.u32 2, %s14
      %p236 = scmp.lt.s32.totalorder %s235, 3
      %s237 = scalar_select %p236, %s235, 3
      %s238 = smul.addr %s237, 2
      %s239 = smul.addr %s238, 4
      %s240 = scalar_lea.vmem %s3, %s239
      // Predicated region
      $region33: #{_lambda_.17} parent=31 // pred_check
        %p241 = pneg %p100
      $region34: #{_lambda_.17} parent=31 // pred_check_branch
        %243 = sbr.rel (%p241) target = $region36
      $region35: #{_lambda_.17} parent=31 // pred_region
        %s244 = smul.u32 2, %s14
      $region36: #{_lambda_.17} parent=31 // pred_fallthru
        _
    $region32: #{_lambda_.17} parent=5 // pred_fallthru
      _
    %p245 = scmp.le.s32.totalorder 2, %s9
    // Predicated region
    $region37: #{_lambda_.17} parent=5 // pred_check
      %p246 = pneg %p245
    $region38: #{_lambda_.17} parent=5 // pred_check_branch
      %248 = sbr.rel (%p246) target = $region40
    $region39: #{_lambda_.17} parent=5 // pred_region
      %s249 = ssub.s32 %s9, 2
      // Predicated region
      $region41: #{_lambda_.17} parent=39 // pred_check
        %p250 = pneg %p106
      $region42: #{_lambda_.17} parent=39 // pred_check_branch
        %252 = sbr.rel (%p250) target = $region44
      $region43: #{_lambda_.17} parent=39 // pred_region
        %s253 = smul.u32 2, %s15
        %p254 = scmp.lt.s32.totalorder %s253, 3
        %s255 = scalar_select %p254, %s253, 3
        %s256 = smul.addr %s255, 2
        %s257 = smul.addr %s256, 4
        %s258 = scalar_lea.vmem %s3, %s257
      $region44: #{_lambda_.17} parent=39 // pred_fallthru
        _
    $region40: #{_lambda_.17} parent=5 // pred_fallthru
      _
  $region6: #{_lambda_.17} parent=0 // loop_footer
    %s13 = sadd.s32 1, %s9
  $region7: #{_lambda_.17} parent=0 // loop_footer_branch
    %8 = sbr.rel target = $region3
  $region8: #{_lambda_.17} parent=0 // loop_exit
    _

// kernel: _lambda_.16
$region0: #{_lambda_.16}
  #allocation0 [shape = 'u32[]', space=smem, size = 0x4, offset = 0x4, fixed_abs, tag = 'smem constant byte address 0x4 - core index']
  #allocation1 [shape = 'u32[144,128]{1,0:T(1,128)}', space=vmem, size = 0x12000, scoped, tag = 'internal scratch']
  %s0 = inlined_call_operand.vmem [shape: bf16[8,10], index: 0, kind: input, shape index: {}]
  %s1 = inlined_call_operand.hbm [shape: bf16[10,2304], index: 1, kind: input, shape index: {}]
  %s2 = inlined_call_operand.vmem [shape: bf16[8,2304], index: 2, kind: output, shape index: {0}]
  %s3 = inlined_call_operand.vmem [shape: f32[1,1,2304], index: 3, kind: output, shape index: {1}]
  %s4 = inlined_call_operand.vmem [shape: f32[1,1,2304], index: 4, kind: output, shape index: {2}]
  %5 = xla_tuple %s2, %s3, %s4
  %s6 = sld [smem:[#allocation0]]
  $region38: #{_lambda_.16} parent=0
    _
  %s8 = ssub.s32 1, %s6
  %s9 = scalar_select 0, %s8, %s6
  $region1: #{_lambda_.16} parent=0
    #allocation2 [shape = 'u8[73728]{0}', space=vmem, size = 0x12000, scoped, tag = 'input window, operand 1, single buffered']
    #allocation3 [shape = 's32[1]{0}', space=sflag, size = 0x4, scoped, tag = 'scoped memory for _lambda_.16']
    %10 = vsyncpa [#allocation3], 0
    // Predicated region
    $region2: #{_lambda_.16} parent=1 // pred_check
      _
    $region3: #{_lambda_.16} parent=1 // pred_check_branch
      %12 = sbr.rel (0) target = $region5
    $region4: #{_lambda_.16} parent=1 // pred_region
      _
    $region5: #{_lambda_.16} parent=1 // pred_fallthru
      _
    // Predicated region
    $region6: #{_lambda_.16} parent=1 // pred_check
      _
    $region7: #{_lambda_.16} parent=1 // pred_check_branch
      %14 = sbr.rel (0) target = $region9
    $region8: #{_lambda_.16} parent=1 // pred_region
      %s16 = ssub.s32 2304, 2304
      %17 = vsyncadd [#allocation3], %s16
      %s18 = sshll.u32 [#allocation2], 4
      %s19 = int_to_ptr.vmem [resolvable:$true] %s18
      %24 = dma.hbm_to_vmem [thread:$0]  %s1, 2304, %s19, [#allocation3], 1152, 1152, 72
    $region9: #{_lambda_.16} parent=1 // pred_fallthru
      _
    // Predicated region
    $region10: #{_lambda_.16} parent=1 // pred_check
      _
    $region11: #{_lambda_.16} parent=1 // pred_check_branch
      %26 = sbr.rel (0) target = $region13
    $region12: #{_lambda_.16} parent=1 // pred_region
      %27 = dma.done [#allocation3], 2304
    $region13: #{_lambda_.16} parent=1 // pred_fallthru
      _
    %v29 = vld [vmem:[%s0] sm:$0xf]
    %v30 = vld [vmem:[#allocation2] sm:$0xff]
    %v31 = vld [vmem:[#allocation2 + $0x8] sm:$0xff]
    %v32 = vld [vmem:[#allocation2 + $0x10] sm:$0xff]
    %v33 = vld [vmem:[#allocation2 + $0x18] sm:$0xff]
    %v34 = vld [vmem:[#allocation2 + $0x20] sm:$0xff]
    %v35 = vld [vmem:[#allocation2 + $0x28] sm:$0xff]
    %v36 = vld [vmem:[#allocation2 + $0x30] sm:$0xff]
    %v37 = vld [vmem:[#allocation2 + $0x38] sm:$0xff]
    %v38 = vld [vmem:[#allocation2 + $0x40] sm:$0xff]
    %v39 = vld [vmem:[#allocation2 + $0x48] sm:$0x11]
    %v40 = vld [vmem:[#allocation2 + $0x50] sm:$0x11]
    %v41 = vld [vmem:[#allocation2 + $0x58] sm:$0x11]
    %v42 = vld [vmem:[#allocation2 + $0x60] sm:$0x11]
    %v43 = vld [vmem:[#allocation2 + $0x68] sm:$0x11]
    %v44 = vld [vmem:[#allocation2 + $0x70] sm:$0x11]
    %v45 = vld [vmem:[#allocation2 + $0x78] sm:$0x11]
    %v46 = vld [vmem:[#allocation2 + $0x80] sm:$0x11]
    %v47 = vld [vmem:[#allocation2 + $0x88] sm:$0x11]
    %v66 = vunpack.c.l.b16 %v30
    %v67 = vunpack.c.h.b16 %v30
    %v68 = vunpack.c.l.b16 %v31
    %v69 = vunpack.c.h.b16 %v31
    %v70 = vunpack.c.l.b16 %v32
    %v71 = vunpack.c.h.b16 %v32
    %v72 = vunpack.c.l.b16 %v33
    %v73 = vunpack.c.h.b16 %v33
    %v74 = vunpack.c.l.b16 %v34
    %v75 = vunpack.c.h.b16 %v34
    %v76 = vunpack.c.l.b16 %v35
    %v77 = vunpack.c.h.b16 %v35
    %v78 = vunpack.c.l.b16 %v36
    %v79 = vunpack.c.h.b16 %v36
    %v80 = vunpack.c.l.b16 %v37
    %v81 = vunpack.c.h.b16 %v37
    %v82 = vunpack.c.l.b16 %v38
    %v83 = vunpack.c.h.b16 %v38
    %v84 = vunpack.c.l.b16 %v39
    %v85 = vunpack.c.h.b16 %v39
    %v86 = vunpack.c.l.b16 %v40
    %v87 = vunpack.c.h.b16 %v40
    %v88 = vunpack.c.l.b16 %v41
    %v89 = vunpack.c.h.b16 %v41
    %v90 = vunpack.c.l.b16 %v42
    %v91 = vunpack.c.h.b16 %v42
    %v92 = vunpack.c.l.b16 %v43
    %v93 = vunpack.c.h.b16 %v43
    %v94 = vunpack.c.l.b16 %v44
    %v95 = vunpack.c.h.b16 %v44
    %v96 = vunpack.c.l.b16 %v45
    %v97 = vunpack.c.h.b16 %v45
    %v98 = vunpack.c.l.b16 %v46
    %v99 = vunpack.c.h.b16 %v46
    %v100 = vunpack.c.l.b16 %v47
    %v101 = vunpack.c.h.b16 %v47
    %v102 = vpack.c.b16 %v84, %v66
    %v103 = vpack.c.b16 %v85, %v67
    %v104 = vpack.c.b16 %v86, %v68
    %v105 = vpack.c.b16 %v87, %v69
    %v106 = vpack.c.b16 %v88, %v70
    %v107 = vpack.c.b16 %v89, %v71
    %v108 = vpack.c.b16 %v90, %v72
    %v109 = vpack.c.b16 %v91, %v73
    %v110 = vpack.c.b16 %v92, %v74
    %v111 = vpack.c.b16 %v93, %v75
    %v112 = vpack.c.b16 %v94, %v76
    %v113 = vpack.c.b16 %v95, %v77
    %v114 = vpack.c.b16 %v96, %v78
    %v115 = vpack.c.b16 %v97, %v79
    %v116 = vpack.c.b16 %v98, %v80
    %v117 = vpack.c.b16 %v99, %v81
    %v118 = vpack.c.b16 %v100, %v82
    %v119 = vpack.c.b16 %v101, %v83
    %vm120 = vcmask 80896
    %v122 = vsel %vm120, %v29, 0
    %vm124 = vcmask 1044480
    %v126 = vsel %vm124, %v102, 0
    %v129 = vsel %vm124, %v103, 0
    %v132 = vsel %vm124, %v104, 0
    %v135 = vsel %vm124, %v105, 0
    %v138 = vsel %vm124, %v106, 0
    %v141 = vsel %vm124, %v107, 0
    %v144 = vsel %vm124, %v108, 0
    %v147 = vsel %vm124, %v109, 0
    %v150 = vsel %vm124, %v110, 0
    %v153 = vsel %vm124, %v111, 0
    %v156 = vsel %vm124, %v112, 0
    %v159 = vsel %vm124, %v113, 0
    %v162 = vsel %vm124, %v114, 0
    %v165 = vsel %vm124, %v115, 0
    %v168 = vsel %vm124, %v116, 0
    %v171 = vsel %vm124, %v117, 0
    %v174 = vsel %vm124, %v118, 0
    %v177 = vsel %vm124, %v119, 0
    %179 = vmatprep.subr.bf16.mxu0 %v129
    %180 = vmatpush1.bf16.msra.mxu0 %v126
    %181 = vmatprep.subr.bf16.mxu0 0
    %182 = vmatpush1.bf16.msra.mxu0 0
    %183 = vmatprep.subr.bf16.mxu0 0
    %184 = vmatpush1.bf16.msra.mxu0 0
    %185 = vmatprep.subr.bf16.mxu0 0
    %186 = vmatpush1.bf16.msra.mxu0 0
    %187 = vmatprep.subr.bf16.mxu0 0
    %188 = vmatpush1.bf16.msra.mxu0 0
    %189 = vmatprep.subr.bf16.mxu0 0
    %190 = vmatpush1.bf16.msra.mxu0 0
    %191 = vmatprep.subr.bf16.mxu0 0
    %192 = vmatpush1.bf16.msra.mxu0 0
    %193 = vmatprep.subr.bf16.mxu0 0
    %194 = vmatpush1.bf16.msra.mxu0 0
    %195 = vmatprep.subr.bf16.mxu0 0
    %196 = vmatpush1.bf16.msra.mxu0 0
    %197 = vmatprep.subr.bf16.mxu0 0
    %198 = vmatpush1.bf16.msra.mxu0 0
    %199 = vmatprep.subr.bf16.mxu0 0
    %200 = vmatpush1.bf16.msra.mxu0 0
    %201 = vmatprep.subr.bf16.mxu0 0
    %202 = vmatpush1.bf16.msra.mxu0 0
    %203 = vmatprep.subr.bf16.mxu0 0
    %204 = vmatpush1.bf16.msra.mxu0 0
    %205 = vmatprep.subr.bf16.mxu0 0
    %206 = vmatpush1.bf16.msra.mxu0 0
    %207 = vmatprep.subr.bf16.mxu0 0
    %208 = vmatpush1.bf16.msra.mxu0 0
    %209 = vmatprep.subr.bf16.mxu0 0
    %210 = vmatpush1.bf16.msra.mxu0 0
    %211 = vmatprep.mubr.bf16.mxu0 0
    %212 = vmatmul.mubr.bf16.gmra.mrb[0].mxu0 %v122
    %v213 = vpop.f32.mrb[0].mxu0
    %v214 = vadd.f32 0.0, %v213
    %v215 = vpop.f32.mrb[0].mxu0
    %v216 = vadd.f32 0.0, %v215
    %v217 = vpop.f32.mrb[0].mxu0
    %v218 = vpop.f32.mrb[0].mxu0
    %219 = vdwg.mxu0
    %220 = vmatprep.subr.bf16.mxu0 %v135
    %221 = vmatpush1.bf16.msra.mxu0 %v132
    %222 = vmatprep.subr.bf16.mxu0 0
    %223 = vmatpush1.bf16.msra.mxu0 0
    %224 = vmatprep.subr.bf16.mxu0 0
    %225 = vmatpush1.bf16.msra.mxu0 0
    %226 = vmatprep.subr.bf16.mxu0 0
    %227 = vmatpush1.bf16.msra.mxu0 0
    %228 = vmatprep.subr.bf16.mxu0 0
    %229 = vmatpush1.bf16.msra.mxu0 0
    %230 = vmatprep.subr.bf16.mxu0 0
    %231 = vmatpush1.bf16.msra.mxu0 0
    %232 = vmatprep.subr.bf16.mxu0 0
    %233 = vmatpush1.bf16.msra.mxu0 0
    %234 = vmatprep.subr.bf16.mxu0 0
    %235 = vmatpush1.bf16.msra.mxu0 0
    %236 = vmatprep.subr.bf16.mxu0 0
    %237 = vmatpush1.bf16.msra.mxu0 0
    %238 = vmatprep.subr.bf16.mxu0 0
    %239 = vmatpush1.bf16.msra.mxu0 0
    %240 = vmatprep.subr.bf16.mxu0 0
    %241 = vmatpush1.bf16.msra.mxu0 0
    %242 = vmatprep.subr.bf16.mxu0 0
    %243 = vmatpush1.bf16.msra.mxu0 0
    %244 = vmatprep.subr.bf16.mxu0 0
    %245 = vmatpush1.bf16.msra.mxu0 0
    %246 = vmatprep.subr.bf16.mxu0 0
    %247 = vmatpush1.bf16.msra.mxu0 0
    %248 = vmatprep.subr.bf16.mxu0 0
    %249 = vmatpush1.bf16.msra.mxu0 0
    %250 = vmatprep.subr.bf16.mxu0 0
    %251 = vmatpush1.bf16.msra.mxu0 0
    %252 = vmatprep.mubr.bf16.mxu0 0
    %253 = vmatmul.mubr.bf16.gmra.mrb[0].mxu0 %v122
    %v254 = vpop.f32.mrb[0].mxu0
    %v255 = vadd.f32 0.0, %v254
    %v256 = vpop.f32.mrb[0].mxu0
    %v257 = vadd.f32 0.0, %v256
    %v258 = vpop.f32.mrb[0].mxu0
    %v259 = vpop.f32.mrb[0].mxu0
    %260 = vdwg.mxu0
    %261 = vmatprep.subr.bf16.mxu0 %v141
    %262 = vmatpush1.bf16.msra.mxu0 %v138
    %263 = vmatprep.subr.bf16.mxu0 0
    %264 = vmatpush1.bf16.msra.mxu0 0
    %265 = vmatprep.subr.bf16.mxu0 0
    %266 = vmatpush1.bf16.msra.mxu0 0
    %267 = vmatprep.subr.bf16.mxu0 0
    %268 = vmatpush1.bf16.msra.mxu0 0
    %269 = vmatprep.subr.bf16.mxu0 0
    %270 = vmatpush1.bf16.msra.mxu0 0
    %271 = vmatprep.subr.bf16.mxu0 0
    %272 = vmatpush1.bf16.msra.mxu0 0
    %273 = vmatprep.subr.bf16.mxu0 0
    %274 = vmatpush1.bf16.msra.mxu0 0
    %275 = vmatprep.subr.bf16.mxu0 0
    %276 = vmatpush1.bf16.msra.mxu0 0
    %277 = vmatprep.subr.bf16.mxu0 0
    %278 = vmatpush1.bf16.msra.mxu0 0
    %279 = vmatprep.subr.bf16.mxu0 0
    %280 = vmatpush1.bf16.msra.mxu0 0
    %281 = vmatprep.subr.bf16.mxu0 0
    %282 = vmatpush1.bf16.msra.mxu0 0
    %283 = vmatprep.subr.bf16.mxu0 0
    %284 = vmatpush1.bf16.msra.mxu0 0
    %285 = vmatprep.subr.bf16.mxu0 0
    %286 = vmatpush1.bf16.msra.mxu0 0
    %287 = vmatprep.subr.bf16.mxu0 0
    %288 = vmatpush1.bf16.msra.mxu0 0
    %289 = vmatprep.subr.bf16.mxu0 0
    %290 = vmatpush1.bf16.msra.mxu0 0
    %291 = vmatprep.subr.bf16.mxu0 0
    %292 = vmatpush1.bf16.msra.mxu0 0
    %293 = vmatprep.mubr.bf16.mxu0 0
    %294 = vmatmul.mubr.bf16.gmra.mrb[0].mxu0 %v122
    %v295 = vpop.f32.mrb[0].mxu0
    %v296 = vadd.f32 0.0, %v295
    %v297 = vpop.f32.mrb[0].mxu0
    %v298 = vadd.f32 0.0, %v297
    %v299 = vpop.f32.mrb[0].mxu0
    %v300 = vpop.f32.mrb[0].mxu0
    %301 = vdwg.mxu0
    %302 = vmatprep.subr.bf16.mxu0 %v147
    %303 = vmatpush1.bf16.msra.mxu0 %v144
    %304 = vmatprep.subr.bf16.mxu0 0
    %305 = vmatpush1.bf16.msra.mxu0 0
    %306 = vmatprep.subr.bf16.mxu0 0
    %307 = vmatpush1.bf16.msra.mxu0 0
    %308 = vmatprep.subr.bf16.mxu0 0
    %309 = vmatpush1.bf16.msra.mxu0 0
    %310 = vmatprep.subr.bf16.mxu0 0
    %311 = vmatpush1.bf16.msra.mxu0 0
    %312 = vmatprep.subr.bf16.mxu0 0
    %313 = vmatpush1.bf16.msra.mxu0 0
    %314 = vmatprep.subr.bf16.mxu0 0
    %315 = vmatpush1.bf16.msra.mxu0 0
    %316 = vmatprep.subr.bf16.mxu0 0
    %317 = vmatpush1.bf16.msra.mxu0 0
    %318 = vmatprep.subr.bf16.mxu0 0
    %319 = vmatpush1.bf16.msra.mxu0 0
    %320 = vmatprep.subr.bf16.mxu0 0
    %321 = vmatpush1.bf16.msra.mxu0 0
    %322 = vmatprep.subr.bf16.mxu0 0
    %323 = vmatpush1.bf16.msra.mxu0 0
    %324 = vmatprep.subr.bf16.mxu0 0
    %325 = vmatpush1.bf16.msra.mxu0 0
    %326 = vmatprep.subr.bf16.mxu0 0
    %327 = vmatpush1.bf16.msra.mxu0 0
    %328 = vmatprep.subr.bf16.mxu0 0
    %329 = vmatpush1.bf16.msra.mxu0 0
    %330 = vmatprep.subr.bf16.mxu0 0
    %331 = vmatpush1.bf16.msra.mxu0 0
    %332 = vmatprep.subr.bf16.mxu0 0
    %333 = vmatpush1.bf16.msra.mxu0 0
    %334 = vmatprep.mubr.bf16.mxu0 0
    %335 = vmatmul.mubr.bf16.gmra.mrb[0].mxu0 %v122
    %v336 = vpop.f32.mrb[0].mxu0
    %v337 = vadd.f32 0.0, %v336
    %v338 = vpop.f32.mrb[0].mxu0
    %v339 = vadd.f32 0.0, %v338
    %v340 = vpop.f32.mrb[0].mxu0
    %v341 = vpop.f32.mrb[0].mxu0
    %342 = vdwg.mxu0
    %343 = vmatprep.subr.bf16.mxu0 %v153
    %344 = vmatpush1.bf16.msra.mxu0 %v150
    %345 = vmatprep.subr.bf16.mxu0 0
    %346 = vmatpush1.bf16.msra.mxu0 0
    %347 = vmatprep.subr.bf16.mxu0 0
    %348 = vmatpush1.bf16.msra.mxu0 0
    %349 = vmatprep.subr.bf16.mxu0 0
    %350 = vmatpush1.bf16.msra.mxu0 0
    %351 = vmatprep.subr.bf16.mxu0 0
    %352 = vmatpush1.bf16.msra.mxu0 0
    %353 = vmatprep.subr.bf16.mxu0 0
    %354 = vmatpush1.bf16.msra.mxu0 0
    %355 = vmatprep.subr.bf16.mxu0 0
    %356 = vmatpush1.bf16.msra.mxu0 0
    %357 = vmatprep.subr.bf16.mxu0 0
    %358 = vmatpush1.bf16.msra.mxu0 0
    %359 = vmatprep.subr.bf16.mxu0 0
    %360 = vmatpush1.bf16.msra.mxu0 0
    %361 = vmatprep.subr.bf16.mxu0 0
    %362 = vmatpush1.bf16.msra.mxu0 0
    %363 = vmatprep.subr.bf16.mxu0 0
    %364 = vmatpush1.bf16.msra.mxu0 0
    %365 = vmatprep.subr.bf16.mxu0 0
    %366 = vmatpush1.bf16.msra.mxu0 0
    %367 = vmatprep.subr.bf16.mxu0 0
    %368 = vmatpush1.bf16.msra.mxu0 0
    %369 = vmatprep.subr.bf16.mxu0 0
    %370 = vmatpush1.bf16.msra.mxu0 0
    %371 = vmatprep.subr.bf16.mxu0 0
    %372 = vmatpush1.bf16.msra.mxu0 0
    %373 = vmatprep.subr.bf16.mxu0 0
    %374 = vmatpush1.bf16.msra.mxu0 0
    %375 = vmatprep.mubr.bf16.mxu0 0
    %376 = vmatmul.mubr.bf16.gmra.mrb[0].mxu0 %v122
    %v377 = vpop.f32.mrb[0].mxu0
    %v378 = vadd.f32 0.0, %v377
    %v379 = vpop.f32.mrb[0].mxu0
    %v380 = vadd.f32 0.0, %v379
    %v381 = vpop.f32.mrb[0].mxu0
    %v382 = vpop.f32.mrb[0].mxu0
    %383 = vdwg.mxu0
    %384 = vmatprep.subr.bf16.mxu0 %v159
    %385 = vmatpush1.bf16.msra.mxu0 %v156
    %386 = vmatprep.subr.bf16.mxu0 0
    %387 = vmatpush1.bf16.msra.mxu0 0
    %388 = vmatprep.subr.bf16.mxu0 0
    %389 = vmatpush1.bf16.msra.mxu0 0
    %390 = vmatprep.subr.bf16.mxu0 0
    %391 = vmatpush1.bf16.msra.mxu0 0
    %392 = vmatprep.subr.bf16.mxu0 0
    %393 = vmatpush1.bf16.msra.mxu0 0
    %394 = vmatprep.subr.bf16.mxu0 0
    %395 = vmatpush1.bf16.msra.mxu0 0
    %396 = vmatprep.subr.bf16.mxu0 0
    %397 = vmatpush1.bf16.msra.mxu0 0
    %398 = vmatprep.subr.bf16.mxu0 0
    %399 = vmatpush1.bf16.msra.mxu0 0
    %400 = vmatprep.subr.bf16.mxu0 0
    %401 = vmatpush1.bf16.msra.mxu0 0
    %402 = vmatprep.subr.bf16.mxu0 0
    %403 = vmatpush1.bf16.msra.mxu0 0
    %404 = vmatprep.subr.bf16.mxu0 0
    %405 = vmatpush1.bf16.msra.mxu0 0
    %406 = vmatprep.subr.bf16.mxu0 0
    %407 = vmatpush1.bf16.msra.mxu0 0
    %408 = vmatprep.subr.bf16.mxu0 0
    %409 = vmatpush1.bf16.msra.mxu0 0
    %410 = vmatprep.subr.bf16.mxu0 0
    %411 = vmatpush1.bf16.msra.mxu0 0
    %412 = vmatprep.subr.bf16.mxu0 0
    %413 = vmatpush1.bf16.msra.mxu0 0
    %414 = vmatprep.subr.bf16.mxu0 0
    %415 = vmatpush1.bf16.msra.mxu0 0
    %416 = vmatprep.mubr.bf16.mxu0 0
    %417 = vmatmul.mubr.bf16.gmra.mrb[0].mxu0 %v122
    %v418 = vpop.f32.mrb[0].mxu0
    %v419 = vadd.f32 0.0, %v418
    %v420 = vpop.f32.mrb[0].mxu0
    %v421 = vadd.f32 0.0, %v420
    %v422 = vpop.f32.mrb[0].mxu0
    %v423 = vpop.f32.mrb[0].mxu0
    %424 = vdwg.mxu0
    %425 = vmatprep.subr.bf16.mxu0 %v165
    %426 = vmatpush1.bf16.msra.mxu0 %v162
    %427 = vmatprep.subr.bf16.mxu0 0
    %428 = vmatpush1.bf16.msra.mxu0 0
    %429 = vmatprep.subr.bf16.mxu0 0
    %430 = vmatpush1.bf16.msra.mxu0 0
    %431 = vmatprep.subr.bf16.mxu0 0
    %432 = vmatpush1.bf16.msra.mxu0 0
    %433 = vmatprep.subr.bf16.mxu0 0
    %434 = vmatpush1.bf16.msra.mxu0 0
    %435 = vmatprep.subr.bf16.mxu0 0
    %436 = vmatpush1.bf16.msra.mxu0 0
    %437 = vmatprep.subr.bf16.mxu0 0
    %438 = vmatpush1.bf16.msra.mxu0 0
    %439 = vmatprep.subr.bf16.mxu0 0
    %440 = vmatpush1.bf16.msra.mxu0 0
    %441 = vmatprep.subr.bf16.mxu0 0
    %442 = vmatpush1.bf16.msra.mxu0 0
    %443 = vmatprep.subr.bf16.mxu0 0
    %444 = vmatpush1.bf16.msra.mxu0 0
    %445 = vmatprep.subr.bf16.mxu0 0
    %446 = vmatpush1.bf16.msra.mxu0 0
    %447 = vmatprep.subr.bf16.mxu0 0
    %448 = vmatpush1.bf16.msra.mxu0 0
    %449 = vmatprep.subr.bf16.mxu0 0
    %450 = vmatpush1.bf16.msra.mxu0 0
    %451 = vmatprep.subr.bf16.mxu0 0
    %452 = vmatpush1.bf16.msra.mxu0 0
    %453 = vmatprep.subr.bf16.mxu0 0
    %454 = vmatpush1.bf16.msra.mxu0 0
    %455 = vmatprep.subr.bf16.mxu0 0
    %456 = vmatpush1.bf16.msra.mxu0 0
    %457 = vmatprep.mubr.bf16.mxu0 0
    %458 = vmatmul.mubr.bf16.gmra.mrb[0].mxu0 %v122
    %v459 = vpop.f32.mrb[0].mxu0
    %v460 = vadd.f32 0.0, %v459
    %v461 = vpop.f32.mrb[0].mxu0
    %v462 = vadd.f32 0.0, %v461
    %v463 = vpop.f32.mrb[0].mxu0
    %v464 = vpop.f32.mrb[0].mxu0
    %465 = vdwg.mxu0
    %466 = vmatprep.subr.bf16.mxu0 %v171
    %467 = vmatpush1.bf16.msra.mxu0 %v168
    %468 = vmatprep.subr.bf16.mxu0 0
    %469 = vmatpush1.bf16.msra.mxu0 0
    %470 = vmatprep.subr.bf16.mxu0 0
    %471 = vmatpush1.bf16.msra.mxu0 0
    %472 = vmatprep.subr.bf16.mxu0 0
    %473 = vmatpush1.bf16.msra.mxu0 0
    %474 = vmatprep.subr.bf16.mxu0 0
    %475 = vmatpush1.bf16.msra.mxu0 0
    %476 = vmatprep.subr.bf16.mxu0 0
    %477 = vmatpush1.bf16.msra.mxu0 0
    %478 = vmatprep.subr.bf16.mxu0 0
    %479 = vmatpush1.bf16.msra.mxu0 0
    %480 = vmatprep.subr.bf16.mxu0 0
    %481 = vmatpush1.bf16.msra.mxu0 0
    %482 = vmatprep.subr.bf16.mxu0 0
    %483 = vmatpush1.bf16.msra.mxu0 0
    %484 = vmatprep.subr.bf16.mxu0 0
    %485 = vmatpush1.bf16.msra.mxu0 0
    %486 = vmatprep.subr.bf16.mxu0 0
    %487 = vmatpush1.bf16.msra.mxu0 0
    %488 = vmatprep.subr.bf16.mxu0 0
    %489 = vmatpush1.bf16.msra.mxu0 0
    %490 = vmatprep.subr.bf16.mxu0 0
    %491 = vmatpush1.bf16.msra.mxu0 0
    %492 = vmatprep.subr.bf16.mxu0 0
    %493 = vmatpush1.bf16.msra.mxu0 0
    %494 = vmatprep.subr.bf16.mxu0 0
    %495 = vmatpush1.bf16.msra.mxu0 0
    %496 = vmatprep.subr.bf16.mxu0 0
    %497 = vmatpush1.bf16.msra.mxu0 0
    %498 = vmatprep.mubr.bf16.mxu0 0
    %499 = vmatmul.mubr.bf16.gmra.mrb[0].mxu0 %v122
    %v500 = vpop.f32.mrb[0].mxu0
    %v501 = vadd.f32 0.0, %v500
    %v502 = vpop.f32.mrb[0].mxu0
    %v503 = vadd.f32 0.0, %v502
    %v504 = vpop.f32.mrb[0].mxu0
    %v505 = vpop.f32.mrb[0].mxu0
    %506 = vdwg.mxu0
    %507 = vmatprep.subr.bf16.mxu0 %v177
    %508 = vmatpush1.bf16.msra.mxu0 %v174
    %509 = vmatprep.subr.bf16.mxu0 0
    %510 = vmatpush1.bf16.msra.mxu0 0
    %511 = vmatprep.subr.bf16.mxu0 0
    %512 = vmatpush1.bf16.msra.mxu0 0
    %513 = vmatprep.subr.bf16.mxu0 0
    %514 = vmatpush1.bf16.msra.mxu0 0
    %515 = vmatprep.subr.bf16.mxu0 0
    %516 = vmatpush1.bf16.msra.mxu0 0
    %517 = vmatprep.subr.bf16.mxu0 0
    %518 = vmatpush1.bf16.msra.mxu0 0
    %519 = vmatprep.subr.bf16.mxu0 0
    %520 = vmatpush1.bf16.msra.mxu0 0
    %521 = vmatprep.subr.bf16.mxu0 0
    %522 = vmatpush1.bf16.msra.mxu0 0
    %523 = vmatprep.subr.bf16.mxu0 0
    %524 = vmatpush1.bf16.msra.mxu0 0
    %525 = vmatprep.subr.bf16.mxu0 0
    %526 = vmatpush1.bf16.msra.mxu0 0
    %527 = vmatprep.subr.bf16.mxu0 0
    %528 = vmatpush1.bf16.msra.mxu0 0
    %529 = vmatprep.subr.bf16.mxu0 0
    %530 = vmatpush1.bf16.msra.mxu0 0
    %531 = vmatprep.subr.bf16.mxu0 0
    %532 = vmatpush1.bf16.msra.mxu0 0
    %533 = vmatprep.subr.bf16.mxu0 0
    %534 = vmatpush1.bf16.msra.mxu0 0
    %535 = vmatprep.subr.bf16.mxu0 0
    %536 = vmatpush1.bf16.msra.mxu0 0
    %537 = vmatprep.subr.bf16.mxu0 0
    %538 = vmatpush1.bf16.msra.mxu0 0
    %539 = vmatprep.mubr.bf16.mxu0 0
    %540 = vmatmul.mubr.bf16.gmra.mrb[0].mxu0 %v122
    %v541 = vpop.f32.mrb[0].mxu0
    %v542 = vadd.f32 0.0, %v541
    %v543 = vpop.f32.mrb[0].mxu0
    %v544 = vadd.f32 0.0, %v543
    %v545 = vpop.f32.mrb[0].mxu0
    %v546 = vpop.f32.mrb[0].mxu0
    %547 = vdwg.mxu0
    %v548 = vpack.c.bf16 %v214, %v214
    %v549 = vpack.c.bf16 %v216, %v216
    %v550 = vpack.c.bf16 %v255, %v255
    %v551 = vpack.c.bf16 %v257, %v257
    %v552 = vpack.c.bf16 %v296, %v296
    %v553 = vpack.c.bf16 %v298, %v298
    %v554 = vpack.c.bf16 %v337, %v337
    %v555 = vpack.c.bf16 %v339, %v339
    %v556 = vpack.c.bf16 %v378, %v378
    %v557 = vpack.c.bf16 %v380, %v380
    %v558 = vpack.c.bf16 %v419, %v419
    %v559 = vpack.c.bf16 %v421, %v421
    %v560 = vpack.c.bf16 %v460, %v460
    %v561 = vpack.c.bf16 %v462, %v462
    %v562 = vpack.c.bf16 %v501, %v501
    %v563 = vpack.c.bf16 %v503, %v503
    %v564 = vpack.c.bf16 %v542, %v542
    %v565 = vpack.c.bf16 %v544, %v544
    %v584 = vunpack.c.l.b16 %v548
    %v585 = vunpack.c.l.b16 %v549
    %v586 = vunpack.c.l.b16 %v550
    %v587 = vunpack.c.l.b16 %v551
    %v588 = vunpack.c.l.b16 %v552
    %v589 = vunpack.c.l.b16 %v553
    %v590 = vunpack.c.l.b16 %v554
    %v591 = vunpack.c.l.b16 %v555
    %v592 = vunpack.c.l.b16 %v556
    %v593 = vunpack.c.l.b16 %v557
    %v594 = vunpack.c.l.b16 %v558
    %v595 = vunpack.c.l.b16 %v559
    %v596 = vunpack.c.l.b16 %v560
    %v597 = vunpack.c.l.b16 %v561
    %v598 = vunpack.c.l.b16 %v562
    %v599 = vunpack.c.l.b16 %v563
    %v600 = vunpack.c.l.b16 %v564
    %v601 = vunpack.c.l.b16 %v565
    %v602 = vpack.c.b16 %v585, %v584
    %v603 = vpack.c.b16 %v587, %v586
    %v604 = vpack.c.b16 %v589, %v588
    %v605 = vpack.c.b16 %v591, %v590
    %v606 = vpack.c.b16 %v593, %v592
    %v607 = vpack.c.b16 %v595, %v594
    %v608 = vpack.c.b16 %v597, %v596
    %v609 = vpack.c.b16 %v599, %v598
    %v610 = vpack.c.b16 %v601, %v600
    %620 = vst [vmem:[%s2] sm:$0xff] %v602
    %621 = vst [vmem:[%s2 + $0x8] sm:$0xff] %v603
    %622 = vst [vmem:[%s2 + $0x10] sm:$0xff] %v604
    %623 = vst [vmem:[%s2 + $0x18] sm:$0xff] %v605
    %624 = vst [vmem:[%s2 + $0x20] sm:$0xff] %v606
    %625 = vst [vmem:[%s2 + $0x28] sm:$0xff] %v607
    %626 = vst [vmem:[%s2 + $0x30] sm:$0xff] %v608
    %627 = vst [vmem:[%s2 + $0x38] sm:$0xff] %v609
    %628 = vst [vmem:[%s2 + $0x40] sm:$0xff] %v610
    %v629 = vrot.slane %v214, 4
    %v630 = vadd.f32 %v214, %v629
    %v631 = vrot.slane %v630, 2
    %v632 = vadd.f32 %v630, %v631
    %v633 = vrot.slane %v632, 1
    %v634 = vadd.f32 %v632, %v633
    %v635 = vrot.slane %v216, 4
    %v636 = vadd.f32 %v216, %v635
    %v637 = vrot.slane %v636, 2
    %v638 = vadd.f32 %v636, %v637
    %v639 = vrot.slane %v638, 1
    %v640 = vadd.f32 %v638, %v639
    %v641 = vrot.slane %v255, 4
    %v642 = vadd.f32 %v255, %v641
    %v643 = vrot.slane %v642, 2
    %v644 = vadd.f32 %v642, %v643
    %v645 = vrot.slane %v644, 1
    %v646 = vadd.f32 %v644, %v645
    %v647 = vrot.slane %v257, 4
    %v648 = vadd.f32 %v257, %v647
    %v649 = vrot.slane %v648, 2
    %v650 = vadd.f32 %v648, %v649
    %v651 = vrot.slane %v650, 1
    %v652 = vadd.f32 %v650, %v651
    %v653 = vrot.slane %v296, 4
    %v654 = vadd.f32 %v296, %v653
    %v655 = vrot.slane %v654, 2
    %v656 = vadd.f32 %v654, %v655
    %v657 = vrot.slane %v656, 1
    %v658 = vadd.f32 %v656, %v657
    %v659 = vrot.slane %v298, 4
    %v660 = vadd.f32 %v298, %v659
    %v661 = vrot.slane %v660, 2
    %v662 = vadd.f32 %v660, %v661
    %v663 = vrot.slane %v662, 1
    %v664 = vadd.f32 %v662, %v663
    %v665 = vrot.slane %v337, 4
    %v666 = vadd.f32 %v337, %v665
    %v667 = vrot.slane %v666, 2
    %v668 = vadd.f32 %v666, %v667
    %v669 = vrot.slane %v668, 1
    %v670 = vadd.f32 %v668, %v669
    %v671 = vrot.slane %v339, 4
    %v672 = vadd.f32 %v339, %v671
    %v673 = vrot.slane %v672, 2
    %v674 = vadd.f32 %v672, %v673
    %v675 = vrot.slane %v674, 1
    %v676 = vadd.f32 %v674, %v675
    %v677 = vrot.slane %v378, 4
    %v678 = vadd.f32 %v378, %v677
    %v679 = vrot.slane %v678, 2
    %v680 = vadd.f32 %v678, %v679
    %v681 = vrot.slane %v680, 1
    %v682 = vadd.f32 %v680, %v681
    %v683 = vrot.slane %v380, 4
    %v684 = vadd.f32 %v380, %v683
    %v685 = vrot.slane %v684, 2
    %v686 = vadd.f32 %v684, %v685
    %v687 = vrot.slane %v686, 1
    %v688 = vadd.f32 %v686, %v687
    %v689 = vrot.slane %v419, 4
    %v690 = vadd.f32 %v419, %v689
    %v691 = vrot.slane %v690, 2
    %v692 = vadd.f32 %v690, %v691
    %v693 = vrot.slane %v692, 1
    %v694 = vadd.f32 %v692, %v693
    %v695 = vrot.slane %v421, 4
    %v696 = vadd.f32 %v421, %v695
    %v697 = vrot.slane %v696, 2
    %v698 = vadd.f32 %v696, %v697
    %v699 = vrot.slane %v698, 1
    %v700 = vadd.f32 %v698, %v699
    %v701 = vrot.slane %v460, 4
    %v702 = vadd.f32 %v460, %v701
    %v703 = vrot.slane %v702, 2
    %v704 = vadd.f32 %v702, %v703
    %v705 = vrot.slane %v704, 1
    %v706 = vadd.f32 %v704, %v705
    %v707 = vrot.slane %v462, 4
    %v708 = vadd.f32 %v462, %v707
    %v709 = vrot.slane %v708, 2
    %v710 = vadd.f32 %v708, %v709
    %v711 = vrot.slane %v710, 1
    %v712 = vadd.f32 %v710, %v711
    %v713 = vrot.slane %v501, 4
    %v714 = vadd.f32 %v501, %v713
    %v715 = vrot.slane %v714, 2
    %v716 = vadd.f32 %v714, %v715
    %v717 = vrot.slane %v716, 1
    %v718 = vadd.f32 %v716, %v717
    %v719 = vrot.slane %v503, 4
    %v720 = vadd.f32 %v503, %v719
    %v721 = vrot.slane %v720, 2
    %v722 = vadd.f32 %v720, %v721
    %v723 = vrot.slane %v722, 1
    %v724 = vadd.f32 %v722, %v723
    %v725 = vrot.slane %v542, 4
    %v726 = vadd.f32 %v542, %v725
    %v727 = vrot.slane %v726, 2
    %v728 = vadd.f32 %v726, %v727
    %v729 = vrot.slane %v728, 1
    %v730 = vadd.f32 %v728, %v729
    %v731 = vrot.slane %v544, 4
    %v732 = vadd.f32 %v544, %v731
    %v733 = vrot.slane %v732, 2
    %v734 = vadd.f32 %v732, %v733
    %v735 = vrot.slane %v734, 1
    %v736 = vadd.f32 %v734, %v735
    %v755 = vcombine.low %v634, %v640
    %v756 = vcombine.low %v646, %v652
    %v757 = vcombine.low %v658, %v664
    %v758 = vcombine.low %v670, %v676
    %v760 = vunpack.c.l.s4 1966171168
    %v761 = vunpack.c.0.s8 %v760
    %v762 = vlaneseq
    %v763 = vshrl.u32 %v762, 7
    %v764 = vsub.s32 %v761, %v763
    %v765 = vrot.slane %v755, %v764
    %v767 = vunpack.c.l.s4 1966171168
    %v768 = vunpack.c.0.s8 %v767
    %v769 = vlaneseq
    %v770 = vshrl.u32 %v769, 7
    %v771 = vsub.s32 %v768, %v770
    %v772 = vrot.slane %v756, %v771
    %v774 = vunpack.c.l.s4 1966171168
    %v775 = vunpack.c.0.s8 %v774
    %v776 = vlaneseq
    %v777 = vshrl.u32 %v776, 7
    %v778 = vsub.s32 %v775, %v777
    %v779 = vrot.slane %v757, %v778
    %v781 = vunpack.c.l.s4 1966171168
    %v782 = vunpack.c.0.s8 %v781
    %v783 = vlaneseq
    %v784 = vshrl.u32 %v783, 7
    %v785 = vsub.s32 %v782, %v784
    %v786 = vrot.slane %v758, %v785
    %v787 = vcombine.low %v765, %v772
    %v788 = vcombine.low %v779, %v786
    %v790 = vunpack.c.l.s4 1966171168
    %v791 = vunpack.c.0.s8 %v790
    %v792 = vlaneseq
    %v793 = vshrl.u32 %v792, 7
    %v794 = vsub.s32 %v791, %v793
    %v795 = vrot.slane %v787, %v794
    %v797 = vunpack.c.l.s4 1966171168
    %v798 = vunpack.c.0.s8 %v797
    %v799 = vlaneseq
    %v800 = vshrl.u32 %v799, 7
    %v801 = vsub.s32 %v798, %v800
    %v802 = vrot.slane %v788, %v801
    %v803 = vcombine.low %v795, %v802
    %v804 = vcombine.low %v682, %v688
    %v805 = vcombine.low %v694, %v700
    %v806 = vcombine.low %v706, %v712
    %v807 = vcombine.low %v718, %v724
    %v809 = vunpack.c.l.s4 1966171168
    %v810 = vunpack.c.0.s8 %v809
    %v811 = vlaneseq
    %v812 = vshrl.u32 %v811, 7
    %v813 = vsub.s32 %v810, %v812
    %v814 = vrot.slane %v804, %v813
    %v816 = vunpack.c.l.s4 1966171168
    %v817 = vunpack.c.0.s8 %v816
    %v818 = vlaneseq
    %v819 = vshrl.u32 %v818, 7
    %v820 = vsub.s32 %v817, %v819
    %v821 = vrot.slane %v805, %v820
    %v823 = vunpack.c.l.s4 1966171168
    %v824 = vunpack.c.0.s8 %v823
    %v825 = vlaneseq
    %v826 = vshrl.u32 %v825, 7
    %v827 = vsub.s32 %v824, %v826
    %v828 = vrot.slane %v806, %v827
    %v830 = vunpack.c.l.s4 1966171168
    %v831 = vunpack.c.0.s8 %v830
    %v832 = vlaneseq
    %v833 = vshrl.u32 %v832, 7
    %v834 = vsub.s32 %v831, %v833
    %v835 = vrot.slane %v807, %v834
    %v836 = vcombine.low %v814, %v821
    %v837 = vcombine.low %v828, %v835
    %v839 = vunpack.c.l.s4 1966171168
    %v840 = vunpack.c.0.s8 %v839
    %v841 = vlaneseq
    %v842 = vshrl.u32 %v841, 7
    %v843 = vsub.s32 %v840, %v842
    %v844 = vrot.slane %v836, %v843
    %v846 = vunpack.c.l.s4 1966171168
    %v847 = vunpack.c.0.s8 %v846
    %v848 = vlaneseq
    %v849 = vshrl.u32 %v848, 7
    %v850 = vsub.s32 %v847, %v849
    %v851 = vrot.slane %v837, %v850
    %v852 = vcombine.low %v844, %v851
    %v853 = vcombine.low %v730, %v736
    %v855 = vunpack.c.l.s4 1966171168
    %v856 = vunpack.c.0.s8 %v855
    %v857 = vlaneseq
    %v858 = vshrl.u32 %v857, 7
    %v859 = vsub.s32 %v856, %v858
    %v860 = vrot.slane %v853, %v859
    %v862 = vunpack.c.l.s4 1966171168
    %v863 = vunpack.c.0.s8 %v862
    %v864 = vlaneseq
    %v865 = vshrl.u32 %v864, 7
    %v866 = vsub.s32 %v863, %v865
    %v867 = vrot.slane %v860, %v866
    %871 = vst [vmem:[%s3] sm:$0xff] %v803
    %872 = vst [vmem:[%s3 + $0x8] sm:$0xff] %v852
    %v873 = vlaneseq
    %vm874 = vcmp.ge.s32.totalorder %v873, 0
    %vm875 = vcmp.lt.s32.totalorder %v873, 256
    %vm876 = vmand %vm874, %vm875
    %877 = vst.msk [vmem:[%s3 + $0x10] sm:$0x3] %vm876, %v867
    %v878 = vmul.f32 %v214, %v214
    %v879 = vmul.f32 %v216, %v216
    %v880 = vmul.f32 %v255, %v255
    %v881 = vmul.f32 %v257, %v257
    %v882 = vmul.f32 %v296, %v296
    %v883 = vmul.f32 %v298, %v298
    %v884 = vmul.f32 %v337, %v337
    %v885 = vmul.f32 %v339, %v339
    %v886 = vmul.f32 %v378, %v378
    %v887 = vmul.f32 %v380, %v380
    %v888 = vmul.f32 %v419, %v419
    %v889 = vmul.f32 %v421, %v421
    %v890 = vmul.f32 %v460, %v460
    %v891 = vmul.f32 %v462, %v462
    %v892 = vmul.f32 %v501, %v501
    %v893 = vmul.f32 %v503, %v503
    %v894 = vmul.f32 %v542, %v542
    %v895 = vmul.f32 %v544, %v544
    %v896 = vrot.slane %v878, 4
    %v897 = vadd.f32 %v878, %v896
    %v898 = vrot.slane %v897, 2
    %v899 = vadd.f32 %v897, %v898
    %v900 = vrot.slane %v899, 1
    %v901 = vadd.f32 %v899, %v900
    %v902 = vrot.slane %v879, 4
    %v903 = vadd.f32 %v879, %v902
    %v904 = vrot.slane %v903, 2
    %v905 = vadd.f32 %v903, %v904
    %v906 = vrot.slane %v905, 1
    %v907 = vadd.f32 %v905, %v906
    %v908 = vrot.slane %v880, 4
    %v909 = vadd.f32 %v880, %v908
    %v910 = vrot.slane %v909, 2
    %v911 = vadd.f32 %v909, %v910
    %v912 = vrot.slane %v911, 1
    %v913 = vadd.f32 %v911, %v912
    %v914 = vrot.slane %v881, 4
    %v915 = vadd.f32 %v881, %v914
    %v916 = vrot.slane %v915, 2
    %v917 = vadd.f32 %v915, %v916
    %v918 = vrot.slane %v917, 1
    %v919 = vadd.f32 %v917, %v918
    %v920 = vrot.slane %v882, 4
    %v921 = vadd.f32 %v882, %v920
    %v922 = vrot.slane %v921, 2
    %v923 = vadd.f32 %v921, %v922
    %v924 = vrot.slane %v923, 1
    %v925 = vadd.f32 %v923, %v924
    %v926 = vrot.slane %v883, 4
    %v927 = vadd.f32 %v883, %v926
    %v928 = vrot.slane %v927, 2
    %v929 = vadd.f32 %v927, %v928
    %v930 = vrot.slane %v929, 1
    %v931 = vadd.f32 %v929, %v930
    %v932 = vrot.slane %v884, 4
    %v933 = vadd.f32 %v884, %v932
    %v934 = vrot.slane %v933, 2
    %v935 = vadd.f32 %v933, %v934
    %v936 = vrot.slane %v935, 1
    %v937 = vadd.f32 %v935, %v936
    %v938 = vrot.slane %v885, 4
    %v939 = vadd.f32 %v885, %v938
    %v940 = vrot.slane %v939, 2
    %v941 = vadd.f32 %v939, %v940
    %v942 = vrot.slane %v941, 1
    %v943 = vadd.f32 %v941, %v942
    %v944 = vrot.slane %v886, 4
    %v945 = vadd.f32 %v886, %v944
    %v946 = vrot.slane %v945, 2
    %v947 = vadd.f32 %v945, %v946
    %v948 = vrot.slane %v947, 1
    %v949 = vadd.f32 %v947, %v948
    %v950 = vrot.slane %v887, 4
    %v951 = vadd.f32 %v887, %v950
    %v952 = vrot.slane %v951, 2
    %v953 = vadd.f32 %v951, %v952
    %v954 = vrot.slane %v953, 1
    %v955 = vadd.f32 %v953, %v954
    %v956 = vrot.slane %v888, 4
    %v957 = vadd.f32 %v888, %v956
    %v958 = vrot.slane %v957, 2
    %v959 = vadd.f32 %v957, %v958
    %v960 = vrot.slane %v959, 1
    %v961 = vadd.f32 %v959, %v960
    %v962 = vrot.slane %v889, 4
    %v963 = vadd.f32 %v889, %v962
    %v964 = vrot.slane %v963, 2
    %v965 = vadd.f32 %v963, %v964
    %v966 = vrot.slane %v965, 1
    %v967 = vadd.f32 %v965, %v966
    %v968 = vrot.slane %v890, 4
    %v969 = vadd.f32 %v890, %v968
    %v970 = vrot.slane %v969, 2
    %v971 = vadd.f32 %v969, %v970
    %v972 = vrot.slane %v971, 1
    %v973 = vadd.f32 %v971, %v972
    %v974 = vrot.slane %v891, 4
    %v975 = vadd.f32 %v891, %v974
    %v976 = vrot.slane %v975, 2
    %v977 = vadd.f32 %v975, %v976
    %v978 = vrot.slane %v977, 1
    %v979 = vadd.f32 %v977, %v978
    %v980 = vrot.slane %v892, 4
    %v981 = vadd.f32 %v892, %v980
    %v982 = vrot.slane %v981, 2
    %v983 = vadd.f32 %v981, %v982
    %v984 = vrot.slane %v983, 1
    %v985 = vadd.f32 %v983, %v984
    %v986 = vrot.slane %v893, 4
    %v987 = vadd.f32 %v893, %v986
    %v988 = vrot.slane %v987, 2
    %v989 = vadd.f32 %v987, %v988
    %v990 = vrot.slane %v989, 1
    %v991 = vadd.f32 %v989, %v990
    %v992 = vrot.slane %v894, 4
    %v993 = vadd.f32 %v894, %v992
    %v994 = vrot.slane %v993, 2
    %v995 = vadd.f32 %v993, %v994
    %v996 = vrot.slane %v995, 1
    %v997 = vadd.f32 %v995, %v996
    %v998 = vrot.slane %v895, 4
    %v999 = vadd.f32 %v895, %v998
    %v1000 = vrot.slane %v999, 2
    %v1001 = vadd.f32 %v999, %v1000
    %v1002 = vrot.slane %v1001, 1
    %v1003 = vadd.f32 %v1001, %v1002
    %v1022 = vcombine.low %v901, %v907
    %v1023 = vcombine.low %v913, %v919
    %v1024 = vcombine.low %v925, %v931
    %v1025 = vcombine.low %v937, %v943
    %v1027 = vunpack.c.l.s4 1966171168
    %v1028 = vunpack.c.0.s8 %v1027
    %v1029 = vlaneseq
    %v1030 = vshrl.u32 %v1029, 7
    %v1031 = vsub.s32 %v1028, %v1030
    %v1032 = vrot.slane %v1022, %v1031
    %v1034 = vunpack.c.l.s4 1966171168
    %v1035 = vunpack.c.0.s8 %v1034
    %v1036 = vlaneseq
    %v1037 = vshrl.u32 %v1036, 7
    %v1038 = vsub.s32 %v1035, %v1037
    %v1039 = vrot.slane %v1023, %v1038
    %v1041 = vunpack.c.l.s4 1966171168
    %v1042 = vunpack.c.0.s8 %v1041
    %v1043 = vlaneseq
    %v1044 = vshrl.u32 %v1043, 7
    %v1045 = vsub.s32 %v1042, %v1044
    %v1046 = vrot.slane %v1024, %v1045
    %v1048 = vunpack.c.l.s4 1966171168
    %v1049 = vunpack.c.0.s8 %v1048
    %v1050 = vlaneseq
    %v1051 = vshrl.u32 %v1050, 7
    %v1052 = vsub.s32 %v1049, %v1051
    %v1053 = vrot.slane %v1025, %v1052
    %v1054 = vcombine.low %v1032, %v1039
    %v1055 = vcombine.low %v1046, %v1053
    %v1057 = vunpack.c.l.s4 1966171168
    %v1058 = vunpack.c.0.s8 %v1057
    %v1059 = vlaneseq
    %v1060 = vshrl.u32 %v1059, 7
    %v1061 = vsub.s32 %v1058, %v1060
    %v1062 = vrot.slane %v1054, %v1061
    %v1064 = vunpack.c.l.s4 1966171168
    %v1065 = vunpack.c.0.s8 %v1064
    %v1066 = vlaneseq
    %v1067 = vshrl.u32 %v1066, 7
    %v1068 = vsub.s32 %v1065, %v1067
    %v1069 = vrot.slane %v1055, %v1068
    %v1070 = vcombine.low %v1062, %v1069
    %v1071 = vcombine.low %v949, %v955
    %v1072 = vcombine.low %v961, %v967
    %v1073 = vcombine.low %v973, %v979
    %v1074 = vcombine.low %v985, %v991
    %v1076 = vunpack.c.l.s4 1966171168
    %v1077 = vunpack.c.0.s8 %v1076
    %v1078 = vlaneseq
    %v1079 = vshrl.u32 %v1078, 7
    %v1080 = vsub.s32 %v1077, %v1079
    %v1081 = vrot.slane %v1071, %v1080
    %v1083 = vunpack.c.l.s4 1966171168
    %v1084 = vunpack.c.0.s8 %v1083
    %v1085 = vlaneseq
    %v1086 = vshrl.u32 %v1085, 7
    %v1087 = vsub.s32 %v1084, %v1086
    %v1088 = vrot.slane %v1072, %v1087
    %v1090 = vunpack.c.l.s4 1966171168
    %v1091 = vunpack.c.0.s8 %v1090
    %v1092 = vlaneseq
    %v1093 = vshrl.u32 %v1092, 7
    %v1094 = vsub.s32 %v1091, %v1093
    %v1095 = vrot.slane %v1073, %v1094
    %v1097 = vunpack.c.l.s4 1966171168
    %v1098 = vunpack.c.0.s8 %v1097
    %v1099 = vlaneseq
    %v1100 = vshrl.u32 %v1099, 7
    %v1101 = vsub.s32 %v1098, %v1100
    %v1102 = vrot.slane %v1074, %v1101
    %v1103 = vcombine.low %v1081, %v1088
    %v1104 = vcombine.low %v1095, %v1102
    %v1106 = vunpack.c.l.s4 1966171168
    %v1107 = vunpack.c.0.s8 %v1106
    %v1108 = vlaneseq
    %v1109 = vshrl.u32 %v1108, 7
    %v1110 = vsub.s32 %v1107, %v1109
    %v1111 = vrot.slane %v1103, %v1110
    %v1113 = vunpack.c.l.s4 1966171168
    %v1114 = vunpack.c.0.s8 %v1113
    %v1115 = vlaneseq
    %v1116 = vshrl.u32 %v1115, 7
    %v1117 = vsub.s32 %v1114, %v1116
    %v1118 = vrot.slane %v1104, %v1117
    %v1119 = vcombine.low %v1111, %v1118
    %v1120 = vcombine.low %v997, %v1003
    %v1122 = vunpack.c.l.s4 1966171168
    %v1123 = vunpack.c.0.s8 %v1122
    %v1124 = vlaneseq
    %v1125 = vshrl.u32 %v1124, 7
    %v1126 = vsub.s32 %v1123, %v1125
    %v1127 = vrot.slane %v1120, %v1126
    %v1129 = vunpack.c.l.s4 1966171168
    %v1130 = vunpack.c.0.s8 %v1129
    %v1131 = vlaneseq
    %v1132 = vshrl.u32 %v1131, 7
    %v1133 = vsub.s32 %v1130, %v1132
    %v1134 = vrot.slane %v1127, %v1133
    %1138 = vst [vmem:[%s4] sm:$0xff] %v1070
    %1139 = vst [vmem:[%s4 + $0x8] sm:$0xff] %v1119
    %1140 = vst.msk [vmem:[%s4 + $0x10] sm:$0x3] %vm876, %v1134
    // Predicated region
    $region14: #{_lambda_.16} parent=1 // pred_check
      _
    $region15: #{_lambda_.16} parent=1 // pred_check_branch
      %1142 = sbr.rel (0) target = $region17
    $region16: #{_lambda_.16} parent=1 // pred_region
      _
    $region17: #{_lambda_.16} parent=1 // pred_fallthru
      _
    // Predicated region
    $region18: #{_lambda_.16} parent=1 // pred_check
      _
    $region19: #{_lambda_.16} parent=1 // pred_check_branch
      %1144 = sbr.rel (0) target = $region21
    $region20: #{_lambda_.16} parent=1 // pred_region
      _
    $region21: #{_lambda_.16} parent=1 // pred_fallthru
      _
    // Predicated region
    $region22: #{_lambda_.16} parent=1 // pred_check
      _
    $region23: #{_lambda_.16} parent=1 // pred_check_branch
      %1146 = sbr.rel (0) target = $region25
    $region24: #{_lambda_.16} parent=1 // pred_region
      _
    $region25: #{_lambda_.16} parent=1 // pred_fallthru
      _
    // Predicated region
    $region26: #{_lambda_.16} parent=1 // pred_check
      _
    $region27: #{_lambda_.16} parent=1 // pred_check_branch
      %1148 = sbr.rel (0) target = $region29
    $region28: #{_lambda_.16} parent=1 // pred_region
      _
    $region29: #{_lambda_.16} parent=1 // pred_fallthru
      _
    // Predicated region
    $region30: #{_lambda_.16} parent=1 // pred_check
      _
    $region31: #{_lambda_.16} parent=1 // pred_check_branch
      %1150 = sbr.rel (0) target = $region33
    $region32: #{_lambda_.16} parent=1 // pred_region
      _
    $region33: #{_lambda_.16} parent=1 // pred_fallthru
      _
    // Predicated region
    $region34: #{_lambda_.16} parent=1 // pred_check
      _
    $region35: #{_lambda_.16} parent=1 // pred_check_branch
      %1152 = sbr.rel (0) target = $region37
    $region36: #{_lambda_.16} parent=1 // pred_region
      _
    $region37: #{_lambda_.16} parent=1 // pred_fallthru
      _
    %1153 = vsyncpa [#allocation3], 1

// kernel: _lambda_.19
$region0: #{_lambda_.19}
  #allocation0 [shape = 'u32[]', space=smem, size = 0x4, offset = 0x4, fixed_abs, tag = 'smem constant byte address 0x4 - core index']
  #allocation1 [shape = 'u32[144,128]{1,0:T(1,128)}', space=vmem, size = 0x12000, scoped, tag = 'internal scratch']
  %s0 = inlined_call_operand.vmem [shape: bf16[80,128], index: 0, kind: input, shape index: {}]
  %s1 = inlined_call_operand.vmem [shape: f32[1,128], index: 1, kind: input, shape index: {}]
  %s2 = inlined_call_operand.vmem [shape: f32[1,128], index: 2, kind: input, shape index: {}]
  %s3 = inlined_call_operand.vmem [shape: bf16[80,128], index: 3, kind: output, shape index: {}]
  %s4 = sld [smem:[#allocation0]]
  $region45: #{_lambda_.19} parent=0
    _
  %s6 = ssub.s32 1, %s4
  %s7 = scalar_select 0, %s6, %s4
  loop: start=0, step=1, limit=4
  $region2: #{_lambda_.19} parent=0 // loop_pre_header
    _
  $region3: #{_lambda_.19} parent=0 // loop_header
    %s9 = sphi 0, %s13
    %p10 = scmp.ge.s32.totalorder %s9, 4
    %s19 = sphi 0, %s21
    %s22 = sphi 0, %s19
    %s23 = sphi 0, %s22
    %s39 = sphi 0, %s23
    %s43 = sphi 0, %s43
    %s45 = sphi 0, %s43
    %s46 = sphi 0, %s45
    %s60 = sphi 0, %s46
    %s64 = sphi 0, %s64
    %s66 = sphi 0, %s64
    %s67 = sphi 0, %s66
    %s81 = sphi 0, %s67
    %s87 = sphi 0, %s89
    %s90 = sphi 0, %s87
    %s91 = sphi 0, %s90
    %s107 = sphi 0, %s91
  $region4: #{_lambda_.19} parent=0 // loop_header_branch
    %12 = sbr.rel (%p10) target = $region8
  $region5: #{_lambda_.19} parent=0 // loop_body
    %s14 = ssub.s32 %s9, 1
    %s15 = ssub.s32 %s9, 2
    %s16 = sadd.s32 %s9, 1
    %s17 = ssub.s32 %s9, %s16
    %p18 = scmp.eq.s32.totalorder %s17, 0
    %s20 = sadd.s32 %s19, 1
    %s21 = scalar_select %p18, %s19, %s20
    %p24 = pneg %p18
    %p25 = scmp.eq.s32.totalorder %s9, 1
    %p26 = por %p24, %p25
    %p27 = scmp.ne.s32.totalorder %s19, %s22
    %p28 = scmp.eq.s32.totalorder %s9, 0
    %p29 = por %p27, %p28
    %p30 = scmp.ne.s32.totalorder %s19, %s22
    %p31 = scmp.eq.s32.totalorder %s14, 1
    %p32 = por %p30, %p31
    %p33 = scmp.ne.s32.totalorder %s22, %s23
    %p34 = scmp.eq.s32.totalorder %s14, 0
    %p35 = por %p33, %p34
    %p36 = scmp.ne.s32.totalorder %s22, %s23
    %p37 = scmp.eq.s32.totalorder %s15, 1
    %p38 = por %p36, %p37
    %p40 = scmp.ne.s32.totalorder %s23, %s39
    %p41 = scmp.eq.s32.totalorder %s15, 0
    %p42 = por %p40, %p41
    %s44 = sadd.s32 %s43, 1
    %p47 = scmp.eq.s32.totalorder %s9, 1
    %p48 = scmp.ne.s32.totalorder %s43, %s45
    %p49 = scmp.eq.s32.totalorder %s9, 0
    %p50 = por %p48, %p49
    %p51 = scmp.ne.s32.totalorder %s43, %s45
    %p52 = scmp.eq.s32.totalorder %s14, 1
    %p53 = por %p51, %p52
    %p54 = scmp.ne.s32.totalorder %s45, %s46
    %p55 = scmp.eq.s32.totalorder %s14, 0
    %p56 = por %p54, %p55
    %p57 = scmp.ne.s32.totalorder %s45, %s46
    %p58 = scmp.eq.s32.totalorder %s15, 1
    %p59 = por %p57, %p58
    %p61 = scmp.ne.s32.totalorder %s46, %s60
    %p62 = scmp.eq.s32.totalorder %s15, 0
    %p63 = por %p61, %p62
    %s65 = sadd.s32 %s64, 1
    %p68 = scmp.eq.s32.totalorder %s9, 1
    %p69 = scmp.ne.s32.totalorder %s64, %s66
    %p70 = scmp.eq.s32.totalorder %s9, 0
    %p71 = por %p69, %p70
    %p72 = scmp.ne.s32.totalorder %s64, %s66
    %p73 = scmp.eq.s32.totalorder %s14, 1
    %p74 = por %p72, %p73
    %p75 = scmp.ne.s32.totalorder %s66, %s67
    %p76 = scmp.eq.s32.totalorder %s14, 0
    %p77 = por %p75, %p76
    %p78 = scmp.ne.s32.totalorder %s66, %s67
    %p79 = scmp.eq.s32.totalorder %s15, 1
    %p80 = por %p78, %p79
    %p82 = scmp.ne.s32.totalorder %s67, %s81
    %p83 = scmp.eq.s32.totalorder %s15, 0
    %p84 = por %p82, %p83
    %s85 = ssub.s32 %s9, %s16
    %p86 = scmp.eq.s32.totalorder %s85, 0
    %s88 = sadd.s32 %s87, 1
    %s89 = scalar_select %p86, %s87, %s88
    %p92 = pneg %p86
    %p93 = scmp.eq.s32.totalorder %s9, 1
    %p94 = por %p92, %p93
    %p95 = scmp.ne.s32.totalorder %s87, %s90
    %p96 = scmp.eq.s32.totalorder %s9, 0
    %p97 = por %p95, %p96
    %p98 = scmp.ne.s32.totalorder %s87, %s90
    %p99 = scmp.eq.s32.totalorder %s14, 1
    %p100 = por %p98, %p99
    %p101 = scmp.ne.s32.totalorder %s90, %s91
    %p102 = scmp.eq.s32.totalorder %s14, 0
    %p103 = por %p101, %p102
    %p104 = scmp.ne.s32.totalorder %s90, %s91
    %p105 = scmp.eq.s32.totalorder %s15, 1
    %p106 = por %p104, %p105
    %p108 = scmp.ne.s32.totalorder %s91, %s107
    %p109 = scmp.eq.s32.totalorder %s15, 0
    %p110 = por %p108, %p109
    %p111 = scmp.le.s32.totalorder 1, %s9
    %p112 = scmp.lt.s32.totalorder %s9, 3
    %p113 = pnand %p111, %p112
    %p114 = pneg %p113
    // Predicated region
    $region9: #{_lambda_.19} parent=5 // pred_check
      _
    $region10: #{_lambda_.19} parent=5 // pred_check_branch
      %116 = sbr.rel (%p113) target = $region12
    $region11: #{_lambda_.19} parent=5 // pred_region
      %s117 = ssub.s32 %s9, 1
      // Predicated region
      $region13: #{_lambda_.19} parent=11 // pred_check
        %p118 = pneg %p56
      $region14: #{_lambda_.19} parent=11 // pred_check_branch
        %120 = sbr.rel (%p118) target = $region16
      $region15: #{_lambda_.19} parent=11 // pred_region
        _
      $region16: #{_lambda_.19} parent=11 // pred_fallthru
        _
      // Predicated region
      $region17: #{_lambda_.19} parent=11 // pred_check
        %p121 = pneg %p77
      $region18: #{_lambda_.19} parent=11 // pred_check_branch
        %123 = sbr.rel (%p121) target = $region20
      $region19: #{_lambda_.19} parent=11 // pred_region
        _
      $region20: #{_lambda_.19} parent=11 // pred_fallthru
        _
    $region12: #{_lambda_.19} parent=5 // pred_fallthru
      _
    %p124 = scmp.lt.s32.totalorder %s9, 2
    // Predicated region
    $region21: #{_lambda_.19} parent=5 // pred_check
      %p125 = pneg %p124
    $region22: #{_lambda_.19} parent=5 // pred_check_branch
      %127 = sbr.rel (%p125) target = $region24
    $region23: #{_lambda_.19} parent=5 // pred_region
      // Predicated region
      $region25: #{_lambda_.19} parent=23 // pred_check
        %p128 = pneg %p29
      $region26: #{_lambda_.19} parent=23 // pred_check_branch
        %130 = sbr.rel (%p128) target = $region28
      $region27: #{_lambda_.19} parent=23 // pred_region
        %s131 = smul.u32 5, %s9
        %p132 = scmp.lt.s32.totalorder %s131, 9
        %s133 = scalar_select %p132, %s131, 9
        %s134 = smul.addr %s133, 4
        %s135 = scalar_lea.vmem %s0, %s134
        %s136 = smul.u32 5, %s9
      $region28: #{_lambda_.19} parent=23 // pred_fallthru
        _
    $region24: #{_lambda_.19} parent=5 // pred_fallthru
      _
    %p137 = scmp.le.s32.totalorder 1, %s9
    %p138 = scmp.lt.s32.totalorder %s9, 3
    %p139 = pnand %p137, %p138
    %p140 = pneg %p139
    // Predicated region
    $region29: #{_lambda_.19} parent=5 // pred_check
      _
    $region30: #{_lambda_.19} parent=5 // pred_check_branch
      %142 = sbr.rel (%p139) target = $region32
    $region31: #{_lambda_.19} parent=5 // pred_region
      %s143 = ssub.s32 %s9, 1
      %s144 = smul.u32 5, %s14
      %p145 = scmp.lt.s32.totalorder %s144, 9
      %s146 = scalar_select %p145, %s144, 9
      %s147 = smul.addr %s146, 4
      %s148 = scalar_lea.vmem %s0, %s147
      %p149 = pneg %p35
      %p150 = pneg %p32
      %p151 = pneg %p56
      %p152 = pneg %p53
      %p153 = pneg %p77
      %p154 = pneg %p74
      %p155 = pneg %p103
      %p156 = pneg %p100
      %s157 = smul.u32 5, %s14
      %p158 = scmp.lt.s32.totalorder %s157, 9
      %s159 = scalar_select %p158, %s157, 9
      %s160 = smul.addr %s159, 4
      %s161 = scalar_lea.vmem %s3, %s160
      %s162 = smul.u32 5, %s14
      %p163 = scmp.lt.s32.totalorder %s162, 9
      %s164 = scalar_select %p163, %s162, 9
      %s165 = smul.addr %s164, 4
      %s166 = scalar_lea.vmem %s0, %s165
      %s167 = smul.u32 5, %s14
      %s168 = smul.u32 5, %s14
      %p169 = scmp.lt.s32.totalorder %s168, 9
      %s170 = scalar_select %p169, %s168, 9
      %s171 = smul.addr %s170, 4
      %s172 = scalar_lea.vmem %s3, %s171
      %s173 = smul.u32 5, %s14
      %v174 = vld [vmem:[%s166] sm:$0xf]
      %v175 = vld [vmem:[%s166 + $0x4] sm:$0xf]
      %v176 = vld [vmem:[%s166 + $0x8] sm:$0xf]
      %v177 = vld [vmem:[%s166 + $0xc] sm:$0xf]
      %v178 = vld [vmem:[%s166 + $0x10] sm:$0xf]
      %v179 = vunpack.c.l.bf16 %v174
      %v180 = vunpack.c.l.bf16 %v175
      %v181 = vunpack.c.l.bf16 %v176
      %v182 = vunpack.c.l.bf16 %v177
      %v183 = vunpack.c.l.bf16 %v178
      %v184 = vld [vmem:[%s1] sm:$0x1]
      %v186 = vlaneseq
      %v187 = vshrl.u32 %v186, 7
      %v188 = vsub.s32 0, %v187
      %v189 = vrot.slane %v184, %v188
      %v191 = vmul.f32 %v179, %v189
      %v192 = vmul.f32 %v180, %v189
      %v193 = vmul.f32 %v181, %v189
      %v194 = vmul.f32 %v182, %v189
      %v195 = vmul.f32 %v183, %v189
      %v196 = vld [vmem:[%s2] sm:$0x1]
      %v198 = vlaneseq
      %v199 = vshrl.u32 %v198, 7
      %v200 = vsub.s32 0, %v199
      %v201 = vrot.slane %v196, %v200
      %v203 = vadd.f32 %v191, %v201
      %v204 = vadd.f32 %v192, %v201
      %v205 = vadd.f32 %v193, %v201
      %v206 = vadd.f32 %v194, %v201
      %v207 = vadd.f32 %v195, %v201
      %v208 = vmax.f32 %v203, 0.0
      %v209 = vmax.f32 %v204, 0.0
      %v210 = vmax.f32 %v205, 0.0
      %v211 = vmax.f32 %v206, 0.0
      %v212 = vmax.f32 %v207, 0.0
      %v213 = vpack.c.bf16 %v209, %v208
      %v214 = vpack.c.bf16 %v211, %v210
      %v215 = vpack.c.bf16 %v212, %v212
      %v219 = vunpack.c.l.b16 %v213
      %v220 = vunpack.c.h.b16 %v213
      %v221 = vunpack.c.l.b16 %v214
      %v222 = vunpack.c.h.b16 %v214
      %v223 = vunpack.c.l.b16 %v215
      %v224 = vpack.c.b16 %v219, %v219
      %v225 = vpack.c.b16 %v220, %v220
      %v226 = vpack.c.b16 %v221, %v221
      %v227 = vpack.c.b16 %v222, %v222
      %v228 = vpack.c.b16 %v223, %v223
      %234 = vst [vmem:[%s172] sm:$0xf] %v224
      %235 = vst [vmem:[%s172 + $0x4] sm:$0xf] %v225
      %236 = vst [vmem:[%s172 + $0x8] sm:$0xf] %v226
      %237 = vst [vmem:[%s172 + $0xc] sm:$0xf] %v227
      %238 = vst [vmem:[%s172 + $0x10] sm:$0xf] %v228
      %s239 = smul.u32 5, %s14
      %p240 = scmp.lt.s32.totalorder %s239, 9
      %s241 = scalar_select %p240, %s239, 9
      %s242 = smul.addr %s241, 4
      %s243 = scalar_lea.vmem %s3, %s242
      // Predicated region
      $region33: #{_lambda_.19} parent=31 // pred_check
        %p244 = pneg %p100
      $region34: #{_lambda_.19} parent=31 // pred_check_branch
        %246 = sbr.rel (%p244) target = $region36
      $region35: #{_lambda_.19} parent=31 // pred_region
        %s247 = smul.u32 5, %s14
      $region36: #{_lambda_.19} parent=31 // pred_fallthru
        _
    $region32: #{_lambda_.19} parent=5 // pred_fallthru
      _
    %p248 = scmp.le.s32.totalorder 2, %s9
    // Predicated region
    $region37: #{_lambda_.19} parent=5 // pred_check
      %p249 = pneg %p248
    $region38: #{_lambda_.19} parent=5 // pred_check_branch
      %251 = sbr.rel (%p249) target = $region40
    $region39: #{_lambda_.19} parent=5 // pred_region
      %s252 = ssub.s32 %s9, 2
      // Predicated region
      $region41: #{_lambda_.19} parent=39 // pred_check
        %p253 = pneg %p106
      $region42: #{_lambda_.19} parent=39 // pred_check_branch
        %255 = sbr.rel (%p253) target = $region44
      $region43: #{_lambda_.19} parent=39 // pred_region
        %s256 = smul.u32 5, %s15
        %p257 = scmp.lt.s32.totalorder %s256, 9
        %s258 = scalar_select %p257, %s256, 9
        %s259 = smul.addr %s258, 4
        %s260 = scalar_lea.vmem %s3, %s259
      $region44: #{_lambda_.19} parent=39 // pred_fallthru
        _
    $region40: #{_lambda_.19} parent=5 // pred_fallthru
      _
  $region6: #{_lambda_.19} parent=0 // loop_footer
    %s13 = sadd.s32 1, %s9
  $region7: #{_lambda_.19} parent=0 // loop_footer_branch
    %8 = sbr.rel target = $region3
  $region8: #{_lambda_.19} parent=0 // loop_exit
    _

// kernel: _lambda_.21
$region0: #{_lambda_.21}
  #allocation0 [shape = 'u32[]', space=smem, size = 0x4, offset = 0x4, fixed_abs, tag = 'smem constant byte address 0x4 - core index']
  #allocation1 [shape = 'u32[144,128]{1,0:T(1,128)}', space=vmem, size = 0x12000, scoped, tag = 'internal scratch']
  %s0 = inlined_call_operand.vmem [shape: bf16[96,256], index: 0, kind: input, shape index: {}]
  %s1 = inlined_call_operand.vmem [shape: bf16[256,128], index: 1, kind: input, shape index: {}]
  %s2 = inlined_call_operand.vmem [shape: bf16[96,128], index: 2, kind: output, shape index: {0}]
  %s3 = inlined_call_operand.vmem [shape: f32[2,1,128], index: 3, kind: output, shape index: {1}]
  %s4 = inlined_call_operand.vmem [shape: f32[2,1,128], index: 4, kind: output, shape index: {2}]
  %5 = xla_tuple %s2, %s3, %s4
  %s6 = sld [smem:[#allocation0]]
  $region57: #{_lambda_.21} parent=0
    _
  %s8 = ssub.s32 1, %s6
  %s9 = scalar_select 0, %s8, %s6
  loop: start=0, step=1, limit=4
  $region2: #{_lambda_.21} parent=0 // loop_pre_header
    _
  $region3: #{_lambda_.21} parent=0 // loop_header
    %s11 = sphi 0, %s15
    %p12 = scmp.ge.s32.totalorder %s11, 4
    %s21 = sphi 0, %s23
    %s24 = sphi 0, %s21
    %s25 = sphi 0, %s24
    %s41 = sphi 0, %s25
    %s45 = sphi 0, %s45
    %s47 = sphi 0, %s45
    %s48 = sphi 0, %s47
    %s62 = sphi 0, %s48
    %s68 = sphi 0, %s70
    %s71 = sphi 0, %s68
    %s72 = sphi 0, %s71
    %s88 = sphi 0, %s72
    %s94 = sphi 0, %s96
    %s97 = sphi 0, %s94
    %s98 = sphi 0, %s97
    %s114 = sphi 0, %s98
    %s120 = sphi 0, %s122
    %s123 = sphi 0, %s120
    %s124 = sphi 0, %s123
    %s140 = sphi 0, %s124
  $region4: #{_lambda_.21} parent=0 // loop_header_branch
    %14 = sbr.rel (%p12) target = $region8
  $region5: #{_lambda_.21} parent=0 // loop_body
    %s16 = ssub.s32 %s11, 1
    %s17 = ssub.s32 %s11, 2
    %s18 = sadd.s32 %s11, 1
    %s19 = ssub.s32 %s11, %s18
    %p20 = scmp.eq.s32.totalorder %s19, 0
    %s22 = sadd.s32 %s21, 1
    %s23 = scalar_select %p20, %s21, %s22
    %p26 = pneg %p20
    %p27 = scmp.eq.s32.totalorder %s11, 1
    %p28 = por %p26, %p27
    %p29 = scmp.ne.s32.totalorder %s21, %s24
    %p30 = scmp.eq.s32.totalorder %s11, 0
    %p31 = por %p29, %p30
    %p32 = scmp.ne.s32.totalorder %s21, %s24
    %p33 = scmp.eq.s32.totalorder %s16, 1
    %p34 = por %p32, %p33
    %p35 = scmp.ne.s32.totalorder %s24, %s25
    %p36 = scmp.eq.s32.totalorder %s16, 0
    %p37 = por %p35, %p36
    %p38 = scmp.ne.s32.totalorder %s24, %s25
    %p39 = scmp.eq.s32.totalorder %s17, 1
    %p40 = por %p38, %p39
    %p42 = scmp.ne.s32.totalorder %s25, %s41
    %p43 = scmp.eq.s32.totalorder %s17, 0
    %p44 = por %p42, %p43
    %s46 = sadd.s32 %s45, 1
    %p49 = scmp.eq.s32.totalorder %s11, 1
    %p50 = scmp.ne.s32.totalorder %s45, %s47
    %p51 = scmp.eq.s32.totalorder %s11, 0
    %p52 = por %p50, %p51
    %p53 = scmp.ne.s32.totalorder %s45, %s47
    %p54 = scmp.eq.s32.totalorder %s16, 1
    %p55 = por %p53, %p54
    %p56 = scmp.ne.s32.totalorder %s47, %s48
    %p57 = scmp.eq.s32.totalorder %s16, 0
    %p58 = por %p56, %p57
    %p59 = scmp.ne.s32.totalorder %s47, %s48
    %p60 = scmp.eq.s32.totalorder %s17, 1
    %p61 = por %p59, %p60
    %p63 = scmp.ne.s32.totalorder %s48, %s62
    %p64 = scmp.eq.s32.totalorder %s17, 0
    %p65 = por %p63, %p64
    %s66 = ssub.s32 %s11, %s18
    %p67 = scmp.eq.s32.totalorder %s66, 0
    %s69 = sadd.s32 %s68, 1
    %s70 = scalar_select %p67, %s68, %s69
    %p73 = pneg %p67
    %p74 = scmp.eq.s32.totalorder %s11, 1
    %p75 = por %p73, %p74
    %p76 = scmp.ne.s32.totalorder %s68, %s71
    %p77 = scmp.eq.s32.totalorder %s11, 0
    %p78 = por %p76, %p77
    %p79 = scmp.ne.s32.totalorder %s68, %s71
    %p80 = scmp.eq.s32.totalorder %s16, 1
    %p81 = por %p79, %p80
    %p82 = scmp.ne.s32.totalorder %s71, %s72
    %p83 = scmp.eq.s32.totalorder %s16, 0
    %p84 = por %p82, %p83
    %p85 = scmp.ne.s32.totalorder %s71, %s72
    %p86 = scmp.eq.s32.totalorder %s17, 1
    %p87 = por %p85, %p86
    %p89 = scmp.ne.s32.totalorder %s72, %s88
    %p90 = scmp.eq.s32.totalorder %s17, 0
    %p91 = por %p89, %p90
    %s92 = ssub.s32 %s11, %s18
    %p93 = scmp.eq.s32.totalorder %s92, 0
    %s95 = sadd.s32 %s94, 1
    %s96 = scalar_select %p93, %s94, %s95
    %p99 = pneg %p93
    %p100 = scmp.eq.s32.totalorder %s11, 1
    %p101 = por %p99, %p100
    %p102 = scmp.ne.s32.totalorder %s94, %s97
    %p103 = scmp.eq.s32.totalorder %s11, 0
    %p104 = por %p102, %p103
    %p105 = scmp.ne.s32.totalorder %s94, %s97
    %p106 = scmp.eq.s32.totalorder %s16, 1
    %p107 = por %p105, %p106
    %p108 = scmp.ne.s32.totalorder %s97, %s98
    %p109 = scmp.eq.s32.totalorder %s16, 0
    %p110 = por %p108, %p109
    %p111 = scmp.ne.s32.totalorder %s97, %s98
    %p112 = scmp.eq.s32.totalorder %s17, 1
    %p113 = por %p111, %p112
    %p115 = scmp.ne.s32.totalorder %s98, %s114
    %p116 = scmp.eq.s32.totalorder %s17, 0
    %p117 = por %p115, %p116
    %s118 = ssub.s32 %s11, %s18
    %p119 = scmp.eq.s32.totalorder %s118, 0
    %s121 = sadd.s32 %s120, 1
    %s122 = scalar_select %p119, %s120, %s121
    %p125 = pneg %p119
    %p126 = scmp.eq.s32.totalorder %s11, 1
    %p127 = por %p125, %p126
    %p128 = scmp.ne.s32.totalorder %s120, %s123
    %p129 = scmp.eq.s32.totalorder %s11, 0
    %p130 = por %p128, %p129
    %p131 = scmp.ne.s32.totalorder %s120, %s123
    %p132 = scmp.eq.s32.totalorder %s16, 1
    %p133 = por %p131, %p132
    %p134 = scmp.ne.s32.totalorder %s123, %s124
    %p135 = scmp.eq.s32.totalorder %s16, 0
    %p136 = por %p134, %p135
    %p137 = scmp.ne.s32.totalorder %s123, %s124
    %p138 = scmp.eq.s32.totalorder %s17, 1
    %p139 = por %p137, %p138
    %p141 = scmp.ne.s32.totalorder %s124, %s140
    %p142 = scmp.eq.s32.totalorder %s17, 0
    %p143 = por %p141, %p142
    %p144 = scmp.le.s32.totalorder 1, %s11
    %p145 = scmp.lt.s32.totalorder %s11, 3
    %p146 = pnand %p144, %p145
    %p147 = pneg %p146
    // Predicated region
    $region9: #{_lambda_.21} parent=5 // pred_check
      _
    $region10: #{_lambda_.21} parent=5 // pred_check_branch
      %149 = sbr.rel (%p146) target = $region12
    $region11: #{_lambda_.21} parent=5 // pred_region
      %s150 = ssub.s32 %s11, 1
      // Predicated region
      $region13: #{_lambda_.21} parent=11 // pred_check
        %p151 = pneg %p58
      $region14: #{_lambda_.21} parent=11 // pred_check_branch
        %153 = sbr.rel (%p151) target = $region16
      $region15: #{_lambda_.21} parent=11 // pred_region
        _
      $region16: #{_lambda_.21} parent=11 // pred_fallthru
        _
    $region12: #{_lambda_.21} parent=5 // pred_fallthru
      _
    %p154 = scmp.lt.s32.totalorder %s11, 2
    // Predicated region
    $region17: #{_lambda_.21} parent=5 // pred_check
      %p155 = pneg %p154
    $region18: #{_lambda_.21} parent=5 // pred_check_branch
      %157 = sbr.rel (%p155) target = $region20
    $region19: #{_lambda_.21} parent=5 // pred_region
      // Predicated region
      $region21: #{_lambda_.21} parent=19 // pred_check
        %p158 = pneg %p31
      $region22: #{_lambda_.21} parent=19 // pred_check_branch
        %160 = sbr.rel (%p158) target = $region24
      $region23: #{_lambda_.21} parent=19 // pred_region
        %s161 = smul.u32 6, %s11
        %p162 = scmp.lt.s32.totalorder %s161, 11
        %s163 = scalar_select %p162, %s161, 11
        %s164 = smul.addr %s163, 2
        %s165 = smul.addr %s164, 4
        %s166 = scalar_lea.vmem %s0, %s165
        %s167 = smul.u32 6, %s11
      $region24: #{_lambda_.21} parent=19 // pred_fallthru
        _
    $region20: #{_lambda_.21} parent=5 // pred_fallthru
      _
    %p168 = scmp.le.s32.totalorder 1, %s11
    %p169 = scmp.lt.s32.totalorder %s11, 3
    %p170 = pnand %p168, %p169
    %p171 = pneg %p170
    // Predicated region
    $region25: #{_lambda_.21} parent=5 // pred_check
      _
    $region26: #{_lambda_.21} parent=5 // pred_check_branch
      %173 = sbr.rel (%p170) target = $region28
    $region27: #{_lambda_.21} parent=5 // pred_region
      %s174 = ssub.s32 %s11, 1
      %s175 = smul.u32 6, %s16
      %p176 = scmp.lt.s32.totalorder %s175, 11
      %s177 = scalar_select %p176, %s175, 11
      %s178 = smul.addr %s177, 2
      %s179 = smul.addr %s178, 4
      %s180 = scalar_lea.vmem %s0, %s179
      %p181 = pneg %p37
      %p182 = pneg %p34
      %p183 = pneg %p58
      %p184 = pneg %p55
      %p185 = pneg %p84
      %p186 = pneg %p81
      %s187 = smul.u32 6, %s16
      %p188 = scmp.lt.s32.totalorder %s187, 11
      %s189 = scalar_select %p188, %s187, 11
      %s190 = smul.addr %s189, 4
      %s191 = scalar_lea.vmem %s2, %s190
      %p192 = pneg %p110
      %p193 = pneg %p107
      %p194 = scmp.lt.s32.totalorder %s16, 1
      %s195 = scalar_select %p194, %s16, 1
      %s196 = scalar_lea.vmem %s3, %s195
      %p197 = pneg %p136
      %p198 = pneg %p133
      %p199 = scmp.lt.s32.totalorder %s16, 1
      %s200 = scalar_select %p199, %s16, 1
      %s201 = scalar_lea.vmem %s4, %s200
      %s202 = smul.u32 6, %s16
      %p203 = scmp.lt.s32.totalorder %s202, 11
      %s204 = scalar_select %p203, %s202, 11
      %s205 = smul.addr %s204, 2
      %s206 = smul.addr %s205, 4
      %s207 = scalar_lea.vmem %s0, %s206
      %s208 = smul.u32 6, %s16
      %s209 = smul.u32 6, %s16
      %p210 = scmp.lt.s32.totalorder %s209, 11
      %s211 = scalar_select %p210, %s209, 11
      %s212 = smul.addr %s211, 4
      %s213 = scalar_lea.vmem %s2, %s212
      %s214 = smul.u32 6, %s16
      %p215 = scmp.lt.s32.totalorder %s16, 1
      %s216 = scalar_select %p215, %s16, 1
      %s217 = scalar_lea.vmem %s3, %s216
      %p218 = scmp.lt.s32.totalorder %s16, 1
      %s219 = scalar_select %p218, %s16, 1
      %s220 = scalar_lea.vmem %s4, %s219
      %v222 = vld [vmem:[%s207] sm:$0xff]
      %v223 = vld [vmem:[%s207 + $0x8] sm:$0xff]
      %v224 = vld [vmem:[%s207 + $0x10] sm:$0xff]
      %v225 = vld [vmem:[%s207 + $0x18] sm:$0xff]
      %v226 = vld [vmem:[%s207 + $0x20] sm:$0xff]
      %v227 = vld [vmem:[%s207 + $0x28] sm:$0xff]
      %v228 = vld [vmem:[%s1] sm:$0xf]
      %v229 = vld [vmem:[%s1 + $0x4] sm:$0xf]
      %v230 = vld [vmem:[%s1 + $0x8] sm:$0xf]
      %v231 = vld [vmem:[%s1 + $0xc] sm:$0xf]
      %v232 = vld [vmem:[%s1 + $0x10] sm:$0xf]
      %v233 = vld [vmem:[%s1 + $0x14] sm:$0xf]
      %v234 = vld [vmem:[%s1 + $0x18] sm:$0xf]
      %v235 = vld [vmem:[%s1 + $0x1c] sm:$0xf]
      %v236 = vld [vmem:[%s1 + $0x20] sm:$0xf]
      %v237 = vld [vmem:[%s1 + $0x24] sm:$0xf]
      %v238 = vld [vmem:[%s1 + $0x28] sm:$0xf]
      %v239 = vld [vmem:[%s1 + $0x2c] sm:$0xf]
      %v240 = vld [vmem:[%s1 + $0x30] sm:$0xf]
      %v241 = vld [vmem:[%s1 + $0x34] sm:$0xf]
      %v242 = vld [vmem:[%s1 + $0x38] sm:$0xf]
      %v243 = vld [vmem:[%s1 + $0x3c] sm:$0xf]
      %v244 = vld [vmem:[%s1 + $0x40] sm:$0xf]
      %v245 = vld [vmem:[%s1 + $0x44] sm:$0xf]
      %v246 = vld [vmem:[%s1 + $0x48] sm:$0xf]
      %v247 = vld [vmem:[%s1 + $0x4c] sm:$0xf]
      %v248 = vld [vmem:[%s1 + $0x50] sm:$0xf]
      %v249 = vld [vmem:[%s1 + $0x54] sm:$0xf]
      %v250 = vld [vmem:[%s1 + $0x58] sm:$0xf]
      %v251 = vld [vmem:[%s1 + $0x5c] sm:$0xf]
      %v252 = vld [vmem:[%s1 + $0x60] sm:$0xf]
      %v253 = vld [vmem:[%s1 + $0x64] sm:$0xf]
      %v254 = vld [vmem:[%s1 + $0x68] sm:$0xf]
      %v255 = vld [vmem:[%s1 + $0x6c] sm:$0xf]
      %v256 = vld [vmem:[%s1 + $0x70] sm:$0xf]
      %v257 = vld [vmem:[%s1 + $0x74] sm:$0xf]
      %v258 = vld [vmem:[%s1 + $0x78] sm:$0xf]
      %v259 = vld [vmem:[%s1 + $0x7c] sm:$0xf]
      %v266 = vunpack.c.l.b16 %v222
      %v267 = vunpack.c.h.b16 %v222
      %v268 = vunpack.c.l.b16 %v223
      %v269 = vunpack.c.h.b16 %v223
      %v270 = vunpack.c.l.b16 %v224
      %v271 = vunpack.c.h.b16 %v224
      %v272 = vunpack.c.l.b16 %v225
      %v273 = vunpack.c.h.b16 %v225
      %v274 = vunpack.c.l.b16 %v226
      %v275 = vunpack.c.h.b16 %v226
      %v276 = vunpack.c.l.b16 %v227
      %v277 = vunpack.c.h.b16 %v227
      %v278 = vpack.c.b16 %v268, %v266
      %v279 = vpack.c.b16 %v269, %v267
      %v280 = vpack.c.b16 %v272, %v270
      %v281 = vpack.c.b16 %v273, %v271
      %v282 = vpack.c.b16 %v276, %v274
      %v283 = vpack.c.b16 %v277, %v275
      %v322 = vunpack.c.l.b16 %v228
      %v323 = vunpack.c.l.b16 %v229
      %v324 = vunpack.c.l.b16 %v230
      %v325 = vunpack.c.l.b16 %v231
      %v326 = vunpack.c.l.b16 %v232
      %v327 = vunpack.c.l.b16 %v233
      %v328 = vunpack.c.l.b16 %v234
      %v329 = vunpack.c.l.b16 %v235
      %v330 = vunpack.c.l.b16 %v236
      %v331 = vunpack.c.l.b16 %v237
      %v332 = vunpack.c.l.b16 %v238
      %v333 = vunpack.c.l.b16 %v239
      %v334 = vunpack.c.l.b16 %v240
      %v335 = vunpack.c.l.b16 %v241
      %v336 = vunpack.c.l.b16 %v242
      %v337 = vunpack.c.l.b16 %v243
      %v338 = vunpack.c.l.b16 %v244
      %v339 = vunpack.c.l.b16 %v245
      %v340 = vunpack.c.l.b16 %v246
      %v341 = vunpack.c.l.b16 %v247
      %v342 = vunpack.c.l.b16 %v248
      %v343 = vunpack.c.l.b16 %v249
      %v344 = vunpack.c.l.b16 %v250
      %v345 = vunpack.c.l.b16 %v251
      %v346 = vunpack.c.l.b16 %v252
      %v347 = vunpack.c.l.b16 %v253
      %v348 = vunpack.c.l.b16 %v254
      %v349 = vunpack.c.l.b16 %v255
      %v350 = vunpack.c.l.b16 %v256
      %v351 = vunpack.c.l.b16 %v257
      %v352 = vunpack.c.l.b16 %v258
      %v353 = vunpack.c.l.b16 %v259
      %v354 = vpack.c.b16 %v323, %v322
      %v355 = vpack.c.b16 %v325, %v324
      %v356 = vpack.c.b16 %v327, %v326
      %v357 = vpack.c.b16 %v329, %v328
      %v358 = vpack.c.b16 %v331, %v330
      %v359 = vpack.c.b16 %v333, %v332
      %v360 = vpack.c.b16 %v335, %v334
      %v361 = vpack.c.b16 %v337, %v336
      %v362 = vpack.c.b16 %v339, %v338
      %v363 = vpack.c.b16 %v341, %v340
      %v364 = vpack.c.b16 %v343, %v342
      %v365 = vpack.c.b16 %v345, %v344
      %v366 = vpack.c.b16 %v347, %v346
      %v367 = vpack.c.b16 %v349, %v348
      %v368 = vpack.c.b16 %v351, %v350
      %v369 = vpack.c.b16 %v353, %v352
      %386 = vmatprep.subr.bf16.mxu0 0
      %387 = vmatpush1.bf16.msra.mxu0 %v354
      %388 = vmatprep.subr.bf16.mxu0 0
      %389 = vmatpush1.bf16.msra.mxu0 %v355
      %390 = vmatprep.subr.bf16.mxu0 0
      %391 = vmatpush1.bf16.msra.mxu0 %v356
      %392 = vmatprep.subr.bf16.mxu0 0
      %393 = vmatpush1.bf16.msra.mxu0 %v357
      %394 = vmatprep.subr.bf16.mxu0 0
      %395 = vmatpush1.bf16.msra.mxu0 %v358
      %396 = vmatprep.subr.bf16.mxu0 0
      %397 = vmatpush1.bf16.msra.mxu0 %v359
      %398 = vmatprep.subr.bf16.mxu0 0
      %399 = vmatpush1.bf16.msra.mxu0 %v360
      %400 = vmatprep.subr.bf16.mxu0 0
      %401 = vmatpush1.bf16.msra.mxu0 %v361
      %402 = vmatprep.subr.bf16.mxu0 0
      %403 = vmatpush1.bf16.msra.mxu0 %v362
      %404 = vmatprep.subr.bf16.mxu0 0
      %405 = vmatpush1.bf16.msra.mxu0 %v363
      %406 = vmatprep.subr.bf16.mxu0 0
      %407 = vmatpush1.bf16.msra.mxu0 %v364
      %408 = vmatprep.subr.bf16.mxu0 0
      %409 = vmatpush1.bf16.msra.mxu0 %v365
      %410 = vmatprep.subr.bf16.mxu0 0
      %411 = vmatpush1.bf16.msra.mxu0 %v366
      %412 = vmatprep.subr.bf16.mxu0 0
      %413 = vmatpush1.bf16.msra.mxu0 %v367
      %414 = vmatprep.subr.bf16.mxu0 0
      %415 = vmatpush1.bf16.msra.mxu0 %v368
      %416 = vmatprep.subr.bf16.mxu0 0
      %417 = vmatpush1.bf16.msra.mxu0 %v369
      %418 = vmatprep.mubr.bf16.mxu0 %v279
      %419 = vmatmul.mubr.bf16.gmra.mrb[0].mxu0 %v278
      %v420 = vpop.f32.mrb[0].mxu0
      %v421 = vadd.f32 0.0, %v420
      %v422 = vpop.f32.mrb[0].mxu0
      %v423 = vpop.f32.mrb[0].mxu0
      %v424 = vadd.f32 0.0, %v423
      %v425 = vpop.f32.mrb[0].mxu0
      %426 = vmatprep.mubr.bf16.mxu0 %v281
      %427 = vmatmul.mubr.bf16.gmra.mrb[0].mxu0 %v280
      %v428 = vpop.f32.mrb[0].mxu0
      %v429 = vadd.f32 0.0, %v428
      %v430 = vpop.f32.mrb[0].mxu0
      %v431 = vpop.f32.mrb[0].mxu0
      %v432 = vadd.f32 0.0, %v431
      %v433 = vpop.f32.mrb[0].mxu0
      %434 = vmatprep.mubr.bf16.mxu0 %v283
      %435 = vmatmul.mubr.bf16.gmra.mrb[0].mxu0 %v282
      %v436 = vpop.f32.mrb[0].mxu0
      %v437 = vadd.f32 0.0, %v436
      %v438 = vpop.f32.mrb[0].mxu0
      %v439 = vpop.f32.mrb[0].mxu0
      %v440 = vadd.f32 0.0, %v439
      %v441 = vpop.f32.mrb[0].mxu0
      %442 = vdwg.mxu0
      %v443 = vpack.c.bf16 %v424, %v421
      %v444 = vpack.c.bf16 %v432, %v429
      %v445 = vpack.c.bf16 %v440, %v437
      %v449 = vunpack.c.l.b16 %v443
      %v450 = vunpack.c.h.b16 %v443
      %v451 = vunpack.c.l.b16 %v444
      %v452 = vunpack.c.h.b16 %v444
      %v453 = vunpack.c.l.b16 %v445
      %v454 = vunpack.c.h.b16 %v445
      %v455 = vpack.c.b16 %v449, %v449
      %v456 = vpack.c.b16 %v450, %v450
      %v457 = vpack.c.b16 %v451, %v451
      %v458 = vpack.c.b16 %v452, %v452
      %v459 = vpack.c.b16 %v453, %v453
      %v460 = vpack.c.b16 %v454, %v454
      %467 = vst [vmem:[%s213] sm:$0xf] %v455
      %468 = vst [vmem:[%s213 + $0x4] sm:$0xf] %v456
      %469 = vst [vmem:[%s213 + $0x8] sm:$0xf] %v457
      %470 = vst [vmem:[%s213 + $0xc] sm:$0xf] %v458
      %471 = vst [vmem:[%s213 + $0x10] sm:$0xf] %v459
      %472 = vst [vmem:[%s213 + $0x14] sm:$0xf] %v460
      %v473 = vadd.f32 %v421, %v424
      %v474 = vadd.f32 %v473, %v429
      %v475 = vadd.f32 %v474, %v432
      %v476 = vadd.f32 %v475, %v437
      %v477 = vadd.f32 %v476, %v440
      %v478 = vrot.slane %v477, 4
      %v479 = vadd.f32 %v477, %v478
      %v480 = vrot.slane %v479, 2
      %v481 = vadd.f32 %v479, %v480
      %v482 = vrot.slane %v481, 1
      %v483 = vadd.f32 %v481, %v482
      %484 = vst [vmem:[%s217] sm:$0x1] %v483
      %v485 = vmul.f32 %v421, %v421
      %v486 = vmul.f32 %v424, %v424
      %v487 = vmul.f32 %v429, %v429
      %v488 = vmul.f32 %v432, %v432
      %v489 = vmul.f32 %v437, %v437
      %v490 = vmul.f32 %v440, %v440
      %v491 = vadd.f32 %v485, %v486
      %v492 = vadd.f32 %v491, %v487
      %v493 = vadd.f32 %v492, %v488
      %v494 = vadd.f32 %v493, %v489
      %v495 = vadd.f32 %v494, %v490
      %v496 = vrot.slane %v495, 4
      %v497 = vadd.f32 %v495, %v496
      %v498 = vrot.slane %v497, 2
      %v499 = vadd.f32 %v497, %v498
      %v500 = vrot.slane %v499, 1
      %v501 = vadd.f32 %v499, %v500
      %502 = vst [vmem:[%s220] sm:$0x1] %v501
      %s503 = smul.u32 6, %s16
      %p504 = scmp.lt.s32.totalorder %s503, 11
      %s505 = scalar_select %p504, %s503, 11
      %s506 = smul.addr %s505, 4
      %s507 = scalar_lea.vmem %s2, %s506
      %p508 = scmp.lt.s32.totalorder %s16, 1
      %s509 = scalar_select %p508, %s16, 1
      %s510 = scalar_lea.vmem %s3, %s509
      %p511 = scmp.lt.s32.totalorder %s16, 1
      %s512 = scalar_select %p511, %s16, 1
      %s513 = scalar_lea.vmem %s4, %s512
      // Predicated region
      $region29: #{_lambda_.21} parent=27 // pred_check
        %p514 = pneg %p81
      $region30: #{_lambda_.21} parent=27 // pred_check_branch
        %516 = sbr.rel (%p514) target = $region32
      $region31: #{_lambda_.21} parent=27 // pred_region
        %s517 = smul.u32 6, %s16
      $region32: #{_lambda_.21} parent=27 // pred_fallthru
        _
      // Predicated region
      $region33: #{_lambda_.21} parent=27 // pred_check
        %p518 = pneg %p107
      $region34: #{_lambda_.21} parent=27 // pred_check_branch
        %520 = sbr.rel (%p518) target = $region36
      $region35: #{_lambda_.21} parent=27 // pred_region
        _
      $region36: #{_lambda_.21} parent=27 // pred_fallthru
        _
      // Predicated region
      $region37: #{_lambda_.21} parent=27 // pred_check
        %p521 = pneg %p133
      $region38: #{_lambda_.21} parent=27 // pred_check_branch
        %523 = sbr.rel (%p521) target = $region40
      $region39: #{_lambda_.21} parent=27 // pred_region
        _
      $region40: #{_lambda_.21} parent=27 // pred_fallthru
        _
    $region28: #{_lambda_.21} parent=5 // pred_fallthru
      _
    %p524 = scmp.le.s32.totalorder 2, %s11
    // Predicated region
    $region41: #{_lambda_.21} parent=5 // pred_check
      %p525 = pneg %p524
    $region42: #{_lambda_.21} parent=5 // pred_check_branch
      %527 = sbr.rel (%p525) target = $region44
    $region43: #{_lambda_.21} parent=5 // pred_region
      %s528 = ssub.s32 %s11, 2
      // Predicated region
      $region45: #{_lambda_.21} parent=43 // pred_check
        %p529 = pneg %p87
      $region46: #{_lambda_.21} parent=43 // pred_check_branch
        %531 = sbr.rel (%p529) target = $region48
      $region47: #{_lambda_.21} parent=43 // pred_region
        %s532 = smul.u32 6, %s17
        %p533 = scmp.lt.s32.totalorder %s532, 11
        %s534 = scalar_select %p533, %s532, 11
        %s535 = smul.addr %s534, 4
        %s536 = scalar_lea.vmem %s2, %s535
      $region48: #{_lambda_.21} parent=43 // pred_fallthru
        _
      // Predicated region
      $region49: #{_lambda_.21} parent=43 // pred_check
        %p537 = pneg %p113
      $region50: #{_lambda_.21} parent=43 // pred_check_branch
        %539 = sbr.rel (%p537) target = $region52
      $region51: #{_lambda_.21} parent=43 // pred_region
        %p540 = scmp.lt.s32.totalorder %s17, 1
        %s541 = scalar_select %p540, %s17, 1
        %s542 = scalar_lea.vmem %s3, %s541
      $region52: #{_lambda_.21} parent=43 // pred_fallthru
        _
      // Predicated region
      $region53: #{_lambda_.21} parent=43 // pred_check
        %p543 = pneg %p139
      $region54: #{_lambda_.21} parent=43 // pred_check_branch
        %545 = sbr.rel (%p543) target = $region56
      $region55: #{_lambda_.21} parent=43 // pred_region
        %p546 = scmp.lt.s32.totalorder %s17, 1
        %s547 = scalar_select %p546, %s17, 1
        %s548 = scalar_lea.vmem %s4, %s547
      $region56: #{_lambda_.21} parent=43 // pred_fallthru
        _
    $region44: #{_lambda_.21} parent=5 // pred_fallthru
      _
  $region6: #{_lambda_.21} parent=0 // loop_footer
    %s15 = sadd.s32 1, %s11
  $region7: #{_lambda_.21} parent=0 // loop_footer_branch
    %10 = sbr.rel target = $region3
  $region8: #{_lambda_.21} parent=0 // loop_exit
    _

// kernel: _lambda_.18
$region0: #{_lambda_.18}
  #allocation0 [shape = 'u32[]', space=smem, size = 0x4, offset = 0x4, fixed_abs, tag = 'smem constant byte address 0x4 - core index']
  #allocation1 [shape = 'u32[144,128]{1,0:T(1,128)}', space=vmem, size = 0x12000, scoped, tag = 'internal scratch']
  %s0 = inlined_call_operand.vmem [shape: bf16[80,4096], index: 0, kind: input, shape index: {}]
  %s1 = inlined_call_operand.vmem [shape: bf16[4096,128], index: 1, kind: input, shape index: {}]
  %s2 = inlined_call_operand.vmem [shape: bf16[80,128], index: 2, kind: output, shape index: {0}]
  %s3 = inlined_call_operand.vmem [shape: f32[2,1,128], index: 3, kind: output, shape index: {1}]
  %s4 = inlined_call_operand.vmem [shape: f32[2,1,128], index: 4, kind: output, shape index: {2}]
  %5 = xla_tuple %s2, %s3, %s4
  %s6 = sld [smem:[#allocation0]]
  $region57: #{_lambda_.18} parent=0
    _
  %s8 = ssub.s32 1, %s6
  %s9 = scalar_select 0, %s8, %s6
  loop: start=0, step=1, limit=4
  $region2: #{_lambda_.18} parent=0 // loop_pre_header
    _
  $region3: #{_lambda_.18} parent=0 // loop_header
    %s11 = sphi 0, %s15
    %p12 = scmp.ge.s32.totalorder %s11, 4
    %s21 = sphi 0, %s23
    %s24 = sphi 0, %s21
    %s25 = sphi 0, %s24
    %s41 = sphi 0, %s25
    %s45 = sphi 0, %s45
    %s47 = sphi 0, %s45
    %s48 = sphi 0, %s47
    %s62 = sphi 0, %s48
    %s68 = sphi 0, %s70
    %s71 = sphi 0, %s68
    %s72 = sphi 0, %s71
    %s88 = sphi 0, %s72
    %s94 = sphi 0, %s96
    %s97 = sphi 0, %s94
    %s98 = sphi 0, %s97
    %s114 = sphi 0, %s98
    %s120 = sphi 0, %s122
    %s123 = sphi 0, %s120
    %s124 = sphi 0, %s123
    %s140 = sphi 0, %s124
  $region4: #{_lambda_.18} parent=0 // loop_header_branch
    %14 = sbr.rel (%p12) target = $region8
  $region5: #{_lambda_.18} parent=0 // loop_body
    %s16 = ssub.s32 %s11, 1
    %s17 = ssub.s32 %s11, 2
    %s18 = sadd.s32 %s11, 1
    %s19 = ssub.s32 %s11, %s18
    %p20 = scmp.eq.s32.totalorder %s19, 0
    %s22 = sadd.s32 %s21, 1
    %s23 = scalar_select %p20, %s21, %s22
    %p26 = pneg %p20
    %p27 = scmp.eq.s32.totalorder %s11, 1
    %p28 = por %p26, %p27
    %p29 = scmp.ne.s32.totalorder %s21, %s24
    %p30 = scmp.eq.s32.totalorder %s11, 0
    %p31 = por %p29, %p30
    %p32 = scmp.ne.s32.totalorder %s21, %s24
    %p33 = scmp.eq.s32.totalorder %s16, 1
    %p34 = por %p32, %p33
    %p35 = scmp.ne.s32.totalorder %s24, %s25
    %p36 = scmp.eq.s32.totalorder %s16, 0
    %p37 = por %p35, %p36
    %p38 = scmp.ne.s32.totalorder %s24, %s25
    %p39 = scmp.eq.s32.totalorder %s17, 1
    %p40 = por %p38, %p39
    %p42 = scmp.ne.s32.totalorder %s25, %s41
    %p43 = scmp.eq.s32.totalorder %s17, 0
    %p44 = por %p42, %p43
    %s46 = sadd.s32 %s45, 1
    %p49 = scmp.eq.s32.totalorder %s11, 1
    %p50 = scmp.ne.s32.totalorder %s45, %s47
    %p51 = scmp.eq.s32.totalorder %s11, 0
    %p52 = por %p50, %p51
    %p53 = scmp.ne.s32.totalorder %s45, %s47
    %p54 = scmp.eq.s32.totalorder %s16, 1
    %p55 = por %p53, %p54
    %p56 = scmp.ne.s32.totalorder %s47, %s48
    %p57 = scmp.eq.s32.totalorder %s16, 0
    %p58 = por %p56, %p57
    %p59 = scmp.ne.s32.totalorder %s47, %s48
    %p60 = scmp.eq.s32.totalorder %s17, 1
    %p61 = por %p59, %p60
    %p63 = scmp.ne.s32.totalorder %s48, %s62
    %p64 = scmp.eq.s32.totalorder %s17, 0
    %p65 = por %p63, %p64
    %s66 = ssub.s32 %s11, %s18
    %p67 = scmp.eq.s32.totalorder %s66, 0
    %s69 = sadd.s32 %s68, 1
    %s70 = scalar_select %p67, %s68, %s69
    %p73 = pneg %p67
    %p74 = scmp.eq.s32.totalorder %s11, 1
    %p75 = por %p73, %p74
    %p76 = scmp.ne.s32.totalorder %s68, %s71
    %p77 = scmp.eq.s32.totalorder %s11, 0
    %p78 = por %p76, %p77
    %p79 = scmp.ne.s32.totalorder %s68, %s71
    %p80 = scmp.eq.s32.totalorder %s16, 1
    %p81 = por %p79, %p80
    %p82 = scmp.ne.s32.totalorder %s71, %s72
    %p83 = scmp.eq.s32.totalorder %s16, 0
    %p84 = por %p82, %p83
    %p85 = scmp.ne.s32.totalorder %s71, %s72
    %p86 = scmp.eq.s32.totalorder %s17, 1
    %p87 = por %p85, %p86
    %p89 = scmp.ne.s32.totalorder %s72, %s88
    %p90 = scmp.eq.s32.totalorder %s17, 0
    %p91 = por %p89, %p90
    %s92 = ssub.s32 %s11, %s18
    %p93 = scmp.eq.s32.totalorder %s92, 0
    %s95 = sadd.s32 %s94, 1
    %s96 = scalar_select %p93, %s94, %s95
    %p99 = pneg %p93
    %p100 = scmp.eq.s32.totalorder %s11, 1
    %p101 = por %p99, %p100
    %p102 = scmp.ne.s32.totalorder %s94, %s97
    %p103 = scmp.eq.s32.totalorder %s11, 0
    %p104 = por %p102, %p103
    %p105 = scmp.ne.s32.totalorder %s94, %s97
    %p106 = scmp.eq.s32.totalorder %s16, 1
    %p107 = por %p105, %p106
    %p108 = scmp.ne.s32.totalorder %s97, %s98
    %p109 = scmp.eq.s32.totalorder %s16, 0
    %p110 = por %p108, %p109
    %p111 = scmp.ne.s32.totalorder %s97, %s98
    %p112 = scmp.eq.s32.totalorder %s17, 1
    %p113 = por %p111, %p112
    %p115 = scmp.ne.s32.totalorder %s98, %s114
    %p116 = scmp.eq.s32.totalorder %s17, 0
    %p117 = por %p115, %p116
    %s118 = ssub.s32 %s11, %s18
    %p119 = scmp.eq.s32.totalorder %s118, 0
    %s121 = sadd.s32 %s120, 1
    %s122 = scalar_select %p119, %s120, %s121
    %p125 = pneg %p119
    %p126 = scmp.eq.s32.totalorder %s11, 1
    %p127 = por %p125, %p126
    %p128 = scmp.ne.s32.totalorder %s120, %s123
    %p129 = scmp.eq.s32.totalorder %s11, 0
    %p130 = por %p128, %p129
    %p131 = scmp.ne.s32.totalorder %s120, %s123
    %p132 = scmp.eq.s32.totalorder %s16, 1
    %p133 = por %p131, %p132
    %p134 = scmp.ne.s32.totalorder %s123, %s124
    %p135 = scmp.eq.s32.totalorder %s16, 0
    %p136 = por %p134, %p135
    %p137 = scmp.ne.s32.totalorder %s123, %s124
    %p138 = scmp.eq.s32.totalorder %s17, 1
    %p139 = por %p137, %p138
    %p141 = scmp.ne.s32.totalorder %s124, %s140
    %p142 = scmp.eq.s32.totalorder %s17, 0
    %p143 = por %p141, %p142
    %p144 = scmp.le.s32.totalorder 1, %s11
    %p145 = scmp.lt.s32.totalorder %s11, 3
    %p146 = pnand %p144, %p145
    %p147 = pneg %p146
    // Predicated region
    $region9: #{_lambda_.18} parent=5 // pred_check
      _
    $region10: #{_lambda_.18} parent=5 // pred_check_branch
      %149 = sbr.rel (%p146) target = $region12
    $region11: #{_lambda_.18} parent=5 // pred_region
      %s150 = ssub.s32 %s11, 1
      // Predicated region
      $region13: #{_lambda_.18} parent=11 // pred_check
        %p151 = pneg %p58
      $region14: #{_lambda_.18} parent=11 // pred_check_branch
        %153 = sbr.rel (%p151) target = $region16
      $region15: #{_lambda_.18} parent=11 // pred_region
        _
      $region16: #{_lambda_.18} parent=11 // pred_fallthru
        _
    $region12: #{_lambda_.18} parent=5 // pred_fallthru
      _
    %p154 = scmp.lt.s32.totalorder %s11, 2
    // Predicated region
    $region17: #{_lambda_.18} parent=5 // pred_check
      %p155 = pneg %p154
    $region18: #{_lambda_.18} parent=5 // pred_check_branch
      %157 = sbr.rel (%p155) target = $region20
    $region19: #{_lambda_.18} parent=5 // pred_region
      // Predicated region
      $region21: #{_lambda_.18} parent=19 // pred_check
        %p158 = pneg %p31
      $region22: #{_lambda_.18} parent=19 // pred_check_branch
        %160 = sbr.rel (%p158) target = $region24
      $region23: #{_lambda_.18} parent=19 // pred_region
        %s161 = smul.u32 5, %s11
        %p162 = scmp.lt.s32.totalorder %s161, 9
        %s163 = scalar_select %p162, %s161, 9
        %s164 = smul.addr %s163, 32
        %s165 = smul.addr %s164, 4
        %s166 = scalar_lea.vmem %s0, %s165
        %s167 = smul.u32 5, %s11
      $region24: #{_lambda_.18} parent=19 // pred_fallthru
        _
    $region20: #{_lambda_.18} parent=5 // pred_fallthru
      _
    %p168 = scmp.le.s32.totalorder 1, %s11
    %p169 = scmp.lt.s32.totalorder %s11, 3
    %p170 = pnand %p168, %p169
    %p171 = pneg %p170
    // Predicated region
    $region25: #{_lambda_.18} parent=5 // pred_check
      _
    $region26: #{_lambda_.18} parent=5 // pred_check_branch
      %173 = sbr.rel (%p170) target = $region28
    $region27: #{_lambda_.18} parent=5 // pred_region
      %s174 = ssub.s32 %s11, 1
      %s175 = smul.u32 5, %s16
      %p176 = scmp.lt.s32.totalorder %s175, 9
      %s177 = scalar_select %p176, %s175, 9
      %s178 = smul.addr %s177, 32
      %s179 = smul.addr %s178, 4
      %s180 = scalar_lea.vmem %s0, %s179
      %p181 = pneg %p37
      %p182 = pneg %p34
      %p183 = pneg %p58
      %p184 = pneg %p55
      %p185 = pneg %p84
      %p186 = pneg %p81
      %s187 = smul.u32 5, %s16
      %p188 = scmp.lt.s32.totalorder %s187, 9
      %s189 = scalar_select %p188, %s187, 9
      %s190 = smul.addr %s189, 4
      %s191 = scalar_lea.vmem %s2, %s190
      %p192 = pneg %p110
      %p193 = pneg %p107
      %p194 = scmp.lt.s32.totalorder %s16, 1
      %s195 = scalar_select %p194, %s16, 1
      %s196 = scalar_lea.vmem %s3, %s195
      %p197 = pneg %p136
      %p198 = pneg %p133
      %p199 = scmp.lt.s32.totalorder %s16, 1
      %s200 = scalar_select %p199, %s16, 1
      %s201 = scalar_lea.vmem %s4, %s200
      %s202 = smul.u32 5, %s16
      %p203 = scmp.lt.s32.totalorder %s202, 9
      %s204 = scalar_select %p203, %s202, 9
      %s205 = smul.addr %s204, 32
      %s206 = smul.addr %s205, 4
      %s207 = scalar_lea.vmem %s0, %s206
      %s208 = smul.u32 5, %s16
      %s209 = smul.u32 5, %s16
      %p210 = scmp.lt.s32.totalorder %s209, 9
      %s211 = scalar_select %p210, %s209, 9
      %s212 = smul.addr %s211, 4
      %s213 = scalar_lea.vmem %s2, %s212
      %s214 = smul.u32 5, %s16
      %p215 = scmp.lt.s32.totalorder %s16, 1
      %s216 = scalar_select %p215, %s16, 1
      %s217 = scalar_lea.vmem %s3, %s216
      %p218 = scmp.lt.s32.totalorder %s16, 1
      %s219 = scalar_select %p218, %s16, 1
      %s220 = scalar_lea.vmem %s4, %s219
      %v222 = vld [vmem:[%s207] sm:$0xff]
      %v223 = vld [vmem:[%s207 + $0x8] sm:$0xff]
      %v224 = vld [vmem:[%s207 + $0x10] sm:$0xff]
      %v225 = vld [vmem:[%s207 + $0x18] sm:$0xff]
      %v226 = vld [vmem:[%s207 + $0x20] sm:$0xff]
      %v227 = vld [vmem:[%s207 + $0x28] sm:$0xff]
      %v228 = vld [vmem:[%s207 + $0x30] sm:$0xff]
      %v229 = vld [vmem:[%s207 + $0x38] sm:$0xff]
      %v230 = vld [vmem:[%s207 + $0x40] sm:$0xff]
      %v231 = vld [vmem:[%s207 + $0x48] sm:$0xff]
      %v232 = vld [vmem:[%s207 + $0x50] sm:$0xff]
      %v233 = vld [vmem:[%s207 + $0x58] sm:$0xff]
      %v234 = vld [vmem:[%s207 + $0x60] sm:$0xff]
      %v235 = vld [vmem:[%s207 + $0x68] sm:$0xff]
      %v236 = vld [vmem:[%s207 + $0x70] sm:$0xff]
      %v237 = vld [vmem:[%s207 + $0x78] sm:$0xff]
      %v238 = vld [vmem:[%s207 + $0x80] sm:$0xff]
      %v239 = vld [vmem:[%s207 + $0x88] sm:$0xff]
      %v240 = vld [vmem:[%s207 + $0x90] sm:$0xff]
      %v241 = vld [vmem:[%s207 + $0x98] sm:$0xff]
      %v242 = vld [vmem:[%s207 + $0xa0] sm:$0xff]
      %v243 = vld [vmem:[%s207 + $0xa8] sm:$0xff]
      %v244 = vld [vmem:[%s207 + $0xb0] sm:$0xff]
      %v245 = vld [vmem:[%s207 + $0xb8] sm:$0xff]
      %v246 = vld [vmem:[%s207 + $0xc0] sm:$0xff]
      %v247 = vld [vmem:[%s207 + $0xc8] sm:$0xff]
      %v248 = vld [vmem:[%s207 + $0xd0] sm:$0xff]
      %v249 = vld [vmem:[%s207 + $0xd8] sm:$0xff]
      %v250 = vld [vmem:[%s207 + $0xe0] sm:$0xff]
      %v251 = vld [vmem:[%s207 + $0xe8] sm:$0xff]
      %v252 = vld [vmem:[%s207 + $0xf0] sm:$0xff]
      %v253 = vld [vmem:[%s207 + $0xf8] sm:$0xff]
      %v254 = vld [vmem:[%s207 + $0x100] sm:$0xff]
      %v255 = vld [vmem:[%s207 + $0x108] sm:$0xff]
      %v256 = vld [vmem:[%s207 + $0x110] sm:$0xff]
      %v257 = vld [vmem:[%s207 + $0x118] sm:$0xff]
      %v258 = vld [vmem:[%s207 + $0x120] sm:$0xff]
      %v259 = vld [vmem:[%s207 + $0x128] sm:$0xff]
      %v260 = vld [vmem:[%s207 + $0x130] sm:$0xff]
      %v261 = vld [vmem:[%s207 + $0x138] sm:$0xff]
      %v262 = vld [vmem:[%s207 + $0x140] sm:$0xff]
      %v263 = vld [vmem:[%s207 + $0x148] sm:$0xff]
      %v264 = vld [vmem:[%s207 + $0x150] sm:$0xff]
      %v265 = vld [vmem:[%s207 + $0x158] sm:$0xff]
      %v266 = vld [vmem:[%s207 + $0x160] sm:$0xff]
      %v267 = vld [vmem:[%s207 + $0x168] sm:$0xff]
      %v268 = vld [vmem:[%s207 + $0x170] sm:$0xff]
      %v269 = vld [vmem:[%s207 + $0x178] sm:$0xff]
      %v270 = vld [vmem:[%s207 + $0x180] sm:$0xff]
      %v271 = vld [vmem:[%s207 + $0x188] sm:$0xff]
      %v272 = vld [vmem:[%s207 + $0x190] sm:$0xff]
      %v273 = vld [vmem:[%s207 + $0x198] sm:$0xff]
      %v274 = vld [vmem:[%s207 + $0x1a0] sm:$0xff]
      %v275 = vld [vmem:[%s207 + $0x1a8] sm:$0xff]
      %v276 = vld [vmem:[%s207 + $0x1b0] sm:$0xff]
      %v277 = vld [vmem:[%s207 + $0x1b8] sm:$0xff]
      %v278 = vld [vmem:[%s207 + $0x1c0] sm:$0xff]
      %v279 = vld [vmem:[%s207 + $0x1c8] sm:$0xff]
      %v280 = vld [vmem:[%s207 + $0x1d0] sm:$0xff]
      %v281 = vld [vmem:[%s207 + $0x1d8] sm:$0xff]
      %v282 = vld [vmem:[%s207 + $0x1e0] sm:$0xff]
      %v283 = vld [vmem:[%s207 + $0x1e8] sm:$0xff]
      %v284 = vld [vmem:[%s207 + $0x1f0] sm:$0xff]
      %v285 = vld [vmem:[%s207 + $0x1f8] sm:$0xff]
      %v286 = vld [vmem:[%s207 + $0x200] sm:$0xff]
      %v287 = vld [vmem:[%s207 + $0x208] sm:$0xff]
      %v288 = vld [vmem:[%s207 + $0x210] sm:$0xff]
      %v289 = vld [vmem:[%s207 + $0x218] sm:$0xff]
      %v290 = vld [vmem:[%s207 + $0x220] sm:$0xff]
      %v291 = vld [vmem:[%s207 + $0x228] sm:$0xff]
      %v292 = vld [vmem:[%s207 + $0x230] sm:$0xff]
      %v293 = vld [vmem:[%s207 + $0x238] sm:$0xff]
      %v294 = vld [vmem:[%s207 + $0x240] sm:$0xff]
      %v295 = vld [vmem:[%s207 + $0x248] sm:$0xff]
      %v296 = vld [vmem:[%s207 + $0x250] sm:$0xff]
      %v297 = vld [vmem:[%s207 + $0x258] sm:$0xff]
      %v298 = vld [vmem:[%s207 + $0x260] sm:$0xff]
      %v299 = vld [vmem:[%s207 + $0x268] sm:$0xff]
      %v300 = vld [vmem:[%s207 + $0x270] sm:$0xff]
      %v301 = vld [vmem:[%s207 + $0x278] sm:$0xff]
      %v302 = vld [vmem:[%s1] sm:$0xf]
      %v303 = vld [vmem:[%s1 + $0x4] sm:$0xf]
      %v304 = vld [vmem:[%s1 + $0x8] sm:$0xf]
      %v305 = vld [vmem:[%s1 + $0xc] sm:$0xf]
      %v306 = vld [vmem:[%s1 + $0x10] sm:$0xf]
      %v307 = vld [vmem:[%s1 + $0x14] sm:$0xf]
      %v308 = vld [vmem:[%s1 + $0x18] sm:$0xf]
      %v309 = vld [vmem:[%s1 + $0x1c] sm:$0xf]
      %v310 = vld [vmem:[%s1 + $0x20] sm:$0xf]
      %v311 = vld [vmem:[%s1 + $0x24] sm:$0xf]
      %v312 = vld [vmem:[%s1 + $0x28] sm:$0xf]
      %v313 = vld [vmem:[%s1 + $0x2c] sm:$0xf]
      %v314 = vld [vmem:[%s1 + $0x30] sm:$0xf]
      %v315 = vld [vmem:[%s1 + $0x34] sm:$0xf]
      %v316 = vld [vmem:[%s1 + $0x38] sm:$0xf]
      %v317 = vld [vmem:[%s1 + $0x3c] sm:$0xf]
      %v318 = vld [vmem:[%s1 + $0x40] sm:$0xf]
      %v319 = vld [vmem:[%s1 + $0x44] sm:$0xf]
      %v320 = vld [vmem:[%s1 + $0x48] sm:$0xf]
      %v321 = vld [vmem:[%s1 + $0x4c] sm:$0xf]
      %v322 = vld [vmem:[%s1 + $0x50] sm:$0xf]
      %v323 = vld [vmem:[%s1 + $0x54] sm:$0xf]
      %v324 = vld [vmem:[%s1 + $0x58] sm:$0xf]
      %v325 = vld [vmem:[%s1 + $0x5c] sm:$0xf]
      %v326 = vld [vmem:[%s1 + $0x60] sm:$0xf]
      %v327 = vld [vmem:[%s1 + $0x64] sm:$0xf]
      %v328 = vld [vmem:[%s1 + $0x68] sm:$0xf]
      %v329 = vld [vmem:[%s1 + $0x6c] sm:$0xf]
      %v330 = vld [vmem:[%s1 + $0x70] sm:$0xf]
      %v331 = vld [vmem:[%s1 + $0x74] sm:$0xf]
      %v332 = vld [vmem:[%s1 + $0x78] sm:$0xf]
      %v333 = vld [vmem:[%s1 + $0x7c] sm:$0xf]
      %v334 = vld [vmem:[%s1 + $0x80] sm:$0xf]
      %v335 = vld [vmem:[%s1 + $0x84] sm:$0xf]
      %v336 = vld [vmem:[%s1 + $0x88] sm:$0xf]
      %v337 = vld [vmem:[%s1 + $0x8c] sm:$0xf]
      %v338 = vld [vmem:[%s1 + $0x90] sm:$0xf]
      %v339 = vld [vmem:[%s1 + $0x94] sm:$0xf]
      %v340 = vld [vmem:[%s1 + $0x98] sm:$0xf]
      %v341 = vld [vmem:[%s1 + $0x9c] sm:$0xf]
      %v342 = vld [vmem:[%s1 + $0xa0] sm:$0xf]
      %v343 = vld [vmem:[%s1 + $0xa4] sm:$0xf]
      %v344 = vld [vmem:[%s1 + $0xa8] sm:$0xf]
      %v345 = vld [vmem:[%s1 + $0xac] sm:$0xf]
      %v346 = vld [vmem:[%s1 + $0xb0] sm:$0xf]
      %v347 = vld [vmem:[%s1 + $0xb4] sm:$0xf]
      %v348 = vld [vmem:[%s1 + $0xb8] sm:$0xf]
      %v349 = vld [vmem:[%s1 + $0xbc] sm:$0xf]
      %v350 = vld [vmem:[%s1 + $0xc0] sm:$0xf]
      %v351 = vld [vmem:[%s1 + $0xc4] sm:$0xf]
      %v352 = vld [vmem:[%s1 + $0xc8] sm:$0xf]
      %v353 = vld [vmem:[%s1 + $0xcc] sm:$0xf]
      %v354 = vld [vmem:[%s1 + $0xd0] sm:$0xf]
      %v355 = vld [vmem:[%s1 + $0xd4] sm:$0xf]
      %v356 = vld [vmem:[%s1 + $0xd8] sm:$0xf]
      %v357 = vld [vmem:[%s1 + $0xdc] sm:$0xf]
      %v358 = vld [vmem:[%s1 + $0xe0] sm:$0xf]
      %v359 = vld [vmem:[%s1 + $0xe4] sm:$0xf]
      %v360 = vld [vmem:[%s1 + $0xe8] sm:$0xf]
      %v361 = vld [vmem:[%s1 + $0xec] sm:$0xf]
      %v362 = vld [vmem:[%s1 + $0xf0] sm:$0xf]
      %v363 = vld [vmem:[%s1 + $0xf4] sm:$0xf]
      %v364 = vld [vmem:[%s1 + $0xf8] sm:$0xf]
      %v365 = vld [vmem:[%s1 + $0xfc] sm:$0xf]
      %v366 = vld [vmem:[%s1 + $0x100] sm:$0xf]
      %v367 = vld [vmem:[%s1 + $0x104] sm:$0xf]
      %v368 = vld [vmem:[%s1 + $0x108] sm:$0xf]
      %v369 = vld [vmem:[%s1 + $0x10c] sm:$0xf]
      %v370 = vld [vmem:[%s1 + $0x110] sm:$0xf]
      %v371 = vld [vmem:[%s1 + $0x114] sm:$0xf]
      %v372 = vld [vmem:[%s1 + $0x118] sm:$0xf]
      %v373 = vld [vmem:[%s1 + $0x11c] sm:$0xf]
      %v374 = vld [vmem:[%s1 + $0x120] sm:$0xf]
      %v375 = vld [vmem:[%s1 + $0x124] sm:$0xf]
      %v376 = vld [vmem:[%s1 + $0x128] sm:$0xf]
      %v377 = vld [vmem:[%s1 + $0x12c] sm:$0xf]
      %v378 = vld [vmem:[%s1 + $0x130] sm:$0xf]
      %v379 = vld [vmem:[%s1 + $0x134] sm:$0xf]
      %v380 = vld [vmem:[%s1 + $0x138] sm:$0xf]
      %v381 = vld [vmem:[%s1 + $0x13c] sm:$0xf]
      %v382 = vld [vmem:[%s1 + $0x140] sm:$0xf]
      %v383 = vld [vmem:[%s1 + $0x144] sm:$0xf]
      %v384 = vld [vmem:[%s1 + $0x148] sm:$0xf]
      %v385 = vld [vmem:[%s1 + $0x14c] sm:$0xf]
      %v386 = vld [vmem:[%s1 + $0x150] sm:$0xf]
      %v387 = vld [vmem:[%s1 + $0x154] sm:$0xf]
      %v388 = vld [vmem:[%s1 + $0x158] sm:$0xf]
      %v389 = vld [vmem:[%s1 + $0x15c] sm:$0xf]
      %v390 = vld [vmem:[%s1 + $0x160] sm:$0xf]
      %v391 = vld [vmem:[%s1 + $0x164] sm:$0xf]
      %v392 = vld [vmem:[%s1 + $0x168] sm:$0xf]
      %v393 = vld [vmem:[%s1 + $0x16c] sm:$0xf]
      %v394 = vld [vmem:[%s1 + $0x170] sm:$0xf]
      %v395 = vld [vmem:[%s1 + $0x174] sm:$0xf]
      %v396 = vld [vmem:[%s1 + $0x178] sm:$0xf]
      %v397 = vld [vmem:[%s1 + $0x17c] sm:$0xf]
      %v398 = vld [vmem:[%s1 + $0x180] sm:$0xf]
      %v399 = vld [vmem:[%s1 + $0x184] sm:$0xf]
      %v400 = vld [vmem:[%s1 + $0x188] sm:$0xf]
      %v401 = vld [vmem:[%s1 + $0x18c] sm:$0xf]
      %v402 = vld [vmem:[%s1 + $0x190] sm:$0xf]
      %v403 = vld [vmem:[%s1 + $0x194] sm:$0xf]
      %v404 = vld [vmem:[%s1 + $0x198] sm:$0xf]
      %v405 = vld [vmem:[%s1 + $0x19c] sm:$0xf]
      %v406 = vld [vmem:[%s1 + $0x1a0] sm:$0xf]
      %v407 = vld [vmem:[%s1 + $0x1a4] sm:$0xf]
      %v408 = vld [vmem:[%s1 + $0x1a8] sm:$0xf]
      %v409 = vld [vmem:[%s1 + $0x1ac] sm:$0xf]
      %v410 = vld [vmem:[%s1 + $0x1b0] sm:$0xf]
      %v411 = vld [vmem:[%s1 + $0x1b4] sm:$0xf]
      %v412 = vld [vmem:[%s1 + $0x1b8] sm:$0xf]
      %v413 = vld [vmem:[%s1 + $0x1bc] sm:$0xf]
      %v414 = vld [vmem:[%s1 + $0x1c0] sm:$0xf]
      %v415 = vld [vmem:[%s1 + $0x1c4] sm:$0xf]
      %v416 = vld [vmem:[%s1 + $0x1c8] sm:$0xf]
      %v417 = vld [vmem:[%s1 + $0x1cc] sm:$0xf]
      %v418 = vld [vmem:[%s1 + $0x1d0] sm:$0xf]
      %v419 = vld [vmem:[%s1 + $0x1d4] sm:$0xf]
      %v420 = vld [vmem:[%s1 + $0x1d8] sm:$0xf]
      %v421 = vld [vmem:[%s1 + $0x1dc] sm:$0xf]
      %v422 = vld [vmem:[%s1 + $0x1e0] sm:$0xf]
      %v423 = vld [vmem:[%s1 + $0x1e4] sm:$0xf]
      %v424 = vld [vmem:[%s1 + $0x1e8] sm:$0xf]
      %v425 = vld [vmem:[%s1 + $0x1ec] sm:$0xf]
      %v426 = vld [vmem:[%s1 + $0x1f0] sm:$0xf]
      %v427 = vld [vmem:[%s1 + $0x1f4] sm:$0xf]
      %v428 = vld [vmem:[%s1 + $0x1f8] sm:$0xf]
      %v429 = vld [vmem:[%s1 + $0x1fc] sm:$0xf]
      %v430 = vld [vmem:[%s1 + $0x200] sm:$0xf]
      %v431 = vld [vmem:[%s1 + $0x204] sm:$0xf]
      %v432 = vld [vmem:[%s1 + $0x208] sm:$0xf]
      %v433 = vld [vmem:[%s1 + $0x20c] sm:$0xf]
      %v434 = vld [vmem:[%s1 + $0x210] sm:$0xf]
      %v435 = vld [vmem:[%s1 + $0x214] sm:$0xf]
      %v436 = vld [vmem:[%s1 + $0x218] sm:$0xf]
      %v437 = vld [vmem:[%s1 + $0x21c] sm:$0xf]
      %v438 = vld [vmem:[%s1 + $0x220] sm:$0xf]
      %v439 = vld [vmem:[%s1 + $0x224] sm:$0xf]
      %v440 = vld [vmem:[%s1 + $0x228] sm:$0xf]
      %v441 = vld [vmem:[%s1 + $0x22c] sm:$0xf]
      %v442 = vld [vmem:[%s1 + $0x230] sm:$0xf]
      %v443 = vld [vmem:[%s1 + $0x234] sm:$0xf]
      %v444 = vld [vmem:[%s1 + $0x238] sm:$0xf]
      %v445 = vld [vmem:[%s1 + $0x23c] sm:$0xf]
      %v446 = vld [vmem:[%s1 + $0x240] sm:$0xf]
      %v447 = vld [vmem:[%s1 + $0x244] sm:$0xf]
      %v448 = vld [vmem:[%s1 + $0x248] sm:$0xf]
      %v449 = vld [vmem:[%s1 + $0x24c] sm:$0xf]
      %v450 = vld [vmem:[%s1 + $0x250] sm:$0xf]
      %v451 = vld [vmem:[%s1 + $0x254] sm:$0xf]
      %v452 = vld [vmem:[%s1 + $0x258] sm:$0xf]
      %v453 = vld [vmem:[%s1 + $0x25c] sm:$0xf]
      %v454 = vld [vmem:[%s1 + $0x260] sm:$0xf]
      %v455 = vld [vmem:[%s1 + $0x264] sm:$0xf]
      %v456 = vld [vmem:[%s1 + $0x268] sm:$0xf]
      %v457 = vld [vmem:[%s1 + $0x26c] sm:$0xf]
      %v458 = vld [vmem:[%s1 + $0x270] sm:$0xf]
      %v459 = vld [vmem:[%s1 + $0x274] sm:$0xf]
      %v460 = vld [vmem:[%s1 + $0x278] sm:$0xf]
      %v461 = vld [vmem:[%s1 + $0x27c] sm:$0xf]
      %v462 = vld [vmem:[%s1 + $0x280] sm:$0xf]
      %v463 = vld [vmem:[%s1 + $0x284] sm:$0xf]
      %v464 = vld [vmem:[%s1 + $0x288] sm:$0xf]
      %v465 = vld [vmem:[%s1 + $0x28c] sm:$0xf]
      %v466 = vld [vmem:[%s1 + $0x290] sm:$0xf]
      %v467 = vld [vmem:[%s1 + $0x294] sm:$0xf]
      %v468 = vld [vmem:[%s1 + $0x298] sm:$0xf]
      %v469 = vld [vmem:[%s1 + $0x29c] sm:$0xf]
      %v470 = vld [vmem:[%s1 + $0x2a0] sm:$0xf]
      %v471 = vld [vmem:[%s1 + $0x2a4] sm:$0xf]
      %v472 = vld [vmem:[%s1 + $0x2a8] sm:$0xf]
      %v473 = vld [vmem:[%s1 + $0x2ac] sm:$0xf]
      %v474 = vld [vmem:[%s1 + $0x2b0] sm:$0xf]
      %v475 = vld [vmem:[%s1 + $0x2b4] sm:$0xf]
      %v476 = vld [vmem:[%s1 + $0x2b8] sm:$0xf]
      %v477 = vld [vmem:[%s1 + $0x2bc] sm:$0xf]
      %v478 = vld [vmem:[%s1 + $0x2c0] sm:$0xf]
      %v479 = vld [vmem:[%s1 + $0x2c4] sm:$0xf]
      %v480 = vld [vmem:[%s1 + $0x2c8] sm:$0xf]
      %v481 = vld [vmem:[%s1 + $0x2cc] sm:$0xf]
      %v482 = vld [vmem:[%s1 + $0x2d0] sm:$0xf]
      %v483 = vld [vmem:[%s1 + $0x2d4] sm:$0xf]
      %v484 = vld [vmem:[%s1 + $0x2d8] sm:$0xf]
      %v485 = vld [vmem:[%s1 + $0x2dc] sm:$0xf]
      %v486 = vld [vmem:[%s1 + $0x2e0] sm:$0xf]
      %v487 = vld [vmem:[%s1 + $0x2e4] sm:$0xf]
      %v488 = vld [vmem:[%s1 + $0x2e8] sm:$0xf]
      %v489 = vld [vmem:[%s1 + $0x2ec] sm:$0xf]
      %v490 = vld [vmem:[%s1 + $0x2f0] sm:$0xf]
      %v491 = vld [vmem:[%s1 + $0x2f4] sm:$0xf]
      %v492 = vld [vmem:[%s1 + $0x2f8] sm:$0xf]
      %v493 = vld [vmem:[%s1 + $0x2fc] sm:$0xf]
      %v494 = vld [vmem:[%s1 + $0x300] sm:$0xf]
      %v495 = vld [vmem:[%s1 + $0x304] sm:$0xf]
      %v496 = vld [vmem:[%s1 + $0x308] sm:$0xf]
      %v497 = vld [vmem:[%s1 + $0x30c] sm:$0xf]
      %v498 = vld [vmem:[%s1 + $0x310] sm:$0xf]
      %v499 = vld [vmem:[%s1 + $0x314] sm:$0xf]
      %v500 = vld [vmem:[%s1 + $0x318] sm:$0xf]
      %v501 = vld [vmem:[%s1 + $0x31c] sm:$0xf]
      %v502 = vld [vmem:[%s1 + $0x320] sm:$0xf]
      %v503 = vld [vmem:[%s1 + $0x324] sm:$0xf]
      %v504 = vld [vmem:[%s1 + $0x328] sm:$0xf]
      %v505 = vld [vmem:[%s1 + $0x32c] sm:$0xf]
      %v506 = vld [vmem:[%s1 + $0x330] sm:$0xf]
      %v507 = vld [vmem:[%s1 + $0x334] sm:$0xf]
      %v508 = vld [vmem:[%s1 + $0x338] sm:$0xf]
      %v509 = vld [vmem:[%s1 + $0x33c] sm:$0xf]
      %v510 = vld [vmem:[%s1 + $0x340] sm:$0xf]
      %v511 = vld [vmem:[%s1 + $0x344] sm:$0xf]
      %v512 = vld [vmem:[%s1 + $0x348] sm:$0xf]
      %v513 = vld [vmem:[%s1 + $0x34c] sm:$0xf]
      %v514 = vld [vmem:[%s1 + $0x350] sm:$0xf]
      %v515 = vld [vmem:[%s1 + $0x354] sm:$0xf]
      %v516 = vld [vmem:[%s1 + $0x358] sm:$0xf]
      %v517 = vld [vmem:[%s1 + $0x35c] sm:$0xf]
      %v518 = vld [vmem:[%s1 + $0x360] sm:$0xf]
      %v519 = vld [vmem:[%s1 + $0x364] sm:$0xf]
      %v520 = vld [vmem:[%s1 + $0x368] sm:$0xf]
      %v521 = vld [vmem:[%s1 + $0x36c] sm:$0xf]
      %v522 = vld [vmem:[%s1 + $0x370] sm:$0xf]
      %v523 = vld [vmem:[%s1 + $0x374] sm:$0xf]
      %v524 = vld [vmem:[%s1 + $0x378] sm:$0xf]
      %v525 = vld [vmem:[%s1 + $0x37c] sm:$0xf]
      %v526 = vld [vmem:[%s1 + $0x380] sm:$0xf]
      %v527 = vld [vmem:[%s1 + $0x384] sm:$0xf]
      %v528 = vld [vmem:[%s1 + $0x388] sm:$0xf]
      %v529 = vld [vmem:[%s1 + $0x38c] sm:$0xf]
      %v530 = vld [vmem:[%s1 + $0x390] sm:$0xf]
      %v531 = vld [vmem:[%s1 + $0x394] sm:$0xf]
      %v532 = vld [vmem:[%s1 + $0x398] sm:$0xf]
      %v533 = vld [vmem:[%s1 + $0x39c] sm:$0xf]
      %v534 = vld [vmem:[%s1 + $0x3a0] sm:$0xf]
      %v535 = vld [vmem:[%s1 + $0x3a4] sm:$0xf]
      %v536 = vld [vmem:[%s1 + $0x3a8] sm:$0xf]
      %v537 = vld [vmem:[%s1 + $0x3ac] sm:$0xf]
      %v538 = vld [vmem:[%s1 + $0x3b0] sm:$0xf]
      %v539 = vld [vmem:[%s1 + $0x3b4] sm:$0xf]
      %v540 = vld [vmem:[%s1 + $0x3b8] sm:$0xf]
      %v541 = vld [vmem:[%s1 + $0x3bc] sm:$0xf]
      %v542 = vld [vmem:[%s1 + $0x3c0] sm:$0xf]
      %v543 = vld [vmem:[%s1 + $0x3c4] sm:$0xf]
      %v544 = vld [vmem:[%s1 + $0x3c8] sm:$0xf]
      %v545 = vld [vmem:[%s1 + $0x3cc] sm:$0xf]
      %v546 = vld [vmem:[%s1 + $0x3d0] sm:$0xf]
      %v547 = vld [vmem:[%s1 + $0x3d4] sm:$0xf]
      %v548 = vld [vmem:[%s1 + $0x3d8] sm:$0xf]
      %v549 = vld [vmem:[%s1 + $0x3dc] sm:$0xf]
      %v550 = vld [vmem:[%s1 + $0x3e0] sm:$0xf]
      %v551 = vld [vmem:[%s1 + $0x3e4] sm:$0xf]
      %v552 = vld [vmem:[%s1 + $0x3e8] sm:$0xf]
      %v553 = vld [vmem:[%s1 + $0x3ec] sm:$0xf]
      %v554 = vld [vmem:[%s1 + $0x3f0] sm:$0xf]
      %v555 = vld [vmem:[%s1 + $0x3f4] sm:$0xf]
      %v556 = vld [vmem:[%s1 + $0x3f8] sm:$0xf]
      %v557 = vld [vmem:[%s1 + $0x3fc] sm:$0xf]
      %v558 = vld [vmem:[%s1 + $0x400] sm:$0xf]
      %v559 = vld [vmem:[%s1 + $0x404] sm:$0xf]
      %v560 = vld [vmem:[%s1 + $0x408] sm:$0xf]
      %v561 = vld [vmem:[%s1 + $0x40c] sm:$0xf]
      %v562 = vld [vmem:[%s1 + $0x410] sm:$0xf]
      %v563 = vld [vmem:[%s1 + $0x414] sm:$0xf]
      %v564 = vld [vmem:[%s1 + $0x418] sm:$0xf]
      %v565 = vld [vmem:[%s1 + $0x41c] sm:$0xf]
      %v566 = vld [vmem:[%s1 + $0x420] sm:$0xf]
      %v567 = vld [vmem:[%s1 + $0x424] sm:$0xf]
      %v568 = vld [vmem:[%s1 + $0x428] sm:$0xf]
      %v569 = vld [vmem:[%s1 + $0x42c] sm:$0xf]
      %v570 = vld [vmem:[%s1 + $0x430] sm:$0xf]
      %v571 = vld [vmem:[%s1 + $0x434] sm:$0xf]
      %v572 = vld [vmem:[%s1 + $0x438] sm:$0xf]
      %v573 = vld [vmem:[%s1 + $0x43c] sm:$0xf]
      %v574 = vld [vmem:[%s1 + $0x440] sm:$0xf]
      %v575 = vld [vmem:[%s1 + $0x444] sm:$0xf]
      %v576 = vld [vmem:[%s1 + $0x448] sm:$0xf]
      %v577 = vld [vmem:[%s1 + $0x44c] sm:$0xf]
      %v578 = vld [vmem:[%s1 + $0x450] sm:$0xf]
      %v579 = vld [vmem:[%s1 + $0x454] sm:$0xf]
      %v580 = vld [vmem:[%s1 + $0x458] sm:$0xf]
      %v581 = vld [vmem:[%s1 + $0x45c] sm:$0xf]
      %v582 = vld [vmem:[%s1 + $0x460] sm:$0xf]
      %v583 = vld [vmem:[%s1 + $0x464] sm:$0xf]
      %v584 = vld [vmem:[%s1 + $0x468] sm:$0xf]
      %v585 = vld [vmem:[%s1 + $0x46c] sm:$0xf]
      %v586 = vld [vmem:[%s1 + $0x470] sm:$0xf]
      %v587 = vld [vmem:[%s1 + $0x474] sm:$0xf]
      %v588 = vld [vmem:[%s1 + $0x478] sm:$0xf]
      %v589 = vld [vmem:[%s1 + $0x47c] sm:$0xf]
      %v590 = vld [vmem:[%s1 + $0x480] sm:$0xf]
      %v591 = vld [vmem:[%s1 + $0x484] sm:$0xf]
      %v592 = vld [vmem:[%s1 + $0x488] sm:$0xf]
      %v593 = vld [vmem:[%s1 + $0x48c] sm:$0xf]
      %v594 = vld [vmem:[%s1 + $0x490] sm:$0xf]
      %v595 = vld [vmem:[%s1 + $0x494] sm:$0xf]
      %v596 = vld [vmem:[%s1 + $0x498] sm:$0xf]
      %v597 = vld [vmem:[%s1 + $0x49c] sm:$0xf]
      %v598 = vld [vmem:[%s1 + $0x4a0] sm:$0xf]
      %v599 = vld [vmem:[%s1 + $0x4a4] sm:$0xf]
      %v600 = vld [vmem:[%s1 + $0x4a8] sm:$0xf]
      %v601 = vld [vmem:[%s1 + $0x4ac] sm:$0xf]
      %v602 = vld [vmem:[%s1 + $0x4b0] sm:$0xf]
      %v603 = vld [vmem:[%s1 + $0x4b4] sm:$0xf]
      %v604 = vld [vmem:[%s1 + $0x4b8] sm:$0xf]
      %v605 = vld [vmem:[%s1 + $0x4bc] sm:$0xf]
      %v606 = vld [vmem:[%s1 + $0x4c0] sm:$0xf]
      %v607 = vld [vmem:[%s1 + $0x4c4] sm:$0xf]
      %v608 = vld [vmem:[%s1 + $0x4c8] sm:$0xf]
      %v609 = vld [vmem:[%s1 + $0x4cc] sm:$0xf]
      %v610 = vld [vmem:[%s1 + $0x4d0] sm:$0xf]
      %v611 = vld [vmem:[%s1 + $0x4d4] sm:$0xf]
      %v612 = vld [vmem:[%s1 + $0x4d8] sm:$0xf]
      %v613 = vld [vmem:[%s1 + $0x4dc] sm:$0xf]
      %v614 = vld [vmem:[%s1 + $0x4e0] sm:$0xf]
      %v615 = vld [vmem:[%s1 + $0x4e4] sm:$0xf]
      %v616 = vld [vmem:[%s1 + $0x4e8] sm:$0xf]
      %v617 = vld [vmem:[%s1 + $0x4ec] sm:$0xf]
      %v618 = vld [vmem:[%s1 + $0x4f0] sm:$0xf]
      %v619 = vld [vmem:[%s1 + $0x4f4] sm:$0xf]
      %v620 = vld [vmem:[%s1 + $0x4f8] sm:$0xf]
      %v621 = vld [vmem:[%s1 + $0x4fc] sm:$0xf]
      %v622 = vld [vmem:[%s1 + $0x500] sm:$0xf]
      %v623 = vld [vmem:[%s1 + $0x504] sm:$0xf]
      %v624 = vld [vmem:[%s1 + $0x508] sm:$0xf]
      %v625 = vld [vmem:[%s1 + $0x50c] sm:$0xf]
      %v626 = vld [vmem:[%s1 + $0x510] sm:$0xf]
      %v627 = vld [vmem:[%s1 + $0x514] sm:$0xf]
      %v628 = vld [vmem:[%s1 + $0x518] sm:$0xf]
      %v629 = vld [vmem:[%s1 + $0x51c] sm:$0xf]
      %v630 = vld [vmem:[%s1 + $0x520] sm:$0xf]
      %v631 = vld [vmem:[%s1 + $0x524] sm:$0xf]
      %v632 = vld [vmem:[%s1 + $0x528] sm:$0xf]
      %v633 = vld [vmem:[%s1 + $0x52c] sm:$0xf]
      %v634 = vld [vmem:[%s1 + $0x530] sm:$0xf]
      %v635 = vld [vmem:[%s1 + $0x534] sm:$0xf]
      %v636 = vld [vmem:[%s1 + $0x538] sm:$0xf]
      %v637 = vld [vmem:[%s1 + $0x53c] sm:$0xf]
      %v638 = vld [vmem:[%s1 + $0x540] sm:$0xf]
      %v639 = vld [vmem:[%s1 + $0x544] sm:$0xf]
      %v640 = vld [vmem:[%s1 + $0x548] sm:$0xf]
      %v641 = vld [vmem:[%s1 + $0x54c] sm:$0xf]
      %v642 = vld [vmem:[%s1 + $0x550] sm:$0xf]
      %v643 = vld [vmem:[%s1 + $0x554] sm:$0xf]
      %v644 = vld [vmem:[%s1 + $0x558] sm:$0xf]
      %v645 = vld [vmem:[%s1 + $0x55c] sm:$0xf]
      %v646 = vld [vmem:[%s1 + $0x560] sm:$0xf]
      %v647 = vld [vmem:[%s1 + $0x564] sm:$0xf]
      %v648 = vld [vmem:[%s1 + $0x568] sm:$0xf]
      %v649 = vld [vmem:[%s1 + $0x56c] sm:$0xf]
      %v650 = vld [vmem:[%s1 + $0x570] sm:$0xf]
      %v651 = vld [vmem:[%s1 + $0x574] sm:$0xf]
      %v652 = vld [vmem:[%s1 + $0x578] sm:$0xf]
      %v653 = vld [vmem:[%s1 + $0x57c] sm:$0xf]
      %v654 = vld [vmem:[%s1 + $0x580] sm:$0xf]
      %v655 = vld [vmem:[%s1 + $0x584] sm:$0xf]
      %v656 = vld [vmem:[%s1 + $0x588] sm:$0xf]
      %v657 = vld [vmem:[%s1 + $0x58c] sm:$0xf]
      %v658 = vld [vmem:[%s1 + $0x590] sm:$0xf]
      %v659 = vld [vmem:[%s1 + $0x594] sm:$0xf]
      %v660 = vld [vmem:[%s1 + $0x598] sm:$0xf]
      %v661 = vld [vmem:[%s1 + $0x59c] sm:$0xf]
      %v662 = vld [vmem:[%s1 + $0x5a0] sm:$0xf]
      %v663 = vld [vmem:[%s1 + $0x5a4] sm:$0xf]
      %v664 = vld [vmem:[%s1 + $0x5a8] sm:$0xf]
      %v665 = vld [vmem:[%s1 + $0x5ac] sm:$0xf]
      %v666 = vld [vmem:[%s1 + $0x5b0] sm:$0xf]
      %v667 = vld [vmem:[%s1 + $0x5b4] sm:$0xf]
      %v668 = vld [vmem:[%s1 + $0x5b8] sm:$0xf]
      %v669 = vld [vmem:[%s1 + $0x5bc] sm:$0xf]
      %v670 = vld [vmem:[%s1 + $0x5c0] sm:$0xf]
      %v671 = vld [vmem:[%s1 + $0x5c4] sm:$0xf]
      %v672 = vld [vmem:[%s1 + $0x5c8] sm:$0xf]
      %v673 = vld [vmem:[%s1 + $0x5cc] sm:$0xf]
      %v674 = vld [vmem:[%s1 + $0x5d0] sm:$0xf]
      %v675 = vld [vmem:[%s1 + $0x5d4] sm:$0xf]
      %v676 = vld [vmem:[%s1 + $0x5d8] sm:$0xf]
      %v677 = vld [vmem:[%s1 + $0x5dc] sm:$0xf]
      %v678 = vld [vmem:[%s1 + $0x5e0] sm:$0xf]
      %v679 = vld [vmem:[%s1 + $0x5e4] sm:$0xf]
      %v680 = vld [vmem:[%s1 + $0x5e8] sm:$0xf]
      %v681 = vld [vmem:[%s1 + $0x5ec] sm:$0xf]
      %v682 = vld [vmem:[%s1 + $0x5f0] sm:$0xf]
      %v683 = vld [vmem:[%s1 + $0x5f4] sm:$0xf]
      %v684 = vld [vmem:[%s1 + $0x5f8] sm:$0xf]
      %v685 = vld [vmem:[%s1 + $0x5fc] sm:$0xf]
      %v686 = vld [vmem:[%s1 + $0x600] sm:$0xf]
      %v687 = vld [vmem:[%s1 + $0x604] sm:$0xf]
      %v688 = vld [vmem:[%s1 + $0x608] sm:$0xf]
      %v689 = vld [vmem:[%s1 + $0x60c] sm:$0xf]
      %v690 = vld [vmem:[%s1 + $0x610] sm:$0xf]
      %v691 = vld [vmem:[%s1 + $0x614] sm:$0xf]
      %v692 = vld [vmem:[%s1 + $0x618] sm:$0xf]
      %v693 = vld [vmem:[%s1 + $0x61c] sm:$0xf]
      %v694 = vld [vmem:[%s1 + $0x620] sm:$0xf]
      %v695 = vld [vmem:[%s1 + $0x624] sm:$0xf]
      %v696 = vld [vmem:[%s1 + $0x628] sm:$0xf]
      %v697 = vld [vmem:[%s1 + $0x62c] sm:$0xf]
      %v698 = vld [vmem:[%s1 + $0x630] sm:$0xf]
      %v699 = vld [vmem:[%s1 + $0x634] sm:$0xf]
      %v700 = vld [vmem:[%s1 + $0x638] sm:$0xf]
      %v701 = vld [vmem:[%s1 + $0x63c] sm:$0xf]
      %v702 = vld [vmem:[%s1 + $0x640] sm:$0xf]
      %v703 = vld [vmem:[%s1 + $0x644] sm:$0xf]
      %v704 = vld [vmem:[%s1 + $0x648] sm:$0xf]
      %v705 = vld [vmem:[%s1 + $0x64c] sm:$0xf]
      %v706 = vld [vmem:[%s1 + $0x650] sm:$0xf]
      %v707 = vld [vmem:[%s1 + $0x654] sm:$0xf]
      %v708 = vld [vmem:[%s1 + $0x658] sm:$0xf]
      %v709 = vld [vmem:[%s1 + $0x65c] sm:$0xf]
      %v710 = vld [vmem:[%s1 + $0x660] sm:$0xf]
      %v711 = vld [vmem:[%s1 + $0x664] sm:$0xf]
      %v712 = vld [vmem:[%s1 + $0x668] sm:$0xf]
      %v713 = vld [vmem:[%s1 + $0x66c] sm:$0xf]
      %v714 = vld [vmem:[%s1 + $0x670] sm:$0xf]
      %v715 = vld [vmem:[%s1 + $0x674] sm:$0xf]
      %v716 = vld [vmem:[%s1 + $0x678] sm:$0xf]
      %v717 = vld [vmem:[%s1 + $0x67c] sm:$0xf]
      %v718 = vld [vmem:[%s1 + $0x680] sm:$0xf]
      %v719 = vld [vmem:[%s1 + $0x684] sm:$0xf]
      %v720 = vld [vmem:[%s1 + $0x688] sm:$0xf]
      %v721 = vld [vmem:[%s1 + $0x68c] sm:$0xf]
      %v722 = vld [vmem:[%s1 + $0x690] sm:$0xf]
      %v723 = vld [vmem:[%s1 + $0x694] sm:$0xf]
      %v724 = vld [vmem:[%s1 + $0x698] sm:$0xf]
      %v725 = vld [vmem:[%s1 + $0x69c] sm:$0xf]
      %v726 = vld [vmem:[%s1 + $0x6a0] sm:$0xf]
      %v727 = vld [vmem:[%s1 + $0x6a4] sm:$0xf]
      %v728 = vld [vmem:[%s1 + $0x6a8] sm:$0xf]
      %v729 = vld [vmem:[%s1 + $0x6ac] sm:$0xf]
      %v730 = vld [vmem:[%s1 + $0x6b0] sm:$0xf]
      %v731 = vld [vmem:[%s1 + $0x6b4] sm:$0xf]
      %v732 = vld [vmem:[%s1 + $0x6b8] sm:$0xf]
      %v733 = vld [vmem:[%s1 + $0x6bc] sm:$0xf]
      %v734 = vld [vmem:[%s1 + $0x6c0] sm:$0xf]
      %v735 = vld [vmem:[%s1 + $0x6c4] sm:$0xf]
      %v736 = vld [vmem:[%s1 + $0x6c8] sm:$0xf]
      %v737 = vld [vmem:[%s1 + $0x6cc] sm:$0xf]
      %v738 = vld [vmem:[%s1 + $0x6d0] sm:$0xf]
      %v739 = vld [vmem:[%s1 + $0x6d4] sm:$0xf]
      %v740 = vld [vmem:[%s1 + $0x6d8] sm:$0xf]
      %v741 = vld [vmem:[%s1 + $0x6dc] sm:$0xf]
      %v742 = vld [vmem:[%s1 + $0x6e0] sm:$0xf]
      %v743 = vld [vmem:[%s1 + $0x6e4] sm:$0xf]
      %v744 = vld [vmem:[%s1 + $0x6e8] sm:$0xf]
      %v745 = vld [vmem:[%s1 + $0x6ec] sm:$0xf]
      %v746 = vld [vmem:[%s1 + $0x6f0] sm:$0xf]
      %v747 = vld [vmem:[%s1 + $0x6f4] sm:$0xf]
      %v748 = vld [vmem:[%s1 + $0x6f8] sm:$0xf]
      %v749 = vld [vmem:[%s1 + $0x6fc] sm:$0xf]
      %v750 = vld [vmem:[%s1 + $0x700] sm:$0xf]
      %v751 = vld [vmem:[%s1 + $0x704] sm:$0xf]
      %v752 = vld [vmem:[%s1 + $0x708] sm:$0xf]
      %v753 = vld [vmem:[%s1 + $0x70c] sm:$0xf]
      %v754 = vld [vmem:[%s1 + $0x710] sm:$0xf]
      %v755 = vld [vmem:[%s1 + $0x714] sm:$0xf]
      %v756 = vld [vmem:[%s1 + $0x718] sm:$0xf]
      %v757 = vld [vmem:[%s1 + $0x71c] sm:$0xf]
      %v758 = vld [vmem:[%s1 + $0x720] sm:$0xf]
      %v759 = vld [vmem:[%s1 + $0x724] sm:$0xf]
      %v760 = vld [vmem:[%s1 + $0x728] sm:$0xf]
      %v761 = vld [vmem:[%s1 + $0x72c] sm:$0xf]
      %v762 = vld [vmem:[%s1 + $0x730] sm:$0xf]
      %v763 = vld [vmem:[%s1 + $0x734] sm:$0xf]
      %v764 = vld [vmem:[%s1 + $0x738] sm:$0xf]
      %v765 = vld [vmem:[%s1 + $0x73c] sm:$0xf]
      %v766 = vld [vmem:[%s1 + $0x740] sm:$0xf]
      %v767 = vld [vmem:[%s1 + $0x744] sm:$0xf]
      %v768 = vld [vmem:[%s1 + $0x748] sm:$0xf]
      %v769 = vld [vmem:[%s1 + $0x74c] sm:$0xf]
      %v770 = vld [vmem:[%s1 + $0x750] sm:$0xf]
      %v771 = vld [vmem:[%s1 + $0x754] sm:$0xf]
      %v772 = vld [vmem:[%s1 + $0x758] sm:$0xf]
      %v773 = vld [vmem:[%s1 + $0x75c] sm:$0xf]
      %v774 = vld [vmem:[%s1 + $0x760] sm:$0xf]
      %v775 = vld [vmem:[%s1 + $0x764] sm:$0xf]
      %v776 = vld [vmem:[%s1 + $0x768] sm:$0xf]
      %v777 = vld [vmem:[%s1 + $0x76c] sm:$0xf]
      %v778 = vld [vmem:[%s1 + $0x770] sm:$0xf]
      %v779 = vld [vmem:[%s1 + $0x774] sm:$0xf]
      %v780 = vld [vmem:[%s1 + $0x778] sm:$0xf]
      %v781 = vld [vmem:[%s1 + $0x77c] sm:$0xf]
      %v782 = vld [vmem:[%s1 + $0x780] sm:$0xf]
      %v783 = vld [vmem:[%s1 + $0x784] sm:$0xf]
      %v784 = vld [vmem:[%s1 + $0x788] sm:$0xf]
      %v785 = vld [vmem:[%s1 + $0x78c] sm:$0xf]
      %v786 = vld [vmem:[%s1 + $0x790] sm:$0xf]
      %v787 = vld [vmem:[%s1 + $0x794] sm:$0xf]
      %v788 = vld [vmem:[%s1 + $0x798] sm:$0xf]
      %v789 = vld [vmem:[%s1 + $0x79c] sm:$0xf]
      %v790 = vld [vmem:[%s1 + $0x7a0] sm:$0xf]
      %v791 = vld [vmem:[%s1 + $0x7a4] sm:$0xf]
      %v792 = vld [vmem:[%s1 + $0x7a8] sm:$0xf]
      %v793 = vld [vmem:[%s1 + $0x7ac] sm:$0xf]
      %v794 = vld [vmem:[%s1 + $0x7b0] sm:$0xf]
      %v795 = vld [vmem:[%s1 + $0x7b4] sm:$0xf]
      %v796 = vld [vmem:[%s1 + $0x7b8] sm:$0xf]
      %v797 = vld [vmem:[%s1 + $0x7bc] sm:$0xf]
      %v798 = vld [vmem:[%s1 + $0x7c0] sm:$0xf]
      %v799 = vld [vmem:[%s1 + $0x7c4] sm:$0xf]
      %v800 = vld [vmem:[%s1 + $0x7c8] sm:$0xf]
      %v801 = vld [vmem:[%s1 + $0x7cc] sm:$0xf]
      %v802 = vld [vmem:[%s1 + $0x7d0] sm:$0xf]
      %v803 = vld [vmem:[%s1 + $0x7d4] sm:$0xf]
      %v804 = vld [vmem:[%s1 + $0x7d8] sm:$0xf]
      %v805 = vld [vmem:[%s1 + $0x7dc] sm:$0xf]
      %v806 = vld [vmem:[%s1 + $0x7e0] sm:$0xf]
      %v807 = vld [vmem:[%s1 + $0x7e4] sm:$0xf]
      %v808 = vld [vmem:[%s1 + $0x7e8] sm:$0xf]
      %v809 = vld [vmem:[%s1 + $0x7ec] sm:$0xf]
      %v810 = vld [vmem:[%s1 + $0x7f0] sm:$0xf]
      %v811 = vld [vmem:[%s1 + $0x7f4] sm:$0xf]
      %v812 = vld [vmem:[%s1 + $0x7f8] sm:$0xf]
      %v813 = vld [vmem:[%s1 + $0x7fc] sm:$0xf]
      %v894 = vunpack.c.l.b16 %v222
      %v895 = vunpack.c.h.b16 %v222
      %v896 = vunpack.c.l.b16 %v223
      %v897 = vunpack.c.h.b16 %v223
      %v898 = vunpack.c.l.b16 %v224
      %v899 = vunpack.c.h.b16 %v224
      %v900 = vunpack.c.l.b16 %v225
      %v901 = vunpack.c.h.b16 %v225
      %v902 = vunpack.c.l.b16 %v226
      %v903 = vunpack.c.h.b16 %v226
      %v904 = vunpack.c.l.b16 %v227
      %v905 = vunpack.c.h.b16 %v227
      %v906 = vunpack.c.l.b16 %v228
      %v907 = vunpack.c.h.b16 %v228
      %v908 = vunpack.c.l.b16 %v229
      %v909 = vunpack.c.h.b16 %v229
      %v910 = vunpack.c.l.b16 %v230
      %v911 = vunpack.c.h.b16 %v230
      %v912 = vunpack.c.l.b16 %v231
      %v913 = vunpack.c.h.b16 %v231
      %v914 = vunpack.c.l.b16 %v232
      %v915 = vunpack.c.h.b16 %v232
      %v916 = vunpack.c.l.b16 %v233
      %v917 = vunpack.c.h.b16 %v233
      %v918 = vunpack.c.l.b16 %v234
      %v919 = vunpack.c.h.b16 %v234
      %v920 = vunpack.c.l.b16 %v235
      %v921 = vunpack.c.h.b16 %v235
      %v922 = vunpack.c.l.b16 %v236
      %v923 = vunpack.c.h.b16 %v236
      %v924 = vunpack.c.l.b16 %v237
      %v925 = vunpack.c.h.b16 %v237
      %v926 = vunpack.c.l.b16 %v238
      %v927 = vunpack.c.h.b16 %v238
      %v928 = vunpack.c.l.b16 %v239
      %v929 = vunpack.c.h.b16 %v239
      %v930 = vunpack.c.l.b16 %v240
      %v931 = vunpack.c.h.b16 %v240
      %v932 = vunpack.c.l.b16 %v241
      %v933 = vunpack.c.h.b16 %v241
      %v934 = vunpack.c.l.b16 %v242
      %v935 = vunpack.c.h.b16 %v242
      %v936 = vunpack.c.l.b16 %v243
      %v937 = vunpack.c.h.b16 %v243
      %v938 = vunpack.c.l.b16 %v244
      %v939 = vunpack.c.h.b16 %v244
      %v940 = vunpack.c.l.b16 %v245
      %v941 = vunpack.c.h.b16 %v245
      %v942 = vunpack.c.l.b16 %v246
      %v943 = vunpack.c.h.b16 %v246
      %v944 = vunpack.c.l.b16 %v247
      %v945 = vunpack.c.h.b16 %v247
      %v946 = vunpack.c.l.b16 %v248
      %v947 = vunpack.c.h.b16 %v248
      %v948 = vunpack.c.l.b16 %v249
      %v949 = vunpack.c.h.b16 %v249
      %v950 = vunpack.c.l.b16 %v250
      %v951 = vunpack.c.h.b16 %v250
      %v952 = vunpack.c.l.b16 %v251
      %v953 = vunpack.c.h.b16 %v251
      %v954 = vunpack.c.l.b16 %v252
      %v955 = vunpack.c.h.b16 %v252
      %v956 = vunpack.c.l.b16 %v253
      %v957 = vunpack.c.h.b16 %v253
      %v958 = vunpack.c.l.b16 %v254
      %v959 = vunpack.c.h.b16 %v254
      %v960 = vunpack.c.l.b16 %v255
      %v961 = vunpack.c.h.b16 %v255
      %v962 = vunpack.c.l.b16 %v256
      %v963 = vunpack.c.h.b16 %v256
      %v964 = vunpack.c.l.b16 %v257
      %v965 = vunpack.c.h.b16 %v257
      %v966 = vunpack.c.l.b16 %v258
      %v967 = vunpack.c.h.b16 %v258
      %v968 = vunpack.c.l.b16 %v259
      %v969 = vunpack.c.h.b16 %v259
      %v970 = vunpack.c.l.b16 %v260
      %v971 = vunpack.c.h.b16 %v260
      %v972 = vunpack.c.l.b16 %v261
      %v973 = vunpack.c.h.b16 %v261
      %v974 = vunpack.c.l.b16 %v262
      %v975 = vunpack.c.h.b16 %v262
      %v976 = vunpack.c.l.b16 %v263
      %v977 = vunpack.c.h.b16 %v263
      %v978 = vunpack.c.l.b16 %v264
      %v979 = vunpack.c.h.b16 %v264
      %v980 = vunpack.c.l.b16 %v265
      %v981 = vunpack.c.h.b16 %v265
      %v982 = vunpack.c.l.b16 %v266
      %v983 = vunpack.c.h.b16 %v266
      %v984 = vunpack.c.l.b16 %v267
      %v985 = vunpack.c.h.b16 %v267
      %v986 = vunpack.c.l.b16 %v268
      %v987 = vunpack.c.h.b16 %v268
      %v988 = vunpack.c.l.b16 %v269
      %v989 = vunpack.c.h.b16 %v269
      %v990 = vunpack.c.l.b16 %v270
      %v991 = vunpack.c.h.b16 %v270
      %v992 = vunpack.c.l.b16 %v271
      %v993 = vunpack.c.h.b16 %v271
      %v994 = vunpack.c.l.b16 %v272
      %v995 = vunpack.c.h.b16 %v272
      %v996 = vunpack.c.l.b16 %v273
      %v997 = vunpack.c.h.b16 %v273
      %v998 = vunpack.c.l.b16 %v274
      %v999 = vunpack.c.h.b16 %v274
      %v1000 = vunpack.c.l.b16 %v275
      %v1001 = vunpack.c.h.b16 %v275
      %v1002 = vunpack.c.l.b16 %v276
      %v1003 = vunpack.c.h.b16 %v276
      %v1004 = vunpack.c.l.b16 %v277
      %v1005 = vunpack.c.h.b16 %v277
      %v1006 = vunpack.c.l.b16 %v278
      %v1007 = vunpack.c.h.b16 %v278
      %v1008 = vunpack.c.l.b16 %v279
      %v1009 = vunpack.c.h.b16 %v279
      %v1010 = vunpack.c.l.b16 %v280
      %v1011 = vunpack.c.h.b16 %v280
      %v1012 = vunpack.c.l.b16 %v281
      %v1013 = vunpack.c.h.b16 %v281
      %v1014 = vunpack.c.l.b16 %v282
      %v1015 = vunpack.c.h.b16 %v282
      %v1016 = vunpack.c.l.b16 %v283
      %v1017 = vunpack.c.h.b16 %v283
      %v1018 = vunpack.c.l.b16 %v284
      %v1019 = vunpack.c.h.b16 %v284
      %v1020 = vunpack.c.l.b16 %v285
      %v1021 = vunpack.c.h.b16 %v285
      %v1022 = vunpack.c.l.b16 %v286
      %v1023 = vunpack.c.h.b16 %v286
      %v1024 = vunpack.c.l.b16 %v287
      %v1025 = vunpack.c.h.b16 %v287
      %v1026 = vunpack.c.l.b16 %v288
      %v1027 = vunpack.c.h.b16 %v288
      %v1028 = vunpack.c.l.b16 %v289
      %v1029 = vunpack.c.h.b16 %v289
      %v1030 = vunpack.c.l.b16 %v290
      %v1031 = vunpack.c.h.b16 %v290
      %v1032 = vunpack.c.l.b16 %v291
      %v1033 = vunpack.c.h.b16 %v291
      %v1034 = vunpack.c.l.b16 %v292
      %v1035 = vunpack.c.h.b16 %v292
      %v1036 = vunpack.c.l.b16 %v293
      %v1037 = vunpack.c.h.b16 %v293
      %v1038 = vunpack.c.l.b16 %v294
      %v1039 = vunpack.c.h.b16 %v294
      %v1040 = vunpack.c.l.b16 %v295
      %v1041 = vunpack.c.h.b16 %v295
      %v1042 = vunpack.c.l.b16 %v296
      %v1043 = vunpack.c.h.b16 %v296
      %v1044 = vunpack.c.l.b16 %v297
      %v1045 = vunpack.c.h.b16 %v297
      %v1046 = vunpack.c.l.b16 %v298
      %v1047 = vunpack.c.h.b16 %v298
      %v1048 = vunpack.c.l.b16 %v299
      %v1049 = vunpack.c.h.b16 %v299
      %v1050 = vunpack.c.l.b16 %v300
      %v1051 = vunpack.c.h.b16 %v300
      %v1052 = vunpack.c.l.b16 %v301
      %v1053 = vunpack.c.h.b16 %v301
      %v1054 = vpack.c.b16 %v926, %v894
      %v1055 = vpack.c.b16 %v927, %v895
      %v1056 = vpack.c.b16 %v928, %v896
      %v1057 = vpack.c.b16 %v929, %v897
      %v1058 = vpack.c.b16 %v930, %v898
      %v1059 = vpack.c.b16 %v931, %v899
      %v1060 = vpack.c.b16 %v932, %v900
      %v1061 = vpack.c.b16 %v933, %v901
      %v1062 = vpack.c.b16 %v934, %v902
      %v1063 = vpack.c.b16 %v935, %v903
      %v1064 = vpack.c.b16 %v936, %v904
      %v1065 = vpack.c.b16 %v937, %v905
      %v1066 = vpack.c.b16 %v938, %v906
      %v1067 = vpack.c.b16 %v939, %v907
      %v1068 = vpack.c.b16 %v940, %v908
      %v1069 = vpack.c.b16 %v941, %v909
      %v1070 = vpack.c.b16 %v942, %v910
      %v1071 = vpack.c.b16 %v943, %v911
      %v1072 = vpack.c.b16 %v944, %v912
      %v1073 = vpack.c.b16 %v945, %v913
      %v1074 = vpack.c.b16 %v946, %v914
      %v1075 = vpack.c.b16 %v947, %v915
      %v1076 = vpack.c.b16 %v948, %v916
      %v1077 = vpack.c.b16 %v949, %v917
      %v1078 = vpack.c.b16 %v950, %v918
      %v1079 = vpack.c.b16 %v951, %v919
      %v1080 = vpack.c.b16 %v952, %v920
      %v1081 = vpack.c.b16 %v953, %v921
      %v1082 = vpack.c.b16 %v954, %v922
      %v1083 = vpack.c.b16 %v955, %v923
      %v1084 = vpack.c.b16 %v956, %v924
      %v1085 = vpack.c.b16 %v957, %v925
      %v1086 = vpack.c.b16 %v990, %v958
      %v1087 = vpack.c.b16 %v991, %v959
      %v1088 = vpack.c.b16 %v992, %v960
      %v1089 = vpack.c.b16 %v993, %v961
      %v1090 = vpack.c.b16 %v994, %v962
      %v1091 = vpack.c.b16 %v995, %v963
      %v1092 = vpack.c.b16 %v996, %v964
      %v1093 = vpack.c.b16 %v997, %v965
      %v1094 = vpack.c.b16 %v998, %v966
      %v1095 = vpack.c.b16 %v999, %v967
      %v1096 = vpack.c.b16 %v1000, %v968
      %v1097 = vpack.c.b16 %v1001, %v969
      %v1098 = vpack.c.b16 %v1002, %v970
      %v1099 = vpack.c.b16 %v1003, %v971
      %v1100 = vpack.c.b16 %v1004, %v972
      %v1101 = vpack.c.b16 %v1005, %v973
      %v1102 = vpack.c.b16 %v1006, %v974
      %v1103 = vpack.c.b16 %v1007, %v975
      %v1104 = vpack.c.b16 %v1008, %v976
      %v1105 = vpack.c.b16 %v1009, %v977
      %v1106 = vpack.c.b16 %v1010, %v978
      %v1107 = vpack.c.b16 %v1011, %v979
      %v1108 = vpack.c.b16 %v1012, %v980
      %v1109 = vpack.c.b16 %v1013, %v981
      %v1110 = vpack.c.b16 %v1014, %v982
      %v1111 = vpack.c.b16 %v1015, %v983
      %v1112 = vpack.c.b16 %v1016, %v984
      %v1113 = vpack.c.b16 %v1017, %v985
      %v1114 = vpack.c.b16 %v1018, %v986
      %v1115 = vpack.c.b16 %v1019, %v987
      %v1116 = vpack.c.b16 %v1020, %v988
      %v1117 = vpack.c.b16 %v1021, %v989
      %v1118 = vpack.c.b16 %v1022, %v1022
      %v1119 = vpack.c.b16 %v1023, %v1023
      %v1120 = vpack.c.b16 %v1024, %v1024
      %v1121 = vpack.c.b16 %v1025, %v1025
      %v1122 = vpack.c.b16 %v1026, %v1026
      %v1123 = vpack.c.b16 %v1027, %v1027
      %v1124 = vpack.c.b16 %v1028, %v1028
      %v1125 = vpack.c.b16 %v1029, %v1029
      %v1126 = vpack.c.b16 %v1030, %v1030
      %v1127 = vpack.c.b16 %v1031, %v1031
      %v1128 = vpack.c.b16 %v1032, %v1032
      %v1129 = vpack.c.b16 %v1033, %v1033
      %v1130 = vpack.c.b16 %v1034, %v1034
      %v1131 = vpack.c.b16 %v1035, %v1035
      %v1132 = vpack.c.b16 %v1036, %v1036
      %v1133 = vpack.c.b16 %v1037, %v1037
      %v1134 = vpack.c.b16 %v1038, %v1038
      %v1135 = vpack.c.b16 %v1039, %v1039
      %v1136 = vpack.c.b16 %v1040, %v1040
      %v1137 = vpack.c.b16 %v1041, %v1041
      %v1138 = vpack.c.b16 %v1042, %v1042
      %v1139 = vpack.c.b16 %v1043, %v1043
      %v1140 = vpack.c.b16 %v1044, %v1044
      %v1141 = vpack.c.b16 %v1045, %v1045
      %v1142 = vpack.c.b16 %v1046, %v1046
      %v1143 = vpack.c.b16 %v1047, %v1047
      %v1144 = vpack.c.b16 %v1048, %v1048
      %v1145 = vpack.c.b16 %v1049, %v1049
      %v1146 = vpack.c.b16 %v1050, %v1050
      %v1147 = vpack.c.b16 %v1051, %v1051
      %v1148 = vpack.c.b16 %v1052, %v1052
      %v1149 = vpack.c.b16 %v1053, %v1053
      %v1758 = vunpack.c.l.b16 %v302
      %v1759 = vunpack.c.l.b16 %v303
      %v1760 = vunpack.c.l.b16 %v304
      %v1761 = vunpack.c.l.b16 %v305
      %v1762 = vunpack.c.l.b16 %v306
      %v1763 = vunpack.c.l.b16 %v307
      %v1764 = vunpack.c.l.b16 %v308
      %v1765 = vunpack.c.l.b16 %v309
      %v1766 = vunpack.c.l.b16 %v310
      %v1767 = vunpack.c.l.b16 %v311
      %v1768 = vunpack.c.l.b16 %v312
      %v1769 = vunpack.c.l.b16 %v313
      %v1770 = vunpack.c.l.b16 %v314
      %v1771 = vunpack.c.l.b16 %v315
      %v1772 = vunpack.c.l.b16 %v316
      %v1773 = vunpack.c.l.b16 %v317
      %v1774 = vunpack.c.l.b16 %v318
      %v1775 = vunpack.c.l.b16 %v319
      %v1776 = vunpack.c.l.b16 %v320
      %v1777 = vunpack.c.l.b16 %v321
      %v1778 = vunpack.c.l.b16 %v322
      %v1779 = vunpack.c.l.b16 %v323
      %v1780 = vunpack.c.l.b16 %v324
      %v1781 = vunpack.c.l.b16 %v325
      %v1782 = vunpack.c.l.b16 %v326
      %v1783 = vunpack.c.l.b16 %v327
      %v1784 = vunpack.c.l.b16 %v328
      %v1785 = vunpack.c.l.b16 %v329
      %v1786 = vunpack.c.l.b16 %v330
      %v1787 = vunpack.c.l.b16 %v331
      %v1788 = vunpack.c.l.b16 %v332
      %v1789 = vunpack.c.l.b16 %v333
      %v1790 = vunpack.c.l.b16 %v334
      %v1791 = vunpack.c.l.b16 %v335
      %v1792 = vunpack.c.l.b16 %v336
      %v1793 = vunpack.c.l.b16 %v337
      %v1794 = vunpack.c.l.b16 %v338
      %v1795 = vunpack.c.l.b16 %v339
      %v1796 = vunpack.c.l.b16 %v340
      %v1797 = vunpack.c.l.b16 %v341
      %v1798 = vunpack.c.l.b16 %v342
      %v1799 = vunpack.c.l.b16 %v343
      %v1800 = vunpack.c.l.b16 %v344
      %v1801 = vunpack.c.l.b16 %v345
      %v1802 = vunpack.c.l.b16 %v346
      %v1803 = vunpack.c.l.b16 %v347
      %v1804 = vunpack.c.l.b16 %v348
      %v1805 = vunpack.c.l.b16 %v349
      %v1806 = vunpack.c.l.b16 %v350
      %v1807 = vunpack.c.l.b16 %v351
      %v1808 = vunpack.c.l.b16 %v352
      %v1809 = vunpack.c.l.b16 %v353
      %v1810 = vunpack.c.l.b16 %v354
      %v1811 = vunpack.c.l.b16 %v355
      %v1812 = vunpack.c.l.b16 %v356
      %v1813 = vunpack.c.l.b16 %v357
      %v1814 = vunpack.c.l.b16 %v358
      %v1815 = vunpack.c.l.b16 %v359
      %v1816 = vunpack.c.l.b16 %v360
      %v1817 = vunpack.c.l.b16 %v361
      %v1818 = vunpack.c.l.b16 %v362
      %v1819 = vunpack.c.l.b16 %v363
      %v1820 = vunpack.c.l.b16 %v364
      %v1821 = vunpack.c.l.b16 %v365
      %v1822 = vunpack.c.l.b16 %v366
      %v1823 = vunpack.c.l.b16 %v367
      %v1824 = vunpack.c.l.b16 %v368
      %v1825 = vunpack.c.l.b16 %v369
      %v1826 = vunpack.c.l.b16 %v370
      %v1827 = vunpack.c.l.b16 %v371
      %v1828 = vunpack.c.l.b16 %v372
      %v1829 = vunpack.c.l.b16 %v373
      %v1830 = vunpack.c.l.b16 %v374
      %v1831 = vunpack.c.l.b16 %v375
      %v1832 = vunpack.c.l.b16 %v376
      %v1833 = vunpack.c.l.b16 %v377
      %v1834 = vunpack.c.l.b16 %v378
      %v1835 = vunpack.c.l.b16 %v379
      %v1836 = vunpack.c.l.b16 %v380
      %v1837 = vunpack.c.l.b16 %v381
      %v1838 = vunpack.c.l.b16 %v382
      %v1839 = vunpack.c.l.b16 %v383
      %v1840 = vunpack.c.l.b16 %v384
      %v1841 = vunpack.c.l.b16 %v385
      %v1842 = vunpack.c.l.b16 %v386
      %v1843 = vunpack.c.l.b16 %v387
      %v1844 = vunpack.c.l.b16 %v388
      %v1845 = vunpack.c.l.b16 %v389
      %v1846 = vunpack.c.l.b16 %v390
      %v1847 = vunpack.c.l.b16 %v391
      %v1848 = vunpack.c.l.b16 %v392
      %v1849 = vunpack.c.l.b16 %v393
      %v1850 = vunpack.c.l.b16 %v394
      %v1851 = vunpack.c.l.b16 %v395
      %v1852 = vunpack.c.l.b16 %v396
      %v1853 = vunpack.c.l.b16 %v397
      %v1854 = vunpack.c.l.b16 %v398
      %v1855 = vunpack.c.l.b16 %v399
      %v1856 = vunpack.c.l.b16 %v400
      %v1857 = vunpack.c.l.b16 %v401
      %v1858 = vunpack.c.l.b16 %v402
      %v1859 = vunpack.c.l.b16 %v403
      %v1860 = vunpack.c.l.b16 %v404
      %v1861 = vunpack.c.l.b16 %v405
      %v1862 = vunpack.c.l.b16 %v406
      %v1863 = vunpack.c.l.b16 %v407
      %v1864 = vunpack.c.l.b16 %v408
      %v1865 = vunpack.c.l.b16 %v409
      %v1866 = vunpack.c.l.b16 %v410
      %v1867 = vunpack.c.l.b16 %v411
      %v1868 = vunpack.c.l.b16 %v412
      %v1869 = vunpack.c.l.b16 %v413
      %v1870 = vunpack.c.l.b16 %v414
      %v1871 = vunpack.c.l.b16 %v415
      %v1872 = vunpack.c.l.b16 %v416
      %v1873 = vunpack.c.l.b16 %v417
      %v1874 = vunpack.c.l.b16 %v418
      %v1875 = vunpack.c.l.b16 %v419
      %v1876 = vunpack.c.l.b16 %v420
      %v1877 = vunpack.c.l.b16 %v421
      %v1878 = vunpack.c.l.b16 %v422
      %v1879 = vunpack.c.l.b16 %v423
      %v1880 = vunpack.c.l.b16 %v424
      %v1881 = vunpack.c.l.b16 %v425
      %v1882 = vunpack.c.l.b16 %v426
      %v1883 = vunpack.c.l.b16 %v427
      %v1884 = vunpack.c.l.b16 %v428
      %v1885 = vunpack.c.l.b16 %v429
      %v1886 = vunpack.c.l.b16 %v430
      %v1887 = vunpack.c.l.b16 %v431
      %v1888 = vunpack.c.l.b16 %v432
      %v1889 = vunpack.c.l.b16 %v433
      %v1890 = vunpack.c.l.b16 %v434
      %v1891 = vunpack.c.l.b16 %v435
      %v1892 = vunpack.c.l.b16 %v436
      %v1893 = vunpack.c.l.b16 %v437
      %v1894 = vunpack.c.l.b16 %v438
      %v1895 = vunpack.c.l.b16 %v439
      %v1896 = vunpack.c.l.b16 %v440
      %v1897 = vunpack.c.l.b16 %v441
      %v1898 = vunpack.c.l.b16 %v442
      %v1899 = vunpack.c.l.b16 %v443
      %v1900 = vunpack.c.l.b16 %v444
      %v1901 = vunpack.c.l.b16 %v445
      %v1902 = vunpack.c.l.b16 %v446
      %v1903 = vunpack.c.l.b16 %v447
      %v1904 = vunpack.c.l.b16 %v448
      %v1905 = vunpack.c.l.b16 %v449
      %v1906 = vunpack.c.l.b16 %v450
      %v1907 = vunpack.c.l.b16 %v451
      %v1908 = vunpack.c.l.b16 %v452
      %v1909 = vunpack.c.l.b16 %v453
      %v1910 = vunpack.c.l.b16 %v454
      %v1911 = vunpack.c.l.b16 %v455
      %v1912 = vunpack.c.l.b16 %v456
      %v1913 = vunpack.c.l.b16 %v457
      %v1914 = vunpack.c.l.b16 %v458
      %v1915 = vunpack.c.l.b16 %v459
      %v1916 = vunpack.c.l.b16 %v460
      %v1917 = vunpack.c.l.b16 %v461
      %v1918 = vunpack.c.l.b16 %v462
      %v1919 = vunpack.c.l.b16 %v463
      %v1920 = vunpack.c.l.b16 %v464
      %v1921 = vunpack.c.l.b16 %v465
      %v1922 = vunpack.c.l.b16 %v466
      %v1923 = vunpack.c.l.b16 %v467
      %v1924 = vunpack.c.l.b16 %v468
      %v1925 = vunpack.c.l.b16 %v469
      %v1926 = vunpack.c.l.b16 %v470
      %v1927 = vunpack.c.l.b16 %v471
      %v1928 = vunpack.c.l.b16 %v472
      %v1929 = vunpack.c.l.b16 %v473
      %v1930 = vunpack.c.l.b16 %v474
      %v1931 = vunpack.c.l.b16 %v475
      %v1932 = vunpack.c.l.b16 %v476
      %v1933 = vunpack.c.l.b16 %v477
      %v1934 = vunpack.c.l.b16 %v478
      %v1935 = vunpack.c.l.b16 %v479
      %v1936 = vunpack.c.l.b16 %v480
      %v1937 = vunpack.c.l.b16 %v481
      %v1938 = vunpack.c.l.b16 %v482
      %v1939 = vunpack.c.l.b16 %v483
      %v1940 = vunpack.c.l.b16 %v484
      %v1941 = vunpack.c.l.b16 %v485
      %v1942 = vunpack.c.l.b16 %v486
      %v1943 = vunpack.c.l.b16 %v487
      %v1944 = vunpack.c.l.b16 %v488
      %v1945 = vunpack.c.l.b16 %v489
      %v1946 = vunpack.c.l.b16 %v490
      %v1947 = vunpack.c.l.b16 %v491
      %v1948 = vunpack.c.l.b16 %v492
      %v1949 = vunpack.c.l.b16 %v493
      %v1950 = vunpack.c.l.b16 %v494
      %v1951 = vunpack.c.l.b16 %v495
      %v1952 = vunpack.c.l.b16 %v496
      %v1953 = vunpack.c.l.b16 %v497
      %v1954 = vunpack.c.l.b16 %v498
      %v1955 = vunpack.c.l.b16 %v499
      %v1956 = vunpack.c.l.b16 %v500
      %v1957 = vunpack.c.l.b16 %v501
      %v1958 = vunpack.c.l.b16 %v502
      %v1959 = vunpack.c.l.b16 %v503
      %v1960 = vunpack.c.l.b16 %v504
      %v1961 = vunpack.c.l.b16 %v505
      %v1962 = vunpack.c.l.b16 %v506
      %v1963 = vunpack.c.l.b16 %v507
      %v1964 = vunpack.c.l.b16 %v508
      %v1965 = vunpack.c.l.b16 %v509
      %v1966 = vunpack.c.l.b16 %v510
      %v1967 = vunpack.c.l.b16 %v511
      %v1968 = vunpack.c.l.b16 %v512
      %v1969 = vunpack.c.l.b16 %v513
      %v1970 = vunpack.c.l.b16 %v514
      %v1971 = vunpack.c.l.b16 %v515
      %v1972 = vunpack.c.l.b16 %v516
      %v1973 = vunpack.c.l.b16 %v517
      %v1974 = vunpack.c.l.b16 %v518
      %v1975 = vunpack.c.l.b16 %v519
      %v1976 = vunpack.c.l.b16 %v520
      %v1977 = vunpack.c.l.b16 %v521
      %v1978 = vunpack.c.l.b16 %v522
      %v1979 = vunpack.c.l.b16 %v523
      %v1980 = vunpack.c.l.b16 %v524
      %v1981 = vunpack.c.l.b16 %v525
      %v1982 = vunpack.c.l.b16 %v526
      %v1983 = vunpack.c.l.b16 %v527
      %v1984 = vunpack.c.l.b16 %v528
      %v1985 = vunpack.c.l.b16 %v529
      %v1986 = vunpack.c.l.b16 %v530
      %v1987 = vunpack.c.l.b16 %v531
      %v1988 = vunpack.c.l.b16 %v532
      %v1989 = vunpack.c.l.b16 %v533
      %v1990 = vunpack.c.l.b16 %v534
      %v1991 = vunpack.c.l.b16 %v535
      %v1992 = vunpack.c.l.b16 %v536
      %v1993 = vunpack.c.l.b16 %v537
      %v1994 = vunpack.c.l.b16 %v538
      %v1995 = vunpack.c.l.b16 %v539
      %v1996 = vunpack.c.l.b16 %v540
      %v1997 = vunpack.c.l.b16 %v541
      %v1998 = vunpack.c.l.b16 %v542
      %v1999 = vunpack.c.l.b16 %v543
      %v2000 = vunpack.c.l.b16 %v544
      %v2001 = vunpack.c.l.b16 %v545
      %v2002 = vunpack.c.l.b16 %v546
      %v2003 = vunpack.c.l.b16 %v547
      %v2004 = vunpack.c.l.b16 %v548
      %v2005 = vunpack.c.l.b16 %v549
      %v2006 = vunpack.c.l.b16 %v550
      %v2007 = vunpack.c.l.b16 %v551
      %v2008 = vunpack.c.l.b16 %v552
      %v2009 = vunpack.c.l.b16 %v553
      %v2010 = vunpack.c.l.b16 %v554
      %v2011 = vunpack.c.l.b16 %v555
      %v2012 = vunpack.c.l.b16 %v556
      %v2013 = vunpack.c.l.b16 %v557
      %v2014 = vunpack.c.l.b16 %v558
      %v2015 = vunpack.c.l.b16 %v559
      %v2016 = vunpack.c.l.b16 %v560
      %v2017 = vunpack.c.l.b16 %v561
      %v2018 = vunpack.c.l.b16 %v562
      %v2019 = vunpack.c.l.b16 %v563
      %v2020 = vunpack.c.l.b16 %v564
      %v2021 = vunpack.c.l.b16 %v565
      %v2022 = vunpack.c.l.b16 %v566
      %v2023 = vunpack.c.l.b16 %v567
      %v2024 = vunpack.c.l.b16 %v568
      %v2025 = vunpack.c.l.b16 %v569
      %v2026 = vunpack.c.l.b16 %v570
      %v2027 = vunpack.c.l.b16 %v571
      %v2028 = vunpack.c.l.b16 %v572
      %v2029 = vunpack.c.l.b16 %v573
      %v2030 = vunpack.c.l.b16 %v574
      %v2031 = vunpack.c.l.b16 %v575
      %v2032 = vunpack.c.l.b16 %v576
      %v2033 = vunpack.c.l.b16 %v577
      %v2034 = vunpack.c.l.b16 %v578
      %v2035 = vunpack.c.l.b16 %v579
      %v2036 = vunpack.c.l.b16 %v580
      %v2037 = vunpack.c.l.b16 %v581
      %v2038 = vunpack.c.l.b16 %v582
      %v2039 = vunpack.c.l.b16 %v583
      %v2040 = vunpack.c.l.b16 %v584
      %v2041 = vunpack.c.l.b16 %v585
      %v2042 = vunpack.c.l.b16 %v586
      %v2043 = vunpack.c.l.b16 %v587
      %v2044 = vunpack.c.l.b16 %v588
      %v2045 = vunpack.c.l.b16 %v589
      %v2046 = vunpack.c.l.b16 %v590
      %v2047 = vunpack.c.l.b16 %v591
      %v2048 = vunpack.c.l.b16 %v592
      %v2049 = vunpack.c.l.b16 %v593
      %v2050 = vunpack.c.l.b16 %v594
      %v2051 = vunpack.c.l.b16 %v595
      %v2052 = vunpack.c.l.b16 %v596
      %v2053 = vunpack.c.l.b16 %v597
      %v2054 = vunpack.c.l.b16 %v598
      %v2055 = vunpack.c.l.b16 %v599
      %v2056 = vunpack.c.l.b16 %v600
      %v2057 = vunpack.c.l.b16 %v601
      %v2058 = vunpack.c.l.b16 %v602
      %v2059 = vunpack.c.l.b16 %v603
      %v2060 = vunpack.c.l.b16 %v604
      %v2061 = vunpack.c.l.b16 %v605
      %v2062 = vunpack.c.l.b16 %v606
      %v2063 = vunpack.c.l.b16 %v607
      %v2064 = vunpack.c.l.b16 %v608
      %v2065 = vunpack.c.l.b16 %v609
      %v2066 = vunpack.c.l.b16 %v610
      %v2067 = vunpack.c.l.b16 %v611
      %v2068 = vunpack.c.l.b16 %v612
      %v2069 = vunpack.c.l.b16 %v613
      %v2070 = vunpack.c.l.b16 %v614
      %v2071 = vunpack.c.l.b16 %v615
      %v2072 = vunpack.c.l.b16 %v616
      %v2073 = vunpack.c.l.b16 %v617
      %v2074 = vunpack.c.l.b16 %v618
      %v2075 = vunpack.c.l.b16 %v619
      %v2076 = vunpack.c.l.b16 %v620
      %v2077 = vunpack.c.l.b16 %v621
      %v2078 = vunpack.c.l.b16 %v622
      %v2079 = vunpack.c.l.b16 %v623
      %v2080 = vunpack.c.l.b16 %v624
      %v2081 = vunpack.c.l.b16 %v625
      %v2082 = vunpack.c.l.b16 %v626
      %v2083 = vunpack.c.l.b16 %v627
      %v2084 = vunpack.c.l.b16 %v628
      %v2085 = vunpack.c.l.b16 %v629
      %v2086 = vunpack.c.l.b16 %v630
      %v2087 = vunpack.c.l.b16 %v631
      %v2088 = vunpack.c.l.b16 %v632
      %v2089 = vunpack.c.l.b16 %v633
      %v2090 = vunpack.c.l.b16 %v634
      %v2091 = vunpack.c.l.b16 %v635
      %v2092 = vunpack.c.l.b16 %v636
      %v2093 = vunpack.c.l.b16 %v637
      %v2094 = vunpack.c.l.b16 %v638
      %v2095 = vunpack.c.l.b16 %v639
      %v2096 = vunpack.c.l.b16 %v640
      %v2097 = vunpack.c.l.b16 %v641
      %v2098 = vunpack.c.l.b16 %v642
      %v2099 = vunpack.c.l.b16 %v643
      %v2100 = vunpack.c.l.b16 %v644
      %v2101 = vunpack.c.l.b16 %v645
      %v2102 = vunpack.c.l.b16 %v646
      %v2103 = vunpack.c.l.b16 %v647
      %v2104 = vunpack.c.l.b16 %v648
      %v2105 = vunpack.c.l.b16 %v649
      %v2106 = vunpack.c.l.b16 %v650
      %v2107 = vunpack.c.l.b16 %v651
      %v2108 = vunpack.c.l.b16 %v652
      %v2109 = vunpack.c.l.b16 %v653
      %v2110 = vunpack.c.l.b16 %v654
      %v2111 = vunpack.c.l.b16 %v655
      %v2112 = vunpack.c.l.b16 %v656
      %v2113 = vunpack.c.l.b16 %v657
      %v2114 = vunpack.c.l.b16 %v658
      %v2115 = vunpack.c.l.b16 %v659
      %v2116 = vunpack.c.l.b16 %v660
      %v2117 = vunpack.c.l.b16 %v661
      %v2118 = vunpack.c.l.b16 %v662
      %v2119 = vunpack.c.l.b16 %v663
      %v2120 = vunpack.c.l.b16 %v664
      %v2121 = vunpack.c.l.b16 %v665
      %v2122 = vunpack.c.l.b16 %v666
      %v2123 = vunpack.c.l.b16 %v667
      %v2124 = vunpack.c.l.b16 %v668
      %v2125 = vunpack.c.l.b16 %v669
      %v2126 = vunpack.c.l.b16 %v670
      %v2127 = vunpack.c.l.b16 %v671
      %v2128 = vunpack.c.l.b16 %v672
      %v2129 = vunpack.c.l.b16 %v673
      %v2130 = vunpack.c.l.b16 %v674
      %v2131 = vunpack.c.l.b16 %v675
      %v2132 = vunpack.c.l.b16 %v676
      %v2133 = vunpack.c.l.b16 %v677
      %v2134 = vunpack.c.l.b16 %v678
      %v2135 = vunpack.c.l.b16 %v679
      %v2136 = vunpack.c.l.b16 %v680
      %v2137 = vunpack.c.l.b16 %v681
      %v2138 = vunpack.c.l.b16 %v682
      %v2139 = vunpack.c.l.b16 %v683
      %v2140 = vunpack.c.l.b16 %v684
      %v2141 = vunpack.c.l.b16 %v685
      %v2142 = vunpack.c.l.b16 %v686
      %v2143 = vunpack.c.l.b16 %v687
      %v2144 = vunpack.c.l.b16 %v688
      %v2145 = vunpack.c.l.b16 %v689
      %v2146 = vunpack.c.l.b16 %v690
      %v2147 = vunpack.c.l.b16 %v691
      %v2148 = vunpack.c.l.b16 %v692
      %v2149 = vunpack.c.l.b16 %v693
      %v2150 = vunpack.c.l.b16 %v694
      %v2151 = vunpack.c.l.b16 %v695
      %v2152 = vunpack.c.l.b16 %v696
      %v2153 = vunpack.c.l.b16 %v697
      %v2154 = vunpack.c.l.b16 %v698
      %v2155 = vunpack.c.l.b16 %v699
      %v2156 = vunpack.c.l.b16 %v700
      %v2157 = vunpack.c.l.b16 %v701
      %v2158 = vunpack.c.l.b16 %v702
      %v2159 = vunpack.c.l.b16 %v703
      %v2160 = vunpack.c.l.b16 %v704
      %v2161 = vunpack.c.l.b16 %v705
      %v2162 = vunpack.c.l.b16 %v706
      %v2163 = vunpack.c.l.b16 %v707
      %v2164 = vunpack.c.l.b16 %v708
      %v2165 = vunpack.c.l.b16 %v709
      %v2166 = vunpack.c.l.b16 %v710
      %v2167 = vunpack.c.l.b16 %v711
      %v2168 = vunpack.c.l.b16 %v712
      %v2169 = vunpack.c.l.b16 %v713
      %v2170 = vunpack.c.l.b16 %v714
      %v2171 = vunpack.c.l.b16 %v715
      %v2172 = vunpack.c.l.b16 %v716
      %v2173 = vunpack.c.l.b16 %v717
      %v2174 = vunpack.c.l.b16 %v718
      %v2175 = vunpack.c.l.b16 %v719
      %v2176 = vunpack.c.l.b16 %v720
      %v2177 = vunpack.c.l.b16 %v721
      %v2178 = vunpack.c.l.b16 %v722
      %v2179 = vunpack.c.l.b16 %v723
      %v2180 = vunpack.c.l.b16 %v724
      %v2181 = vunpack.c.l.b16 %v725
      %v2182 = vunpack.c.l.b16 %v726
      %v2183 = vunpack.c.l.b16 %v727
      %v2184 = vunpack.c.l.b16 %v728
      %v2185 = vunpack.c.l.b16 %v729
      %v2186 = vunpack.c.l.b16 %v730
      %v2187 = vunpack.c.l.b16 %v731
      %v2188 = vunpack.c.l.b16 %v732
      %v2189 = vunpack.c.l.b16 %v733
      %v2190 = vunpack.c.l.b16 %v734
      %v2191 = vunpack.c.l.b16 %v735
      %v2192 = vunpack.c.l.b16 %v736
      %v2193 = vunpack.c.l.b16 %v737
      %v2194 = vunpack.c.l.b16 %v738
      %v2195 = vunpack.c.l.b16 %v739
      %v2196 = vunpack.c.l.b16 %v740
      %v2197 = vunpack.c.l.b16 %v741
      %v2198 = vunpack.c.l.b16 %v742
      %v2199 = vunpack.c.l.b16 %v743
      %v2200 = vunpack.c.l.b16 %v744
      %v2201 = vunpack.c.l.b16 %v745
      %v2202 = vunpack.c.l.b16 %v746
      %v2203 = vunpack.c.l.b16 %v747
      %v2204 = vunpack.c.l.b16 %v748
      %v2205 = vunpack.c.l.b16 %v749
      %v2206 = vunpack.c.l.b16 %v750
      %v2207 = vunpack.c.l.b16 %v751
      %v2208 = vunpack.c.l.b16 %v752
      %v2209 = vunpack.c.l.b16 %v753
      %v2210 = vunpack.c.l.b16 %v754
      %v2211 = vunpack.c.l.b16 %v755
      %v2212 = vunpack.c.l.b16 %v756
      %v2213 = vunpack.c.l.b16 %v757
      %v2214 = vunpack.c.l.b16 %v758
      %v2215 = vunpack.c.l.b16 %v759
      %v2216 = vunpack.c.l.b16 %v760
      %v2217 = vunpack.c.l.b16 %v761
      %v2218 = vunpack.c.l.b16 %v762
      %v2219 = vunpack.c.l.b16 %v763
      %v2220 = vunpack.c.l.b16 %v764
      %v2221 = vunpack.c.l.b16 %v765
      %v2222 = vunpack.c.l.b16 %v766
      %v2223 = vunpack.c.l.b16 %v767
      %v2224 = vunpack.c.l.b16 %v768
      %v2225 = vunpack.c.l.b16 %v769
      %v2226 = vunpack.c.l.b16 %v770
      %v2227 = vunpack.c.l.b16 %v771
      %v2228 = vunpack.c.l.b16 %v772
      %v2229 = vunpack.c.l.b16 %v773
      %v2230 = vunpack.c.l.b16 %v774
      %v2231 = vunpack.c.l.b16 %v775
      %v2232 = vunpack.c.l.b16 %v776
      %v2233 = vunpack.c.l.b16 %v777
      %v2234 = vunpack.c.l.b16 %v778
      %v2235 = vunpack.c.l.b16 %v779
      %v2236 = vunpack.c.l.b16 %v780
      %v2237 = vunpack.c.l.b16 %v781
      %v2238 = vunpack.c.l.b16 %v782
      %v2239 = vunpack.c.l.b16 %v783
      %v2240 = vunpack.c.l.b16 %v784
      %v2241 = vunpack.c.l.b16 %v785
      %v2242 = vunpack.c.l.b16 %v786
      %v2243 = vunpack.c.l.b16 %v787
      %v2244 = vunpack.c.l.b16 %v788
      %v2245 = vunpack.c.l.b16 %v789
      %v2246 = vunpack.c.l.b16 %v790
      %v2247 = vunpack.c.l.b16 %v791
      %v2248 = vunpack.c.l.b16 %v792
      %v2249 = vunpack.c.l.b16 %v793
      %v2250 = vunpack.c.l.b16 %v794
      %v2251 = vunpack.c.l.b16 %v795
      %v2252 = vunpack.c.l.b16 %v796
      %v2253 = vunpack.c.l.b16 %v797
      %v2254 = vunpack.c.l.b16 %v798
      %v2255 = vunpack.c.l.b16 %v799
      %v2256 = vunpack.c.l.b16 %v800
      %v2257 = vunpack.c.l.b16 %v801
      %v2258 = vunpack.c.l.b16 %v802
      %v2259 = vunpack.c.l.b16 %v803
      %v2260 = vunpack.c.l.b16 %v804
      %v2261 = vunpack.c.l.b16 %v805
      %v2262 = vunpack.c.l.b16 %v806
      %v2263 = vunpack.c.l.b16 %v807
      %v2264 = vunpack.c.l.b16 %v808
      %v2265 = vunpack.c.l.b16 %v809
      %v2266 = vunpack.c.l.b16 %v810
      %v2267 = vunpack.c.l.b16 %v811
      %v2268 = vunpack.c.l.b16 %v812
      %v2269 = vunpack.c.l.b16 %v813
      %v2270 = vpack.c.b16 %v1759, %v1758
      %v2271 = vpack.c.b16 %v1761, %v1760
      %v2272 = vpack.c.b16 %v1763, %v1762
      %v2273 = vpack.c.b16 %v1765, %v1764
      %v2274 = vpack.c.b16 %v1767, %v1766
      %v2275 = vpack.c.b16 %v1769, %v1768
      %v2276 = vpack.c.b16 %v1771, %v1770
      %v2277 = vpack.c.b16 %v1773, %v1772
      %v2278 = vpack.c.b16 %v1775, %v1774
      %v2279 = vpack.c.b16 %v1777, %v1776
      %v2280 = vpack.c.b16 %v1779, %v1778
      %v2281 = vpack.c.b16 %v1781, %v1780
      %v2282 = vpack.c.b16 %v1783, %v1782
      %v2283 = vpack.c.b16 %v1785, %v1784
      %v2284 = vpack.c.b16 %v1787, %v1786
      %v2285 = vpack.c.b16 %v1789, %v1788
      %v2286 = vpack.c.b16 %v1791, %v1790
      %v2287 = vpack.c.b16 %v1793, %v1792
      %v2288 = vpack.c.b16 %v1795, %v1794
      %v2289 = vpack.c.b16 %v1797, %v1796
      %v2290 = vpack.c.b16 %v1799, %v1798
      %v2291 = vpack.c.b16 %v1801, %v1800
      %v2292 = vpack.c.b16 %v1803, %v1802
      %v2293 = vpack.c.b16 %v1805, %v1804
      %v2294 = vpack.c.b16 %v1807, %v1806
      %v2295 = vpack.c.b16 %v1809, %v1808
      %v2296 = vpack.c.b16 %v1811, %v1810
      %v2297 = vpack.c.b16 %v1813, %v1812
      %v2298 = vpack.c.b16 %v1815, %v1814
      %v2299 = vpack.c.b16 %v1817, %v1816
      %v2300 = vpack.c.b16 %v1819, %v1818
      %v2301 = vpack.c.b16 %v1821, %v1820
      %v2302 = vpack.c.b16 %v1823, %v1822
      %v2303 = vpack.c.b16 %v1825, %v1824
      %v2304 = vpack.c.b16 %v1827, %v1826
      %v2305 = vpack.c.b16 %v1829, %v1828
      %v2306 = vpack.c.b16 %v1831, %v1830
      %v2307 = vpack.c.b16 %v1833, %v1832
      %v2308 = vpack.c.b16 %v1835, %v1834
      %v2309 = vpack.c.b16 %v1837, %v1836
      %v2310 = vpack.c.b16 %v1839, %v1838
      %v2311 = vpack.c.b16 %v1841, %v1840
      %v2312 = vpack.c.b16 %v1843, %v1842
      %v2313 = vpack.c.b16 %v1845, %v1844
      %v2314 = vpack.c.b16 %v1847, %v1846
      %v2315 = vpack.c.b16 %v1849, %v1848
      %v2316 = vpack.c.b16 %v1851, %v1850
      %v2317 = vpack.c.b16 %v1853, %v1852
      %v2318 = vpack.c.b16 %v1855, %v1854
      %v2319 = vpack.c.b16 %v1857, %v1856
      %v2320 = vpack.c.b16 %v1859, %v1858
      %v2321 = vpack.c.b16 %v1861, %v1860
      %v2322 = vpack.c.b16 %v1863, %v1862
      %v2323 = vpack.c.b16 %v1865, %v1864
      %v2324 = vpack.c.b16 %v1867, %v1866
      %v2325 = vpack.c.b16 %v1869, %v1868
      %v2326 = vpack.c.b16 %v1871, %v1870
      %v2327 = vpack.c.b16 %v1873, %v1872
      %v2328 = vpack.c.b16 %v1875, %v1874
      %v2329 = vpack.c.b16 %v1877, %v1876
      %v2330 = vpack.c.b16 %v1879, %v1878
      %v2331 = vpack.c.b16 %v1881, %v1880
      %v2332 = vpack.c.b16 %v1883, %v1882
      %v2333 = vpack.c.b16 %v1885, %v1884
      %v2334 = vpack.c.b16 %v1887, %v1886
      %v2335 = vpack.c.b16 %v1889, %v1888
      %v2336 = vpack.c.b16 %v1891, %v1890
      %v2337 = vpack.c.b16 %v1893, %v1892
      %v2338 = vpack.c.b16 %v1895, %v1894
      %v2339 = vpack.c.b16 %v1897, %v1896
      %v2340 = vpack.c.b16 %v1899, %v1898
      %v2341 = vpack.c.b16 %v1901, %v1900
      %v2342 = vpack.c.b16 %v1903, %v1902
      %v2343 = vpack.c.b16 %v1905, %v1904
      %v2344 = vpack.c.b16 %v1907, %v1906
      %v2345 = vpack.c.b16 %v1909, %v1908
      %v2346 = vpack.c.b16 %v1911, %v1910
      %v2347 = vpack.c.b16 %v1913, %v1912
      %v2348 = vpack.c.b16 %v1915, %v1914
      %v2349 = vpack.c.b16 %v1917, %v1916
      %v2350 = vpack.c.b16 %v1919, %v1918
      %v2351 = vpack.c.b16 %v1921, %v1920
      %v2352 = vpack.c.b16 %v1923, %v1922
      %v2353 = vpack.c.b16 %v1925, %v1924
      %v2354 = vpack.c.b16 %v1927, %v1926
      %v2355 = vpack.c.b16 %v1929, %v1928
      %v2356 = vpack.c.b16 %v1931, %v1930
      %v2357 = vpack.c.b16 %v1933, %v1932
      %v2358 = vpack.c.b16 %v1935, %v1934
      %v2359 = vpack.c.b16 %v1937, %v1936
      %v2360 = vpack.c.b16 %v1939, %v1938
      %v2361 = vpack.c.b16 %v1941, %v1940
      %v2362 = vpack.c.b16 %v1943, %v1942
      %v2363 = vpack.c.b16 %v1945, %v1944
      %v2364 = vpack.c.b16 %v1947, %v1946
      %v2365 = vpack.c.b16 %v1949, %v1948
      %v2366 = vpack.c.b16 %v1951, %v1950
      %v2367 = vpack.c.b16 %v1953, %v1952
      %v2368 = vpack.c.b16 %v1955, %v1954
      %v2369 = vpack.c.b16 %v1957, %v1956
      %v2370 = vpack.c.b16 %v1959, %v1958
      %v2371 = vpack.c.b16 %v1961, %v1960
      %v2372 = vpack.c.b16 %v1963, %v1962
      %v2373 = vpack.c.b16 %v1965, %v1964
      %v2374 = vpack.c.b16 %v1967, %v1966
      %v2375 = vpack.c.b16 %v1969, %v1968
      %v2376 = vpack.c.b16 %v1971, %v1970
      %v2377 = vpack.c.b16 %v1973, %v1972
      %v2378 = vpack.c.b16 %v1975, %v1974
      %v2379 = vpack.c.b16 %v1977, %v1976
      %v2380 = vpack.c.b16 %v1979, %v1978
      %v2381 = vpack.c.b16 %v1981, %v1980
      %v2382 = vpack.c.b16 %v1983, %v1982
      %v2383 = vpack.c.b16 %v1985, %v1984
      %v2384 = vpack.c.b16 %v1987, %v1986
      %v2385 = vpack.c.b16 %v1989, %v1988
      %v2386 = vpack.c.b16 %v1991, %v1990
      %v2387 = vpack.c.b16 %v1993, %v1992
      %v2388 = vpack.c.b16 %v1995, %v1994
      %v2389 = vpack.c.b16 %v1997, %v1996
      %v2390 = vpack.c.b16 %v1999, %v1998
      %v2391 = vpack.c.b16 %v2001, %v2000
      %v2392 = vpack.c.b16 %v2003, %v2002
      %v2393 = vpack.c.b16 %v2005, %v2004
      %v2394 = vpack.c.b16 %v2007, %v2006
      %v2395 = vpack.c.b16 %v2009, %v2008
      %v2396 = vpack.c.b16 %v2011, %v2010
      %v2397 = vpack.c.b16 %v2013, %v2012
      %v2398 = vpack.c.b16 %v2015, %v2014
      %v2399 = vpack.c.b16 %v2017, %v2016
      %v2400 = vpack.c.b16 %v2019, %v2018
      %v2401 = vpack.c.b16 %v2021, %v2020
      %v2402 = vpack.c.b16 %v2023, %v2022
      %v2403 = vpack.c.b16 %v2025, %v2024
      %v2404 = vpack.c.b16 %v2027, %v2026
      %v2405 = vpack.c.b16 %v2029, %v2028
      %v2406 = vpack.c.b16 %v2031, %v2030
      %v2407 = vpack.c.b16 %v2033, %v2032
      %v2408 = vpack.c.b16 %v2035, %v2034
      %v2409 = vpack.c.b16 %v2037, %v2036
      %v2410 = vpack.c.b16 %v2039, %v2038
      %v2411 = vpack.c.b16 %v2041, %v2040
      %v2412 = vpack.c.b16 %v2043, %v2042
      %v2413 = vpack.c.b16 %v2045, %v2044
      %v2414 = vpack.c.b16 %v2047, %v2046
      %v2415 = vpack.c.b16 %v2049, %v2048
      %v2416 = vpack.c.b16 %v2051, %v2050
      %v2417 = vpack.c.b16 %v2053, %v2052
      %v2418 = vpack.c.b16 %v2055, %v2054
      %v2419 = vpack.c.b16 %v2057, %v2056
      %v2420 = vpack.c.b16 %v2059, %v2058
      %v2421 = vpack.c.b16 %v2061, %v2060
      %v2422 = vpack.c.b16 %v2063, %v2062
      %v2423 = vpack.c.b16 %v2065, %v2064
      %v2424 = vpack.c.b16 %v2067, %v2066
      %v2425 = vpack.c.b16 %v2069, %v2068
      %v2426 = vpack.c.b16 %v2071, %v2070
      %v2427 = vpack.c.b16 %v2073, %v2072
      %v2428 = vpack.c.b16 %v2075, %v2074
      %v2429 = vpack.c.b16 %v2077, %v2076
      %v2430 = vpack.c.b16 %v2079, %v2078
      %v2431 = vpack.c.b16 %v2081, %v2080
      %v2432 = vpack.c.b16 %v2083, %v2082
      %v2433 = vpack.c.b16 %v2085, %v2084
      %v2434 = vpack.c.b16 %v2087, %v2086
      %v2435 = vpack.c.b16 %v2089, %v2088
      %v2436 = vpack.c.b16 %v2091, %v2090
      %v2437 = vpack.c.b16 %v2093, %v2092
      %v2438 = vpack.c.b16 %v2095, %v2094
      %v2439 = vpack.c.b16 %v2097, %v2096
      %v2440 = vpack.c.b16 %v2099, %v2098
      %v2441 = vpack.c.b16 %v2101, %v2100
      %v2442 = vpack.c.b16 %v2103, %v2102
      %v2443 = vpack.c.b16 %v2105, %v2104
      %v2444 = vpack.c.b16 %v2107, %v2106
      %v2445 = vpack.c.b16 %v2109, %v2108
      %v2446 = vpack.c.b16 %v2111, %v2110
      %v2447 = vpack.c.b16 %v2113, %v2112
      %v2448 = vpack.c.b16 %v2115, %v2114
      %v2449 = vpack.c.b16 %v2117, %v2116
      %v2450 = vpack.c.b16 %v2119, %v2118
      %v2451 = vpack.c.b16 %v2121, %v2120
      %v2452 = vpack.c.b16 %v2123, %v2122
      %v2453 = vpack.c.b16 %v2125, %v2124
      %v2454 = vpack.c.b16 %v2127, %v2126
      %v2455 = vpack.c.b16 %v2129, %v2128
      %v2456 = vpack.c.b16 %v2131, %v2130
      %v2457 = vpack.c.b16 %v2133, %v2132
      %v2458 = vpack.c.b16 %v2135, %v2134
      %v2459 = vpack.c.b16 %v2137, %v2136
      %v2460 = vpack.c.b16 %v2139, %v2138
      %v2461 = vpack.c.b16 %v2141, %v2140
      %v2462 = vpack.c.b16 %v2143, %v2142
      %v2463 = vpack.c.b16 %v2145, %v2144
      %v2464 = vpack.c.b16 %v2147, %v2146
      %v2465 = vpack.c.b16 %v2149, %v2148
      %v2466 = vpack.c.b16 %v2151, %v2150
      %v2467 = vpack.c.b16 %v2153, %v2152
      %v2468 = vpack.c.b16 %v2155, %v2154
      %v2469 = vpack.c.b16 %v2157, %v2156
      %v2470 = vpack.c.b16 %v2159, %v2158
      %v2471 = vpack.c.b16 %v2161, %v2160
      %v2472 = vpack.c.b16 %v2163, %v2162
      %v2473 = vpack.c.b16 %v2165, %v2164
      %v2474 = vpack.c.b16 %v2167, %v2166
      %v2475 = vpack.c.b16 %v2169, %v2168
      %v2476 = vpack.c.b16 %v2171, %v2170
      %v2477 = vpack.c.b16 %v2173, %v2172
      %v2478 = vpack.c.b16 %v2175, %v2174
      %v2479 = vpack.c.b16 %v2177, %v2176
      %v2480 = vpack.c.b16 %v2179, %v2178
      %v2481 = vpack.c.b16 %v2181, %v2180
      %v2482 = vpack.c.b16 %v2183, %v2182
      %v2483 = vpack.c.b16 %v2185, %v2184
      %v2484 = vpack.c.b16 %v2187, %v2186
      %v2485 = vpack.c.b16 %v2189, %v2188
      %v2486 = vpack.c.b16 %v2191, %v2190
      %v2487 = vpack.c.b16 %v2193, %v2192
      %v2488 = vpack.c.b16 %v2195, %v2194
      %v2489 = vpack.c.b16 %v2197, %v2196
      %v2490 = vpack.c.b16 %v2199, %v2198
      %v2491 = vpack.c.b16 %v2201, %v2200
      %v2492 = vpack.c.b16 %v2203, %v2202
      %v2493 = vpack.c.b16 %v2205, %v2204
      %v2494 = vpack.c.b16 %v2207, %v2206
      %v2495 = vpack.c.b16 %v2209, %v2208
      %v2496 = vpack.c.b16 %v2211, %v2210
      %v2497 = vpack.c.b16 %v2213, %v2212
      %v2498 = vpack.c.b16 %v2215, %v2214
      %v2499 = vpack.c.b16 %v2217, %v2216
      %v2500 = vpack.c.b16 %v2219, %v2218
      %v2501 = vpack.c.b16 %v2221, %v2220
      %v2502 = vpack.c.b16 %v2223, %v2222
      %v2503 = vpack.c.b16 %v2225, %v2224
      %v2504 = vpack.c.b16 %v2227, %v2226
      %v2505 = vpack.c.b16 %v2229, %v2228
      %v2506 = vpack.c.b16 %v2231, %v2230
      %v2507 = vpack.c.b16 %v2233, %v2232
      %v2508 = vpack.c.b16 %v2235, %v2234
      %v2509 = vpack.c.b16 %v2237, %v2236
      %v2510 = vpack.c.b16 %v2239, %v2238
      %v2511 = vpack.c.b16 %v2241, %v2240
      %v2512 = vpack.c.b16 %v2243, %v2242
      %v2513 = vpack.c.b16 %v2245, %v2244
      %v2514 = vpack.c.b16 %v2247, %v2246
      %v2515 = vpack.c.b16 %v2249, %v2248
      %v2516 = vpack.c.b16 %v2251, %v2250
      %v2517 = vpack.c.b16 %v2253, %v2252
      %v2518 = vpack.c.b16 %v2255, %v2254
      %v2519 = vpack.c.b16 %v2257, %v2256
      %v2520 = vpack.c.b16 %v2259, %v2258
      %v2521 = vpack.c.b16 %v2261, %v2260
      %v2522 = vpack.c.b16 %v2263, %v2262
      %v2523 = vpack.c.b16 %v2265, %v2264
      %v2524 = vpack.c.b16 %v2267, %v2266
      %v2525 = vpack.c.b16 %v2269, %v2268
      %2782 = vmatprep.subr.bf16.mxu0 0
      %2783 = vmatpush1.bf16.msra.mxu0 %v2270
      %2784 = vmatprep.subr.bf16.mxu0 0
      %2785 = vmatpush1.bf16.msra.mxu0 %v2271
      %2786 = vmatprep.subr.bf16.mxu0 0
      %2787 = vmatpush1.bf16.msra.mxu0 %v2272
      %2788 = vmatprep.subr.bf16.mxu0 0
      %2789 = vmatpush1.bf16.msra.mxu0 %v2273
      %2790 = vmatprep.subr.bf16.mxu0 0
      %2791 = vmatpush1.bf16.msra.mxu0 %v2274
      %2792 = vmatprep.subr.bf16.mxu0 0
      %2793 = vmatpush1.bf16.msra.mxu0 %v2275
      %2794 = vmatprep.subr.bf16.mxu0 0
      %2795 = vmatpush1.bf16.msra.mxu0 %v2276
      %2796 = vmatprep.subr.bf16.mxu0 0
      %2797 = vmatpush1.bf16.msra.mxu0 %v2277
      %2798 = vmatprep.subr.bf16.mxu0 0
      %2799 = vmatpush1.bf16.msra.mxu0 %v2278
      %2800 = vmatprep.subr.bf16.mxu0 0
      %2801 = vmatpush1.bf16.msra.mxu0 %v2279
      %2802 = vmatprep.subr.bf16.mxu0 0
      %2803 = vmatpush1.bf16.msra.mxu0 %v2280
      %2804 = vmatprep.subr.bf16.mxu0 0
      %2805 = vmatpush1.bf16.msra.mxu0 %v2281
      %2806 = vmatprep.subr.bf16.mxu0 0
      %2807 = vmatpush1.bf16.msra.mxu0 %v2282
      %2808 = vmatprep.subr.bf16.mxu0 0
      %2809 = vmatpush1.bf16.msra.mxu0 %v2283
      %2810 = vmatprep.subr.bf16.mxu0 0
      %2811 = vmatpush1.bf16.msra.mxu0 %v2284
      %2812 = vmatprep.subr.bf16.mxu0 0
      %2813 = vmatpush1.bf16.msra.mxu0 %v2285
      %2814 = vmatprep.mubr.bf16.mxu0 %v1055
      %2815 = vmatmul.mubr.bf16.gmra.mrb[0].mxu0 %v1054
      %v2816 = vpop.f32.mrb[0].mxu0
      %v2817 = vadd.f32 0.0, %v2816
      %v2818 = vpop.f32.mrb[0].mxu0
      %v2819 = vpop.f32.mrb[0].mxu0
      %v2820 = vadd.f32 0.0, %v2819
      %v2821 = vpop.f32.mrb[0].mxu0
      %2822 = vmatprep.mubr.bf16.mxu0 %v1087
      %2823 = vmatmul.mubr.bf16.gmra.mrb[0].mxu0 %v1086
      %v2824 = vpop.f32.mrb[0].mxu0
      %v2825 = vadd.f32 0.0, %v2824
      %v2826 = vpop.f32.mrb[0].mxu0
      %v2827 = vpop.f32.mrb[0].mxu0
      %v2828 = vadd.f32 0.0, %v2827
      %v2829 = vpop.f32.mrb[0].mxu0
      %2830 = vmatprep.mubr.bf16.mxu0 %v1119
      %2831 = vmatmul.mubr.bf16.gmra.mrb[0].mxu0 %v1118
      %v2832 = vpop.f32.mrb[0].mxu0
      %v2833 = vadd.f32 0.0, %v2832
      %v2834 = vpop.f32.mrb[0].mxu0
      %v2835 = vpop.f32.mrb[0].mxu0
      %v2836 = vpop.f32.mrb[0].mxu0
      %2837 = vdwg.mxu0
      %2838 = vmatprep.subr.bf16.mxu0 0
      %2839 = vmatpush1.bf16.msra.mxu0 %v2286
      %2840 = vmatprep.subr.bf16.mxu0 0
      %2841 = vmatpush1.bf16.msra.mxu0 %v2287
      %2842 = vmatprep.subr.bf16.mxu0 0
      %2843 = vmatpush1.bf16.msra.mxu0 %v2288
      %2844 = vmatprep.subr.bf16.mxu0 0
      %2845 = vmatpush1.bf16.msra.mxu0 %v2289
      %2846 = vmatprep.subr.bf16.mxu0 0
      %2847 = vmatpush1.bf16.msra.mxu0 %v2290
      %2848 = vmatprep.subr.bf16.mxu0 0
      %2849 = vmatpush1.bf16.msra.mxu0 %v2291
      %2850 = vmatprep.subr.bf16.mxu0 0
      %2851 = vmatpush1.bf16.msra.mxu0 %v2292
      %2852 = vmatprep.subr.bf16.mxu0 0
      %2853 = vmatpush1.bf16.msra.mxu0 %v2293
      %2854 = vmatprep.subr.bf16.mxu0 0
      %2855 = vmatpush1.bf16.msra.mxu0 %v2294
      %2856 = vmatprep.subr.bf16.mxu0 0
      %2857 = vmatpush1.bf16.msra.mxu0 %v2295
      %2858 = vmatprep.subr.bf16.mxu0 0
      %2859 = vmatpush1.bf16.msra.mxu0 %v2296
      %2860 = vmatprep.subr.bf16.mxu0 0
      %2861 = vmatpush1.bf16.msra.mxu0 %v2297
      %2862 = vmatprep.subr.bf16.mxu0 0
      %2863 = vmatpush1.bf16.msra.mxu0 %v2298
      %2864 = vmatprep.subr.bf16.mxu0 0
      %2865 = vmatpush1.bf16.msra.mxu0 %v2299
      %2866 = vmatprep.subr.bf16.mxu0 0
      %2867 = vmatpush1.bf16.msra.mxu0 %v2300
      %2868 = vmatprep.subr.bf16.mxu0 0
      %2869 = vmatpush1.bf16.msra.mxu0 %v2301
      %2870 = vmatprep.mubr.bf16.mxu0 %v1057
      %2871 = vmatmul.mubr.bf16.gmra.mrb[0].mxu0 %v1056
      %v2872 = vpop.f32.mrb[0].mxu0
      %v2873 = vadd.f32 %v2817, %v2872
      %v2874 = vpop.f32.mrb[0].mxu0
      %v2875 = vpop.f32.mrb[0].mxu0
      %v2876 = vadd.f32 %v2820, %v2875
      %v2877 = vpop.f32.mrb[0].mxu0
      %2878 = vmatprep.mubr.bf16.mxu0 %v1089
      %2879 = vmatmul.mubr.bf16.gmra.mrb[0].mxu0 %v1088
      %v2880 = vpop.f32.mrb[0].mxu0
      %v2881 = vadd.f32 %v2825, %v2880
      %v2882 = vpop.f32.mrb[0].mxu0
      %v2883 = vpop.f32.mrb[0].mxu0
      %v2884 = vadd.f32 %v2828, %v2883
      %v2885 = vpop.f32.mrb[0].mxu0
      %2886 = vmatprep.mubr.bf16.mxu0 %v1121
      %2887 = vmatmul.mubr.bf16.gmra.mrb[0].mxu0 %v1120
      %v2888 = vpop.f32.mrb[0].mxu0
      %v2889 = vadd.f32 %v2833, %v2888
      %v2890 = vpop.f32.mrb[0].mxu0
      %v2891 = vpop.f32.mrb[0].mxu0
      %v2892 = vpop.f32.mrb[0].mxu0
      %2893 = vdwg.mxu0
      %2894 = vmatprep.subr.bf16.mxu0 0
      %2895 = vmatpush1.bf16.msra.mxu0 %v2302
      %2896 = vmatprep.subr.bf16.mxu0 0
      %2897 = vmatpush1.bf16.msra.mxu0 %v2303
      %2898 = vmatprep.subr.bf16.mxu0 0
      %2899 = vmatpush1.bf16.msra.mxu0 %v2304
      %2900 = vmatprep.subr.bf16.mxu0 0
      %2901 = vmatpush1.bf16.msra.mxu0 %v2305
      %2902 = vmatprep.subr.bf16.mxu0 0
      %2903 = vmatpush1.bf16.msra.mxu0 %v2306
      %2904 = vmatprep.subr.bf16.mxu0 0
      %2905 = vmatpush1.bf16.msra.mxu0 %v2307
      %2906 = vmatprep.subr.bf16.mxu0 0
      %2907 = vmatpush1.bf16.msra.mxu0 %v2308
      %2908 = vmatprep.subr.bf16.mxu0 0
      %2909 = vmatpush1.bf16.msra.mxu0 %v2309
      %2910 = vmatprep.subr.bf16.mxu0 0
      %2911 = vmatpush1.bf16.msra.mxu0 %v2310
      %2912 = vmatprep.subr.bf16.mxu0 0
      %2913 = vmatpush1.bf16.msra.mxu0 %v2311
      %2914 = vmatprep.subr.bf16.mxu0 0
      %2915 = vmatpush1.bf16.msra.mxu0 %v2312
      %2916 = vmatprep.subr.bf16.mxu0 0
      %2917 = vmatpush1.bf16.msra.mxu0 %v2313
      %2918 = vmatprep.subr.bf16.mxu0 0
      %2919 = vmatpush1.bf16.msra.mxu0 %v2314
      %2920 = vmatprep.subr.bf16.mxu0 0
      %2921 = vmatpush1.bf16.msra.mxu0 %v2315
      %2922 = vmatprep.subr.bf16.mxu0 0
      %2923 = vmatpush1.bf16.msra.mxu0 %v2316
      %2924 = vmatprep.subr.bf16.mxu0 0
      %2925 = vmatpush1.bf16.msra.mxu0 %v2317
      %2926 = vmatprep.mubr.bf16.mxu0 %v1059
      %2927 = vmatmul.mubr.bf16.gmra.mrb[0].mxu0 %v1058
      %v2928 = vpop.f32.mrb[0].mxu0
      %v2929 = vadd.f32 %v2873, %v2928
      %v2930 = vpop.f32.mrb[0].mxu0
      %v2931 = vpop.f32.mrb[0].mxu0
      %v2932 = vadd.f32 %v2876, %v2931
      %v2933 = vpop.f32.mrb[0].mxu0
      %2934 = vmatprep.mubr.bf16.mxu0 %v1091
      %2935 = vmatmul.mubr.bf16.gmra.mrb[0].mxu0 %v1090
      %v2936 = vpop.f32.mrb[0].mxu0
      %v2937 = vadd.f32 %v2881, %v2936
      %v2938 = vpop.f32.mrb[0].mxu0
      %v2939 = vpop.f32.mrb[0].mxu0
      %v2940 = vadd.f32 %v2884, %v2939
      %v2941 = vpop.f32.mrb[0].mxu0
      %2942 = vmatprep.mubr.bf16.mxu0 %v1123
      %2943 = vmatmul.mubr.bf16.gmra.mrb[0].mxu0 %v1122
      %v2944 = vpop.f32.mrb[0].mxu0
      %v2945 = vadd.f32 %v2889, %v2944
      %v2946 = vpop.f32.mrb[0].mxu0
      %v2947 = vpop.f32.mrb[0].mxu0
      %v2948 = vpop.f32.mrb[0].mxu0
      %2949 = vdwg.mxu0
      %2950 = vmatprep.subr.bf16.mxu0 0
      %2951 = vmatpush1.bf16.msra.mxu0 %v2318
      %2952 = vmatprep.subr.bf16.mxu0 0
      %2953 = vmatpush1.bf16.msra.mxu0 %v2319
      %2954 = vmatprep.subr.bf16.mxu0 0
      %2955 = vmatpush1.bf16.msra.mxu0 %v2320
      %2956 = vmatprep.subr.bf16.mxu0 0
      %2957 = vmatpush1.bf16.msra.mxu0 %v2321
      %2958 = vmatprep.subr.bf16.mxu0 0
      %2959 = vmatpush1.bf16.msra.mxu0 %v2322
      %2960 = vmatprep.subr.bf16.mxu0 0
      %2961 = vmatpush1.bf16.msra.mxu0 %v2323
      %2962 = vmatprep.subr.bf16.mxu0 0
      %2963 = vmatpush1.bf16.msra.mxu0 %v2324
      %2964 = vmatprep.subr.bf16.mxu0 0
      %2965 = vmatpush1.bf16.msra.mxu0 %v2325
      %2966 = vmatprep.subr.bf16.mxu0 0
      %2967 = vmatpush1.bf16.msra.mxu0 %v2326
      %2968 = vmatprep.subr.bf16.mxu0 0
      %2969 = vmatpush1.bf16.msra.mxu0 %v2327
      %2970 = vmatprep.subr.bf16.mxu0 0
      %2971 = vmatpush1.bf16.msra.mxu0 %v2328
      %2972 = vmatprep.subr.bf16.mxu0 0
      %2973 = vmatpush1.bf16.msra.mxu0 %v2329
      %2974 = vmatprep.subr.bf16.mxu0 0
      %2975 = vmatpush1.bf16.msra.mxu0 %v2330
      %2976 = vmatprep.subr.bf16.mxu0 0
      %2977 = vmatpush1.bf16.msra.mxu0 %v2331
      %2978 = vmatprep.subr.bf16.mxu0 0
      %2979 = vmatpush1.bf16.msra.mxu0 %v2332
      %2980 = vmatprep.subr.bf16.mxu0 0
      %2981 = vmatpush1.bf16.msra.mxu0 %v2333
      %2982 = vmatprep.mubr.bf16.mxu0 %v1061
      %2983 = vmatmul.mubr.bf16.gmra.mrb[0].mxu0 %v1060
      %v2984 = vpop.f32.mrb[0].mxu0
      %v2985 = vadd.f32 %v2929, %v2984
      %v2986 = vpop.f32.mrb[0].mxu0
      %v2987 = vpop.f32.mrb[0].mxu0
      %v2988 = vadd.f32 %v2932, %v2987
      %v2989 = vpop.f32.mrb[0].mxu0
      %2990 = vmatprep.mubr.bf16.mxu0 %v1093
      %2991 = vmatmul.mubr.bf16.gmra.mrb[0].mxu0 %v1092
      %v2992 = vpop.f32.mrb[0].mxu0
      %v2993 = vadd.f32 %v2937, %v2992
      %v2994 = vpop.f32.mrb[0].mxu0
      %v2995 = vpop.f32.mrb[0].mxu0
      %v2996 = vadd.f32 %v2940, %v2995
      %v2997 = vpop.f32.mrb[0].mxu0
      %2998 = vmatprep.mubr.bf16.mxu0 %v1125
      %2999 = vmatmul.mubr.bf16.gmra.mrb[0].mxu0 %v1124
      %v3000 = vpop.f32.mrb[0].mxu0
      %v3001 = vadd.f32 %v2945, %v3000
      %v3002 = vpop.f32.mrb[0].mxu0
      %v3003 = vpop.f32.mrb[0].mxu0
      %v3004 = vpop.f32.mrb[0].mxu0
      %3005 = vdwg.mxu0
      %3006 = vmatprep.subr.bf16.mxu0 0
      %3007 = vmatpush1.bf16.msra.mxu0 %v2334
      %3008 = vmatprep.subr.bf16.mxu0 0
      %3009 = vmatpush1.bf16.msra.mxu0 %v2335
      %3010 = vmatprep.subr.bf16.mxu0 0
      %3011 = vmatpush1.bf16.msra.mxu0 %v2336
      %3012 = vmatprep.subr.bf16.mxu0 0
      %3013 = vmatpush1.bf16.msra.mxu0 %v2337
      %3014 = vmatprep.subr.bf16.mxu0 0
      %3015 = vmatpush1.bf16.msra.mxu0 %v2338
      %3016 = vmatprep.subr.bf16.mxu0 0
      %3017 = vmatpush1.bf16.msra.mxu0 %v2339
      %3018 = vmatprep.subr.bf16.mxu0 0
      %3019 = vmatpush1.bf16.msra.mxu0 %v2340
      %3020 = vmatprep.subr.bf16.mxu0 0
      %3021 = vmatpush1.bf16.msra.mxu0 %v2341
      %3022 = vmatprep.subr.bf16.mxu0 0
      %3023 = vmatpush1.bf16.msra.mxu0 %v2342
      %3024 = vmatprep.subr.bf16.mxu0 0
      %3025 = vmatpush1.bf16.msra.mxu0 %v2343
      %3026 = vmatprep.subr.bf16.mxu0 0
      %3027 = vmatpush1.bf16.msra.mxu0 %v2344
      %3028 = vmatprep.subr.bf16.mxu0 0
      %3029 = vmatpush1.bf16.msra.mxu0 %v2345
      %3030 = vmatprep.subr.bf16.mxu0 0
      %3031 = vmatpush1.bf16.msra.mxu0 %v2346
      %3032 = vmatprep.subr.bf16.mxu0 0
      %3033 = vmatpush1.bf16.msra.mxu0 %v2347
      %3034 = vmatprep.subr.bf16.mxu0 0
      %3035 = vmatpush1.bf16.msra.mxu0 %v2348
      %3036 = vmatprep.subr.bf16.mxu0 0
      %3037 = vmatpush1.bf16.msra.mxu0 %v2349
      %3038 = vmatprep.mubr.bf16.mxu0 %v1063
      %3039 = vmatmul.mubr.bf16.gmra.mrb[0].mxu0 %v1062
      %v3040 = vpop.f32.mrb[0].mxu0
      %v3041 = vadd.f32 %v2985, %v3040
      %v3042 = vpop.f32.mrb[0].mxu0
      %v3043 = vpop.f32.mrb[0].mxu0
      %v3044 = vadd.f32 %v2988, %v3043
      %v3045 = vpop.f32.mrb[0].mxu0
      %3046 = vmatprep.mubr.bf16.mxu0 %v1095
      %3047 = vmatmul.mubr.bf16.gmra.mrb[0].mxu0 %v1094
      %v3048 = vpop.f32.mrb[0].mxu0
      %v3049 = vadd.f32 %v2993, %v3048
      %v3050 = vpop.f32.mrb[0].mxu0
      %v3051 = vpop.f32.mrb[0].mxu0
      %v3052 = vadd.f32 %v2996, %v3051
      %v3053 = vpop.f32.mrb[0].mxu0
      %3054 = vmatprep.mubr.bf16.mxu0 %v1127
      %3055 = vmatmul.mubr.bf16.gmra.mrb[0].mxu0 %v1126
      %v3056 = vpop.f32.mrb[0].mxu0
      %v3057 = vadd.f32 %v3001, %v3056
      %v3058 = vpop.f32.mrb[0].mxu0
      %v3059 = vpop.f32.mrb[0].mxu0
      %v3060 = vpop.f32.mrb[0].mxu0
      %3061 = vdwg.mxu0
      %3062 = vmatprep.subr.bf16.mxu0 0
      %3063 = vmatpush1.bf16.msra.mxu0 %v2350
      %3064 = vmatprep.subr.bf16.mxu0 0
      %3065 = vmatpush1.bf16.msra.mxu0 %v2351
      %3066 = vmatprep.subr.bf16.mxu0 0
      %3067 = vmatpush1.bf16.msra.mxu0 %v2352
      %3068 = vmatprep.subr.bf16.mxu0 0
      %3069 = vmatpush1.bf16.msra.mxu0 %v2353
      %3070 = vmatprep.subr.bf16.mxu0 0
      %3071 = vmatpush1.bf16.msra.mxu0 %v2354
      %3072 = vmatprep.subr.bf16.mxu0 0
      %3073 = vmatpush1.bf16.msra.mxu0 %v2355
      %3074 = vmatprep.subr.bf16.mxu0 0
      %3075 = vmatpush1.bf16.msra.mxu0 %v2356
      %3076 = vmatprep.subr.bf16.mxu0 0
      %3077 = vmatpush1.bf16.msra.mxu0 %v2357
      %3078 = vmatprep.subr.bf16.mxu0 0
      %3079 = vmatpush1.bf16.msra.mxu0 %v2358
      %3080 = vmatprep.subr.bf16.mxu0 0
      %3081 = vmatpush1.bf16.msra.mxu0 %v2359
      %3082 = vmatprep.subr.bf16.mxu0 0
      %3083 = vmatpush1.bf16.msra.mxu0 %v2360
      %3084 = vmatprep.subr.bf16.mxu0 0
      %3085 = vmatpush1.bf16.msra.mxu0 %v2361
      %3086 = vmatprep.subr.bf16.mxu0 0
      %3087 = vmatpush1.bf16.msra.mxu0 %v2362
      %3088 = vmatprep.subr.bf16.mxu0 0
      %3089 = vmatpush1.bf16.msra.mxu0 %v2363
      %3090 = vmatprep.subr.bf16.mxu0 0
      %3091 = vmatpush1.bf16.msra.mxu0 %v2364
      %3092 = vmatprep.subr.bf16.mxu0 0
      %3093 = vmatpush1.bf16.msra.mxu0 %v2365
      %3094 = vmatprep.mubr.bf16.mxu0 %v1065
      %3095 = vmatmul.mubr.bf16.gmra.mrb[0].mxu0 %v1064
      %v3096 = vpop.f32.mrb[0].mxu0
      %v3097 = vadd.f32 %v3041, %v3096
      %v3098 = vpop.f32.mrb[0].mxu0
      %v3099 = vpop.f32.mrb[0].mxu0
      %v3100 = vadd.f32 %v3044, %v3099
      %v3101 = vpop.f32.mrb[0].mxu0
      %3102 = vmatprep.mubr.bf16.mxu0 %v1097
      %3103 = vmatmul.mubr.bf16.gmra.mrb[0].mxu0 %v1096
      %v3104 = vpop.f32.mrb[0].mxu0
      %v3105 = vadd.f32 %v3049, %v3104
      %v3106 = vpop.f32.mrb[0].mxu0
      %v3107 = vpop.f32.mrb[0].mxu0
      %v3108 = vadd.f32 %v3052, %v3107
      %v3109 = vpop.f32.mrb[0].mxu0
      %3110 = vmatprep.mubr.bf16.mxu0 %v1129
      %3111 = vmatmul.mubr.bf16.gmra.mrb[0].mxu0 %v1128
      %v3112 = vpop.f32.mrb[0].mxu0
      %v3113 = vadd.f32 %v3057, %v3112
      %v3114 = vpop.f32.mrb[0].mxu0
      %v3115 = vpop.f32.mrb[0].mxu0
      %v3116 = vpop.f32.mrb[0].mxu0
      %3117 = vdwg.mxu0
      %3118 = vmatprep.subr.bf16.mxu0 0
      %3119 = vmatpush1.bf16.msra.mxu0 %v2366
      %3120 = vmatprep.subr.bf16.mxu0 0
      %3121 = vmatpush1.bf16.msra.mxu0 %v2367
      %3122 = vmatprep.subr.bf16.mxu0 0
      %3123 = vmatpush1.bf16.msra.mxu0 %v2368
      %3124 = vmatprep.subr.bf16.mxu0 0
      %3125 = vmatpush1.bf16.msra.mxu0 %v2369
      %3126 = vmatprep.subr.bf16.mxu0 0
      %3127 = vmatpush1.bf16.msra.mxu0 %v2370
      %3128 = vmatprep.subr.bf16.mxu0 0
      %3129 = vmatpush1.bf16.msra.mxu0 %v2371
      %3130 = vmatprep.subr.bf16.mxu0 0
      %3131 = vmatpush1.bf16.msra.mxu0 %v2372
      %3132 = vmatprep.subr.bf16.mxu0 0
      %3133 = vmatpush1.bf16.msra.mxu0 %v2373
      %3134 = vmatprep.subr.bf16.mxu0 0
      %3135 = vmatpush1.bf16.msra.mxu0 %v2374
      %3136 = vmatprep.subr.bf16.mxu0 0
      %3137 = vmatpush1.bf16.msra.mxu0 %v2375
      %3138 = vmatprep.subr.bf16.mxu0 0
      %3139 = vmatpush1.bf16.msra.mxu0 %v2376
      %3140 = vmatprep.subr.bf16.mxu0 0
      %3141 = vmatpush1.bf16.msra.mxu0 %v2377
      %3142 = vmatprep.subr.bf16.mxu0 0
      %3143 = vmatpush1.bf16.msra.mxu0 %v2378
      %3144 = vmatprep.subr.bf16.mxu0 0
      %3145 = vmatpush1.bf16.msra.mxu0 %v2379
      %3146 = vmatprep.subr.bf16.mxu0 0
      %3147 = vmatpush1.bf16.msra.mxu0 %v2380
      %3148 = vmatprep.subr.bf16.mxu0 0
      %3149 = vmatpush1.bf16.msra.mxu0 %v2381
      %3150 = vmatprep.mubr.bf16.mxu0 %v1067
      %3151 = vmatmul.mubr.bf16.gmra.mrb[0].mxu0 %v1066
      %v3152 = vpop.f32.mrb[0].mxu0
      %v3153 = vadd.f32 %v3097, %v3152
      %v3154 = vpop.f32.mrb[0].mxu0
      %v3155 = vpop.f32.mrb[0].mxu0
      %v3156 = vadd.f32 %v3100, %v3155
      %v3157 = vpop.f32.mrb[0].mxu0
      %3158 = vmatprep.mubr.bf16.mxu0 %v1099
      %3159 = vmatmul.mubr.bf16.gmra.mrb[0].mxu0 %v1098
      %v3160 = vpop.f32.mrb[0].mxu0
      %v3161 = vadd.f32 %v3105, %v3160
      %v3162 = vpop.f32.mrb[0].mxu0
      %v3163 = vpop.f32.mrb[0].mxu0
      %v3164 = vadd.f32 %v3108, %v3163
      %v3165 = vpop.f32.mrb[0].mxu0
      %3166 = vmatprep.mubr.bf16.mxu0 %v1131
      %3167 = vmatmul.mubr.bf16.gmra.mrb[0].mxu0 %v1130
      %v3168 = vpop.f32.mrb[0].mxu0
      %v3169 = vadd.f32 %v3113, %v3168
      %v3170 = vpop.f32.mrb[0].mxu0
      %v3171 = vpop.f32.mrb[0].mxu0
      %v3172 = vpop.f32.mrb[0].mxu0
      %3173 = vdwg.mxu0
      %3174 = vmatprep.subr.bf16.mxu0 0
      %3175 = vmatpush1.bf16.msra.mxu0 %v2382
      %3176 = vmatprep.subr.bf16.mxu0 0
      %3177 = vmatpush1.bf16.msra.mxu0 %v2383
      %3178 = vmatprep.subr.bf16.mxu0 0
      %3179 = vmatpush1.bf16.msra.mxu0 %v2384
      %3180 = vmatprep.subr.bf16.mxu0 0
      %3181 = vmatpush1.bf16.msra.mxu0 %v2385
      %3182 = vmatprep.subr.bf16.mxu0 0
      %3183 = vmatpush1.bf16.msra.mxu0 %v2386
      %3184 = vmatprep.subr.bf16.mxu0 0
      %3185 = vmatpush1.bf16.msra.mxu0 %v2387
      %3186 = vmatprep.subr.bf16.mxu0 0
      %3187 = vmatpush1.bf16.msra.mxu0 %v2388
      %3188 = vmatprep.subr.bf16.mxu0 0
      %3189 = vmatpush1.bf16.msra.mxu0 %v2389
      %3190 = vmatprep.subr.bf16.mxu0 0
      %3191 = vmatpush1.bf16.msra.mxu0 %v2390
      %3192 = vmatprep.subr.bf16.mxu0 0
      %3193 = vmatpush1.bf16.msra.mxu0 %v2391
      %3194 = vmatprep.subr.bf16.mxu0 0
      %3195 = vmatpush1.bf16.msra.mxu0 %v2392
      %3196 = vmatprep.subr.bf16.mxu0 0
      %3197 = vmatpush1.bf16.msra.mxu0 %v2393
      %3198 = vmatprep.subr.bf16.mxu0 0
      %3199 = vmatpush1.bf16.msra.mxu0 %v2394
      %3200 = vmatprep.subr.bf16.mxu0 0
      %3201 = vmatpush1.bf16.msra.mxu0 %v2395
      %3202 = vmatprep.subr.bf16.mxu0 0
      %3203 = vmatpush1.bf16.msra.mxu0 %v2396
      %3204 = vmatprep.subr.bf16.mxu0 0
      %3205 = vmatpush1.bf16.msra.mxu0 %v2397
      %3206 = vmatprep.mubr.bf16.mxu0 %v1069
      %3207 = vmatmul.mubr.bf16.gmra.mrb[0].mxu0 %v1068
      %v3208 = vpop.f32.mrb[0].mxu0
      %v3209 = vadd.f32 %v3153, %v3208
      %v3210 = vpop.f32.mrb[0].mxu0
      %v3211 = vpop.f32.mrb[0].mxu0
      %v3212 = vadd.f32 %v3156, %v3211
      %v3213 = vpop.f32.mrb[0].mxu0
      %3214 = vmatprep.mubr.bf16.mxu0 %v1101
      %3215 = vmatmul.mubr.bf16.gmra.mrb[0].mxu0 %v1100
      %v3216 = vpop.f32.mrb[0].mxu0
      %v3217 = vadd.f32 %v3161, %v3216
      %v3218 = vpop.f32.mrb[0].mxu0
      %v3219 = vpop.f32.mrb[0].mxu0
      %v3220 = vadd.f32 %v3164, %v3219
      %v3221 = vpop.f32.mrb[0].mxu0
      %3222 = vmatprep.mubr.bf16.mxu0 %v1133
      %3223 = vmatmul.mubr.bf16.gmra.mrb[0].mxu0 %v1132
      %v3224 = vpop.f32.mrb[0].mxu0
      %v3225 = vadd.f32 %v3169, %v3224
      %v3226 = vpop.f32.mrb[0].mxu0
      %v3227 = vpop.f32.mrb[0].mxu0
      %v3228 = vpop.f32.mrb[0].mxu0
      %3229 = vdwg.mxu0
      %3230 = vmatprep.subr.bf16.mxu0 0
      %3231 = vmatpush1.bf16.msra.mxu0 %v2398
      %3232 = vmatprep.subr.bf16.mxu0 0
      %3233 = vmatpush1.bf16.msra.mxu0 %v2399
      %3234 = vmatprep.subr.bf16.mxu0 0
      %3235 = vmatpush1.bf16.msra.mxu0 %v2400
      %3236 = vmatprep.subr.bf16.mxu0 0
      %3237 = vmatpush1.bf16.msra.mxu0 %v2401
      %3238 = vmatprep.subr.bf16.mxu0 0
      %3239 = vmatpush1.bf16.msra.mxu0 %v2402
      %3240 = vmatprep.subr.bf16.mxu0 0
      %3241 = vmatpush1.bf16.msra.mxu0 %v2403
      %3242 = vmatprep.subr.bf16.mxu0 0
      %3243 = vmatpush1.bf16.msra.mxu0 %v2404
      %3244 = vmatprep.subr.bf16.mxu0 0
      %3245 = vmatpush1.bf16.msra.mxu0 %v2405
      %3246 = vmatprep.subr.bf16.mxu0 0
      %3247 = vmatpush1.bf16.msra.mxu0 %v2406
      %3248 = vmatprep.subr.bf16.mxu0 0
      %3249 = vmatpush1.bf16.msra.mxu0 %v2407
      %3250 = vmatprep.subr.bf16.mxu0 0
      %3251 = vmatpush1.bf16.msra.mxu0 %v2408
      %3252 = vmatprep.subr.bf16.mxu0 0
      %3253 = vmatpush1.bf16.msra.mxu0 %v2409
      %3254 = vmatprep.subr.bf16.mxu0 0
      %3255 = vmatpush1.bf16.msra.mxu0 %v2410
      %3256 = vmatprep.subr.bf16.mxu0 0
      %3257 = vmatpush1.bf16.msra.mxu0 %v2411
      %3258 = vmatprep.subr.bf16.mxu0 0
      %3259 = vmatpush1.bf16.msra.mxu0 %v2412
      %3260 = vmatprep.subr.bf16.mxu0 0
      %3261 = vmatpush1.bf16.msra.mxu0 %v2413
      %3262 = vmatprep.mubr.bf16.mxu0 %v1071
      %3263 = vmatmul.mubr.bf16.gmra.mrb[0].mxu0 %v1070
      %v3264 = vpop.f32.mrb[0].mxu0
      %v3265 = vadd.f32 %v3209, %v3264
      %v3266 = vpop.f32.mrb[0].mxu0
      %v3267 = vpop.f32.mrb[0].mxu0
      %v3268 = vadd.f32 %v3212, %v3267
      %v3269 = vpop.f32.mrb[0].mxu0
      %3270 = vmatprep.mubr.bf16.mxu0 %v1103
      %3271 = vmatmul.mubr.bf16.gmra.mrb[0].mxu0 %v1102
      %v3272 = vpop.f32.mrb[0].mxu0
      %v3273 = vadd.f32 %v3217, %v3272
      %v3274 = vpop.f32.mrb[0].mxu0
      %v3275 = vpop.f32.mrb[0].mxu0
      %v3276 = vadd.f32 %v3220, %v3275
      %v3277 = vpop.f32.mrb[0].mxu0
      %3278 = vmatprep.mubr.bf16.mxu0 %v1135
      %3279 = vmatmul.mubr.bf16.gmra.mrb[0].mxu0 %v1134
      %v3280 = vpop.f32.mrb[0].mxu0
      %v3281 = vadd.f32 %v3225, %v3280
      %v3282 = vpop.f32.mrb[0].mxu0
      %v3283 = vpop.f32.mrb[0].mxu0
      %v3284 = vpop.f32.mrb[0].mxu0
      %3285 = vdwg.mxu0
      %3286 = vmatprep.subr.bf16.mxu0 0
      %3287 = vmatpush1.bf16.msra.mxu0 %v2414
      %3288 = vmatprep.subr.bf16.mxu0 0
      %3289 = vmatpush1.bf16.msra.mxu0 %v2415
      %3290 = vmatprep.subr.bf16.mxu0 0
      %3291 = vmatpush1.bf16.msra.mxu0 %v2416
      %3292 = vmatprep.subr.bf16.mxu0 0
      %3293 = vmatpush1.bf16.msra.mxu0 %v2417
      %3294 = vmatprep.subr.bf16.mxu0 0
      %3295 = vmatpush1.bf16.msra.mxu0 %v2418
      %3296 = vmatprep.subr.bf16.mxu0 0
      %3297 = vmatpush1.bf16.msra.mxu0 %v2419
      %3298 = vmatprep.subr.bf16.mxu0 0
      %3299 = vmatpush1.bf16.msra.mxu0 %v2420
      %3300 = vmatprep.subr.bf16.mxu0 0
      %3301 = vmatpush1.bf16.msra.mxu0 %v2421
      %3302 = vmatprep.subr.bf16.mxu0 0
      %3303 = vmatpush1.bf16.msra.mxu0 %v2422
      %3304 = vmatprep.subr.bf16.mxu0 0
      %3305 = vmatpush1.bf16.msra.mxu0 %v2423
      %3306 = vmatprep.subr.bf16.mxu0 0
      %3307 = vmatpush1.bf16.msra.mxu0 %v2424
      %3308 = vmatprep.subr.bf16.mxu0 0
      %3309 = vmatpush1.bf16.msra.mxu0 %v2425
      %3310 = vmatprep.subr.bf16.mxu0 0
      %3311 = vmatpush1.bf16.msra.mxu0 %v2426
      %3312 = vmatprep.subr.bf16.mxu0 0
      %3313 = vmatpush1.bf16.msra.mxu0 %v2427
      %3314 = vmatprep.subr.bf16.mxu0 0
      %3315 = vmatpush1.bf16.msra.mxu0 %v2428
      %3316 = vmatprep.subr.bf16.mxu0 0
      %3317 = vmatpush1.bf16.msra.mxu0 %v2429
      %3318 = vmatprep.mubr.bf16.mxu0 %v1073
      %3319 = vmatmul.mubr.bf16.gmra.mrb[0].mxu0 %v1072
      %v3320 = vpop.f32.mrb[0].mxu0
      %v3321 = vadd.f32 %v3265, %v3320
      %v3322 = vpop.f32.mrb[0].mxu0
      %v3323 = vpop.f32.mrb[0].mxu0
      %v3324 = vadd.f32 %v3268, %v3323
      %v3325 = vpop.f32.mrb[0].mxu0
      %3326 = vmatprep.mubr.bf16.mxu0 %v1105
      %3327 = vmatmul.mubr.bf16.gmra.mrb[0].mxu0 %v1104
      %v3328 = vpop.f32.mrb[0].mxu0
      %v3329 = vadd.f32 %v3273, %v3328
      %v3330 = vpop.f32.mrb[0].mxu0
      %v3331 = vpop.f32.mrb[0].mxu0
      %v3332 = vadd.f32 %v3276, %v3331
      %v3333 = vpop.f32.mrb[0].mxu0
      %3334 = vmatprep.mubr.bf16.mxu0 %v1137
      %3335 = vmatmul.mubr.bf16.gmra.mrb[0].mxu0 %v1136
      %v3336 = vpop.f32.mrb[0].mxu0
      %v3337 = vadd.f32 %v3281, %v3336
      %v3338 = vpop.f32.mrb[0].mxu0
      %v3339 = vpop.f32.mrb[0].mxu0
      %v3340 = vpop.f32.mrb[0].mxu0
      %3341 = vdwg.mxu0
      %3342 = vmatprep.subr.bf16.mxu0 0
      %3343 = vmatpush1.bf16.msra.mxu0 %v2430
      %3344 = vmatprep.subr.bf16.mxu0 0
      %3345 = vmatpush1.bf16.msra.mxu0 %v2431
      %3346 = vmatprep.subr.bf16.mxu0 0
      %3347 = vmatpush1.bf16.msra.mxu0 %v2432
      %3348 = vmatprep.subr.bf16.mxu0 0
      %3349 = vmatpush1.bf16.msra.mxu0 %v2433
      %3350 = vmatprep.subr.bf16.mxu0 0
      %3351 = vmatpush1.bf16.msra.mxu0 %v2434
      %3352 = vmatprep.subr.bf16.mxu0 0
      %3353 = vmatpush1.bf16.msra.mxu0 %v2435
      %3354 = vmatprep.subr.bf16.mxu0 0
      %3355 = vmatpush1.bf16.msra.mxu0 %v2436
      %3356 = vmatprep.subr.bf16.mxu0 0
      %3357 = vmatpush1.bf16.msra.mxu0 %v2437
      %3358 = vmatprep.subr.bf16.mxu0 0
      %3359 = vmatpush1.bf16.msra.mxu0 %v2438
      %3360 = vmatprep.subr.bf16.mxu0 0
      %3361 = vmatpush1.bf16.msra.mxu0 %v2439
      %3362 = vmatprep.subr.bf16.mxu0 0
      %3363 = vmatpush1.bf16.msra.mxu0 %v2440
      %3364 = vmatprep.subr.bf16.mxu0 0
      %3365 = vmatpush1.bf16.msra.mxu0 %v2441
      %3366 = vmatprep.subr.bf16.mxu0 0
      %3367 = vmatpush1.bf16.msra.mxu0 %v2442
      %3368 = vmatprep.subr.bf16.mxu0 0
      %3369 = vmatpush1.bf16.msra.mxu0 %v2443
      %3370 = vmatprep.subr.bf16.mxu0 0
      %3371 = vmatpush1.bf16.msra.mxu0 %v2444
      %3372 = vmatprep.subr.bf16.mxu0 0
      %3373 = vmatpush1.bf16.msra.mxu0 %v2445
      %3374 = vmatprep.mubr.bf16.mxu0 %v1075
      %3375 = vmatmul.mubr.bf16.gmra.mrb[0].mxu0 %v1074
      %v3376 = vpop.f32.mrb[0].mxu0
      %v3377 = vadd.f32 %v3321, %v3376
      %v3378 = vpop.f32.mrb[0].mxu0
      %v3379 = vpop.f32.mrb[0].mxu0
      %v3380 = vadd.f32 %v3324, %v3379
      %v3381 = vpop.f32.mrb[0].mxu0
      %3382 = vmatprep.mubr.bf16.mxu0 %v1107
      %3383 = vmatmul.mubr.bf16.gmra.mrb[0].mxu0 %v1106
      %v3384 = vpop.f32.mrb[0].mxu0
      %v3385 = vadd.f32 %v3329, %v3384
      %v3386 = vpop.f32.mrb[0].mxu0
      %v3387 = vpop.f32.mrb[0].mxu0
      %v3388 = vadd.f32 %v3332, %v3387
      %v3389 = vpop.f32.mrb[0].mxu0
      %3390 = vmatprep.mubr.bf16.mxu0 %v1139
      %3391 = vmatmul.mubr.bf16.gmra.mrb[0].mxu0 %v1138
      %v3392 = vpop.f32.mrb[0].mxu0
      %v3393 = vadd.f32 %v3337, %v3392
      %v3394 = vpop.f32.mrb[0].mxu0
      %v3395 = vpop.f32.mrb[0].mxu0
      %v3396 = vpop.f32.mrb[0].mxu0
      %3397 = vdwg.mxu0
      %3398 = vmatprep.subr.bf16.mxu0 0
      %3399 = vmatpush1.bf16.msra.mxu0 %v2446
      %3400 = vmatprep.subr.bf16.mxu0 0
      %3401 = vmatpush1.bf16.msra.mxu0 %v2447
      %3402 = vmatprep.subr.bf16.mxu0 0
      %3403 = vmatpush1.bf16.msra.mxu0 %v2448
      %3404 = vmatprep.subr.bf16.mxu0 0
      %3405 = vmatpush1.bf16.msra.mxu0 %v2449
      %3406 = vmatprep.subr.bf16.mxu0 0
      %3407 = vmatpush1.bf16.msra.mxu0 %v2450
      %3408 = vmatprep.subr.bf16.mxu0 0
      %3409 = vmatpush1.bf16.msra.mxu0 %v2451
      %3410 = vmatprep.subr.bf16.mxu0 0
      %3411 = vmatpush1.bf16.msra.mxu0 %v2452
      %3412 = vmatprep.subr.bf16.mxu0 0
      %3413 = vmatpush1.bf16.msra.mxu0 %v2453
      %3414 = vmatprep.subr.bf16.mxu0 0
      %3415 = vmatpush1.bf16.msra.mxu0 %v2454
      %3416 = vmatprep.subr.bf16.mxu0 0
      %3417 = vmatpush1.bf16.msra.mxu0 %v2455
      %3418 = vmatprep.subr.bf16.mxu0 0
      %3419 = vmatpush1.bf16.msra.mxu0 %v2456
      %3420 = vmatprep.subr.bf16.mxu0 0
      %3421 = vmatpush1.bf16.msra.mxu0 %v2457
      %3422 = vmatprep.subr.bf16.mxu0 0
      %3423 = vmatpush1.bf16.msra.mxu0 %v2458
      %3424 = vmatprep.subr.bf16.mxu0 0
      %3425 = vmatpush1.bf16.msra.mxu0 %v2459
      %3426 = vmatprep.subr.bf16.mxu0 0
      %3427 = vmatpush1.bf16.msra.mxu0 %v2460
      %3428 = vmatprep.subr.bf16.mxu0 0
      %3429 = vmatpush1.bf16.msra.mxu0 %v2461
      %3430 = vmatprep.mubr.bf16.mxu0 %v1077
      %3431 = vmatmul.mubr.bf16.gmra.mrb[0].mxu0 %v1076
      %v3432 = vpop.f32.mrb[0].mxu0
      %v3433 = vadd.f32 %v3377, %v3432
      %v3434 = vpop.f32.mrb[0].mxu0
      %v3435 = vpop.f32.mrb[0].mxu0
      %v3436 = vadd.f32 %v3380, %v3435
      %v3437 = vpop.f32.mrb[0].mxu0
      %3438 = vmatprep.mubr.bf16.mxu0 %v1109
      %3439 = vmatmul.mubr.bf16.gmra.mrb[0].mxu0 %v1108
      %v3440 = vpop.f32.mrb[0].mxu0
      %v3441 = vadd.f32 %v3385, %v3440
      %v3442 = vpop.f32.mrb[0].mxu0
      %v3443 = vpop.f32.mrb[0].mxu0
      %v3444 = vadd.f32 %v3388, %v3443
      %v3445 = vpop.f32.mrb[0].mxu0
      %3446 = vmatprep.mubr.bf16.mxu0 %v1141
      %3447 = vmatmul.mubr.bf16.gmra.mrb[0].mxu0 %v1140
      %v3448 = vpop.f32.mrb[0].mxu0
      %v3449 = vadd.f32 %v3393, %v3448
      %v3450 = vpop.f32.mrb[0].mxu0
      %v3451 = vpop.f32.mrb[0].mxu0
      %v3452 = vpop.f32.mrb[0].mxu0
      %3453 = vdwg.mxu0
      %3454 = vmatprep.subr.bf16.mxu0 0
      %3455 = vmatpush1.bf16.msra.mxu0 %v2462
      %3456 = vmatprep.subr.bf16.mxu0 0
      %3457 = vmatpush1.bf16.msra.mxu0 %v2463
      %3458 = vmatprep.subr.bf16.mxu0 0
      %3459 = vmatpush1.bf16.msra.mxu0 %v2464
      %3460 = vmatprep.subr.bf16.mxu0 0
      %3461 = vmatpush1.bf16.msra.mxu0 %v2465
      %3462 = vmatprep.subr.bf16.mxu0 0
      %3463 = vmatpush1.bf16.msra.mxu0 %v2466
      %3464 = vmatprep.subr.bf16.mxu0 0
      %3465 = vmatpush1.bf16.msra.mxu0 %v2467
      %3466 = vmatprep.subr.bf16.mxu0 0
      %3467 = vmatpush1.bf16.msra.mxu0 %v2468
      %3468 = vmatprep.subr.bf16.mxu0 0
      %3469 = vmatpush1.bf16.msra.mxu0 %v2469
      %3470 = vmatprep.subr.bf16.mxu0 0
      %3471 = vmatpush1.bf16.msra.mxu0 %v2470
      %3472 = vmatprep.subr.bf16.mxu0 0
      %3473 = vmatpush1.bf16.msra.mxu0 %v2471
      %3474 = vmatprep.subr.bf16.mxu0 0
      %3475 = vmatpush1.bf16.msra.mxu0 %v2472
      %3476 = vmatprep.subr.bf16.mxu0 0
      %3477 = vmatpush1.bf16.msra.mxu0 %v2473
      %3478 = vmatprep.subr.bf16.mxu0 0
      %3479 = vmatpush1.bf16.msra.mxu0 %v2474
      %3480 = vmatprep.subr.bf16.mxu0 0
      %3481 = vmatpush1.bf16.msra.mxu0 %v2475
      %3482 = vmatprep.subr.bf16.mxu0 0
      %3483 = vmatpush1.bf16.msra.mxu0 %v2476
      %3484 = vmatprep.subr.bf16.mxu0 0
      %3485 = vmatpush1.bf16.msra.mxu0 %v2477
      %3486 = vmatprep.mubr.bf16.mxu0 %v1079
      %3487 = vmatmul.mubr.bf16.gmra.mrb[0].mxu0 %v1078
      %v3488 = vpop.f32.mrb[0].mxu0
      %v3489 = vadd.f32 %v3433, %v3488
      %v3490 = vpop.f32.mrb[0].mxu0
      %v3491 = vpop.f32.mrb[0].mxu0
      %v3492 = vadd.f32 %v3436, %v3491
      %v3493 = vpop.f32.mrb[0].mxu0
      %3494 = vmatprep.mubr.bf16.mxu0 %v1111
      %3495 = vmatmul.mubr.bf16.gmra.mrb[0].mxu0 %v1110
      %v3496 = vpop.f32.mrb[0].mxu0
      %v3497 = vadd.f32 %v3441, %v3496
      %v3498 = vpop.f32.mrb[0].mxu0
      %v3499 = vpop.f32.mrb[0].mxu0
      %v3500 = vadd.f32 %v3444, %v3499
      %v3501 = vpop.f32.mrb[0].mxu0
      %3502 = vmatprep.mubr.bf16.mxu0 %v1143
      %3503 = vmatmul.mubr.bf16.gmra.mrb[0].mxu0 %v1142
      %v3504 = vpop.f32.mrb[0].mxu0
      %v3505 = vadd.f32 %v3449, %v3504
      %v3506 = vpop.f32.mrb[0].mxu0
      %v3507 = vpop.f32.mrb[0].mxu0
      %v3508 = vpop.f32.mrb[0].mxu0
      %3509 = vdwg.mxu0
      %3510 = vmatprep.subr.bf16.mxu0 0
      %3511 = vmatpush1.bf16.msra.mxu0 %v2478
      %3512 = vmatprep.subr.bf16.mxu0 0
      %3513 = vmatpush1.bf16.msra.mxu0 %v2479
      %3514 = vmatprep.subr.bf16.mxu0 0
      %3515 = vmatpush1.bf16.msra.mxu0 %v2480
      %3516 = vmatprep.subr.bf16.mxu0 0
      %3517 = vmatpush1.bf16.msra.mxu0 %v2481
      %3518 = vmatprep.subr.bf16.mxu0 0
      %3519 = vmatpush1.bf16.msra.mxu0 %v2482
      %3520 = vmatprep.subr.bf16.mxu0 0
      %3521 = vmatpush1.bf16.msra.mxu0 %v2483
      %3522 = vmatprep.subr.bf16.mxu0 0
      %3523 = vmatpush1.bf16.msra.mxu0 %v2484
      %3524 = vmatprep.subr.bf16.mxu0 0
      %3525 = vmatpush1.bf16.msra.mxu0 %v2485
      %3526 = vmatprep.subr.bf16.mxu0 0
      %3527 = vmatpush1.bf16.msra.mxu0 %v2486
      %3528 = vmatprep.subr.bf16.mxu0 0
      %3529 = vmatpush1.bf16.msra.mxu0 %v2487
      %3530 = vmatprep.subr.bf16.mxu0 0
      %3531 = vmatpush1.bf16.msra.mxu0 %v2488
      %3532 = vmatprep.subr.bf16.mxu0 0
      %3533 = vmatpush1.bf16.msra.mxu0 %v2489
      %3534 = vmatprep.subr.bf16.mxu0 0
      %3535 = vmatpush1.bf16.msra.mxu0 %v2490
      %3536 = vmatprep.subr.bf16.mxu0 0
      %3537 = vmatpush1.bf16.msra.mxu0 %v2491
      %3538 = vmatprep.subr.bf16.mxu0 0
      %3539 = vmatpush1.bf16.msra.mxu0 %v2492
      %3540 = vmatprep.subr.bf16.mxu0 0
      %3541 = vmatpush1.bf16.msra.mxu0 %v2493
      %3542 = vmatprep.mubr.bf16.mxu0 %v1081
      %3543 = vmatmul.mubr.bf16.gmra.mrb[0].mxu0 %v1080
      %v3544 = vpop.f32.mrb[0].mxu0
      %v3545 = vadd.f32 %v3489, %v3544
      %v3546 = vpop.f32.mrb[0].mxu0
      %v3547 = vpop.f32.mrb[0].mxu0
      %v3548 = vadd.f32 %v3492, %v3547
      %v3549 = vpop.f32.mrb[0].mxu0
      %3550 = vmatprep.mubr.bf16.mxu0 %v1113
      %3551 = vmatmul.mubr.bf16.gmra.mrb[0].mxu0 %v1112
      %v3552 = vpop.f32.mrb[0].mxu0
      %v3553 = vadd.f32 %v3497, %v3552
      %v3554 = vpop.f32.mrb[0].mxu0
      %v3555 = vpop.f32.mrb[0].mxu0
      %v3556 = vadd.f32 %v3500, %v3555
      %v3557 = vpop.f32.mrb[0].mxu0
      %3558 = vmatprep.mubr.bf16.mxu0 %v1145
      %3559 = vmatmul.mubr.bf16.gmra.mrb[0].mxu0 %v1144
      %v3560 = vpop.f32.mrb[0].mxu0
      %v3561 = vadd.f32 %v3505, %v3560
      %v3562 = vpop.f32.mrb[0].mxu0
      %v3563 = vpop.f32.mrb[0].mxu0
      %v3564 = vpop.f32.mrb[0].mxu0
      %3565 = vdwg.mxu0
      %3566 = vmatprep.subr.bf16.mxu0 0
      %3567 = vmatpush1.bf16.msra.mxu0 %v2494
      %3568 = vmatprep.subr.bf16.mxu0 0
      %3569 = vmatpush1.bf16.msra.mxu0 %v2495
      %3570 = vmatprep.subr.bf16.mxu0 0
      %3571 = vmatpush1.bf16.msra.mxu0 %v2496
      %3572 = vmatprep.subr.bf16.mxu0 0
      %3573 = vmatpush1.bf16.msra.mxu0 %v2497
      %3574 = vmatprep.subr.bf16.mxu0 0
      %3575 = vmatpush1.bf16.msra.mxu0 %v2498
      %3576 = vmatprep.subr.bf16.mxu0 0
      %3577 = vmatpush1.bf16.msra.mxu0 %v2499
      %3578 = vmatprep.subr.bf16.mxu0 0
      %3579 = vmatpush1.bf16.msra.mxu0 %v2500
      %3580 = vmatprep.subr.bf16.mxu0 0
      %3581 = vmatpush1.bf16.msra.mxu0 %v2501
      %3582 = vmatprep.subr.bf16.mxu0 0
      %3583 = vmatpush1.bf16.msra.mxu0 %v2502
      %3584 = vmatprep.subr.bf16.mxu0 0
      %3585 = vmatpush1.bf16.msra.mxu0 %v2503
      %3586 = vmatprep.subr.bf16.mxu0 0
      %3587 = vmatpush1.bf16.msra.mxu0 %v2504
      %3588 = vmatprep.subr.bf16.mxu0 0
      %3589 = vmatpush1.bf16.msra.mxu0 %v2505
      %3590 = vmatprep.subr.bf16.mxu0 0
      %3591 = vmatpush1.bf16.msra.mxu0 %v2506
      %3592 = vmatprep.subr.bf16.mxu0 0
      %3593 = vmatpush1.bf16.msra.mxu0 %v2507
      %3594 = vmatprep.subr.bf16.mxu0 0
      %3595 = vmatpush1.bf16.msra.mxu0 %v2508
      %3596 = vmatprep.subr.bf16.mxu0 0
      %3597 = vmatpush1.bf16.msra.mxu0 %v2509
      %3598 = vmatprep.mubr.bf16.mxu0 %v1083
      %3599 = vmatmul.mubr.bf16.gmra.mrb[0].mxu0 %v1082
      %v3600 = vpop.f32.mrb[0].mxu0
      %v3601 = vadd.f32 %v3545, %v3600
      %v3602 = vpop.f32.mrb[0].mxu0
      %v3603 = vpop.f32.mrb[0].mxu0
      %v3604 = vadd.f32 %v3548, %v3603
      %v3605 = vpop.f32.mrb[0].mxu0
      %3606 = vmatprep.mubr.bf16.mxu0 %v1115
      %3607 = vmatmul.mubr.bf16.gmra.mrb[0].mxu0 %v1114
      %v3608 = vpop.f32.mrb[0].mxu0
      %v3609 = vadd.f32 %v3553, %v3608
      %v3610 = vpop.f32.mrb[0].mxu0
      %v3611 = vpop.f32.mrb[0].mxu0
      %v3612 = vadd.f32 %v3556, %v3611
      %v3613 = vpop.f32.mrb[0].mxu0
      %3614 = vmatprep.mubr.bf16.mxu0 %v1147
      %3615 = vmatmul.mubr.bf16.gmra.mrb[0].mxu0 %v1146
      %v3616 = vpop.f32.mrb[0].mxu0
      %v3617 = vadd.f32 %v3561, %v3616
      %v3618 = vpop.f32.mrb[0].mxu0
      %v3619 = vpop.f32.mrb[0].mxu0
      %v3620 = vpop.f32.mrb[0].mxu0
      %3621 = vdwg.mxu0
      %3622 = vmatprep.subr.bf16.mxu0 0
      %3623 = vmatpush1.bf16.msra.mxu0 %v2510
      %3624 = vmatprep.subr.bf16.mxu0 0
      %3625 = vmatpush1.bf16.msra.mxu0 %v2511
      %3626 = vmatprep.subr.bf16.mxu0 0
      %3627 = vmatpush1.bf16.msra.mxu0 %v2512
      %3628 = vmatprep.subr.bf16.mxu0 0
      %3629 = vmatpush1.bf16.msra.mxu0 %v2513
      %3630 = vmatprep.subr.bf16.mxu0 0
      %3631 = vmatpush1.bf16.msra.mxu0 %v2514
      %3632 = vmatprep.subr.bf16.mxu0 0
      %3633 = vmatpush1.bf16.msra.mxu0 %v2515
      %3634 = vmatprep.subr.bf16.mxu0 0
      %3635 = vmatpush1.bf16.msra.mxu0 %v2516
      %3636 = vmatprep.subr.bf16.mxu0 0
      %3637 = vmatpush1.bf16.msra.mxu0 %v2517
      %3638 = vmatprep.subr.bf16.mxu0 0
      %3639 = vmatpush1.bf16.msra.mxu0 %v2518
      %3640 = vmatprep.subr.bf16.mxu0 0
      %3641 = vmatpush1.bf16.msra.mxu0 %v2519
      %3642 = vmatprep.subr.bf16.mxu0 0
      %3643 = vmatpush1.bf16.msra.mxu0 %v2520
      %3644 = vmatprep.subr.bf16.mxu0 0
      %3645 = vmatpush1.bf16.msra.mxu0 %v2521
      %3646 = vmatprep.subr.bf16.mxu0 0
      %3647 = vmatpush1.bf16.msra.mxu0 %v2522
      %3648 = vmatprep.subr.bf16.mxu0 0
      %3649 = vmatpush1.bf16.msra.mxu0 %v2523
      %3650 = vmatprep.subr.bf16.mxu0 0
      %3651 = vmatpush1.bf16.msra.mxu0 %v2524
      %3652 = vmatprep.subr.bf16.mxu0 0
      %3653 = vmatpush1.bf16.msra.mxu0 %v2525
      %3654 = vmatprep.mubr.bf16.mxu0 %v1085
      %3655 = vmatmul.mubr.bf16.gmra.mrb[0].mxu0 %v1084
      %v3656 = vpop.f32.mrb[0].mxu0
      %v3657 = vadd.f32 %v3601, %v3656
      %v3658 = vpop.f32.mrb[0].mxu0
      %v3659 = vpop.f32.mrb[0].mxu0
      %v3660 = vadd.f32 %v3604, %v3659
      %v3661 = vpop.f32.mrb[0].mxu0
      %3662 = vmatprep.mubr.bf16.mxu0 %v1117
      %3663 = vmatmul.mubr.bf16.gmra.mrb[0].mxu0 %v1116
      %v3664 = vpop.f32.mrb[0].mxu0
      %v3665 = vadd.f32 %v3609, %v3664
      %v3666 = vpop.f32.mrb[0].mxu0
      %v3667 = vpop.f32.mrb[0].mxu0
      %v3668 = vadd.f32 %v3612, %v3667
      %v3669 = vpop.f32.mrb[0].mxu0
      %3670 = vmatprep.mubr.bf16.mxu0 %v1149
      %3671 = vmatmul.mubr.bf16.gmra.mrb[0].mxu0 %v1148
      %v3672 = vpop.f32.mrb[0].mxu0
      %v3673 = vadd.f32 %v3617, %v3672
      %v3674 = vpop.f32.mrb[0].mxu0
      %v3675 = vpop.f32.mrb[0].mxu0
      %v3676 = vpop.f32.mrb[0].mxu0
      %3677 = vdwg.mxu0
      %v3678 = vpack.c.bf16 %v3660, %v3657
      %v3679 = vpack.c.bf16 %v3668, %v3665
      %v3680 = vpack.c.bf16 %v3673, %v3673
      %v3684 = vunpack.c.l.b16 %v3678
      %v3685 = vunpack.c.h.b16 %v3678
      %v3686 = vunpack.c.l.b16 %v3679
      %v3687 = vunpack.c.h.b16 %v3679
      %v3688 = vunpack.c.l.b16 %v3680
      %v3689 = vpack.c.b16 %v3684, %v3684
      %v3690 = vpack.c.b16 %v3685, %v3685
      %v3691 = vpack.c.b16 %v3686, %v3686
      %v3692 = vpack.c.b16 %v3687, %v3687
      %v3693 = vpack.c.b16 %v3688, %v3688
      %3699 = vst [vmem:[%s213] sm:$0xf] %v3689
      %3700 = vst [vmem:[%s213 + $0x4] sm:$0xf] %v3690
      %3701 = vst [vmem:[%s213 + $0x8] sm:$0xf] %v3691
      %3702 = vst [vmem:[%s213 + $0xc] sm:$0xf] %v3692
      %3703 = vst [vmem:[%s213 + $0x10] sm:$0xf] %v3693
      %v3704 = vadd.f32 %v3657, %v3660
      %v3705 = vadd.f32 %v3704, %v3665
      %v3706 = vadd.f32 %v3705, %v3668
      %v3707 = vadd.f32 %v3706, %v3673
      %v3708 = vrot.slane %v3707, 4
      %v3709 = vadd.f32 %v3707, %v3708
      %v3710 = vrot.slane %v3709, 2
      %v3711 = vadd.f32 %v3709, %v3710
      %v3712 = vrot.slane %v3711, 1
      %v3713 = vadd.f32 %v3711, %v3712
      %3714 = vst [vmem:[%s217] sm:$0x1] %v3713
      %v3715 = vmul.f32 %v3657, %v3657
      %v3716 = vmul.f32 %v3660, %v3660
      %v3717 = vmul.f32 %v3665, %v3665
      %v3718 = vmul.f32 %v3668, %v3668
      %v3719 = vmul.f32 %v3673, %v3673
      %v3720 = vadd.f32 %v3715, %v3716
      %v3721 = vadd.f32 %v3720, %v3717
      %v3722 = vadd.f32 %v3721, %v3718
      %v3723 = vadd.f32 %v3722, %v3719
      %v3724 = vrot.slane %v3723, 4
      %v3725 = vadd.f32 %v3723, %v3724
      %v3726 = vrot.slane %v3725, 2
      %v3727 = vadd.f32 %v3725, %v3726
      %v3728 = vrot.slane %v3727, 1
      %v3729 = vadd.f32 %v3727, %v3728
      %3730 = vst [vmem:[%s220] sm:$0x1] %v3729
      %s3731 = smul.u32 5, %s16
      %p3732 = scmp.lt.s32.totalorder %s3731, 9
      %s3733 = scalar_select %p3732, %s3731, 9
      %s3734 = smul.addr %s3733, 4
      %s3735 = scalar_lea.vmem %s2, %s3734
      %p3736 = scmp.lt.s32.totalorder %s16, 1
      %s3737 = scalar_select %p3736, %s16, 1
      %s3738 = scalar_lea.vmem %s3, %s3737
      %p3739 = scmp.lt.s32.totalorder %s16, 1
      %s3740 = scalar_select %p3739, %s16, 1
      %s3741 = scalar_lea.vmem %s4, %s3740
      // Predicated region
      $region29: #{_lambda_.18} parent=27 // pred_check
        %p3742 = pneg %p81
      $region30: #{_lambda_.18} parent=27 // pred_check_branch
        %3744 = sbr.rel (%p3742) target = $region32
      $region31: #{_lambda_.18} parent=27 // pred_region
        %s3745 = smul.u32 5, %s16
      $region32: #{_lambda_.18} parent=27 // pred_fallthru
        _
      // Predicated region
      $region33: #{_lambda_.18} parent=27 // pred_check
        %p3746 = pneg %p107
      $region34: #{_lambda_.18} parent=27 // pred_check_branch
        %3748 = sbr.rel (%p3746) target = $region36
      $region35: #{_lambda_.18} parent=27 // pred_region
        _
      $region36: #{_lambda_.18} parent=27 // pred_fallthru
        _
      // Predicated region
      $region37: #{_lambda_.18} parent=27 // pred_check
        %p3749 = pneg %p133
      $region38: #{_lambda_.18} parent=27 // pred_check_branch
        %3751 = sbr.rel (%p3749) target = $region40
      $region39: #{_lambda_.18} parent=27 // pred_region
        _
      $region40: #{_lambda_.18} parent=27 // pred_fallthru
        _
    $region28: #{_lambda_.18} parent=5 // pred_fallthru
      _
    %p3752 = scmp.le.s32.totalorder 2, %s11
    // Predicated region
    $region41: #{_lambda_.18} parent=5 // pred_check
      %p3753 = pneg %p3752
    $region42: #{_lambda_.18} parent=5 // pred_check_branch
      %3755 = sbr.rel (%p3753) target = $region44
    $region43: #{_lambda_.18} parent=5 // pred_region
      %s3756 = ssub.s32 %s11, 2
      // Predicated region
      $region45: #{_lambda_.18} parent=43 // pred_check
        %p3757 = pneg %p87
      $region46: #{_lambda_.18} parent=43 // pred_check_branch
        %3759 = sbr.rel (%p3757) target = $region48
      $region47: #{_lambda_.18} parent=43 // pred_region
        %s3760 = smul.u32 5, %s17
        %p3761 = scmp.lt.s32.totalorder %s3760, 9
        %s3762 = scalar_select %p3761, %s3760, 9
        %s3763 = smul.addr %s3762, 4
        %s3764 = scalar_lea.vmem %s2, %s3763
      $region48: #{_lambda_.18} parent=43 // pred_fallthru
        _
      // Predicated region
      $region49: #{_lambda_.18} parent=43 // pred_check
        %p3765 = pneg %p113
      $region50: #{_lambda_.18} parent=43 // pred_check_branch
        %3767 = sbr.rel (%p3765) target = $region52
      $region51: #{_lambda_.18} parent=43 // pred_region
        %p3768 = scmp.lt.s32.totalorder %s17, 1
        %s3769 = scalar_select %p3768, %s17, 1
        %s3770 = scalar_lea.vmem %s3, %s3769
      $region52: #{_lambda_.18} parent=43 // pred_fallthru
        _
      // Predicated region
      $region53: #{_lambda_.18} parent=43 // pred_check
        %p3771 = pneg %p139
      $region54: #{_lambda_.18} parent=43 // pred_check_branch
        %3773 = sbr.rel (%p3771) target = $region56
      $region55: #{_lambda_.18} parent=43 // pred_region
        %p3774 = scmp.lt.s32.totalorder %s17, 1
        %s3775 = scalar_select %p3774, %s17, 1
        %s3776 = scalar_lea.vmem %s4, %s3775
      $region56: #{_lambda_.18} parent=43 // pred_fallthru
        _
    $region44: #{_lambda_.18} parent=5 // pred_fallthru
      _
  $region6: #{_lambda_.18} parent=0 // loop_footer
    %s15 = sadd.s32 1, %s11
  $region7: #{_lambda_.18} parent=0 // loop_footer_branch
    %10 = sbr.rel target = $region3
  $region8: #{_lambda_.18} parent=0 // loop_exit
    _

// kernel: _lambda_.20
$region0: #{_lambda_.20}
  #allocation0 [shape = 'u32[]', space=smem, size = 0x4, offset = 0x4, fixed_abs, tag = 'smem constant byte address 0x4 - core index']
  #allocation1 [shape = 'u32[144,128]{1,0:T(1,128)}', space=vmem, size = 0x12000, scoped, tag = 'internal scratch']
  %s0 = inlined_call_operand.vmem [shape: bf16[112,512], index: 0, kind: input, shape index: {}]
  %s1 = inlined_call_operand.vmem [shape: bf16[512,128], index: 1, kind: input, shape index: {}]
  %s2 = inlined_call_operand.vmem [shape: bf16[112,128], index: 2, kind: output, shape index: {0}]
  %s3 = inlined_call_operand.vmem [shape: f32[2,1,128], index: 3, kind: output, shape index: {1}]
  %s4 = inlined_call_operand.vmem [shape: f32[2,1,128], index: 4, kind: output, shape index: {2}]
  %5 = xla_tuple %s2, %s3, %s4
  %s6 = sld [smem:[#allocation0]]
  $region57: #{_lambda_.20} parent=0
    _
  %s8 = ssub.s32 1, %s6
  %s9 = scalar_select 0, %s8, %s6
  loop: start=0, step=1, limit=4
  $region2: #{_lambda_.20} parent=0 // loop_pre_header
    _
  $region3: #{_lambda_.20} parent=0 // loop_header
    %s11 = sphi 0, %s15
    %p12 = scmp.ge.s32.totalorder %s11, 4
    %s21 = sphi 0, %s23
    %s24 = sphi 0, %s21
    %s25 = sphi 0, %s24
    %s41 = sphi 0, %s25
    %s45 = sphi 0, %s45
    %s47 = sphi 0, %s45
    %s48 = sphi 0, %s47
    %s62 = sphi 0, %s48
    %s68 = sphi 0, %s70
    %s71 = sphi 0, %s68
    %s72 = sphi 0, %s71
    %s88 = sphi 0, %s72
    %s94 = sphi 0, %s96
    %s97 = sphi 0, %s94
    %s98 = sphi 0, %s97
    %s114 = sphi 0, %s98
    %s120 = sphi 0, %s122
    %s123 = sphi 0, %s120
    %s124 = sphi 0, %s123
    %s140 = sphi 0, %s124
  $region4: #{_lambda_.20} parent=0 // loop_header_branch
    %14 = sbr.rel (%p12) target = $region8
  $region5: #{_lambda_.20} parent=0 // loop_body
    %s16 = ssub.s32 %s11, 1
    %s17 = ssub.s32 %s11, 2
    %s18 = sadd.s32 %s11, 1
    %s19 = ssub.s32 %s11, %s18
    %p20 = scmp.eq.s32.totalorder %s19, 0
    %s22 = sadd.s32 %s21, 1
    %s23 = scalar_select %p20, %s21, %s22
    %p26 = pneg %p20
    %p27 = scmp.eq.s32.totalorder %s11, 1
    %p28 = por %p26, %p27
    %p29 = scmp.ne.s32.totalorder %s21, %s24
    %p30 = scmp.eq.s32.totalorder %s11, 0
    %p31 = por %p29, %p30
    %p32 = scmp.ne.s32.totalorder %s21, %s24
    %p33 = scmp.eq.s32.totalorder %s16, 1
    %p34 = por %p32, %p33
    %p35 = scmp.ne.s32.totalorder %s24, %s25
    %p36 = scmp.eq.s32.totalorder %s16, 0
    %p37 = por %p35, %p36
    %p38 = scmp.ne.s32.totalorder %s24, %s25
    %p39 = scmp.eq.s32.totalorder %s17, 1
    %p40 = por %p38, %p39
    %p42 = scmp.ne.s32.totalorder %s25, %s41
    %p43 = scmp.eq.s32.totalorder %s17, 0
    %p44 = por %p42, %p43
    %s46 = sadd.s32 %s45, 1
    %p49 = scmp.eq.s32.totalorder %s11, 1
    %p50 = scmp.ne.s32.totalorder %s45, %s47
    %p51 = scmp.eq.s32.totalorder %s11, 0
    %p52 = por %p50, %p51
    %p53 = scmp.ne.s32.totalorder %s45, %s47
    %p54 = scmp.eq.s32.totalorder %s16, 1
    %p55 = por %p53, %p54
    %p56 = scmp.ne.s32.totalorder %s47, %s48
    %p57 = scmp.eq.s32.totalorder %s16, 0
    %p58 = por %p56, %p57
    %p59 = scmp.ne.s32.totalorder %s47, %s48
    %p60 = scmp.eq.s32.totalorder %s17, 1
    %p61 = por %p59, %p60
    %p63 = scmp.ne.s32.totalorder %s48, %s62
    %p64 = scmp.eq.s32.totalorder %s17, 0
    %p65 = por %p63, %p64
    %s66 = ssub.s32 %s11, %s18
    %p67 = scmp.eq.s32.totalorder %s66, 0
    %s69 = sadd.s32 %s68, 1
    %s70 = scalar_select %p67, %s68, %s69
    %p73 = pneg %p67
    %p74 = scmp.eq.s32.totalorder %s11, 1
    %p75 = por %p73, %p74
    %p76 = scmp.ne.s32.totalorder %s68, %s71
    %p77 = scmp.eq.s32.totalorder %s11, 0
    %p78 = por %p76, %p77
    %p79 = scmp.ne.s32.totalorder %s68, %s71
    %p80 = scmp.eq.s32.totalorder %s16, 1
    %p81 = por %p79, %p80
    %p82 = scmp.ne.s32.totalorder %s71, %s72
    %p83 = scmp.eq.s32.totalorder %s16, 0
    %p84 = por %p82, %p83
    %p85 = scmp.ne.s32.totalorder %s71, %s72
    %p86 = scmp.eq.s32.totalorder %s17, 1
    %p87 = por %p85, %p86
    %p89 = scmp.ne.s32.totalorder %s72, %s88
    %p90 = scmp.eq.s32.totalorder %s17, 0
    %p91 = por %p89, %p90
    %s92 = ssub.s32 %s11, %s18
    %p93 = scmp.eq.s32.totalorder %s92, 0
    %s95 = sadd.s32 %s94, 1
    %s96 = scalar_select %p93, %s94, %s95
    %p99 = pneg %p93
    %p100 = scmp.eq.s32.totalorder %s11, 1
    %p101 = por %p99, %p100
    %p102 = scmp.ne.s32.totalorder %s94, %s97
    %p103 = scmp.eq.s32.totalorder %s11, 0
    %p104 = por %p102, %p103
    %p105 = scmp.ne.s32.totalorder %s94, %s97
    %p106 = scmp.eq.s32.totalorder %s16, 1
    %p107 = por %p105, %p106
    %p108 = scmp.ne.s32.totalorder %s97, %s98
    %p109 = scmp.eq.s32.totalorder %s16, 0
    %p110 = por %p108, %p109
    %p111 = scmp.ne.s32.totalorder %s97, %s98
    %p112 = scmp.eq.s32.totalorder %s17, 1
    %p113 = por %p111, %p112
    %p115 = scmp.ne.s32.totalorder %s98, %s114
    %p116 = scmp.eq.s32.totalorder %s17, 0
    %p117 = por %p115, %p116
    %s118 = ssub.s32 %s11, %s18
    %p119 = scmp.eq.s32.totalorder %s118, 0
    %s121 = sadd.s32 %s120, 1
    %s122 = scalar_select %p119, %s120, %s121
    %p125 = pneg %p119
    %p126 = scmp.eq.s32.totalorder %s11, 1
    %p127 = por %p125, %p126
    %p128 = scmp.ne.s32.totalorder %s120, %s123
    %p129 = scmp.eq.s32.totalorder %s11, 0
    %p130 = por %p128, %p129
    %p131 = scmp.ne.s32.totalorder %s120, %s123
    %p132 = scmp.eq.s32.totalorder %s16, 1
    %p133 = por %p131, %p132
    %p134 = scmp.ne.s32.totalorder %s123, %s124
    %p135 = scmp.eq.s32.totalorder %s16, 0
    %p136 = por %p134, %p135
    %p137 = scmp.ne.s32.totalorder %s123, %s124
    %p138 = scmp.eq.s32.totalorder %s17, 1
    %p139 = por %p137, %p138
    %p141 = scmp.ne.s32.totalorder %s124, %s140
    %p142 = scmp.eq.s32.totalorder %s17, 0
    %p143 = por %p141, %p142
    %p144 = scmp.le.s32.totalorder 1, %s11
    %p145 = scmp.lt.s32.totalorder %s11, 3
    %p146 = pnand %p144, %p145
    %p147 = pneg %p146
    // Predicated region
    $region9: #{_lambda_.20} parent=5 // pred_check
      _
    $region10: #{_lambda_.20} parent=5 // pred_check_branch
      %149 = sbr.rel (%p146) target = $region12
    $region11: #{_lambda_.20} parent=5 // pred_region
      %s150 = ssub.s32 %s11, 1
      // Predicated region
      $region13: #{_lambda_.20} parent=11 // pred_check
        %p151 = pneg %p58
      $region14: #{_lambda_.20} parent=11 // pred_check_branch
        %153 = sbr.rel (%p151) target = $region16
      $region15: #{_lambda_.20} parent=11 // pred_region
        _
      $region16: #{_lambda_.20} parent=11 // pred_fallthru
        _
    $region12: #{_lambda_.20} parent=5 // pred_fallthru
      _
    %p154 = scmp.lt.s32.totalorder %s11, 2
    // Predicated region
    $region17: #{_lambda_.20} parent=5 // pred_check
      %p155 = pneg %p154
    $region18: #{_lambda_.20} parent=5 // pred_check_branch
      %157 = sbr.rel (%p155) target = $region20
    $region19: #{_lambda_.20} parent=5 // pred_region
      // Predicated region
      $region21: #{_lambda_.20} parent=19 // pred_check
        %p158 = pneg %p31
      $region22: #{_lambda_.20} parent=19 // pred_check_branch
        %160 = sbr.rel (%p158) target = $region24
      $region23: #{_lambda_.20} parent=19 // pred_region
        %s161 = smul.u32 7, %s11
        %p162 = scmp.lt.s32.totalorder %s161, 13
        %s163 = scalar_select %p162, %s161, 13
        %s164 = smul.addr %s163, 4
        %s165 = smul.addr %s164, 4
        %s166 = scalar_lea.vmem %s0, %s165
        %s167 = smul.u32 7, %s11
      $region24: #{_lambda_.20} parent=19 // pred_fallthru
        _
    $region20: #{_lambda_.20} parent=5 // pred_fallthru
      _
    %p168 = scmp.le.s32.totalorder 1, %s11
    %p169 = scmp.lt.s32.totalorder %s11, 3
    %p170 = pnand %p168, %p169
    %p171 = pneg %p170
    // Predicated region
    $region25: #{_lambda_.20} parent=5 // pred_check
      _
    $region26: #{_lambda_.20} parent=5 // pred_check_branch
      %173 = sbr.rel (%p170) target = $region28
    $region27: #{_lambda_.20} parent=5 // pred_region
      %s174 = ssub.s32 %s11, 1
      %s175 = smul.u32 7, %s16
      %p176 = scmp.lt.s32.totalorder %s175, 13
      %s177 = scalar_select %p176, %s175, 13
      %s178 = smul.addr %s177, 4
      %s179 = smul.addr %s178, 4
      %s180 = scalar_lea.vmem %s0, %s179
      %p181 = pneg %p37
      %p182 = pneg %p34
      %p183 = pneg %p58
      %p184 = pneg %p55
      %p185 = pneg %p84
      %p186 = pneg %p81
      %s187 = smul.u32 7, %s16
      %p188 = scmp.lt.s32.totalorder %s187, 13
      %s189 = scalar_select %p188, %s187, 13
      %s190 = smul.addr %s189, 4
      %s191 = scalar_lea.vmem %s2, %s190
      %p192 = pneg %p110
      %p193 = pneg %p107
      %p194 = scmp.lt.s32.totalorder %s16, 1
      %s195 = scalar_select %p194, %s16, 1
      %s196 = scalar_lea.vmem %s3, %s195
      %p197 = pneg %p136
      %p198 = pneg %p133
      %p199 = scmp.lt.s32.totalorder %s16, 1
      %s200 = scalar_select %p199, %s16, 1
      %s201 = scalar_lea.vmem %s4, %s200
      %s202 = smul.u32 7, %s16
      %p203 = scmp.lt.s32.totalorder %s202, 13
      %s204 = scalar_select %p203, %s202, 13
      %s205 = smul.addr %s204, 4
      %s206 = smul.addr %s205, 4
      %s207 = scalar_lea.vmem %s0, %s206
      %s208 = smul.u32 7, %s16
      %s209 = smul.u32 7, %s16
      %p210 = scmp.lt.s32.totalorder %s209, 13
      %s211 = scalar_select %p210, %s209, 13
      %s212 = smul.addr %s211, 4
      %s213 = scalar_lea.vmem %s2, %s212
      %s214 = smul.u32 7, %s16
      %p215 = scmp.lt.s32.totalorder %s16, 1
      %s216 = scalar_select %p215, %s16, 1
      %s217 = scalar_lea.vmem %s3, %s216
      %p218 = scmp.lt.s32.totalorder %s16, 1
      %s219 = scalar_select %p218, %s16, 1
      %s220 = scalar_lea.vmem %s4, %s219
      %v222 = vld [vmem:[%s207] sm:$0xff]
      %v223 = vld [vmem:[%s207 + $0x8] sm:$0xff]
      %v224 = vld [vmem:[%s207 + $0x10] sm:$0xff]
      %v225 = vld [vmem:[%s207 + $0x18] sm:$0xff]
      %v226 = vld [vmem:[%s207 + $0x20] sm:$0xff]
      %v227 = vld [vmem:[%s207 + $0x28] sm:$0xff]
      %v228 = vld [vmem:[%s207 + $0x30] sm:$0xff]
      %v229 = vld [vmem:[%s207 + $0x38] sm:$0xff]
      %v230 = vld [vmem:[%s207 + $0x40] sm:$0xff]
      %v231 = vld [vmem:[%s207 + $0x48] sm:$0xff]
      %v232 = vld [vmem:[%s207 + $0x50] sm:$0xff]
      %v233 = vld [vmem:[%s207 + $0x58] sm:$0xff]
      %v234 = vld [vmem:[%s207 + $0x60] sm:$0xff]
      %v235 = vld [vmem:[%s207 + $0x68] sm:$0xff]
      %v236 = vld [vmem:[%s1] sm:$0xf]
      %v237 = vld [vmem:[%s1 + $0x4] sm:$0xf]
      %v238 = vld [vmem:[%s1 + $0x8] sm:$0xf]
      %v239 = vld [vmem:[%s1 + $0xc] sm:$0xf]
      %v240 = vld [vmem:[%s1 + $0x10] sm:$0xf]
      %v241 = vld [vmem:[%s1 + $0x14] sm:$0xf]
      %v242 = vld [vmem:[%s1 + $0x18] sm:$0xf]
      %v243 = vld [vmem:[%s1 + $0x1c] sm:$0xf]
      %v244 = vld [vmem:[%s1 + $0x20] sm:$0xf]
      %v245 = vld [vmem:[%s1 + $0x24] sm:$0xf]
      %v246 = vld [vmem:[%s1 + $0x28] sm:$0xf]
      %v247 = vld [vmem:[%s1 + $0x2c] sm:$0xf]
      %v248 = vld [vmem:[%s1 + $0x30] sm:$0xf]
      %v249 = vld [vmem:[%s1 + $0x34] sm:$0xf]
      %v250 = vld [vmem:[%s1 + $0x38] sm:$0xf]
      %v251 = vld [vmem:[%s1 + $0x3c] sm:$0xf]
      %v252 = vld [vmem:[%s1 + $0x40] sm:$0xf]
      %v253 = vld [vmem:[%s1 + $0x44] sm:$0xf]
      %v254 = vld [vmem:[%s1 + $0x48] sm:$0xf]
      %v255 = vld [vmem:[%s1 + $0x4c] sm:$0xf]
      %v256 = vld [vmem:[%s1 + $0x50] sm:$0xf]
      %v257 = vld [vmem:[%s1 + $0x54] sm:$0xf]
      %v258 = vld [vmem:[%s1 + $0x58] sm:$0xf]
      %v259 = vld [vmem:[%s1 + $0x5c] sm:$0xf]
      %v260 = vld [vmem:[%s1 + $0x60] sm:$0xf]
      %v261 = vld [vmem:[%s1 + $0x64] sm:$0xf]
      %v262 = vld [vmem:[%s1 + $0x68] sm:$0xf]
      %v263 = vld [vmem:[%s1 + $0x6c] sm:$0xf]
      %v264 = vld [vmem:[%s1 + $0x70] sm:$0xf]
      %v265 = vld [vmem:[%s1 + $0x74] sm:$0xf]
      %v266 = vld [vmem:[%s1 + $0x78] sm:$0xf]
      %v267 = vld [vmem:[%s1 + $0x7c] sm:$0xf]
      %v268 = vld [vmem:[%s1 + $0x80] sm:$0xf]
      %v269 = vld [vmem:[%s1 + $0x84] sm:$0xf]
      %v270 = vld [vmem:[%s1 + $0x88] sm:$0xf]
      %v271 = vld [vmem:[%s1 + $0x8c] sm:$0xf]
      %v272 = vld [vmem:[%s1 + $0x90] sm:$0xf]
      %v273 = vld [vmem:[%s1 + $0x94] sm:$0xf]
      %v274 = vld [vmem:[%s1 + $0x98] sm:$0xf]
      %v275 = vld [vmem:[%s1 + $0x9c] sm:$0xf]
      %v276 = vld [vmem:[%s1 + $0xa0] sm:$0xf]
      %v277 = vld [vmem:[%s1 + $0xa4] sm:$0xf]
      %v278 = vld [vmem:[%s1 + $0xa8] sm:$0xf]
      %v279 = vld [vmem:[%s1 + $0xac] sm:$0xf]
      %v280 = vld [vmem:[%s1 + $0xb0] sm:$0xf]
      %v281 = vld [vmem:[%s1 + $0xb4] sm:$0xf]
      %v282 = vld [vmem:[%s1 + $0xb8] sm:$0xf]
      %v283 = vld [vmem:[%s1 + $0xbc] sm:$0xf]
      %v284 = vld [vmem:[%s1 + $0xc0] sm:$0xf]
      %v285 = vld [vmem:[%s1 + $0xc4] sm:$0xf]
      %v286 = vld [vmem:[%s1 + $0xc8] sm:$0xf]
      %v287 = vld [vmem:[%s1 + $0xcc] sm:$0xf]
      %v288 = vld [vmem:[%s1 + $0xd0] sm:$0xf]
      %v289 = vld [vmem:[%s1 + $0xd4] sm:$0xf]
      %v290 = vld [vmem:[%s1 + $0xd8] sm:$0xf]
      %v291 = vld [vmem:[%s1 + $0xdc] sm:$0xf]
      %v292 = vld [vmem:[%s1 + $0xe0] sm:$0xf]
      %v293 = vld [vmem:[%s1 + $0xe4] sm:$0xf]
      %v294 = vld [vmem:[%s1 + $0xe8] sm:$0xf]
      %v295 = vld [vmem:[%s1 + $0xec] sm:$0xf]
      %v296 = vld [vmem:[%s1 + $0xf0] sm:$0xf]
      %v297 = vld [vmem:[%s1 + $0xf4] sm:$0xf]
      %v298 = vld [vmem:[%s1 + $0xf8] sm:$0xf]
      %v299 = vld [vmem:[%s1 + $0xfc] sm:$0xf]
      %v314 = vunpack.c.l.b16 %v222
      %v315 = vunpack.c.h.b16 %v222
      %v316 = vunpack.c.l.b16 %v223
      %v317 = vunpack.c.h.b16 %v223
      %v318 = vunpack.c.l.b16 %v224
      %v319 = vunpack.c.h.b16 %v224
      %v320 = vunpack.c.l.b16 %v225
      %v321 = vunpack.c.h.b16 %v225
      %v322 = vunpack.c.l.b16 %v226
      %v323 = vunpack.c.h.b16 %v226
      %v324 = vunpack.c.l.b16 %v227
      %v325 = vunpack.c.h.b16 %v227
      %v326 = vunpack.c.l.b16 %v228
      %v327 = vunpack.c.h.b16 %v228
      %v328 = vunpack.c.l.b16 %v229
      %v329 = vunpack.c.h.b16 %v229
      %v330 = vunpack.c.l.b16 %v230
      %v331 = vunpack.c.h.b16 %v230
      %v332 = vunpack.c.l.b16 %v231
      %v333 = vunpack.c.h.b16 %v231
      %v334 = vunpack.c.l.b16 %v232
      %v335 = vunpack.c.h.b16 %v232
      %v336 = vunpack.c.l.b16 %v233
      %v337 = vunpack.c.h.b16 %v233
      %v338 = vunpack.c.l.b16 %v234
      %v339 = vunpack.c.h.b16 %v234
      %v340 = vunpack.c.l.b16 %v235
      %v341 = vunpack.c.h.b16 %v235
      %v342 = vpack.c.b16 %v318, %v314
      %v343 = vpack.c.b16 %v319, %v315
      %v344 = vpack.c.b16 %v320, %v316
      %v345 = vpack.c.b16 %v321, %v317
      %v346 = vpack.c.b16 %v326, %v322
      %v347 = vpack.c.b16 %v327, %v323
      %v348 = vpack.c.b16 %v328, %v324
      %v349 = vpack.c.b16 %v329, %v325
      %v350 = vpack.c.b16 %v334, %v330
      %v351 = vpack.c.b16 %v335, %v331
      %v352 = vpack.c.b16 %v336, %v332
      %v353 = vpack.c.b16 %v337, %v333
      %v354 = vpack.c.b16 %v338, %v338
      %v355 = vpack.c.b16 %v339, %v339
      %v356 = vpack.c.b16 %v340, %v340
      %v357 = vpack.c.b16 %v341, %v341
      %v438 = vunpack.c.l.b16 %v236
      %v439 = vunpack.c.l.b16 %v237
      %v440 = vunpack.c.l.b16 %v238
      %v441 = vunpack.c.l.b16 %v239
      %v442 = vunpack.c.l.b16 %v240
      %v443 = vunpack.c.l.b16 %v241
      %v444 = vunpack.c.l.b16 %v242
      %v445 = vunpack.c.l.b16 %v243
      %v446 = vunpack.c.l.b16 %v244
      %v447 = vunpack.c.l.b16 %v245
      %v448 = vunpack.c.l.b16 %v246
      %v449 = vunpack.c.l.b16 %v247
      %v450 = vunpack.c.l.b16 %v248
      %v451 = vunpack.c.l.b16 %v249
      %v452 = vunpack.c.l.b16 %v250
      %v453 = vunpack.c.l.b16 %v251
      %v454 = vunpack.c.l.b16 %v252
      %v455 = vunpack.c.l.b16 %v253
      %v456 = vunpack.c.l.b16 %v254
      %v457 = vunpack.c.l.b16 %v255
      %v458 = vunpack.c.l.b16 %v256
      %v459 = vunpack.c.l.b16 %v257
      %v460 = vunpack.c.l.b16 %v258
      %v461 = vunpack.c.l.b16 %v259
      %v462 = vunpack.c.l.b16 %v260
      %v463 = vunpack.c.l.b16 %v261
      %v464 = vunpack.c.l.b16 %v262
      %v465 = vunpack.c.l.b16 %v263
      %v466 = vunpack.c.l.b16 %v264
      %v467 = vunpack.c.l.b16 %v265
      %v468 = vunpack.c.l.b16 %v266
      %v469 = vunpack.c.l.b16 %v267
      %v470 = vunpack.c.l.b16 %v268
      %v471 = vunpack.c.l.b16 %v269
      %v472 = vunpack.c.l.b16 %v270
      %v473 = vunpack.c.l.b16 %v271
      %v474 = vunpack.c.l.b16 %v272
      %v475 = vunpack.c.l.b16 %v273
      %v476 = vunpack.c.l.b16 %v274
      %v477 = vunpack.c.l.b16 %v275
      %v478 = vunpack.c.l.b16 %v276
      %v479 = vunpack.c.l.b16 %v277
      %v480 = vunpack.c.l.b16 %v278
      %v481 = vunpack.c.l.b16 %v279
      %v482 = vunpack.c.l.b16 %v280
      %v483 = vunpack.c.l.b16 %v281
      %v484 = vunpack.c.l.b16 %v282
      %v485 = vunpack.c.l.b16 %v283
      %v486 = vunpack.c.l.b16 %v284
      %v487 = vunpack.c.l.b16 %v285
      %v488 = vunpack.c.l.b16 %v286
      %v489 = vunpack.c.l.b16 %v287
      %v490 = vunpack.c.l.b16 %v288
      %v491 = vunpack.c.l.b16 %v289
      %v492 = vunpack.c.l.b16 %v290
      %v493 = vunpack.c.l.b16 %v291
      %v494 = vunpack.c.l.b16 %v292
      %v495 = vunpack.c.l.b16 %v293
      %v496 = vunpack.c.l.b16 %v294
      %v497 = vunpack.c.l.b16 %v295
      %v498 = vunpack.c.l.b16 %v296
      %v499 = vunpack.c.l.b16 %v297
      %v500 = vunpack.c.l.b16 %v298
      %v501 = vunpack.c.l.b16 %v299
      %v502 = vpack.c.b16 %v439, %v438
      %v503 = vpack.c.b16 %v441, %v440
      %v504 = vpack.c.b16 %v443, %v442
      %v505 = vpack.c.b16 %v445, %v444
      %v506 = vpack.c.b16 %v447, %v446
      %v507 = vpack.c.b16 %v449, %v448
      %v508 = vpack.c.b16 %v451, %v450
      %v509 = vpack.c.b16 %v453, %v452
      %v510 = vpack.c.b16 %v455, %v454
      %v511 = vpack.c.b16 %v457, %v456
      %v512 = vpack.c.b16 %v459, %v458
      %v513 = vpack.c.b16 %v461, %v460
      %v514 = vpack.c.b16 %v463, %v462
      %v515 = vpack.c.b16 %v465, %v464
      %v516 = vpack.c.b16 %v467, %v466
      %v517 = vpack.c.b16 %v469, %v468
      %v518 = vpack.c.b16 %v471, %v470
      %v519 = vpack.c.b16 %v473, %v472
      %v520 = vpack.c.b16 %v475, %v474
      %v521 = vpack.c.b16 %v477, %v476
      %v522 = vpack.c.b16 %v479, %v478
      %v523 = vpack.c.b16 %v481, %v480
      %v524 = vpack.c.b16 %v483, %v482
      %v525 = vpack.c.b16 %v485, %v484
      %v526 = vpack.c.b16 %v487, %v486
      %v527 = vpack.c.b16 %v489, %v488
      %v528 = vpack.c.b16 %v491, %v490
      %v529 = vpack.c.b16 %v493, %v492
      %v530 = vpack.c.b16 %v495, %v494
      %v531 = vpack.c.b16 %v497, %v496
      %v532 = vpack.c.b16 %v499, %v498
      %v533 = vpack.c.b16 %v501, %v500
      %566 = vmatprep.subr.bf16.mxu0 0
      %567 = vmatpush1.bf16.msra.mxu0 %v502
      %568 = vmatprep.subr.bf16.mxu0 0
      %569 = vmatpush1.bf16.msra.mxu0 %v503
      %570 = vmatprep.subr.bf16.mxu0 0
      %571 = vmatpush1.bf16.msra.mxu0 %v504
      %572 = vmatprep.subr.bf16.mxu0 0
      %573 = vmatpush1.bf16.msra.mxu0 %v505
      %574 = vmatprep.subr.bf16.mxu0 0
      %575 = vmatpush1.bf16.msra.mxu0 %v506
      %576 = vmatprep.subr.bf16.mxu0 0
      %577 = vmatpush1.bf16.msra.mxu0 %v507
      %578 = vmatprep.subr.bf16.mxu0 0
      %579 = vmatpush1.bf16.msra.mxu0 %v508
      %580 = vmatprep.subr.bf16.mxu0 0
      %581 = vmatpush1.bf16.msra.mxu0 %v509
      %582 = vmatprep.subr.bf16.mxu0 0
      %583 = vmatpush1.bf16.msra.mxu0 %v510
      %584 = vmatprep.subr.bf16.mxu0 0
      %585 = vmatpush1.bf16.msra.mxu0 %v511
      %586 = vmatprep.subr.bf16.mxu0 0
      %587 = vmatpush1.bf16.msra.mxu0 %v512
      %588 = vmatprep.subr.bf16.mxu0 0
      %589 = vmatpush1.bf16.msra.mxu0 %v513
      %590 = vmatprep.subr.bf16.mxu0 0
      %591 = vmatpush1.bf16.msra.mxu0 %v514
      %592 = vmatprep.subr.bf16.mxu0 0
      %593 = vmatpush1.bf16.msra.mxu0 %v515
      %594 = vmatprep.subr.bf16.mxu0 0
      %595 = vmatpush1.bf16.msra.mxu0 %v516
      %596 = vmatprep.subr.bf16.mxu0 0
      %597 = vmatpush1.bf16.msra.mxu0 %v517
      %598 = vmatprep.mubr.bf16.mxu0 %v343
      %599 = vmatmul.mubr.bf16.gmra.mrb[0].mxu0 %v342
      %v600 = vpop.f32.mrb[0].mxu0
      %v601 = vadd.f32 0.0, %v600
      %v602 = vpop.f32.mrb[0].mxu0
      %v603 = vpop.f32.mrb[0].mxu0
      %v604 = vadd.f32 0.0, %v603
      %v605 = vpop.f32.mrb[0].mxu0
      %606 = vmatprep.mubr.bf16.mxu0 %v347
      %607 = vmatmul.mubr.bf16.gmra.mrb[0].mxu0 %v346
      %v608 = vpop.f32.mrb[0].mxu0
      %v609 = vadd.f32 0.0, %v608
      %v610 = vpop.f32.mrb[0].mxu0
      %v611 = vpop.f32.mrb[0].mxu0
      %v612 = vadd.f32 0.0, %v611
      %v613 = vpop.f32.mrb[0].mxu0
      %614 = vmatprep.mubr.bf16.mxu0 %v351
      %615 = vmatmul.mubr.bf16.gmra.mrb[0].mxu0 %v350
      %v616 = vpop.f32.mrb[0].mxu0
      %v617 = vadd.f32 0.0, %v616
      %v618 = vpop.f32.mrb[0].mxu0
      %v619 = vpop.f32.mrb[0].mxu0
      %v620 = vadd.f32 0.0, %v619
      %v621 = vpop.f32.mrb[0].mxu0
      %622 = vmatprep.mubr.bf16.mxu0 %v355
      %623 = vmatmul.mubr.bf16.gmra.mrb[0].mxu0 %v354
      %v624 = vpop.f32.mrb[0].mxu0
      %v625 = vadd.f32 0.0, %v624
      %v626 = vpop.f32.mrb[0].mxu0
      %v627 = vpop.f32.mrb[0].mxu0
      %v628 = vpop.f32.mrb[0].mxu0
      %629 = vdwg.mxu0
      %630 = vmatprep.subr.bf16.mxu0 0
      %631 = vmatpush1.bf16.msra.mxu0 %v518
      %632 = vmatprep.subr.bf16.mxu0 0
      %633 = vmatpush1.bf16.msra.mxu0 %v519
      %634 = vmatprep.subr.bf16.mxu0 0
      %635 = vmatpush1.bf16.msra.mxu0 %v520
      %636 = vmatprep.subr.bf16.mxu0 0
      %637 = vmatpush1.bf16.msra.mxu0 %v521
      %638 = vmatprep.subr.bf16.mxu0 0
      %639 = vmatpush1.bf16.msra.mxu0 %v522
      %640 = vmatprep.subr.bf16.mxu0 0
      %641 = vmatpush1.bf16.msra.mxu0 %v523
      %642 = vmatprep.subr.bf16.mxu0 0
      %643 = vmatpush1.bf16.msra.mxu0 %v524
      %644 = vmatprep.subr.bf16.mxu0 0
      %645 = vmatpush1.bf16.msra.mxu0 %v525
      %646 = vmatprep.subr.bf16.mxu0 0
      %647 = vmatpush1.bf16.msra.mxu0 %v526
      %648 = vmatprep.subr.bf16.mxu0 0
      %649 = vmatpush1.bf16.msra.mxu0 %v527
      %650 = vmatprep.subr.bf16.mxu0 0
      %651 = vmatpush1.bf16.msra.mxu0 %v528
      %652 = vmatprep.subr.bf16.mxu0 0
      %653 = vmatpush1.bf16.msra.mxu0 %v529
      %654 = vmatprep.subr.bf16.mxu0 0
      %655 = vmatpush1.bf16.msra.mxu0 %v530
      %656 = vmatprep.subr.bf16.mxu0 0
      %657 = vmatpush1.bf16.msra.mxu0 %v531
      %658 = vmatprep.subr.bf16.mxu0 0
      %659 = vmatpush1.bf16.msra.mxu0 %v532
      %660 = vmatprep.subr.bf16.mxu0 0
      %661 = vmatpush1.bf16.msra.mxu0 %v533
      %662 = vmatprep.mubr.bf16.mxu0 %v345
      %663 = vmatmul.mubr.bf16.gmra.mrb[0].mxu0 %v344
      %v664 = vpop.f32.mrb[0].mxu0
      %v665 = vadd.f32 %v601, %v664
      %v666 = vpop.f32.mrb[0].mxu0
      %v667 = vpop.f32.mrb[0].mxu0
      %v668 = vadd.f32 %v604, %v667
      %v669 = vpop.f32.mrb[0].mxu0
      %670 = vmatprep.mubr.bf16.mxu0 %v349
      %671 = vmatmul.mubr.bf16.gmra.mrb[0].mxu0 %v348
      %v672 = vpop.f32.mrb[0].mxu0
      %v673 = vadd.f32 %v609, %v672
      %v674 = vpop.f32.mrb[0].mxu0
      %v675 = vpop.f32.mrb[0].mxu0
      %v676 = vadd.f32 %v612, %v675
      %v677 = vpop.f32.mrb[0].mxu0
      %678 = vmatprep.mubr.bf16.mxu0 %v353
      %679 = vmatmul.mubr.bf16.gmra.mrb[0].mxu0 %v352
      %v680 = vpop.f32.mrb[0].mxu0
      %v681 = vadd.f32 %v617, %v680
      %v682 = vpop.f32.mrb[0].mxu0
      %v683 = vpop.f32.mrb[0].mxu0
      %v684 = vadd.f32 %v620, %v683
      %v685 = vpop.f32.mrb[0].mxu0
      %686 = vmatprep.mubr.bf16.mxu0 %v357
      %687 = vmatmul.mubr.bf16.gmra.mrb[0].mxu0 %v356
      %v688 = vpop.f32.mrb[0].mxu0
      %v689 = vadd.f32 %v625, %v688
      %v690 = vpop.f32.mrb[0].mxu0
      %v691 = vpop.f32.mrb[0].mxu0
      %v692 = vpop.f32.mrb[0].mxu0
      %693 = vdwg.mxu0
      %v694 = vpack.c.bf16 %v668, %v665
      %v695 = vpack.c.bf16 %v676, %v673
      %v696 = vpack.c.bf16 %v684, %v681
      %v697 = vpack.c.bf16 %v689, %v689
      %v702 = vunpack.c.l.b16 %v694
      %v703 = vunpack.c.h.b16 %v694
      %v704 = vunpack.c.l.b16 %v695
      %v705 = vunpack.c.h.b16 %v695
      %v706 = vunpack.c.l.b16 %v696
      %v707 = vunpack.c.h.b16 %v696
      %v708 = vunpack.c.l.b16 %v697
      %v709 = vpack.c.b16 %v702, %v702
      %v710 = vpack.c.b16 %v703, %v703
      %v711 = vpack.c.b16 %v704, %v704
      %v712 = vpack.c.b16 %v705, %v705
      %v713 = vpack.c.b16 %v706, %v706
      %v714 = vpack.c.b16 %v707, %v707
      %v715 = vpack.c.b16 %v708, %v708
      %723 = vst [vmem:[%s213] sm:$0xf] %v709
      %724 = vst [vmem:[%s213 + $0x4] sm:$0xf] %v710
      %725 = vst [vmem:[%s213 + $0x8] sm:$0xf] %v711
      %726 = vst [vmem:[%s213 + $0xc] sm:$0xf] %v712
      %727 = vst [vmem:[%s213 + $0x10] sm:$0xf] %v713
      %728 = vst [vmem:[%s213 + $0x14] sm:$0xf] %v714
      %729 = vst [vmem:[%s213 + $0x18] sm:$0xf] %v715
      %v730 = vadd.f32 %v665, %v668
      %v731 = vadd.f32 %v730, %v673
      %v732 = vadd.f32 %v731, %v676
      %v733 = vadd.f32 %v732, %v681
      %v734 = vadd.f32 %v733, %v684
      %v735 = vadd.f32 %v734, %v689
      %v736 = vrot.slane %v735, 4
      %v737 = vadd.f32 %v735, %v736
      %v738 = vrot.slane %v737, 2
      %v739 = vadd.f32 %v737, %v738
      %v740 = vrot.slane %v739, 1
      %v741 = vadd.f32 %v739, %v740
      %742 = vst [vmem:[%s217] sm:$0x1] %v741
      %v743 = vmul.f32 %v665, %v665
      %v744 = vmul.f32 %v668, %v668
      %v745 = vmul.f32 %v673, %v673
      %v746 = vmul.f32 %v676, %v676
      %v747 = vmul.f32 %v681, %v681
      %v748 = vmul.f32 %v684, %v684
      %v749 = vmul.f32 %v689, %v689
      %v750 = vadd.f32 %v743, %v744
      %v751 = vadd.f32 %v750, %v745
      %v752 = vadd.f32 %v751, %v746
      %v753 = vadd.f32 %v752, %v747
      %v754 = vadd.f32 %v753, %v748
      %v755 = vadd.f32 %v754, %v749
      %v756 = vrot.slane %v755, 4
      %v757 = vadd.f32 %v755, %v756
      %v758 = vrot.slane %v757, 2
      %v759 = vadd.f32 %v757, %v758
      %v760 = vrot.slane %v759, 1
      %v761 = vadd.f32 %v759, %v760
      %762 = vst [vmem:[%s220] sm:$0x1] %v761
      %s763 = smul.u32 7, %s16
      %p764 = scmp.lt.s32.totalorder %s763, 13
      %s765 = scalar_select %p764, %s763, 13
      %s766 = smul.addr %s765, 4
      %s767 = scalar_lea.vmem %s2, %s766
      %p768 = scmp.lt.s32.totalorder %s16, 1
      %s769 = scalar_select %p768, %s16, 1
      %s770 = scalar_lea.vmem %s3, %s769
      %p771 = scmp.lt.s32.totalorder %s16, 1
      %s772 = scalar_select %p771, %s16, 1
      %s773 = scalar_lea.vmem %s4, %s772
      // Predicated region
      $region29: #{_lambda_.20} parent=27 // pred_check
        %p774 = pneg %p81
      $region30: #{_lambda_.20} parent=27 // pred_check_branch
        %776 = sbr.rel (%p774) target = $region32
      $region31: #{_lambda_.20} parent=27 // pred_region
        %s777 = smul.u32 7, %s16
      $region32: #{_lambda_.20} parent=27 // pred_fallthru
        _
      // Predicated region
      $region33: #{_lambda_.20} parent=27 // pred_check
        %p778 = pneg %p107
      $region34: #{_lambda_.20} parent=27 // pred_check_branch
        %780 = sbr.rel (%p778) target = $region36
      $region35: #{_lambda_.20} parent=27 // pred_region
        _
      $region36: #{_lambda_.20} parent=27 // pred_fallthru
        _
      // Predicated region
      $region37: #{_lambda_.20} parent=27 // pred_check
        %p781 = pneg %p133
      $region38: #{_lambda_.20} parent=27 // pred_check_branch
        %783 = sbr.rel (%p781) target = $region40
      $region39: #{_lambda_.20} parent=27 // pred_region
        _
      $region40: #{_lambda_.20} parent=27 // pred_fallthru
        _
    $region28: #{_lambda_.20} parent=5 // pred_fallthru
      _
    %p784 = scmp.le.s32.totalorder 2, %s11
    // Predicated region
    $region41: #{_lambda_.20} parent=5 // pred_check
      %p785 = pneg %p784
    $region42: #{_lambda_.20} parent=5 // pred_check_branch
      %787 = sbr.rel (%p785) target = $region44
    $region43: #{_lambda_.20} parent=5 // pred_region
      %s788 = ssub.s32 %s11, 2
      // Predicated region
      $region45: #{_lambda_.20} parent=43 // pred_check
        %p789 = pneg %p87
      $region46: #{_lambda_.20} parent=43 // pred_check_branch
        %791 = sbr.rel (%p789) target = $region48
      $region47: #{_lambda_.20} parent=43 // pred_region
        %s792 = smul.u32 7, %s17
        %p793 = scmp.lt.s32.totalorder %s792, 13
        %s794 = scalar_select %p793, %s792, 13
        %s795 = smul.addr %s794, 4
        %s796 = scalar_lea.vmem %s2, %s795
      $region48: #{_lambda_.20} parent=43 // pred_fallthru
        _
      // Predicated region
      $region49: #{_lambda_.20} parent=43 // pred_check
        %p797 = pneg %p113
      $region50: #{_lambda_.20} parent=43 // pred_check_branch
        %799 = sbr.rel (%p797) target = $region52
      $region51: #{_lambda_.20} parent=43 // pred_region
        %p800 = scmp.lt.s32.totalorder %s17, 1
        %s801 = scalar_select %p800, %s17, 1
        %s802 = scalar_lea.vmem %s3, %s801
      $region52: #{_lambda_.20} parent=43 // pred_fallthru
        _
      // Predicated region
      $region53: #{_lambda_.20} parent=43 // pred_check
        %p803 = pneg %p139
      $region54: #{_lambda_.20} parent=43 // pred_check_branch
        %805 = sbr.rel (%p803) target = $region56
      $region55: #{_lambda_.20} parent=43 // pred_region
        %p806 = scmp.lt.s32.totalorder %s17, 1
        %s807 = scalar_select %p806, %s17, 1
        %s808 = scalar_lea.vmem %s4, %s807
      $region56: #{_lambda_.20} parent=43 // pred_fallthru
        _
    $region44: #{_lambda_.20} parent=5 // pred_fallthru
      _
  $region6: #{_lambda_.20} parent=0 // loop_footer
    %s15 = sadd.s32 1, %s11
  $region7: #{_lambda_.20} parent=0 // loop_footer_branch
    %10 = sbr.rel target = $region3
  $region8: #{_lambda_.20} parent=0 // loop_exit
    _

// kernel: _lambda_.23
$region0: #{_lambda_.23}
  #allocation0 [shape = 'u32[]', space=smem, size = 0x4, offset = 0x4, fixed_abs, tag = 'smem constant byte address 0x4 - core index']
  #allocation1 [shape = 'u32[144,128]{1,0:T(1,128)}', space=vmem, size = 0x12000, scoped, tag = 'internal scratch']
  %s0 = inlined_call_operand.vmem [shape: bf16[80,128], index: 0, kind: input, shape index: {}]
  %s1 = inlined_call_operand.vmem [shape: bf16[128,128], index: 1, kind: input, shape index: {}]
  %s2 = inlined_call_operand.vmem [shape: bf16[80,128], index: 2, kind: output, shape index: {0}]
  %s3 = inlined_call_operand.vmem [shape: f32[2,1,128], index: 3, kind: output, shape index: {1}]
  %s4 = inlined_call_operand.vmem [shape: f32[2,1,128], index: 4, kind: output, shape index: {2}]
  %5 = xla_tuple %s2, %s3, %s4
  %s6 = sld [smem:[#allocation0]]
  $region57: #{_lambda_.23} parent=0
    _
  %s8 = ssub.s32 1, %s6
  %s9 = scalar_select 0, %s8, %s6
  loop: start=0, step=1, limit=4
  $region2: #{_lambda_.23} parent=0 // loop_pre_header
    _
  $region3: #{_lambda_.23} parent=0 // loop_header
    %s11 = sphi 0, %s15
    %p12 = scmp.ge.s32.totalorder %s11, 4
    %s21 = sphi 0, %s23
    %s24 = sphi 0, %s21
    %s25 = sphi 0, %s24
    %s41 = sphi 0, %s25
    %s45 = sphi 0, %s45
    %s47 = sphi 0, %s45
    %s48 = sphi 0, %s47
    %s62 = sphi 0, %s48
    %s68 = sphi 0, %s70
    %s71 = sphi 0, %s68
    %s72 = sphi 0, %s71
    %s88 = sphi 0, %s72
    %s94 = sphi 0, %s96
    %s97 = sphi 0, %s94
    %s98 = sphi 0, %s97
    %s114 = sphi 0, %s98
    %s120 = sphi 0, %s122
    %s123 = sphi 0, %s120
    %s124 = sphi 0, %s123
    %s140 = sphi 0, %s124
  $region4: #{_lambda_.23} parent=0 // loop_header_branch
    %14 = sbr.rel (%p12) target = $region8
  $region5: #{_lambda_.23} parent=0 // loop_body
    %s16 = ssub.s32 %s11, 1
    %s17 = ssub.s32 %s11, 2
    %s18 = sadd.s32 %s11, 1
    %s19 = ssub.s32 %s11, %s18
    %p20 = scmp.eq.s32.totalorder %s19, 0
    %s22 = sadd.s32 %s21, 1
    %s23 = scalar_select %p20, %s21, %s22
    %p26 = pneg %p20
    %p27 = scmp.eq.s32.totalorder %s11, 1
    %p28 = por %p26, %p27
    %p29 = scmp.ne.s32.totalorder %s21, %s24
    %p30 = scmp.eq.s32.totalorder %s11, 0
    %p31 = por %p29, %p30
    %p32 = scmp.ne.s32.totalorder %s21, %s24
    %p33 = scmp.eq.s32.totalorder %s16, 1
    %p34 = por %p32, %p33
    %p35 = scmp.ne.s32.totalorder %s24, %s25
    %p36 = scmp.eq.s32.totalorder %s16, 0
    %p37 = por %p35, %p36
    %p38 = scmp.ne.s32.totalorder %s24, %s25
    %p39 = scmp.eq.s32.totalorder %s17, 1
    %p40 = por %p38, %p39
    %p42 = scmp.ne.s32.totalorder %s25, %s41
    %p43 = scmp.eq.s32.totalorder %s17, 0
    %p44 = por %p42, %p43
    %s46 = sadd.s32 %s45, 1
    %p49 = scmp.eq.s32.totalorder %s11, 1
    %p50 = scmp.ne.s32.totalorder %s45, %s47
    %p51 = scmp.eq.s32.totalorder %s11, 0
    %p52 = por %p50, %p51
    %p53 = scmp.ne.s32.totalorder %s45, %s47
    %p54 = scmp.eq.s32.totalorder %s16, 1
    %p55 = por %p53, %p54
    %p56 = scmp.ne.s32.totalorder %s47, %s48
    %p57 = scmp.eq.s32.totalorder %s16, 0
    %p58 = por %p56, %p57
    %p59 = scmp.ne.s32.totalorder %s47, %s48
    %p60 = scmp.eq.s32.totalorder %s17, 1
    %p61 = por %p59, %p60
    %p63 = scmp.ne.s32.totalorder %s48, %s62
    %p64 = scmp.eq.s32.totalorder %s17, 0
    %p65 = por %p63, %p64
    %s66 = ssub.s32 %s11, %s18
    %p67 = scmp.eq.s32.totalorder %s66, 0
    %s69 = sadd.s32 %s68, 1
    %s70 = scalar_select %p67, %s68, %s69
    %p73 = pneg %p67
    %p74 = scmp.eq.s32.totalorder %s11, 1
    %p75 = por %p73, %p74
    %p76 = scmp.ne.s32.totalorder %s68, %s71
    %p77 = scmp.eq.s32.totalorder %s11, 0
    %p78 = por %p76, %p77
    %p79 = scmp.ne.s32.totalorder %s68, %s71
    %p80 = scmp.eq.s32.totalorder %s16, 1
    %p81 = por %p79, %p80
    %p82 = scmp.ne.s32.totalorder %s71, %s72
    %p83 = scmp.eq.s32.totalorder %s16, 0
    %p84 = por %p82, %p83
    %p85 = scmp.ne.s32.totalorder %s71, %s72
    %p86 = scmp.eq.s32.totalorder %s17, 1
    %p87 = por %p85, %p86
    %p89 = scmp.ne.s32.totalorder %s72, %s88
    %p90 = scmp.eq.s32.totalorder %s17, 0
    %p91 = por %p89, %p90
    %s92 = ssub.s32 %s11, %s18
    %p93 = scmp.eq.s32.totalorder %s92, 0
    %s95 = sadd.s32 %s94, 1
    %s96 = scalar_select %p93, %s94, %s95
    %p99 = pneg %p93
    %p100 = scmp.eq.s32.totalorder %s11, 1
    %p101 = por %p99, %p100
    %p102 = scmp.ne.s32.totalorder %s94, %s97
    %p103 = scmp.eq.s32.totalorder %s11, 0
    %p104 = por %p102, %p103
    %p105 = scmp.ne.s32.totalorder %s94, %s97
    %p106 = scmp.eq.s32.totalorder %s16, 1
    %p107 = por %p105, %p106
    %p108 = scmp.ne.s32.totalorder %s97, %s98
    %p109 = scmp.eq.s32.totalorder %s16, 0
    %p110 = por %p108, %p109
    %p111 = scmp.ne.s32.totalorder %s97, %s98
    %p112 = scmp.eq.s32.totalorder %s17, 1
    %p113 = por %p111, %p112
    %p115 = scmp.ne.s32.totalorder %s98, %s114
    %p116 = scmp.eq.s32.totalorder %s17, 0
    %p117 = por %p115, %p116
    %s118 = ssub.s32 %s11, %s18
    %p119 = scmp.eq.s32.totalorder %s118, 0
    %s121 = sadd.s32 %s120, 1
    %s122 = scalar_select %p119, %s120, %s121
    %p125 = pneg %p119
    %p126 = scmp.eq.s32.totalorder %s11, 1
    %p127 = por %p125, %p126
    %p128 = scmp.ne.s32.totalorder %s120, %s123
    %p129 = scmp.eq.s32.totalorder %s11, 0
    %p130 = por %p128, %p129
    %p131 = scmp.ne.s32.totalorder %s120, %s123
    %p132 = scmp.eq.s32.totalorder %s16, 1
    %p133 = por %p131, %p132
    %p134 = scmp.ne.s32.totalorder %s123, %s124
    %p135 = scmp.eq.s32.totalorder %s16, 0
    %p136 = por %p134, %p135
    %p137 = scmp.ne.s32.totalorder %s123, %s124
    %p138 = scmp.eq.s32.totalorder %s17, 1
    %p139 = por %p137, %p138
    %p141 = scmp.ne.s32.totalorder %s124, %s140
    %p142 = scmp.eq.s32.totalorder %s17, 0
    %p143 = por %p141, %p142
    %p144 = scmp.le.s32.totalorder 1, %s11
    %p145 = scmp.lt.s32.totalorder %s11, 3
    %p146 = pnand %p144, %p145
    %p147 = pneg %p146
    // Predicated region
    $region9: #{_lambda_.23} parent=5 // pred_check
      _
    $region10: #{_lambda_.23} parent=5 // pred_check_branch
      %149 = sbr.rel (%p146) target = $region12
    $region11: #{_lambda_.23} parent=5 // pred_region
      %s150 = ssub.s32 %s11, 1
      // Predicated region
      $region13: #{_lambda_.23} parent=11 // pred_check
        %p151 = pneg %p58
      $region14: #{_lambda_.23} parent=11 // pred_check_branch
        %153 = sbr.rel (%p151) target = $region16
      $region15: #{_lambda_.23} parent=11 // pred_region
        _
      $region16: #{_lambda_.23} parent=11 // pred_fallthru
        _
    $region12: #{_lambda_.23} parent=5 // pred_fallthru
      _
    %p154 = scmp.lt.s32.totalorder %s11, 2
    // Predicated region
    $region17: #{_lambda_.23} parent=5 // pred_check
      %p155 = pneg %p154
    $region18: #{_lambda_.23} parent=5 // pred_check_branch
      %157 = sbr.rel (%p155) target = $region20
    $region19: #{_lambda_.23} parent=5 // pred_region
      // Predicated region
      $region21: #{_lambda_.23} parent=19 // pred_check
        %p158 = pneg %p31
      $region22: #{_lambda_.23} parent=19 // pred_check_branch
        %160 = sbr.rel (%p158) target = $region24
      $region23: #{_lambda_.23} parent=19 // pred_region
        %s161 = smul.u32 5, %s11
        %p162 = scmp.lt.s32.totalorder %s161, 9
        %s163 = scalar_select %p162, %s161, 9
        %s164 = smul.addr %s163, 4
        %s165 = scalar_lea.vmem %s0, %s164
        %s166 = smul.u32 5, %s11
      $region24: #{_lambda_.23} parent=19 // pred_fallthru
        _
    $region20: #{_lambda_.23} parent=5 // pred_fallthru
      _
    %p167 = scmp.le.s32.totalorder 1, %s11
    %p168 = scmp.lt.s32.totalorder %s11, 3
    %p169 = pnand %p167, %p168
    %p170 = pneg %p169
    // Predicated region
    $region25: #{_lambda_.23} parent=5 // pred_check
      _
    $region26: #{_lambda_.23} parent=5 // pred_check_branch
      %172 = sbr.rel (%p169) target = $region28
    $region27: #{_lambda_.23} parent=5 // pred_region
      %s173 = ssub.s32 %s11, 1
      %s174 = smul.u32 5, %s16
      %p175 = scmp.lt.s32.totalorder %s174, 9
      %s176 = scalar_select %p175, %s174, 9
      %s177 = smul.addr %s176, 4
      %s178 = scalar_lea.vmem %s0, %s177
      %p179 = pneg %p37
      %p180 = pneg %p34
      %p181 = pneg %p58
      %p182 = pneg %p55
      %p183 = pneg %p84
      %p184 = pneg %p81
      %s185 = smul.u32 5, %s16
      %p186 = scmp.lt.s32.totalorder %s185, 9
      %s187 = scalar_select %p186, %s185, 9
      %s188 = smul.addr %s187, 4
      %s189 = scalar_lea.vmem %s2, %s188
      %p190 = pneg %p110
      %p191 = pneg %p107
      %p192 = scmp.lt.s32.totalorder %s16, 1
      %s193 = scalar_select %p192, %s16, 1
      %s194 = scalar_lea.vmem %s3, %s193
      %p195 = pneg %p136
      %p196 = pneg %p133
      %p197 = scmp.lt.s32.totalorder %s16, 1
      %s198 = scalar_select %p197, %s16, 1
      %s199 = scalar_lea.vmem %s4, %s198
      %s200 = smul.u32 5, %s16
      %p201 = scmp.lt.s32.totalorder %s200, 9
      %s202 = scalar_select %p201, %s200, 9
      %s203 = smul.addr %s202, 4
      %s204 = scalar_lea.vmem %s0, %s203
      %s205 = smul.u32 5, %s16
      %s206 = smul.u32 5, %s16
      %p207 = scmp.lt.s32.totalorder %s206, 9
      %s208 = scalar_select %p207, %s206, 9
      %s209 = smul.addr %s208, 4
      %s210 = scalar_lea.vmem %s2, %s209
      %s211 = smul.u32 5, %s16
      %p212 = scmp.lt.s32.totalorder %s16, 1
      %s213 = scalar_select %p212, %s16, 1
      %s214 = scalar_lea.vmem %s3, %s213
      %p215 = scmp.lt.s32.totalorder %s16, 1
      %s216 = scalar_select %p215, %s16, 1
      %s217 = scalar_lea.vmem %s4, %s216
      %v219 = vld [vmem:[%s204] sm:$0xf]
      %v220 = vld [vmem:[%s204 + $0x4] sm:$0xf]
      %v221 = vld [vmem:[%s204 + $0x8] sm:$0xf]
      %v222 = vld [vmem:[%s204 + $0xc] sm:$0xf]
      %v223 = vld [vmem:[%s204 + $0x10] sm:$0xf]
      %v224 = vld [vmem:[%s1] sm:$0xf]
      %v225 = vld [vmem:[%s1 + $0x4] sm:$0xf]
      %v226 = vld [vmem:[%s1 + $0x8] sm:$0xf]
      %v227 = vld [vmem:[%s1 + $0xc] sm:$0xf]
      %v228 = vld [vmem:[%s1 + $0x10] sm:$0xf]
      %v229 = vld [vmem:[%s1 + $0x14] sm:$0xf]
      %v230 = vld [vmem:[%s1 + $0x18] sm:$0xf]
      %v231 = vld [vmem:[%s1 + $0x1c] sm:$0xf]
      %v232 = vld [vmem:[%s1 + $0x20] sm:$0xf]
      %v233 = vld [vmem:[%s1 + $0x24] sm:$0xf]
      %v234 = vld [vmem:[%s1 + $0x28] sm:$0xf]
      %v235 = vld [vmem:[%s1 + $0x2c] sm:$0xf]
      %v236 = vld [vmem:[%s1 + $0x30] sm:$0xf]
      %v237 = vld [vmem:[%s1 + $0x34] sm:$0xf]
      %v238 = vld [vmem:[%s1 + $0x38] sm:$0xf]
      %v239 = vld [vmem:[%s1 + $0x3c] sm:$0xf]
      %v245 = vunpack.c.l.b16 %v219
      %v246 = vunpack.c.l.b16 %v220
      %v247 = vunpack.c.l.b16 %v221
      %v248 = vunpack.c.l.b16 %v222
      %v249 = vunpack.c.l.b16 %v223
      %v250 = vpack.c.b16 %v246, %v245
      %v251 = vpack.c.b16 %v248, %v247
      %v252 = vpack.c.b16 %v249, %v249
      %v272 = vunpack.c.l.b16 %v224
      %v273 = vunpack.c.l.b16 %v225
      %v274 = vunpack.c.l.b16 %v226
      %v275 = vunpack.c.l.b16 %v227
      %v276 = vunpack.c.l.b16 %v228
      %v277 = vunpack.c.l.b16 %v229
      %v278 = vunpack.c.l.b16 %v230
      %v279 = vunpack.c.l.b16 %v231
      %v280 = vunpack.c.l.b16 %v232
      %v281 = vunpack.c.l.b16 %v233
      %v282 = vunpack.c.l.b16 %v234
      %v283 = vunpack.c.l.b16 %v235
      %v284 = vunpack.c.l.b16 %v236
      %v285 = vunpack.c.l.b16 %v237
      %v286 = vunpack.c.l.b16 %v238
      %v287 = vunpack.c.l.b16 %v239
      %v288 = vpack.c.b16 %v273, %v272
      %v289 = vpack.c.b16 %v275, %v274
      %v290 = vpack.c.b16 %v277, %v276
      %v291 = vpack.c.b16 %v279, %v278
      %v292 = vpack.c.b16 %v281, %v280
      %v293 = vpack.c.b16 %v283, %v282
      %v294 = vpack.c.b16 %v285, %v284
      %v295 = vpack.c.b16 %v287, %v286
      %304 = vmatprep.subr.bf16.mxu0 0
      %305 = vmatpush1.bf16.msra.mxu0 %v288
      %306 = vmatprep.subr.bf16.mxu0 0
      %307 = vmatpush1.bf16.msra.mxu0 %v289
      %308 = vmatprep.subr.bf16.mxu0 0
      %309 = vmatpush1.bf16.msra.mxu0 %v290
      %310 = vmatprep.subr.bf16.mxu0 0
      %311 = vmatpush1.bf16.msra.mxu0 %v291
      %312 = vmatprep.subr.bf16.mxu0 0
      %313 = vmatpush1.bf16.msra.mxu0 %v292
      %314 = vmatprep.subr.bf16.mxu0 0
      %315 = vmatpush1.bf16.msra.mxu0 %v293
      %316 = vmatprep.subr.bf16.mxu0 0
      %317 = vmatpush1.bf16.msra.mxu0 %v294
      %318 = vmatprep.subr.bf16.mxu0 0
      %319 = vmatpush1.bf16.msra.mxu0 %v295
      %320 = vmatprep.subr.bf16.mxu0 0
      %321 = vmatpush1.bf16.msra.mxu0 0
      %322 = vmatprep.subr.bf16.mxu0 0
      %323 = vmatpush1.bf16.msra.mxu0 0
      %324 = vmatprep.subr.bf16.mxu0 0
      %325 = vmatpush1.bf16.msra.mxu0 0
      %326 = vmatprep.subr.bf16.mxu0 0
      %327 = vmatpush1.bf16.msra.mxu0 0
      %328 = vmatprep.subr.bf16.mxu0 0
      %329 = vmatpush1.bf16.msra.mxu0 0
      %330 = vmatprep.subr.bf16.mxu0 0
      %331 = vmatpush1.bf16.msra.mxu0 0
      %332 = vmatprep.subr.bf16.mxu0 0
      %333 = vmatpush1.bf16.msra.mxu0 0
      %334 = vmatprep.subr.bf16.mxu0 0
      %335 = vmatpush1.bf16.msra.mxu0 0
      %336 = vmatprep.mubr.bf16.mxu0 0
      %337 = vmatmul.mubr.bf16.gmra.mrb[0].mxu0 %v250
      %v338 = vpop.f32.mrb[0].mxu0
      %v339 = vadd.f32 0.0, %v338
      %v340 = vpop.f32.mrb[0].mxu0
      %v341 = vpop.f32.mrb[0].mxu0
      %v342 = vadd.f32 0.0, %v341
      %v343 = vpop.f32.mrb[0].mxu0
      %344 = vmatprep.mubr.bf16.mxu0 0
      %345 = vmatmul.mubr.bf16.gmra.mrb[0].mxu0 %v251
      %v346 = vpop.f32.mrb[0].mxu0
      %v347 = vadd.f32 0.0, %v346
      %v348 = vpop.f32.mrb[0].mxu0
      %v349 = vpop.f32.mrb[0].mxu0
      %v350 = vadd.f32 0.0, %v349
      %v351 = vpop.f32.mrb[0].mxu0
      %352 = vmatprep.mubr.bf16.mxu0 0
      %353 = vmatmul.mubr.bf16.gmra.mrb[0].mxu0 %v252
      %v354 = vpop.f32.mrb[0].mxu0
      %v355 = vadd.f32 0.0, %v354
      %v356 = vpop.f32.mrb[0].mxu0
      %v357 = vpop.f32.mrb[0].mxu0
      %v358 = vpop.f32.mrb[0].mxu0
      %359 = vdwg.mxu0
      %v360 = vpack.c.bf16 %v342, %v339
      %v361 = vpack.c.bf16 %v350, %v347
      %v362 = vpack.c.bf16 %v355, %v355
      %v366 = vunpack.c.l.b16 %v360
      %v367 = vunpack.c.h.b16 %v360
      %v368 = vunpack.c.l.b16 %v361
      %v369 = vunpack.c.h.b16 %v361
      %v370 = vunpack.c.l.b16 %v362
      %v371 = vpack.c.b16 %v366, %v366
      %v372 = vpack.c.b16 %v367, %v367
      %v373 = vpack.c.b16 %v368, %v368
      %v374 = vpack.c.b16 %v369, %v369
      %v375 = vpack.c.b16 %v370, %v370
      %381 = vst [vmem:[%s210] sm:$0xf] %v371
      %382 = vst [vmem:[%s210 + $0x4] sm:$0xf] %v372
      %383 = vst [vmem:[%s210 + $0x8] sm:$0xf] %v373
      %384 = vst [vmem:[%s210 + $0xc] sm:$0xf] %v374
      %385 = vst [vmem:[%s210 + $0x10] sm:$0xf] %v375
      %v386 = vadd.f32 %v339, %v342
      %v387 = vadd.f32 %v386, %v347
      %v388 = vadd.f32 %v387, %v350
      %v389 = vadd.f32 %v388, %v355
      %v390 = vrot.slane %v389, 4
      %v391 = vadd.f32 %v389, %v390
      %v392 = vrot.slane %v391, 2
      %v393 = vadd.f32 %v391, %v392
      %v394 = vrot.slane %v393, 1
      %v395 = vadd.f32 %v393, %v394
      %396 = vst [vmem:[%s214] sm:$0x1] %v395
      %v397 = vmul.f32 %v339, %v339
      %v398 = vmul.f32 %v342, %v342
      %v399 = vmul.f32 %v347, %v347
      %v400 = vmul.f32 %v350, %v350
      %v401 = vmul.f32 %v355, %v355
      %v402 = vadd.f32 %v397, %v398
      %v403 = vadd.f32 %v402, %v399
      %v404 = vadd.f32 %v403, %v400
      %v405 = vadd.f32 %v404, %v401
      %v406 = vrot.slane %v405, 4
      %v407 = vadd.f32 %v405, %v406
      %v408 = vrot.slane %v407, 2
      %v409 = vadd.f32 %v407, %v408
      %v410 = vrot.slane %v409, 1
      %v411 = vadd.f32 %v409, %v410
      %412 = vst [vmem:[%s217] sm:$0x1] %v411
      %s413 = smul.u32 5, %s16
      %p414 = scmp.lt.s32.totalorder %s413, 9
      %s415 = scalar_select %p414, %s413, 9
      %s416 = smul.addr %s415, 4
      %s417 = scalar_lea.vmem %s2, %s416
      %p418 = scmp.lt.s32.totalorder %s16, 1
      %s419 = scalar_select %p418, %s16, 1
      %s420 = scalar_lea.vmem %s3, %s419
      %p421 = scmp.lt.s32.totalorder %s16, 1
      %s422 = scalar_select %p421, %s16, 1
      %s423 = scalar_lea.vmem %s4, %s422
      // Predicated region
      $region29: #{_lambda_.23} parent=27 // pred_check
        %p424 = pneg %p81
      $region30: #{_lambda_.23} parent=27 // pred_check_branch
        %426 = sbr.rel (%p424) target = $region32
      $region31: #{_lambda_.23} parent=27 // pred_region
        %s427 = smul.u32 5, %s16
      $region32: #{_lambda_.23} parent=27 // pred_fallthru
        _
      // Predicated region
      $region33: #{_lambda_.23} parent=27 // pred_check
        %p428 = pneg %p107
      $region34: #{_lambda_.23} parent=27 // pred_check_branch
        %430 = sbr.rel (%p428) target = $region36
      $region35: #{_lambda_.23} parent=27 // pred_region
        _
      $region36: #{_lambda_.23} parent=27 // pred_fallthru
        _
      // Predicated region
      $region37: #{_lambda_.23} parent=27 // pred_check
        %p431 = pneg %p133
      $region38: #{_lambda_.23} parent=27 // pred_check_branch
        %433 = sbr.rel (%p431) target = $region40
      $region39: #{_lambda_.23} parent=27 // pred_region
        _
      $region40: #{_lambda_.23} parent=27 // pred_fallthru
        _
    $region28: #{_lambda_.23} parent=5 // pred_fallthru
      _
    %p434 = scmp.le.s32.totalorder 2, %s11
    // Predicated region
    $region41: #{_lambda_.23} parent=5 // pred_check
      %p435 = pneg %p434
    $region42: #{_lambda_.23} parent=5 // pred_check_branch
      %437 = sbr.rel (%p435) target = $region44
    $region43: #{_lambda_.23} parent=5 // pred_region
      %s438 = ssub.s32 %s11, 2
      // Predicated region
      $region45: #{_lambda_.23} parent=43 // pred_check
        %p439 = pneg %p87
      $region46: #{_lambda_.23} parent=43 // pred_check_branch
        %441 = sbr.rel (%p439) target = $region48
      $region47: #{_lambda_.23} parent=43 // pred_region
        %s442 = smul.u32 5, %s17
        %p443 = scmp.lt.s32.totalorder %s442, 9
        %s444 = scalar_select %p443, %s442, 9
        %s445 = smul.addr %s444, 4
        %s446 = scalar_lea.vmem %s2, %s445
      $region48: #{_lambda_.23} parent=43 // pred_fallthru
        _
      // Predicated region
      $region49: #{_lambda_.23} parent=43 // pred_check
        %p447 = pneg %p113
      $region50: #{_lambda_.23} parent=43 // pred_check_branch
        %449 = sbr.rel (%p447) target = $region52
      $region51: #{_lambda_.23} parent=43 // pred_region
        %p450 = scmp.lt.s32.totalorder %s17, 1
        %s451 = scalar_select %p450, %s17, 1
        %s452 = scalar_lea.vmem %s3, %s451
      $region52: #{_lambda_.23} parent=43 // pred_fallthru
        _
      // Predicated region
      $region53: #{_lambda_.23} parent=43 // pred_check
        %p453 = pneg %p139
      $region54: #{_lambda_.23} parent=43 // pred_check_branch
        %455 = sbr.rel (%p453) target = $region56
      $region55: #{_lambda_.23} parent=43 // pred_region
        %p456 = scmp.lt.s32.totalorder %s17, 1
        %s457 = scalar_select %p456, %s17, 1
        %s458 = scalar_lea.vmem %s4, %s457
      $region56: #{_lambda_.23} parent=43 // pred_fallthru
        _
    $region44: #{_lambda_.23} parent=5 // pred_fallthru
      _
  $region6: #{_lambda_.23} parent=0 // loop_footer
    %s15 = sadd.s32 1, %s11
  $region7: #{_lambda_.23} parent=0 // loop_footer_branch
    %10 = sbr.rel target = $region3
  $region8: #{_lambda_.23} parent=0 // loop_exit
    _

// kernel: _lambda_.26
$region0: #{_lambda_.26}
  #allocation0 [shape = 'u32[]', space=smem, size = 0x4, offset = 0x4, fixed_abs, tag = 'smem constant byte address 0x4 - core index']
  #allocation1 [shape = 'u32[144,128]{1,0:T(1,128)}', space=vmem, size = 0x12000, scoped, tag = 'internal scratch']
  %s0 = inlined_call_operand.vmem [shape: bf16[96,128], index: 0, kind: input, shape index: {}]
  %s1 = inlined_call_operand.vmem [shape: f32[1,128], index: 1, kind: input, shape index: {}]
  %s2 = inlined_call_operand.vmem [shape: f32[1,128], index: 2, kind: input, shape index: {}]
  %s3 = inlined_call_operand.vmem [shape: bf16[96,128], index: 3, kind: output, shape index: {}]
  %s4 = sld [smem:[#allocation0]]
  $region45: #{_lambda_.26} parent=0
    _
  %s6 = ssub.s32 1, %s4
  %s7 = scalar_select 0, %s6, %s4
  loop: start=0, step=1, limit=4
  $region2: #{_lambda_.26} parent=0 // loop_pre_header
    _
  $region3: #{_lambda_.26} parent=0 // loop_header
    %s9 = sphi 0, %s13
    %p10 = scmp.ge.s32.totalorder %s9, 4
    %s19 = sphi 0, %s21
    %s22 = sphi 0, %s19
    %s23 = sphi 0, %s22
    %s39 = sphi 0, %s23
    %s43 = sphi 0, %s43
    %s45 = sphi 0, %s43
    %s46 = sphi 0, %s45
    %s60 = sphi 0, %s46
    %s64 = sphi 0, %s64
    %s66 = sphi 0, %s64
    %s67 = sphi 0, %s66
    %s81 = sphi 0, %s67
    %s87 = sphi 0, %s89
    %s90 = sphi 0, %s87
    %s91 = sphi 0, %s90
    %s107 = sphi 0, %s91
  $region4: #{_lambda_.26} parent=0 // loop_header_branch
    %12 = sbr.rel (%p10) target = $region8
  $region5: #{_lambda_.26} parent=0 // loop_body
    %s14 = ssub.s32 %s9, 1
    %s15 = ssub.s32 %s9, 2
    %s16 = sadd.s32 %s9, 1
    %s17 = ssub.s32 %s9, %s16
    %p18 = scmp.eq.s32.totalorder %s17, 0
    %s20 = sadd.s32 %s19, 1
    %s21 = scalar_select %p18, %s19, %s20
    %p24 = pneg %p18
    %p25 = scmp.eq.s32.totalorder %s9, 1
    %p26 = por %p24, %p25
    %p27 = scmp.ne.s32.totalorder %s19, %s22
    %p28 = scmp.eq.s32.totalorder %s9, 0
    %p29 = por %p27, %p28
    %p30 = scmp.ne.s32.totalorder %s19, %s22
    %p31 = scmp.eq.s32.totalorder %s14, 1
    %p32 = por %p30, %p31
    %p33 = scmp.ne.s32.totalorder %s22, %s23
    %p34 = scmp.eq.s32.totalorder %s14, 0
    %p35 = por %p33, %p34
    %p36 = scmp.ne.s32.totalorder %s22, %s23
    %p37 = scmp.eq.s32.totalorder %s15, 1
    %p38 = por %p36, %p37
    %p40 = scmp.ne.s32.totalorder %s23, %s39
    %p41 = scmp.eq.s32.totalorder %s15, 0
    %p42 = por %p40, %p41
    %s44 = sadd.s32 %s43, 1
    %p47 = scmp.eq.s32.totalorder %s9, 1
    %p48 = scmp.ne.s32.totalorder %s43, %s45
    %p49 = scmp.eq.s32.totalorder %s9, 0
    %p50 = por %p48, %p49
    %p51 = scmp.ne.s32.totalorder %s43, %s45
    %p52 = scmp.eq.s32.totalorder %s14, 1
    %p53 = por %p51, %p52
    %p54 = scmp.ne.s32.totalorder %s45, %s46
    %p55 = scmp.eq.s32.totalorder %s14, 0
    %p56 = por %p54, %p55
    %p57 = scmp.ne.s32.totalorder %s45, %s46
    %p58 = scmp.eq.s32.totalorder %s15, 1
    %p59 = por %p57, %p58
    %p61 = scmp.ne.s32.totalorder %s46, %s60
    %p62 = scmp.eq.s32.totalorder %s15, 0
    %p63 = por %p61, %p62
    %s65 = sadd.s32 %s64, 1
    %p68 = scmp.eq.s32.totalorder %s9, 1
    %p69 = scmp.ne.s32.totalorder %s64, %s66
    %p70 = scmp.eq.s32.totalorder %s9, 0
    %p71 = por %p69, %p70
    %p72 = scmp.ne.s32.totalorder %s64, %s66
    %p73 = scmp.eq.s32.totalorder %s14, 1
    %p74 = por %p72, %p73
    %p75 = scmp.ne.s32.totalorder %s66, %s67
    %p76 = scmp.eq.s32.totalorder %s14, 0
    %p77 = por %p75, %p76
    %p78 = scmp.ne.s32.totalorder %s66, %s67
    %p79 = scmp.eq.s32.totalorder %s15, 1
    %p80 = por %p78, %p79
    %p82 = scmp.ne.s32.totalorder %s67, %s81
    %p83 = scmp.eq.s32.totalorder %s15, 0
    %p84 = por %p82, %p83
    %s85 = ssub.s32 %s9, %s16
    %p86 = scmp.eq.s32.totalorder %s85, 0
    %s88 = sadd.s32 %s87, 1
    %s89 = scalar_select %p86, %s87, %s88
    %p92 = pneg %p86
    %p93 = scmp.eq.s32.totalorder %s9, 1
    %p94 = por %p92, %p93
    %p95 = scmp.ne.s32.totalorder %s87, %s90
    %p96 = scmp.eq.s32.totalorder %s9, 0
    %p97 = por %p95, %p96
    %p98 = scmp.ne.s32.totalorder %s87, %s90
    %p99 = scmp.eq.s32.totalorder %s14, 1
    %p100 = por %p98, %p99
    %p101 = scmp.ne.s32.totalorder %s90, %s91
    %p102 = scmp.eq.s32.totalorder %s14, 0
    %p103 = por %p101, %p102
    %p104 = scmp.ne.s32.totalorder %s90, %s91
    %p105 = scmp.eq.s32.totalorder %s15, 1
    %p106 = por %p104, %p105
    %p108 = scmp.ne.s32.totalorder %s91, %s107
    %p109 = scmp.eq.s32.totalorder %s15, 0
    %p110 = por %p108, %p109
    %p111 = scmp.le.s32.totalorder 1, %s9
    %p112 = scmp.lt.s32.totalorder %s9, 3
    %p113 = pnand %p111, %p112
    %p114 = pneg %p113
    // Predicated region
    $region9: #{_lambda_.26} parent=5 // pred_check
      _
    $region10: #{_lambda_.26} parent=5 // pred_check_branch
      %116 = sbr.rel (%p113) target = $region12
    $region11: #{_lambda_.26} parent=5 // pred_region
      %s117 = ssub.s32 %s9, 1
      // Predicated region
      $region13: #{_lambda_.26} parent=11 // pred_check
        %p118 = pneg %p56
      $region14: #{_lambda_.26} parent=11 // pred_check_branch
        %120 = sbr.rel (%p118) target = $region16
      $region15: #{_lambda_.26} parent=11 // pred_region
        _
      $region16: #{_lambda_.26} parent=11 // pred_fallthru
        _
      // Predicated region
      $region17: #{_lambda_.26} parent=11 // pred_check
        %p121 = pneg %p77
      $region18: #{_lambda_.26} parent=11 // pred_check_branch
        %123 = sbr.rel (%p121) target = $region20
      $region19: #{_lambda_.26} parent=11 // pred_region
        _
      $region20: #{_lambda_.26} parent=11 // pred_fallthru
        _
    $region12: #{_lambda_.26} parent=5 // pred_fallthru
      _
    %p124 = scmp.lt.s32.totalorder %s9, 2
    // Predicated region
    $region21: #{_lambda_.26} parent=5 // pred_check
      %p125 = pneg %p124
    $region22: #{_lambda_.26} parent=5 // pred_check_branch
      %127 = sbr.rel (%p125) target = $region24
    $region23: #{_lambda_.26} parent=5 // pred_region
      // Predicated region
      $region25: #{_lambda_.26} parent=23 // pred_check
        %p128 = pneg %p29
      $region26: #{_lambda_.26} parent=23 // pred_check_branch
        %130 = sbr.rel (%p128) target = $region28
      $region27: #{_lambda_.26} parent=23 // pred_region
        %s131 = smul.u32 6, %s9
        %p132 = scmp.lt.s32.totalorder %s131, 11
        %s133 = scalar_select %p132, %s131, 11
        %s134 = smul.addr %s133, 4
        %s135 = scalar_lea.vmem %s0, %s134
        %s136 = smul.u32 6, %s9
      $region28: #{_lambda_.26} parent=23 // pred_fallthru
        _
    $region24: #{_lambda_.26} parent=5 // pred_fallthru
      _
    %p137 = scmp.le.s32.totalorder 1, %s9
    %p138 = scmp.lt.s32.totalorder %s9, 3
    %p139 = pnand %p137, %p138
    %p140 = pneg %p139
    // Predicated region
    $region29: #{_lambda_.26} parent=5 // pred_check
      _
    $region30: #{_lambda_.26} parent=5 // pred_check_branch
      %142 = sbr.rel (%p139) target = $region32
    $region31: #{_lambda_.26} parent=5 // pred_region
      %s143 = ssub.s32 %s9, 1
      %s144 = smul.u32 6, %s14
      %p145 = scmp.lt.s32.totalorder %s144, 11
      %s146 = scalar_select %p145, %s144, 11
      %s147 = smul.addr %s146, 4
      %s148 = scalar_lea.vmem %s0, %s147
      %p149 = pneg %p35
      %p150 = pneg %p32
      %p151 = pneg %p56
      %p152 = pneg %p53
      %p153 = pneg %p77
      %p154 = pneg %p74
      %p155 = pneg %p103
      %p156 = pneg %p100
      %s157 = smul.u32 6, %s14
      %p158 = scmp.lt.s32.totalorder %s157, 11
      %s159 = scalar_select %p158, %s157, 11
      %s160 = smul.addr %s159, 4
      %s161 = scalar_lea.vmem %s3, %s160
      %s162 = smul.u32 6, %s14
      %p163 = scmp.lt.s32.totalorder %s162, 11
      %s164 = scalar_select %p163, %s162, 11
      %s165 = smul.addr %s164, 4
      %s166 = scalar_lea.vmem %s0, %s165
      %s167 = smul.u32 6, %s14
      %s168 = smul.u32 6, %s14
      %p169 = scmp.lt.s32.totalorder %s168, 11
      %s170 = scalar_select %p169, %s168, 11
      %s171 = smul.addr %s170, 4
      %s172 = scalar_lea.vmem %s3, %s171
      %s173 = smul.u32 6, %s14
      %v174 = vld [vmem:[%s166] sm:$0xf]
      %v175 = vld [vmem:[%s166 + $0x4] sm:$0xf]
      %v176 = vld [vmem:[%s166 + $0x8] sm:$0xf]
      %v177 = vld [vmem:[%s166 + $0xc] sm:$0xf]
      %v178 = vld [vmem:[%s166 + $0x10] sm:$0xf]
      %v179 = vld [vmem:[%s166 + $0x14] sm:$0xf]
      %v180 = vunpack.c.l.bf16 %v174
      %v181 = vunpack.c.l.bf16 %v175
      %v182 = vunpack.c.l.bf16 %v176
      %v183 = vunpack.c.l.bf16 %v177
      %v184 = vunpack.c.l.bf16 %v178
      %v185 = vunpack.c.l.bf16 %v179
      %v186 = vld [vmem:[%s1] sm:$0x1]
      %v188 = vlaneseq
      %v189 = vshrl.u32 %v188, 7
      %v190 = vsub.s32 0, %v189
      %v191 = vrot.slane %v186, %v190
      %v193 = vmul.f32 %v180, %v191
      %v194 = vmul.f32 %v181, %v191
      %v195 = vmul.f32 %v182, %v191
      %v196 = vmul.f32 %v183, %v191
      %v197 = vmul.f32 %v184, %v191
      %v198 = vmul.f32 %v185, %v191
      %v199 = vld [vmem:[%s2] sm:$0x1]
      %v201 = vlaneseq
      %v202 = vshrl.u32 %v201, 7
      %v203 = vsub.s32 0, %v202
      %v204 = vrot.slane %v199, %v203
      %v206 = vadd.f32 %v193, %v204
      %v207 = vadd.f32 %v194, %v204
      %v208 = vadd.f32 %v195, %v204
      %v209 = vadd.f32 %v196, %v204
      %v210 = vadd.f32 %v197, %v204
      %v211 = vadd.f32 %v198, %v204
      %v212 = vmax.f32 %v206, 0.0
      %v213 = vmax.f32 %v207, 0.0
      %v214 = vmax.f32 %v208, 0.0
      %v215 = vmax.f32 %v209, 0.0
      %v216 = vmax.f32 %v210, 0.0
      %v217 = vmax.f32 %v211, 0.0
      %v218 = vpack.c.bf16 %v213, %v212
      %v219 = vpack.c.bf16 %v215, %v214
      %v220 = vpack.c.bf16 %v217, %v216
      %v224 = vunpack.c.l.b16 %v218
      %v225 = vunpack.c.h.b16 %v218
      %v226 = vunpack.c.l.b16 %v219
      %v227 = vunpack.c.h.b16 %v219
      %v228 = vunpack.c.l.b16 %v220
      %v229 = vunpack.c.h.b16 %v220
      %v230 = vpack.c.b16 %v224, %v224
      %v231 = vpack.c.b16 %v225, %v225
      %v232 = vpack.c.b16 %v226, %v226
      %v233 = vpack.c.b16 %v227, %v227
      %v234 = vpack.c.b16 %v228, %v228
      %v235 = vpack.c.b16 %v229, %v229
      %242 = vst [vmem:[%s172] sm:$0xf] %v230
      %243 = vst [vmem:[%s172 + $0x4] sm:$0xf] %v231
      %244 = vst [vmem:[%s172 + $0x8] sm:$0xf] %v232
      %245 = vst [vmem:[%s172 + $0xc] sm:$0xf] %v233
      %246 = vst [vmem:[%s172 + $0x10] sm:$0xf] %v234
      %247 = vst [vmem:[%s172 + $0x14] sm:$0xf] %v235
      %s248 = smul.u32 6, %s14
      %p249 = scmp.lt.s32.totalorder %s248, 11
      %s250 = scalar_select %p249, %s248, 11
      %s251 = smul.addr %s250, 4
      %s252 = scalar_lea.vmem %s3, %s251
      // Predicated region
      $region33: #{_lambda_.26} parent=31 // pred_check
        %p253 = pneg %p100
      $region34: #{_lambda_.26} parent=31 // pred_check_branch
        %255 = sbr.rel (%p253) target = $region36
      $region35: #{_lambda_.26} parent=31 // pred_region
        %s256 = smul.u32 6, %s14
      $region36: #{_lambda_.26} parent=31 // pred_fallthru
        _
    $region32: #{_lambda_.26} parent=5 // pred_fallthru
      _
    %p257 = scmp.le.s32.totalorder 2, %s9
    // Predicated region
    $region37: #{_lambda_.26} parent=5 // pred_check
      %p258 = pneg %p257
    $region38: #{_lambda_.26} parent=5 // pred_check_branch
      %260 = sbr.rel (%p258) target = $region40
    $region39: #{_lambda_.26} parent=5 // pred_region
      %s261 = ssub.s32 %s9, 2
      // Predicated region
      $region41: #{_lambda_.26} parent=39 // pred_check
        %p262 = pneg %p106
      $region42: #{_lambda_.26} parent=39 // pred_check_branch
        %264 = sbr.rel (%p262) target = $region44
      $region43: #{_lambda_.26} parent=39 // pred_region
        %s265 = smul.u32 6, %s15
        %p266 = scmp.lt.s32.totalorder %s265, 11
        %s267 = scalar_select %p266, %s265, 11
        %s268 = smul.addr %s267, 4
        %s269 = scalar_lea.vmem %s3, %s268
      $region44: #{_lambda_.26} parent=39 // pred_fallthru
        _
    $region40: #{_lambda_.26} parent=5 // pred_fallthru
      _
  $region6: #{_lambda_.26} parent=0 // loop_footer
    %s13 = sadd.s32 1, %s9
  $region7: #{_lambda_.26} parent=0 // loop_footer_branch
    %8 = sbr.rel target = $region3
  $region8: #{_lambda_.26} parent=0 // loop_exit
    _

// kernel: _lambda_.24
$region0: #{_lambda_.24}
  #allocation0 [shape = 'u32[]', space=smem, size = 0x4, offset = 0x4, fixed_abs, tag = 'smem constant byte address 0x4 - core index']
  #allocation1 [shape = 'u32[144,128]{1,0:T(1,128)}', space=vmem, size = 0x12000, scoped, tag = 'internal scratch']
  %s0 = inlined_call_operand.vmem [shape: bf16[112,128], index: 0, kind: input, shape index: {}]
  %s1 = inlined_call_operand.vmem [shape: f32[1,128], index: 1, kind: input, shape index: {}]
  %s2 = inlined_call_operand.vmem [shape: f32[1,128], index: 2, kind: input, shape index: {}]
  %s3 = inlined_call_operand.vmem [shape: bf16[112,128], index: 3, kind: output, shape index: {}]
  %s4 = sld [smem:[#allocation0]]
  $region45: #{_lambda_.24} parent=0
    _
  %s6 = ssub.s32 1, %s4
  %s7 = scalar_select 0, %s6, %s4
  loop: start=0, step=1, limit=4
  $region2: #{_lambda_.24} parent=0 // loop_pre_header
    _
  $region3: #{_lambda_.24} parent=0 // loop_header
    %s9 = sphi 0, %s13
    %p10 = scmp.ge.s32.totalorder %s9, 4
    %s19 = sphi 0, %s21
    %s22 = sphi 0, %s19
    %s23 = sphi 0, %s22
    %s39 = sphi 0, %s23
    %s43 = sphi 0, %s43
    %s45 = sphi 0, %s43
    %s46 = sphi 0, %s45
    %s60 = sphi 0, %s46
    %s64 = sphi 0, %s64
    %s66 = sphi 0, %s64
    %s67 = sphi 0, %s66
    %s81 = sphi 0, %s67
    %s87 = sphi 0, %s89
    %s90 = sphi 0, %s87
    %s91 = sphi 0, %s90
    %s107 = sphi 0, %s91
  $region4: #{_lambda_.24} parent=0 // loop_header_branch
    %12 = sbr.rel (%p10) target = $region8
  $region5: #{_lambda_.24} parent=0 // loop_body
    %s14 = ssub.s32 %s9, 1
    %s15 = ssub.s32 %s9, 2
    %s16 = sadd.s32 %s9, 1
    %s17 = ssub.s32 %s9, %s16
    %p18 = scmp.eq.s32.totalorder %s17, 0
    %s20 = sadd.s32 %s19, 1
    %s21 = scalar_select %p18, %s19, %s20
    %p24 = pneg %p18
    %p25 = scmp.eq.s32.totalorder %s9, 1
    %p26 = por %p24, %p25
    %p27 = scmp.ne.s32.totalorder %s19, %s22
    %p28 = scmp.eq.s32.totalorder %s9, 0
    %p29 = por %p27, %p28
    %p30 = scmp.ne.s32.totalorder %s19, %s22
    %p31 = scmp.eq.s32.totalorder %s14, 1
    %p32 = por %p30, %p31
    %p33 = scmp.ne.s32.totalorder %s22, %s23
    %p34 = scmp.eq.s32.totalorder %s14, 0
    %p35 = por %p33, %p34
    %p36 = scmp.ne.s32.totalorder %s22, %s23
    %p37 = scmp.eq.s32.totalorder %s15, 1
    %p38 = por %p36, %p37
    %p40 = scmp.ne.s32.totalorder %s23, %s39
    %p41 = scmp.eq.s32.totalorder %s15, 0
    %p42 = por %p40, %p41
    %s44 = sadd.s32 %s43, 1
    %p47 = scmp.eq.s32.totalorder %s9, 1
    %p48 = scmp.ne.s32.totalorder %s43, %s45
    %p49 = scmp.eq.s32.totalorder %s9, 0
    %p50 = por %p48, %p49
    %p51 = scmp.ne.s32.totalorder %s43, %s45
    %p52 = scmp.eq.s32.totalorder %s14, 1
    %p53 = por %p51, %p52
    %p54 = scmp.ne.s32.totalorder %s45, %s46
    %p55 = scmp.eq.s32.totalorder %s14, 0
    %p56 = por %p54, %p55
    %p57 = scmp.ne.s32.totalorder %s45, %s46
    %p58 = scmp.eq.s32.totalorder %s15, 1
    %p59 = por %p57, %p58
    %p61 = scmp.ne.s32.totalorder %s46, %s60
    %p62 = scmp.eq.s32.totalorder %s15, 0
    %p63 = por %p61, %p62
    %s65 = sadd.s32 %s64, 1
    %p68 = scmp.eq.s32.totalorder %s9, 1
    %p69 = scmp.ne.s32.totalorder %s64, %s66
    %p70 = scmp.eq.s32.totalorder %s9, 0
    %p71 = por %p69, %p70
    %p72 = scmp.ne.s32.totalorder %s64, %s66
    %p73 = scmp.eq.s32.totalorder %s14, 1
    %p74 = por %p72, %p73
    %p75 = scmp.ne.s32.totalorder %s66, %s67
    %p76 = scmp.eq.s32.totalorder %s14, 0
    %p77 = por %p75, %p76
    %p78 = scmp.ne.s32.totalorder %s66, %s67
    %p79 = scmp.eq.s32.totalorder %s15, 1
    %p80 = por %p78, %p79
    %p82 = scmp.ne.s32.totalorder %s67, %s81
    %p83 = scmp.eq.s32.totalorder %s15, 0
    %p84 = por %p82, %p83
    %s85 = ssub.s32 %s9, %s16
    %p86 = scmp.eq.s32.totalorder %s85, 0
    %s88 = sadd.s32 %s87, 1
    %s89 = scalar_select %p86, %s87, %s88
    %p92 = pneg %p86
    %p93 = scmp.eq.s32.totalorder %s9, 1
    %p94 = por %p92, %p93
    %p95 = scmp.ne.s32.totalorder %s87, %s90
    %p96 = scmp.eq.s32.totalorder %s9, 0
    %p97 = por %p95, %p96
    %p98 = scmp.ne.s32.totalorder %s87, %s90
    %p99 = scmp.eq.s32.totalorder %s14, 1
    %p100 = por %p98, %p99
    %p101 = scmp.ne.s32.totalorder %s90, %s91
    %p102 = scmp.eq.s32.totalorder %s14, 0
    %p103 = por %p101, %p102
    %p104 = scmp.ne.s32.totalorder %s90, %s91
    %p105 = scmp.eq.s32.totalorder %s15, 1
    %p106 = por %p104, %p105
    %p108 = scmp.ne.s32.totalorder %s91, %s107
    %p109 = scmp.eq.s32.totalorder %s15, 0
    %p110 = por %p108, %p109
    %p111 = scmp.le.s32.totalorder 1, %s9
    %p112 = scmp.lt.s32.totalorder %s9, 3
    %p113 = pnand %p111, %p112
    %p114 = pneg %p113
    // Predicated region
    $region9: #{_lambda_.24} parent=5 // pred_check
      _
    $region10: #{_lambda_.24} parent=5 // pred_check_branch
      %116 = sbr.rel (%p113) target = $region12
    $region11: #{_lambda_.24} parent=5 // pred_region
      %s117 = ssub.s32 %s9, 1
      // Predicated region
      $region13: #{_lambda_.24} parent=11 // pred_check
        %p118 = pneg %p56
      $region14: #{_lambda_.24} parent=11 // pred_check_branch
        %120 = sbr.rel (%p118) target = $region16
      $region15: #{_lambda_.24} parent=11 // pred_region
        _
      $region16: #{_lambda_.24} parent=11 // pred_fallthru
        _
      // Predicated region
      $region17: #{_lambda_.24} parent=11 // pred_check
        %p121 = pneg %p77
      $region18: #{_lambda_.24} parent=11 // pred_check_branch
        %123 = sbr.rel (%p121) target = $region20
      $region19: #{_lambda_.24} parent=11 // pred_region
        _
      $region20: #{_lambda_.24} parent=11 // pred_fallthru
        _
    $region12: #{_lambda_.24} parent=5 // pred_fallthru
      _
    %p124 = scmp.lt.s32.totalorder %s9, 2
    // Predicated region
    $region21: #{_lambda_.24} parent=5 // pred_check
      %p125 = pneg %p124
    $region22: #{_lambda_.24} parent=5 // pred_check_branch
      %127 = sbr.rel (%p125) target = $region24
    $region23: #{_lambda_.24} parent=5 // pred_region
      // Predicated region
      $region25: #{_lambda_.24} parent=23 // pred_check
        %p128 = pneg %p29
      $region26: #{_lambda_.24} parent=23 // pred_check_branch
        %130 = sbr.rel (%p128) target = $region28
      $region27: #{_lambda_.24} parent=23 // pred_region
        %s131 = smul.u32 7, %s9
        %p132 = scmp.lt.s32.totalorder %s131, 13
        %s133 = scalar_select %p132, %s131, 13
        %s134 = smul.addr %s133, 4
        %s135 = scalar_lea.vmem %s0, %s134
        %s136 = smul.u32 7, %s9
      $region28: #{_lambda_.24} parent=23 // pred_fallthru
        _
    $region24: #{_lambda_.24} parent=5 // pred_fallthru
      _
    %p137 = scmp.le.s32.totalorder 1, %s9
    %p138 = scmp.lt.s32.totalorder %s9, 3
    %p139 = pnand %p137, %p138
    %p140 = pneg %p139
    // Predicated region
    $region29: #{_lambda_.24} parent=5 // pred_check
      _
    $region30: #{_lambda_.24} parent=5 // pred_check_branch
      %142 = sbr.rel (%p139) target = $region32
    $region31: #{_lambda_.24} parent=5 // pred_region
      %s143 = ssub.s32 %s9, 1
      %s144 = smul.u32 7, %s14
      %p145 = scmp.lt.s32.totalorder %s144, 13
      %s146 = scalar_select %p145, %s144, 13
      %s147 = smul.addr %s146, 4
      %s148 = scalar_lea.vmem %s0, %s147
      %p149 = pneg %p35
      %p150 = pneg %p32
      %p151 = pneg %p56
      %p152 = pneg %p53
      %p153 = pneg %p77
      %p154 = pneg %p74
      %p155 = pneg %p103
      %p156 = pneg %p100
      %s157 = smul.u32 7, %s14
      %p158 = scmp.lt.s32.totalorder %s157, 13
      %s159 = scalar_select %p158, %s157, 13
      %s160 = smul.addr %s159, 4
      %s161 = scalar_lea.vmem %s3, %s160
      %s162 = smul.u32 7, %s14
      %p163 = scmp.lt.s32.totalorder %s162, 13
      %s164 = scalar_select %p163, %s162, 13
      %s165 = smul.addr %s164, 4
      %s166 = scalar_lea.vmem %s0, %s165
      %s167 = smul.u32 7, %s14
      %s168 = smul.u32 7, %s14
      %p169 = scmp.lt.s32.totalorder %s168, 13
      %s170 = scalar_select %p169, %s168, 13
      %s171 = smul.addr %s170, 4
      %s172 = scalar_lea.vmem %s3, %s171
      %s173 = smul.u32 7, %s14
      %v174 = vld [vmem:[%s166] sm:$0xf]
      %v175 = vld [vmem:[%s166 + $0x4] sm:$0xf]
      %v176 = vld [vmem:[%s166 + $0x8] sm:$0xf]
      %v177 = vld [vmem:[%s166 + $0xc] sm:$0xf]
      %v178 = vld [vmem:[%s166 + $0x10] sm:$0xf]
      %v179 = vld [vmem:[%s166 + $0x14] sm:$0xf]
      %v180 = vld [vmem:[%s166 + $0x18] sm:$0xf]
      %v181 = vunpack.c.l.bf16 %v174
      %v182 = vunpack.c.l.bf16 %v175
      %v183 = vunpack.c.l.bf16 %v176
      %v184 = vunpack.c.l.bf16 %v177
      %v185 = vunpack.c.l.bf16 %v178
      %v186 = vunpack.c.l.bf16 %v179
      %v187 = vunpack.c.l.bf16 %v180
      %v188 = vld [vmem:[%s1] sm:$0x1]
      %v190 = vlaneseq
      %v191 = vshrl.u32 %v190, 7
      %v192 = vsub.s32 0, %v191
      %v193 = vrot.slane %v188, %v192
      %v195 = vmul.f32 %v181, %v193
      %v196 = vmul.f32 %v182, %v193
      %v197 = vmul.f32 %v183, %v193
      %v198 = vmul.f32 %v184, %v193
      %v199 = vmul.f32 %v185, %v193
      %v200 = vmul.f32 %v186, %v193
      %v201 = vmul.f32 %v187, %v193
      %v202 = vld [vmem:[%s2] sm:$0x1]
      %v204 = vlaneseq
      %v205 = vshrl.u32 %v204, 7
      %v206 = vsub.s32 0, %v205
      %v207 = vrot.slane %v202, %v206
      %v209 = vadd.f32 %v195, %v207
      %v210 = vadd.f32 %v196, %v207
      %v211 = vadd.f32 %v197, %v207
      %v212 = vadd.f32 %v198, %v207
      %v213 = vadd.f32 %v199, %v207
      %v214 = vadd.f32 %v200, %v207
      %v215 = vadd.f32 %v201, %v207
      %v216 = vmax.f32 %v209, 0.0
      %v217 = vmax.f32 %v210, 0.0
      %v218 = vmax.f32 %v211, 0.0
      %v219 = vmax.f32 %v212, 0.0
      %v220 = vmax.f32 %v213, 0.0
      %v221 = vmax.f32 %v214, 0.0
      %v222 = vmax.f32 %v215, 0.0
      %v223 = vpack.c.bf16 %v217, %v216
      %v224 = vpack.c.bf16 %v219, %v218
      %v225 = vpack.c.bf16 %v221, %v220
      %v226 = vpack.c.bf16 %v222, %v222
      %v231 = vunpack.c.l.b16 %v223
      %v232 = vunpack.c.h.b16 %v223
      %v233 = vunpack.c.l.b16 %v224
      %v234 = vunpack.c.h.b16 %v224
      %v235 = vunpack.c.l.b16 %v225
      %v236 = vunpack.c.h.b16 %v225
      %v237 = vunpack.c.l.b16 %v226
      %v238 = vpack.c.b16 %v231, %v231
      %v239 = vpack.c.b16 %v232, %v232
      %v240 = vpack.c.b16 %v233, %v233
      %v241 = vpack.c.b16 %v234, %v234
      %v242 = vpack.c.b16 %v235, %v235
      %v243 = vpack.c.b16 %v236, %v236
      %v244 = vpack.c.b16 %v237, %v237
      %252 = vst [vmem:[%s172] sm:$0xf] %v238
      %253 = vst [vmem:[%s172 + $0x4] sm:$0xf] %v239
      %254 = vst [vmem:[%s172 + $0x8] sm:$0xf] %v240
      %255 = vst [vmem:[%s172 + $0xc] sm:$0xf] %v241
      %256 = vst [vmem:[%s172 + $0x10] sm:$0xf] %v242
      %257 = vst [vmem:[%s172 + $0x14] sm:$0xf] %v243
      %258 = vst [vmem:[%s172 + $0x18] sm:$0xf] %v244
      %s259 = smul.u32 7, %s14
      %p260 = scmp.lt.s32.totalorder %s259, 13
      %s261 = scalar_select %p260, %s259, 13
      %s262 = smul.addr %s261, 4
      %s263 = scalar_lea.vmem %s3, %s262
      // Predicated region
      $region33: #{_lambda_.24} parent=31 // pred_check
        %p264 = pneg %p100
      $region34: #{_lambda_.24} parent=31 // pred_check_branch
        %266 = sbr.rel (%p264) target = $region36
      $region35: #{_lambda_.24} parent=31 // pred_region
        %s267 = smul.u32 7, %s14
      $region36: #{_lambda_.24} parent=31 // pred_fallthru
        _
    $region32: #{_lambda_.24} parent=5 // pred_fallthru
      _
    %p268 = scmp.le.s32.totalorder 2, %s9
    // Predicated region
    $region37: #{_lambda_.24} parent=5 // pred_check
      %p269 = pneg %p268
    $region38: #{_lambda_.24} parent=5 // pred_check_branch
      %271 = sbr.rel (%p269) target = $region40
    $region39: #{_lambda_.24} parent=5 // pred_region
      %s272 = ssub.s32 %s9, 2
      // Predicated region
      $region41: #{_lambda_.24} parent=39 // pred_check
        %p273 = pneg %p106
      $region42: #{_lambda_.24} parent=39 // pred_check_branch
        %275 = sbr.rel (%p273) target = $region44
      $region43: #{_lambda_.24} parent=39 // pred_region
        %s276 = smul.u32 7, %s15
        %p277 = scmp.lt.s32.totalorder %s276, 13
        %s278 = scalar_select %p277, %s276, 13
        %s279 = smul.addr %s278, 4
        %s280 = scalar_lea.vmem %s3, %s279
      $region44: #{_lambda_.24} parent=39 // pred_fallthru
        _
    $region40: #{_lambda_.24} parent=5 // pred_fallthru
      _
  $region6: #{_lambda_.24} parent=0 // loop_footer
    %s13 = sadd.s32 1, %s9
  $region7: #{_lambda_.24} parent=0 // loop_footer_branch
    %8 = sbr.rel target = $region3
  $region8: #{_lambda_.24} parent=0 // loop_exit
    _

// kernel: _lambda_.28
$region0: #{_lambda_.28}
  #allocation0 [shape = 'u32[]', space=smem, size = 0x4, offset = 0x4, fixed_abs, tag = 'smem constant byte address 0x4 - core index']
  #allocation1 [shape = 'u32[144,128]{1,0:T(1,128)}', space=vmem, size = 0x12000, scoped, tag = 'internal scratch']
  %s0 = inlined_call_operand.vmem [shape: bf16[400,256], index: 0, kind: input, shape index: {}]
  %s1 = inlined_call_operand.vmem [shape: bf16[256,128], index: 1, kind: input, shape index: {}]
  %s2 = inlined_call_operand.vmem [shape: f32[1,128], index: 2, kind: input, shape index: {}]
  %s3 = inlined_call_operand.vmem [shape: bf16[400,128], index: 3, kind: output, shape index: {}]
  %s4 = sld [smem:[#allocation0]]
  $region45: #{_lambda_.28} parent=0
    _
  %s6 = ssub.s32 1, %s4
  %s7 = scalar_select 0, %s6, %s4
  loop: start=0, step=1, limit=4
  $region2: #{_lambda_.28} parent=0 // loop_pre_header
    _
  $region3: #{_lambda_.28} parent=0 // loop_header
    %s9 = sphi 0, %s13
    %p10 = scmp.ge.s32.totalorder %s9, 4
    %s19 = sphi 0, %s21
    %s22 = sphi 0, %s19
    %s23 = sphi 0, %s22
    %s39 = sphi 0, %s23
    %s43 = sphi 0, %s43
    %s45 = sphi 0, %s43
    %s46 = sphi 0, %s45
    %s60 = sphi 0, %s46
    %s64 = sphi 0, %s64
    %s66 = sphi 0, %s64
    %s67 = sphi 0, %s66
    %s81 = sphi 0, %s67
    %s87 = sphi 0, %s89
    %s90 = sphi 0, %s87
    %s91 = sphi 0, %s90
    %s107 = sphi 0, %s91
  $region4: #{_lambda_.28} parent=0 // loop_header_branch
    %12 = sbr.rel (%p10) target = $region8
  $region5: #{_lambda_.28} parent=0 // loop_body
    %s14 = ssub.s32 %s9, 1
    %s15 = ssub.s32 %s9, 2
    %s16 = sadd.s32 %s9, 1
    %s17 = ssub.s32 %s9, %s16
    %p18 = scmp.eq.s32.totalorder %s17, 0
    %s20 = sadd.s32 %s19, 1
    %s21 = scalar_select %p18, %s19, %s20
    %p24 = pneg %p18
    %p25 = scmp.eq.s32.totalorder %s9, 1
    %p26 = por %p24, %p25
    %p27 = scmp.ne.s32.totalorder %s19, %s22
    %p28 = scmp.eq.s32.totalorder %s9, 0
    %p29 = por %p27, %p28
    %p30 = scmp.ne.s32.totalorder %s19, %s22
    %p31 = scmp.eq.s32.totalorder %s14, 1
    %p32 = por %p30, %p31
    %p33 = scmp.ne.s32.totalorder %s22, %s23
    %p34 = scmp.eq.s32.totalorder %s14, 0
    %p35 = por %p33, %p34
    %p36 = scmp.ne.s32.totalorder %s22, %s23
    %p37 = scmp.eq.s32.totalorder %s15, 1
    %p38 = por %p36, %p37
    %p40 = scmp.ne.s32.totalorder %s23, %s39
    %p41 = scmp.eq.s32.totalorder %s15, 0
    %p42 = por %p40, %p41
    %s44 = sadd.s32 %s43, 1
    %p47 = scmp.eq.s32.totalorder %s9, 1
    %p48 = scmp.ne.s32.totalorder %s43, %s45
    %p49 = scmp.eq.s32.totalorder %s9, 0
    %p50 = por %p48, %p49
    %p51 = scmp.ne.s32.totalorder %s43, %s45
    %p52 = scmp.eq.s32.totalorder %s14, 1
    %p53 = por %p51, %p52
    %p54 = scmp.ne.s32.totalorder %s45, %s46
    %p55 = scmp.eq.s32.totalorder %s14, 0
    %p56 = por %p54, %p55
    %p57 = scmp.ne.s32.totalorder %s45, %s46
    %p58 = scmp.eq.s32.totalorder %s15, 1
    %p59 = por %p57, %p58
    %p61 = scmp.ne.s32.totalorder %s46, %s60
    %p62 = scmp.eq.s32.totalorder %s15, 0
    %p63 = por %p61, %p62
    %s65 = sadd.s32 %s64, 1
    %p68 = scmp.eq.s32.totalorder %s9, 1
    %p69 = scmp.ne.s32.totalorder %s64, %s66
    %p70 = scmp.eq.s32.totalorder %s9, 0
    %p71 = por %p69, %p70
    %p72 = scmp.ne.s32.totalorder %s64, %s66
    %p73 = scmp.eq.s32.totalorder %s14, 1
    %p74 = por %p72, %p73
    %p75 = scmp.ne.s32.totalorder %s66, %s67
    %p76 = scmp.eq.s32.totalorder %s14, 0
    %p77 = por %p75, %p76
    %p78 = scmp.ne.s32.totalorder %s66, %s67
    %p79 = scmp.eq.s32.totalorder %s15, 1
    %p80 = por %p78, %p79
    %p82 = scmp.ne.s32.totalorder %s67, %s81
    %p83 = scmp.eq.s32.totalorder %s15, 0
    %p84 = por %p82, %p83
    %s85 = ssub.s32 %s9, %s16
    %p86 = scmp.eq.s32.totalorder %s85, 0
    %s88 = sadd.s32 %s87, 1
    %s89 = scalar_select %p86, %s87, %s88
    %p92 = pneg %p86
    %p93 = scmp.eq.s32.totalorder %s9, 1
    %p94 = por %p92, %p93
    %p95 = scmp.ne.s32.totalorder %s87, %s90
    %p96 = scmp.eq.s32.totalorder %s9, 0
    %p97 = por %p95, %p96
    %p98 = scmp.ne.s32.totalorder %s87, %s90
    %p99 = scmp.eq.s32.totalorder %s14, 1
    %p100 = por %p98, %p99
    %p101 = scmp.ne.s32.totalorder %s90, %s91
    %p102 = scmp.eq.s32.totalorder %s14, 0
    %p103 = por %p101, %p102
    %p104 = scmp.ne.s32.totalorder %s90, %s91
    %p105 = scmp.eq.s32.totalorder %s15, 1
    %p106 = por %p104, %p105
    %p108 = scmp.ne.s32.totalorder %s91, %s107
    %p109 = scmp.eq.s32.totalorder %s15, 0
    %p110 = por %p108, %p109
    %p111 = scmp.le.s32.totalorder 1, %s9
    %p112 = scmp.lt.s32.totalorder %s9, 3
    %p113 = pnand %p111, %p112
    %p114 = pneg %p113
    // Predicated region
    $region9: #{_lambda_.28} parent=5 // pred_check
      _
    $region10: #{_lambda_.28} parent=5 // pred_check_branch
      %116 = sbr.rel (%p113) target = $region12
    $region11: #{_lambda_.28} parent=5 // pred_region
      %s117 = ssub.s32 %s9, 1
      // Predicated region
      $region13: #{_lambda_.28} parent=11 // pred_check
        %p118 = pneg %p56
      $region14: #{_lambda_.28} parent=11 // pred_check_branch
        %120 = sbr.rel (%p118) target = $region16
      $region15: #{_lambda_.28} parent=11 // pred_region
        _
      $region16: #{_lambda_.28} parent=11 // pred_fallthru
        _
      // Predicated region
      $region17: #{_lambda_.28} parent=11 // pred_check
        %p121 = pneg %p77
      $region18: #{_lambda_.28} parent=11 // pred_check_branch
        %123 = sbr.rel (%p121) target = $region20
      $region19: #{_lambda_.28} parent=11 // pred_region
        _
      $region20: #{_lambda_.28} parent=11 // pred_fallthru
        _
    $region12: #{_lambda_.28} parent=5 // pred_fallthru
      _
    %p124 = scmp.lt.s32.totalorder %s9, 2
    // Predicated region
    $region21: #{_lambda_.28} parent=5 // pred_check
      %p125 = pneg %p124
    $region22: #{_lambda_.28} parent=5 // pred_check_branch
      %127 = sbr.rel (%p125) target = $region24
    $region23: #{_lambda_.28} parent=5 // pred_region
      // Predicated region
      $region25: #{_lambda_.28} parent=23 // pred_check
        %p128 = pneg %p29
      $region26: #{_lambda_.28} parent=23 // pred_check_branch
        %130 = sbr.rel (%p128) target = $region28
      $region27: #{_lambda_.28} parent=23 // pred_region
        %s131 = smul.u32 25, %s9
        %p132 = scmp.lt.s32.totalorder %s131, 49
        %s133 = scalar_select %p132, %s131, 49
        %s134 = smul.addr %s133, 2
        %s135 = smul.addr %s134, 4
        %s136 = scalar_lea.vmem %s0, %s135
        %s137 = smul.u32 25, %s9
      $region28: #{_lambda_.28} parent=23 // pred_fallthru
        _
    $region24: #{_lambda_.28} parent=5 // pred_fallthru
      _
    %p138 = scmp.le.s32.totalorder 1, %s9
    %p139 = scmp.lt.s32.totalorder %s9, 3
    %p140 = pnand %p138, %p139
    %p141 = pneg %p140
    // Predicated region
    $region29: #{_lambda_.28} parent=5 // pred_check
      _
    $region30: #{_lambda_.28} parent=5 // pred_check_branch
      %143 = sbr.rel (%p140) target = $region32
    $region31: #{_lambda_.28} parent=5 // pred_region
      %s144 = ssub.s32 %s9, 1
      %s145 = smul.u32 25, %s14
      %p146 = scmp.lt.s32.totalorder %s145, 49
      %s147 = scalar_select %p146, %s145, 49
      %s148 = smul.addr %s147, 2
      %s149 = smul.addr %s148, 4
      %s150 = scalar_lea.vmem %s0, %s149
      %p151 = pneg %p35
      %p152 = pneg %p32
      %p153 = pneg %p56
      %p154 = pneg %p53
      %p155 = pneg %p77
      %p156 = pneg %p74
      %p157 = pneg %p103
      %p158 = pneg %p100
      %s159 = smul.u32 25, %s14
      %p160 = scmp.lt.s32.totalorder %s159, 49
      %s161 = scalar_select %p160, %s159, 49
      %s162 = smul.addr %s161, 4
      %s163 = scalar_lea.vmem %s3, %s162
      %s164 = smul.u32 25, %s14
      %p165 = scmp.lt.s32.totalorder %s164, 49
      %s166 = scalar_select %p165, %s164, 49
      %s167 = smul.addr %s166, 2
      %s168 = smul.addr %s167, 4
      %s169 = scalar_lea.vmem %s0, %s168
      %s170 = smul.u32 25, %s14
      %s171 = smul.u32 25, %s14
      %p172 = scmp.lt.s32.totalorder %s171, 49
      %s173 = scalar_select %p172, %s171, 49
      %s174 = smul.addr %s173, 4
      %s175 = scalar_lea.vmem %s3, %s174
      %s176 = smul.u32 25, %s14
      %v178 = vld [vmem:[%s169] sm:$0xff]
      %v179 = vld [vmem:[%s169 + $0x8] sm:$0xff]
      %v180 = vld [vmem:[%s169 + $0x10] sm:$0xff]
      %v181 = vld [vmem:[%s169 + $0x18] sm:$0xff]
      %v182 = vld [vmem:[%s169 + $0x20] sm:$0xff]
      %v183 = vld [vmem:[%s169 + $0x28] sm:$0xff]
      %v184 = vld [vmem:[%s169 + $0x30] sm:$0xff]
      %v185 = vld [vmem:[%s169 + $0x38] sm:$0xff]
      %v186 = vld [vmem:[%s169 + $0x40] sm:$0xff]
      %v187 = vld [vmem:[%s169 + $0x48] sm:$0xff]
      %v188 = vld [vmem:[%s169 + $0x50] sm:$0xff]
      %v189 = vld [vmem:[%s169 + $0x58] sm:$0xff]
      %v190 = vld [vmem:[%s169 + $0x60] sm:$0xff]
      %v191 = vld [vmem:[%s169 + $0x68] sm:$0xff]
      %v192 = vld [vmem:[%s169 + $0x70] sm:$0xff]
      %v193 = vld [vmem:[%s169 + $0x78] sm:$0xff]
      %v194 = vld [vmem:[%s169 + $0x80] sm:$0xff]
      %v195 = vld [vmem:[%s169 + $0x88] sm:$0xff]
      %v196 = vld [vmem:[%s169 + $0x90] sm:$0xff]
      %v197 = vld [vmem:[%s169 + $0x98] sm:$0xff]
      %v198 = vld [vmem:[%s169 + $0xa0] sm:$0xff]
      %v199 = vld [vmem:[%s169 + $0xa8] sm:$0xff]
      %v200 = vld [vmem:[%s169 + $0xb0] sm:$0xff]
      %v201 = vld [vmem:[%s169 + $0xb8] sm:$0xff]
      %v202 = vld [vmem:[%s169 + $0xc0] sm:$0xff]
      %v203 = vld [vmem:[%s1] sm:$0xf]
      %v204 = vld [vmem:[%s1 + $0x4] sm:$0xf]
      %v205 = vld [vmem:[%s1 + $0x8] sm:$0xf]
      %v206 = vld [vmem:[%s1 + $0xc] sm:$0xf]
      %v207 = vld [vmem:[%s1 + $0x10] sm:$0xf]
      %v208 = vld [vmem:[%s1 + $0x14] sm:$0xf]
      %v209 = vld [vmem:[%s1 + $0x18] sm:$0xf]
      %v210 = vld [vmem:[%s1 + $0x1c] sm:$0xf]
      %v211 = vld [vmem:[%s1 + $0x20] sm:$0xf]
      %v212 = vld [vmem:[%s1 + $0x24] sm:$0xf]
      %v213 = vld [vmem:[%s1 + $0x28] sm:$0xf]
      %v214 = vld [vmem:[%s1 + $0x2c] sm:$0xf]
      %v215 = vld [vmem:[%s1 + $0x30] sm:$0xf]
      %v216 = vld [vmem:[%s1 + $0x34] sm:$0xf]
      %v217 = vld [vmem:[%s1 + $0x38] sm:$0xf]
      %v218 = vld [vmem:[%s1 + $0x3c] sm:$0xf]
      %v219 = vld [vmem:[%s1 + $0x40] sm:$0xf]
      %v220 = vld [vmem:[%s1 + $0x44] sm:$0xf]
      %v221 = vld [vmem:[%s1 + $0x48] sm:$0xf]
      %v222 = vld [vmem:[%s1 + $0x4c] sm:$0xf]
      %v223 = vld [vmem:[%s1 + $0x50] sm:$0xf]
      %v224 = vld [vmem:[%s1 + $0x54] sm:$0xf]
      %v225 = vld [vmem:[%s1 + $0x58] sm:$0xf]
      %v226 = vld [vmem:[%s1 + $0x5c] sm:$0xf]
      %v227 = vld [vmem:[%s1 + $0x60] sm:$0xf]
      %v228 = vld [vmem:[%s1 + $0x64] sm:$0xf]
      %v229 = vld [vmem:[%s1 + $0x68] sm:$0xf]
      %v230 = vld [vmem:[%s1 + $0x6c] sm:$0xf]
      %v231 = vld [vmem:[%s1 + $0x70] sm:$0xf]
      %v232 = vld [vmem:[%s1 + $0x74] sm:$0xf]
      %v233 = vld [vmem:[%s1 + $0x78] sm:$0xf]
      %v234 = vld [vmem:[%s1 + $0x7c] sm:$0xf]
      %v235 = vld [vmem:[%s2] sm:$0x1]
      %v237 = vlaneseq
      %v238 = vshrl.u32 %v237, 7
      %v239 = vsub.s32 0, %v238
      %v240 = vrot.slane %v235, %v239
      %v267 = vunpack.c.l.b16 %v178
      %v268 = vunpack.c.h.b16 %v178
      %v269 = vunpack.c.l.b16 %v179
      %v270 = vunpack.c.h.b16 %v179
      %v271 = vunpack.c.l.b16 %v180
      %v272 = vunpack.c.h.b16 %v180
      %v273 = vunpack.c.l.b16 %v181
      %v274 = vunpack.c.h.b16 %v181
      %v275 = vunpack.c.l.b16 %v182
      %v276 = vunpack.c.h.b16 %v182
      %v277 = vunpack.c.l.b16 %v183
      %v278 = vunpack.c.h.b16 %v183
      %v279 = vunpack.c.l.b16 %v184
      %v280 = vunpack.c.h.b16 %v184
      %v281 = vunpack.c.l.b16 %v185
      %v282 = vunpack.c.h.b16 %v185
      %v283 = vunpack.c.l.b16 %v186
      %v284 = vunpack.c.h.b16 %v186
      %v285 = vunpack.c.l.b16 %v187
      %v286 = vunpack.c.h.b16 %v187
      %v287 = vunpack.c.l.b16 %v188
      %v288 = vunpack.c.h.b16 %v188
      %v289 = vunpack.c.l.b16 %v189
      %v290 = vunpack.c.h.b16 %v189
      %v291 = vunpack.c.l.b16 %v190
      %v292 = vunpack.c.h.b16 %v190
      %v293 = vunpack.c.l.b16 %v191
      %v294 = vunpack.c.h.b16 %v191
      %v295 = vunpack.c.l.b16 %v192
      %v296 = vunpack.c.h.b16 %v192
      %v297 = vunpack.c.l.b16 %v193
      %v298 = vunpack.c.h.b16 %v193
      %v299 = vunpack.c.l.b16 %v194
      %v300 = vunpack.c.h.b16 %v194
      %v301 = vunpack.c.l.b16 %v195
      %v302 = vunpack.c.h.b16 %v195
      %v303 = vunpack.c.l.b16 %v196
      %v304 = vunpack.c.h.b16 %v196
      %v305 = vunpack.c.l.b16 %v197
      %v306 = vunpack.c.h.b16 %v197
      %v307 = vunpack.c.l.b16 %v198
      %v308 = vunpack.c.h.b16 %v198
      %v309 = vunpack.c.l.b16 %v199
      %v310 = vunpack.c.h.b16 %v199
      %v311 = vunpack.c.l.b16 %v200
      %v312 = vunpack.c.h.b16 %v200
      %v313 = vunpack.c.l.b16 %v201
      %v314 = vunpack.c.h.b16 %v201
      %v315 = vunpack.c.l.b16 %v202
      %v316 = vunpack.c.h.b16 %v202
      %v317 = vpack.c.b16 %v269, %v267
      %v318 = vpack.c.b16 %v270, %v268
      %v319 = vpack.c.b16 %v273, %v271
      %v320 = vpack.c.b16 %v274, %v272
      %v321 = vpack.c.b16 %v277, %v275
      %v322 = vpack.c.b16 %v278, %v276
      %v323 = vpack.c.b16 %v281, %v279
      %v324 = vpack.c.b16 %v282, %v280
      %v325 = vpack.c.b16 %v285, %v283
      %v326 = vpack.c.b16 %v286, %v284
      %v327 = vpack.c.b16 %v289, %v287
      %v328 = vpack.c.b16 %v290, %v288
      %v329 = vpack.c.b16 %v293, %v291
      %v330 = vpack.c.b16 %v294, %v292
      %v331 = vpack.c.b16 %v297, %v295
      %v332 = vpack.c.b16 %v298, %v296
      %v333 = vpack.c.b16 %v301, %v299
      %v334 = vpack.c.b16 %v302, %v300
      %v335 = vpack.c.b16 %v305, %v303
      %v336 = vpack.c.b16 %v306, %v304
      %v337 = vpack.c.b16 %v309, %v307
      %v338 = vpack.c.b16 %v310, %v308
      %v339 = vpack.c.b16 %v313, %v311
      %v340 = vpack.c.b16 %v314, %v312
      %v341 = vpack.c.b16 %v315, %v315
      %v342 = vpack.c.b16 %v316, %v316
      %v401 = vunpack.c.l.b16 %v203
      %v402 = vunpack.c.l.b16 %v204
      %v403 = vunpack.c.l.b16 %v205
      %v404 = vunpack.c.l.b16 %v206
      %v405 = vunpack.c.l.b16 %v207
      %v406 = vunpack.c.l.b16 %v208
      %v407 = vunpack.c.l.b16 %v209
      %v408 = vunpack.c.l.b16 %v210
      %v409 = vunpack.c.l.b16 %v211
      %v410 = vunpack.c.l.b16 %v212
      %v411 = vunpack.c.l.b16 %v213
      %v412 = vunpack.c.l.b16 %v214
      %v413 = vunpack.c.l.b16 %v215
      %v414 = vunpack.c.l.b16 %v216
      %v415 = vunpack.c.l.b16 %v217
      %v416 = vunpack.c.l.b16 %v218
      %v417 = vunpack.c.l.b16 %v219
      %v418 = vunpack.c.l.b16 %v220
      %v419 = vunpack.c.l.b16 %v221
      %v420 = vunpack.c.l.b16 %v222
      %v421 = vunpack.c.l.b16 %v223
      %v422 = vunpack.c.l.b16 %v224
      %v423 = vunpack.c.l.b16 %v225
      %v424 = vunpack.c.l.b16 %v226
      %v425 = vunpack.c.l.b16 %v227
      %v426 = vunpack.c.l.b16 %v228
      %v427 = vunpack.c.l.b16 %v229
      %v428 = vunpack.c.l.b16 %v230
      %v429 = vunpack.c.l.b16 %v231
      %v430 = vunpack.c.l.b16 %v232
      %v431 = vunpack.c.l.b16 %v233
      %v432 = vunpack.c.l.b16 %v234
      %v433 = vpack.c.b16 %v402, %v401
      %v434 = vpack.c.b16 %v404, %v403
      %v435 = vpack.c.b16 %v406, %v405
      %v436 = vpack.c.b16 %v408, %v407
      %v437 = vpack.c.b16 %v410, %v409
      %v438 = vpack.c.b16 %v412, %v411
      %v439 = vpack.c.b16 %v414, %v413
      %v440 = vpack.c.b16 %v416, %v415
      %v441 = vpack.c.b16 %v418, %v417
      %v442 = vpack.c.b16 %v420, %v419
      %v443 = vpack.c.b16 %v422, %v421
      %v444 = vpack.c.b16 %v424, %v423
      %v445 = vpack.c.b16 %v426, %v425
      %v446 = vpack.c.b16 %v428, %v427
      %v447 = vpack.c.b16 %v430, %v429
      %v448 = vpack.c.b16 %v432, %v431
      %465 = vmatprep.subr.bf16.mxu0 0
      %466 = vmatpush1.bf16.msra.mxu0 %v433
      %467 = vmatprep.subr.bf16.mxu0 0
      %468 = vmatpush1.bf16.msra.mxu0 %v434
      %469 = vmatprep.subr.bf16.mxu0 0
      %470 = vmatpush1.bf16.msra.mxu0 %v435
      %471 = vmatprep.subr.bf16.mxu0 0
      %472 = vmatpush1.bf16.msra.mxu0 %v436
      %473 = vmatprep.subr.bf16.mxu0 0
      %474 = vmatpush1.bf16.msra.mxu0 %v437
      %475 = vmatprep.subr.bf16.mxu0 0
      %476 = vmatpush1.bf16.msra.mxu0 %v438
      %477 = vmatprep.subr.bf16.mxu0 0
      %478 = vmatpush1.bf16.msra.mxu0 %v439
      %479 = vmatprep.subr.bf16.mxu0 0
      %480 = vmatpush1.bf16.msra.mxu0 %v440
      %481 = vmatprep.subr.bf16.mxu0 0
      %482 = vmatpush1.bf16.msra.mxu0 %v441
      %483 = vmatprep.subr.bf16.mxu0 0
      %484 = vmatpush1.bf16.msra.mxu0 %v442
      %485 = vmatprep.subr.bf16.mxu0 0
      %486 = vmatpush1.bf16.msra.mxu0 %v443
      %487 = vmatprep.subr.bf16.mxu0 0
      %488 = vmatpush1.bf16.msra.mxu0 %v444
      %489 = vmatprep.subr.bf16.mxu0 0
      %490 = vmatpush1.bf16.msra.mxu0 %v445
      %491 = vmatprep.subr.bf16.mxu0 0
      %492 = vmatpush1.bf16.msra.mxu0 %v446
      %493 = vmatprep.subr.bf16.mxu0 0
      %494 = vmatpush1.bf16.msra.mxu0 %v447
      %495 = vmatprep.subr.bf16.mxu0 0
      %496 = vmatpush1.bf16.msra.mxu0 %v448
      %497 = vmatprep.mubr.bf16.mxu0 %v318
      %498 = vmatmul.mubr.bf16.gmra.mrb[0].mxu0 %v317
      %v499 = vpop.f32.mrb[0].mxu0
      %v500 = vadd.f32 %v240, %v499
      %v501 = vpop.f32.mrb[0].mxu0
      %v502 = vpop.f32.mrb[0].mxu0
      %v503 = vadd.f32 %v240, %v502
      %v504 = vpop.f32.mrb[0].mxu0
      %505 = vmatprep.mubr.bf16.mxu0 %v320
      %506 = vmatmul.mubr.bf16.gmra.mrb[0].mxu0 %v319
      %v507 = vpop.f32.mrb[0].mxu0
      %v508 = vadd.f32 %v240, %v507
      %v509 = vpop.f32.mrb[0].mxu0
      %v510 = vpop.f32.mrb[0].mxu0
      %v511 = vadd.f32 %v240, %v510
      %v512 = vpop.f32.mrb[0].mxu0
      %513 = vmatprep.mubr.bf16.mxu0 %v322
      %514 = vmatmul.mubr.bf16.gmra.mrb[0].mxu0 %v321
      %v515 = vpop.f32.mrb[0].mxu0
      %v516 = vadd.f32 %v240, %v515
      %v517 = vpop.f32.mrb[0].mxu0
      %v518 = vpop.f32.mrb[0].mxu0
      %v519 = vadd.f32 %v240, %v518
      %v520 = vpop.f32.mrb[0].mxu0
      %521 = vmatprep.mubr.bf16.mxu0 %v324
      %522 = vmatmul.mubr.bf16.gmra.mrb[0].mxu0 %v323
      %v523 = vpop.f32.mrb[0].mxu0
      %v524 = vadd.f32 %v240, %v523
      %v525 = vpop.f32.mrb[0].mxu0
      %v526 = vpop.f32.mrb[0].mxu0
      %v527 = vadd.f32 %v240, %v526
      %v528 = vpop.f32.mrb[0].mxu0
      %529 = vmatprep.mubr.bf16.mxu0 %v326
      %530 = vmatmul.mubr.bf16.gmra.mrb[0].mxu0 %v325
      %v531 = vpop.f32.mrb[0].mxu0
      %v532 = vadd.f32 %v240, %v531
      %v533 = vpop.f32.mrb[0].mxu0
      %v534 = vpop.f32.mrb[0].mxu0
      %v535 = vadd.f32 %v240, %v534
      %v536 = vpop.f32.mrb[0].mxu0
      %537 = vmatprep.mubr.bf16.mxu0 %v328
      %538 = vmatmul.mubr.bf16.gmra.mrb[0].mxu0 %v327
      %v539 = vpop.f32.mrb[0].mxu0
      %v540 = vadd.f32 %v240, %v539
      %v541 = vpop.f32.mrb[0].mxu0
      %v542 = vpop.f32.mrb[0].mxu0
      %v543 = vadd.f32 %v240, %v542
      %v544 = vpop.f32.mrb[0].mxu0
      %545 = vmatprep.mubr.bf16.mxu0 %v330
      %546 = vmatmul.mubr.bf16.gmra.mrb[0].mxu0 %v329
      %v547 = vpop.f32.mrb[0].mxu0
      %v548 = vadd.f32 %v240, %v547
      %v549 = vpop.f32.mrb[0].mxu0
      %v550 = vpop.f32.mrb[0].mxu0
      %v551 = vadd.f32 %v240, %v550
      %v552 = vpop.f32.mrb[0].mxu0
      %553 = vmatprep.mubr.bf16.mxu0 %v332
      %554 = vmatmul.mubr.bf16.gmra.mrb[0].mxu0 %v331
      %v555 = vpop.f32.mrb[0].mxu0
      %v556 = vadd.f32 %v240, %v555
      %v557 = vpop.f32.mrb[0].mxu0
      %v558 = vpop.f32.mrb[0].mxu0
      %v559 = vadd.f32 %v240, %v558
      %v560 = vpop.f32.mrb[0].mxu0
      %561 = vmatprep.mubr.bf16.mxu0 %v334
      %562 = vmatmul.mubr.bf16.gmra.mrb[0].mxu0 %v333
      %v563 = vpop.f32.mrb[0].mxu0
      %v564 = vadd.f32 %v240, %v563
      %v565 = vpop.f32.mrb[0].mxu0
      %v566 = vpop.f32.mrb[0].mxu0
      %v567 = vadd.f32 %v240, %v566
      %v568 = vpop.f32.mrb[0].mxu0
      %569 = vmatprep.mubr.bf16.mxu0 %v336
      %570 = vmatmul.mubr.bf16.gmra.mrb[0].mxu0 %v335
      %v571 = vpop.f32.mrb[0].mxu0
      %v572 = vadd.f32 %v240, %v571
      %v573 = vpop.f32.mrb[0].mxu0
      %v574 = vpop.f32.mrb[0].mxu0
      %v575 = vadd.f32 %v240, %v574
      %v576 = vpop.f32.mrb[0].mxu0
      %577 = vmatprep.mubr.bf16.mxu0 %v338
      %578 = vmatmul.mubr.bf16.gmra.mrb[0].mxu0 %v337
      %v579 = vpop.f32.mrb[0].mxu0
      %v580 = vadd.f32 %v240, %v579
      %v581 = vpop.f32.mrb[0].mxu0
      %v582 = vpop.f32.mrb[0].mxu0
      %v583 = vadd.f32 %v240, %v582
      %v584 = vpop.f32.mrb[0].mxu0
      %585 = vmatprep.mubr.bf16.mxu0 %v340
      %586 = vmatmul.mubr.bf16.gmra.mrb[0].mxu0 %v339
      %v587 = vpop.f32.mrb[0].mxu0
      %v588 = vadd.f32 %v240, %v587
      %v589 = vpop.f32.mrb[0].mxu0
      %v590 = vpop.f32.mrb[0].mxu0
      %v591 = vadd.f32 %v240, %v590
      %v592 = vpop.f32.mrb[0].mxu0
      %593 = vmatprep.mubr.bf16.mxu0 %v342
      %594 = vmatmul.mubr.bf16.gmra.mrb[0].mxu0 %v341
      %v595 = vpop.f32.mrb[0].mxu0
      %v596 = vadd.f32 %v240, %v595
      %v597 = vpop.f32.mrb[0].mxu0
      %v598 = vpop.f32.mrb[0].mxu0
      %v599 = vpop.f32.mrb[0].mxu0
      %600 = vdwg.mxu0
      %v601 = vtanh.pop %v500
      %v602 = vtanh.pop %v503
      %v603 = vtanh.pop %v508
      %v604 = vtanh.pop %v511
      %v605 = vtanh.pop %v516
      %v606 = vtanh.pop %v519
      %v607 = vtanh.pop %v524
      %v608 = vtanh.pop %v527
      %v609 = vtanh.pop %v532
      %v610 = vtanh.pop %v535
      %v611 = vtanh.pop %v540
      %v612 = vtanh.pop %v543
      %v613 = vtanh.pop %v548
      %v614 = vtanh.pop %v551
      %v615 = vtanh.pop %v556
      %v616 = vtanh.pop %v559
      %v617 = vtanh.pop %v564
      %v618 = vtanh.pop %v567
      %v619 = vtanh.pop %v572
      %v620 = vtanh.pop %v575
      %v621 = vtanh.pop %v580
      %v622 = vtanh.pop %v583
      %v623 = vtanh.pop %v588
      %v624 = vtanh.pop %v591
      %v625 = vtanh.pop %v596
      %v626 = vpack.c.bf16 %v602, %v601
      %v627 = vpack.c.bf16 %v604, %v603
      %v628 = vpack.c.bf16 %v606, %v605
      %v629 = vpack.c.bf16 %v608, %v607
      %v630 = vpack.c.bf16 %v610, %v609
      %v631 = vpack.c.bf16 %v612, %v611
      %v632 = vpack.c.bf16 %v614, %v613
      %v633 = vpack.c.bf16 %v616, %v615
      %v634 = vpack.c.bf16 %v618, %v617
      %v635 = vpack.c.bf16 %v620, %v619
      %v636 = vpack.c.bf16 %v622, %v621
      %v637 = vpack.c.bf16 %v624, %v623
      %v638 = vpack.c.bf16 %v625, %v625
      %v652 = vunpack.c.l.b16 %v626
      %v653 = vunpack.c.h.b16 %v626
      %v654 = vunpack.c.l.b16 %v627
      %v655 = vunpack.c.h.b16 %v627
      %v656 = vunpack.c.l.b16 %v628
      %v657 = vunpack.c.h.b16 %v628
      %v658 = vunpack.c.l.b16 %v629
      %v659 = vunpack.c.h.b16 %v629
      %v660 = vunpack.c.l.b16 %v630
      %v661 = vunpack.c.h.b16 %v630
      %v662 = vunpack.c.l.b16 %v631
      %v663 = vunpack.c.h.b16 %v631
      %v664 = vunpack.c.l.b16 %v632
      %v665 = vunpack.c.h.b16 %v632
      %v666 = vunpack.c.l.b16 %v633
      %v667 = vunpack.c.h.b16 %v633
      %v668 = vunpack.c.l.b16 %v634
      %v669 = vunpack.c.h.b16 %v634
      %v670 = vunpack.c.l.b16 %v635
      %v671 = vunpack.c.h.b16 %v635
      %v672 = vunpack.c.l.b16 %v636
      %v673 = vunpack.c.h.b16 %v636
      %v674 = vunpack.c.l.b16 %v637
      %v675 = vunpack.c.h.b16 %v637
      %v676 = vunpack.c.l.b16 %v638
      %v677 = vpack.c.b16 %v652, %v652
      %v678 = vpack.c.b16 %v653, %v653
      %v679 = vpack.c.b16 %v654, %v654
      %v680 = vpack.c.b16 %v655, %v655
      %v681 = vpack.c.b16 %v656, %v656
      %v682 = vpack.c.b16 %v657, %v657
      %v683 = vpack.c.b16 %v658, %v658
      %v684 = vpack.c.b16 %v659, %v659
      %v685 = vpack.c.b16 %v660, %v660
      %v686 = vpack.c.b16 %v661, %v661
      %v687 = vpack.c.b16 %v662, %v662
      %v688 = vpack.c.b16 %v663, %v663
      %v689 = vpack.c.b16 %v664, %v664
      %v690 = vpack.c.b16 %v665, %v665
      %v691 = vpack.c.b16 %v666, %v666
      %v692 = vpack.c.b16 %v667, %v667
      %v693 = vpack.c.b16 %v668, %v668
      %v694 = vpack.c.b16 %v669, %v669
      %v695 = vpack.c.b16 %v670, %v670
      %v696 = vpack.c.b16 %v671, %v671
      %v697 = vpack.c.b16 %v672, %v672
      %v698 = vpack.c.b16 %v673, %v673
      %v699 = vpack.c.b16 %v674, %v674
      %v700 = vpack.c.b16 %v675, %v675
      %v701 = vpack.c.b16 %v676, %v676
      %727 = vst [vmem:[%s175] sm:$0xf] %v677
      %728 = vst [vmem:[%s175 + $0x4] sm:$0xf] %v678
      %729 = vst [vmem:[%s175 + $0x8] sm:$0xf] %v679
      %730 = vst [vmem:[%s175 + $0xc] sm:$0xf] %v680
      %731 = vst [vmem:[%s175 + $0x10] sm:$0xf] %v681
      %732 = vst [vmem:[%s175 + $0x14] sm:$0xf] %v682
      %733 = vst [vmem:[%s175 + $0x18] sm:$0xf] %v683
      %734 = vst [vmem:[%s175 + $0x1c] sm:$0xf] %v684
      %735 = vst [vmem:[%s175 + $0x20] sm:$0xf] %v685
      %736 = vst [vmem:[%s175 + $0x24] sm:$0xf] %v686
      %737 = vst [vmem:[%s175 + $0x28] sm:$0xf] %v687
      %738 = vst [vmem:[%s175 + $0x2c] sm:$0xf] %v688
      %739 = vst [vmem:[%s175 + $0x30] sm:$0xf] %v689
      %740 = vst [vmem:[%s175 + $0x34] sm:$0xf] %v690
      %741 = vst [vmem:[%s175 + $0x38] sm:$0xf] %v691
      %742 = vst [vmem:[%s175 + $0x3c] sm:$0xf] %v692
      %743 = vst [vmem:[%s175 + $0x40] sm:$0xf] %v693
      %744 = vst [vmem:[%s175 + $0x44] sm:$0xf] %v694
      %745 = vst [vmem:[%s175 + $0x48] sm:$0xf] %v695
      %746 = vst [vmem:[%s175 + $0x4c] sm:$0xf] %v696
      %747 = vst [vmem:[%s175 + $0x50] sm:$0xf] %v697
      %748 = vst [vmem:[%s175 + $0x54] sm:$0xf] %v698
      %749 = vst [vmem:[%s175 + $0x58] sm:$0xf] %v699
      %750 = vst [vmem:[%s175 + $0x5c] sm:$0xf] %v700
      %751 = vst [vmem:[%s175 + $0x60] sm:$0xf] %v701
      %s752 = smul.u32 25, %s14
      %p753 = scmp.lt.s32.totalorder %s752, 49
      %s754 = scalar_select %p753, %s752, 49
      %s755 = smul.addr %s754, 4
      %s756 = scalar_lea.vmem %s3, %s755
      // Predicated region
      $region33: #{_lambda_.28} parent=31 // pred_check
        %p757 = pneg %p100
      $region34: #{_lambda_.28} parent=31 // pred_check_branch
        %759 = sbr.rel (%p757) target = $region36
      $region35: #{_lambda_.28} parent=31 // pred_region
        %s760 = smul.u32 25, %s14
      $region36: #{_lambda_.28} parent=31 // pred_fallthru
        _
    $region32: #{_lambda_.28} parent=5 // pred_fallthru
      _
    %p761 = scmp.le.s32.totalorder 2, %s9
    // Predicated region
    $region37: #{_lambda_.28} parent=5 // pred_check
      %p762 = pneg %p761
    $region38: #{_lambda_.28} parent=5 // pred_check_branch
      %764 = sbr.rel (%p762) target = $region40
    $region39: #{_lambda_.28} parent=5 // pred_region
      %s765 = ssub.s32 %s9, 2
      // Predicated region
      $region41: #{_lambda_.28} parent=39 // pred_check
        %p766 = pneg %p106
      $region42: #{_lambda_.28} parent=39 // pred_check_branch
        %768 = sbr.rel (%p766) target = $region44
      $region43: #{_lambda_.28} parent=39 // pred_region
        %s769 = smul.u32 25, %s15
        %p770 = scmp.lt.s32.totalorder %s769, 49
        %s771 = scalar_select %p770, %s769, 49
        %s772 = smul.addr %s771, 4
        %s773 = scalar_lea.vmem %s3, %s772
      $region44: #{_lambda_.28} parent=39 // pred_fallthru
        _
    $region40: #{_lambda_.28} parent=5 // pred_fallthru
      _
  $region6: #{_lambda_.28} parent=0 // loop_footer
    %s13 = sadd.s32 1, %s9
  $region7: #{_lambda_.28} parent=0 // loop_footer_branch
    %8 = sbr.rel target = $region3
  $region8: #{_lambda_.28} parent=0 // loop_exit
    _

</llo_original>
